<compile_context>
chip_gen: v5e
topology: v5e:2x2
jax: 0.10.0
libtpu: 0.0.40
codegen_flags: <defaults>
</compile_context>

<pallas_src>
import numpy as np
import jax
import jax.numpy as jnp
from jax.experimental import pallas as pl
from jax.experimental.pallas import tpu as pltpu

# ---------------- small, module-consistent shapes ----------------
B = 2        # batch
CIN = 4      # in_channels
COUT = 8     # out_channels
D = 8        # depth
H = 8        # height
W = 8        # width
EPS = 1e-5   # nn.BatchNorm3d default eps

LIN = (W + 2) * CIN     # 40 lanes: (padded width) x in-channels   (conv1 input rows)
LMID = (W + 2) * COUT   # 80 lanes: (padded width) x out-channels  (conv2 input rows)
LOUT = W * COUT         # 64 lanes: width x out-channels           (output rows)
ROWS = D * H            # 64 sublane rows per batch element


def encoder_block_kernel(x_ref, w1_ref, w2_ref, bn_ref, o_ref, pad_ref):
    xp = x_ref[...]                                  # (D+2, H+2, (W+2)*CIN)
    bn = bn_ref[...]                                 # (4, W*COUT) packed BN scale/shift
    scale1, shift1 = bn[0:1, :], bn[1:2, :]
    scale2, shift2 = bn[2:3, :], bn[3:4, :]

    # ---- conv1: 9 banded matmuls over (kd, kh); kw folded into the weight band ----
    acc = jnp.zeros((ROWS, LOUT), jnp.float32)
    for kd in range(3):
        for kh in range(3):
            patch = xp[kd:kd + D, kh:kh + H, :].reshape(ROWS, LIN)
            acc = acc + jnp.dot(patch, w1_ref[kd * 3 + kh],
                                preferred_element_type=jnp.float32,
                                precision=jax.lax.Precision.HIGHEST)
    y1 = jnp.maximum(acc * scale1 + shift1, 0.0)     # folded BN (eval) + ReLU

    # ---- zero-pad y1 (pad=1 on d/h/w) into a VMEM scratch for conv2 ----
    pad_ref[...] = jnp.zeros_like(pad_ref)
    pad_ref[1:1 + D, 1:1 + H, COUT:(W + 1) * COUT] = y1.reshape(D, H, LOUT)

    # ---- conv2: same banded structure, COUT input channels ----
    acc2 = jnp.zeros((ROWS, LOUT), jnp.float32)
    for kd in range(3):
        for kh in range(3):
            patch = pad_ref[kd:kd + D, kh:kh + H, :].reshape(ROWS, LMID)
            acc2 = acc2 + jnp.dot(patch, w2_ref[kd * 3 + kh],
                                  preferred_element_type=jnp.float32,
                                  precision=jax.lax.Precision.HIGHEST)
    o_ref[...] = jnp.maximum(acc2 * scale2 + shift2, 0.0)


# ---------------- one-time parameter preparation (outside hot path) ----------------
def _banded_weight(w, width):
    """(Cout, Cin, 3,3,3) PyTorch conv weight -> (9, (width+2)*Cin, width*Cout) band slabs.

    band[kd*3+kh, (w+kw)*Cin + ci, w*Cout + co] = W[co, ci, kd, kh, kw]; zeros elsewhere.
    """
    w = np.asarray(w, np.float32)
    cout, cin = w.shape[0], w.shape[1]
    band = np.zeros((9, (width + 2) * cin, width * cout), np.float32)
    for kd in range(3):
        for kh in range(3):
            t = kd * 3 + kh
            for kw in range(3):
                blk = w[:, :, kd, kh, kw].T          # (Cin, Cout)
                for ww in range(width):
                    wp = ww + kw
                    band[t, wp * cin:(wp + 1) * cin, ww * cout:(ww + 1) * cout] = blk
    return band


def prepare_params(params):
    (w1, g1, b1, m1, v1, w2, g2, b2, m2, v2) = params
    w1band = jnp.asarray(_banded_weight(w1, W))                    # (9, 40, 64)
    w2band = jnp.asarray(_banded_weight(w2, W))                    # (9, 80, 64)

    def fold(g, b, m, v):
        g, b, m, v = (np.asarray(a, np.float32) for a in (g, b, m, v))
        s = g / np.sqrt(v + EPS)
        sh = b - m * s
        return np.tile(s, W), np.tile(sh, W)                       # broadcast to W*Cout lanes

    s1, sh1 = fold(g1, b1, m1, v1)
    s2, sh2 = fold(g2, b2, m2, v2)
    bnvec = jnp.asarray(np.stack([s1, sh1, s2, sh2]).astype(np.float32))   # (4, 64)
    return (w1band, w2band, bnvec)


def encoder_block_forward(x_ncdhw, prepped):
    w1band, w2band, bnvec = prepped

    # layout plumbing (cheap XLA): NCDHW -> channels-last, pad spatial by 1, fold W*C into lanes
    xcl = jnp.transpose(x_ncdhw, (0, 2, 3, 4, 1))                  # (B, D, H, W, CIN)
    xpad = jnp.pad(xcl, ((0, 0), (1, 1), (1, 1), (1, 1), (0, 0)))
    xpad = xpad.reshape(B, D + 2, H + 2, LIN)

    flops = 2 * B * D * H * W * 27 * (CIN * COUT + COUT * COUT)    # useful conv FLOPs
    bytes_accessed = 4 * (xpad.size + w1band.size + w2band.size + bnvec.size
                          + B * ROWS * LOUT)

    out = pl.pallas_call(
        encoder_block_kernel,
        out_shape=jax.ShapeDtypeStruct((B, ROWS, LOUT), jnp.float32),
        grid=(B,),
        in_specs=[
            pl.BlockSpec((None, D + 2, H + 2, LIN), lambda b: (b, 0, 0, 0)),   # x (per batch)
            pl.BlockSpec((9, (W + 2) * CIN, LOUT), lambda b: (0, 0, 0)),       # conv1 band slab
            pl.BlockSpec((9, (W + 2) * COUT, LOUT), lambda b: (0, 0, 0)),      # conv2 band slab
            pl.BlockSpec((4, LOUT), lambda b: (0, 0)),                         # packed BN params
        ],
        out_specs=pl.BlockSpec((None, ROWS, LOUT), lambda b: (b, 0, 0)),
        scratch_shapes=[pltpu.VMEM((D + 2, H + 2, LMID), jnp.float32)],
        compiler_params=pltpu.CompilerParams(
            dimension_semantics=("parallel",)),
        cost_estimate=pl.CostEstimate(flops=flops, transcendentals=0,
                                      bytes_accessed=bytes_accessed),
    )(xpad, w1band, w2band, bnvec)

    # back to the PyTorch NCDHW output layout
    return jnp.transpose(out.reshape(B, D, H, W, COUT), (0, 4, 1, 2, 3))


# ---------------- parameter init & pure-JAX reference ----------------
def init_params(key):
    ks = jax.random.split(key, 10)
    w1 = 0.1 * jax.random.normal(ks[0], (COUT, CIN, 3, 3, 3), jnp.float32)
    g1 = 1.0 + 0.1 * jax.random.normal(ks[1], (COUT,), jnp.float32)
    b1 = 0.1 * jax.random.normal(ks[2], (COUT,), jnp.float32)
    m1 = 0.1 * jax.random.normal(ks[3], (COUT,), jnp.float32)
    v1 = 1.0 + 0.5 * jax.random.uniform(ks[4], (COUT,), jnp.float32)
    w2 = 0.1 * jax.random.normal(ks[5], (COUT, COUT, 3, 3, 3), jnp.float32)
    g2 = 1.0 + 0.1 * jax.random.normal(ks[6], (COUT,), jnp.float32)
    b2 = 0.1 * jax.random.normal(ks[7], (COUT,), jnp.float32)
    m2 = 0.1 * jax.random.normal(ks[8], (COUT,), jnp.float32)
    v2 = 1.0 + 0.5 * jax.random.uniform(ks[9], (COUT,), jnp.float32)
    return (w1, g1, b1, m1, v1, w2, g2, b2, m2, v2)


def reference_forward(x, params):
    (w1, g1, b1, m1, v1, w2, g2, b2, m2, v2) = params

    def conv_bn_relu(z, w, g, b, m, v):
        y = jax.lax.conv_general_dilated(
            z, w, window_strides=(1, 1, 1), padding=[(1, 1)] * 3,
            dimension_numbers=('NCDHW', 'OIDHW', 'NCDHW'),
            precision=jax.lax.Precision.HIGHEST)
        s = g / jnp.sqrt(v + EPS)
        sh = b - m * s
        y = y * s[None, :, None, None, None] + sh[None, :, None, None, None]
        return jnp.maximum(y, 0.0)

    return conv_bn_relu(conv_bn_relu(x, w1, g1, b1, m1, v1), w2, g2, b2, m2, v2)


if __name__ == "__main__":
    key = jax.random.PRNGKey(0)
    kx, kp = jax.random.split(key)
    x = jax.random.normal(kx, (B, CIN, D, H, W), jnp.float32)
    params = init_params(kp)

    prepped = prepare_params(params)          # one-time weight/BN packing (not in hot path)
    out = encoder_block_forward(x, prepped)
    out = jax.block_until_ready(out)

    ref = reference_forward(x, params)
    assert out.shape == (B, COUT, D, H, W)
    err = jnp.max(jnp.abs(out - ref))
    assert jnp.allclose(out, ref, atol=2e-3, rtol=2e-3), f"max err {err}"
    print("KERNEL_OK")
</pallas_src>

<mosaic_0001>
module attributes {stable_mosaic.version = 11 : i64} {
  func.func @encoder_block_kernel(%arg0: i32, %arg1: memref<1x10x10x40xf32, #tpu.memory_space<vmem>>, %arg2: memref<9x40x64xf32, #tpu.memory_space<vmem>>, %arg3: memref<9x80x64xf32, #tpu.memory_space<vmem>>, %arg4: memref<4x64xf32, #tpu.memory_space<vmem>>, %arg5: memref<1x64x64xf32, #tpu.memory_space<vmem>>, %arg6: memref<10x10x80xf32, #tpu.memory_space<vmem>>) attributes {dimension_semantics = [#tpu.dimension_semantics<parallel>], iteration_bounds = array<i64: 2>, scalar_prefetch = 0 : i64, scratch_operands = 1 : i64, tpu.core_type = #tpu.core_type<tc>, window_params = [{transform_indices = @transform_0, window_bounds = array<i64: 1, 10, 10, 40>}, {pipeline_mode = #tpu.pipeline_mode<synchronous>, transform_indices = @transform_1, window_bounds = array<i64: 9, 40, 64>}, {pipeline_mode = #tpu.pipeline_mode<synchronous>, transform_indices = @transform_2, window_bounds = array<i64: 9, 80, 64>}, {pipeline_mode = #tpu.pipeline_mode<synchronous>, transform_indices = @transform_3, window_bounds = array<i64: 4, 64>}, {transform_indices = @transform_4, window_bounds = array<i64: 1, 64, 64>}]} {
    %c0 = arith.constant 0 : index
    %c0_0 = arith.constant 0 : index
    %c0_1 = arith.constant 0 : index
    %c0_2 = arith.constant 0 : index
    %0 = vector.load %arg1[%c0, %c0_0, %c0_1, %c0_2] : memref<1x10x10x40xf32, #tpu.memory_space<vmem>>, vector<1x10x10x40xf32>
    %1 = vector.shape_cast %0 : vector<1x10x10x40xf32> to vector<10x10x40xf32>
    %c0_3 = arith.constant 0 : index
    %c0_4 = arith.constant 0 : index
    %2 = vector.load %arg4[%c0_3, %c0_4] : memref<4x64xf32, #tpu.memory_space<vmem>>, vector<4x64xf32>
    %3 = vector.extract_strided_slice %2 {offsets = [0, 0], sizes = [1, 64], strides = [1, 1]} : vector<4x64xf32> to vector<1x64xf32>
    %4 = vector.extract_strided_slice %2 {offsets = [1, 0], sizes = [1, 64], strides = [1, 1]} : vector<4x64xf32> to vector<1x64xf32>
    %5 = vector.extract_strided_slice %2 {offsets = [2, 0], sizes = [1, 64], strides = [1, 1]} : vector<4x64xf32> to vector<1x64xf32>
    %6 = vector.extract_strided_slice %2 {offsets = [3, 0], sizes = [1, 64], strides = [1, 1]} : vector<4x64xf32> to vector<1x64xf32>
    %cst = arith.constant 0.000000e+00 : f32
    %7 = vector.broadcast %cst : f32 to vector<64x64xf32>
    %8 = vector.extract_strided_slice %1 {offsets = [0, 0, 0], sizes = [8, 8, 40], strides = [1, 1, 1]} : vector<10x10x40xf32> to vector<8x8x40xf32>
    %9 = vector.shape_cast %8 : vector<8x8x40xf32> to vector<64x40xf32>
    %c0_5 = arith.constant 0 : index
    %c0_6 = arith.constant 0 : index
    %c0_7 = arith.constant 0 : index
    %10 = vector.load %arg2[%c0_5, %c0_6, %c0_7] : memref<9x40x64xf32, #tpu.memory_space<vmem>>, vector<1x40x64xf32>
    %11 = vector.shape_cast %10 : vector<1x40x64xf32> to vector<40x64xf32>
    %cst_8 = arith.constant dense<0.000000e+00> : vector<64x64xf32>
    %12 = tpu.matmul %9, %11, %cst_8 {dimension_numbers = #tpu.dot_dimension_numbers<[1], [0], [0], [1], [0, 0, 1, 1], [], []>, precision = #tpu.contract_precision<fp32>} : vector<64x40xf32>, vector<40x64xf32>, vector<64x64xf32> -> vector<64x64xf32>
    %13 = arith.addf %7, %12 : vector<64x64xf32>
    %14 = vector.extract_strided_slice %1 {offsets = [0, 1, 0], sizes = [8, 8, 40], strides = [1, 1, 1]} : vector<10x10x40xf32> to vector<8x8x40xf32>
    %15 = vector.shape_cast %14 : vector<8x8x40xf32> to vector<64x40xf32>
    %c1 = arith.constant 1 : index
    %c0_9 = arith.constant 0 : index
    %c0_10 = arith.constant 0 : index
    %16 = vector.load %arg2[%c1, %c0_9, %c0_10] : memref<9x40x64xf32, #tpu.memory_space<vmem>>, vector<1x40x64xf32>
    %17 = vector.shape_cast %16 : vector<1x40x64xf32> to vector<40x64xf32>
    %cst_11 = arith.constant dense<0.000000e+00> : vector<64x64xf32>
    %18 = tpu.matmul %15, %17, %cst_11 {dimension_numbers = #tpu.dot_dimension_numbers<[1], [0], [0], [1], [0, 0, 1, 1], [], []>, precision = #tpu.contract_precision<fp32>} : vector<64x40xf32>, vector<40x64xf32>, vector<64x64xf32> -> vector<64x64xf32>
    %19 = arith.addf %13, %18 : vector<64x64xf32>
    %20 = vector.extract_strided_slice %1 {offsets = [0, 2, 0], sizes = [8, 8, 40], strides = [1, 1, 1]} : vector<10x10x40xf32> to vector<8x8x40xf32>
    %21 = vector.shape_cast %20 : vector<8x8x40xf32> to vector<64x40xf32>
    %c2 = arith.constant 2 : index
    %c0_12 = arith.constant 0 : index
    %c0_13 = arith.constant 0 : index
    %22 = vector.load %arg2[%c2, %c0_12, %c0_13] : memref<9x40x64xf32, #tpu.memory_space<vmem>>, vector<1x40x64xf32>
    %23 = vector.shape_cast %22 : vector<1x40x64xf32> to vector<40x64xf32>
    %cst_14 = arith.constant dense<0.000000e+00> : vector<64x64xf32>
    %24 = tpu.matmul %21, %23, %cst_14 {dimension_numbers = #tpu.dot_dimension_numbers<[1], [0], [0], [1], [0, 0, 1, 1], [], []>, precision = #tpu.contract_precision<fp32>} : vector<64x40xf32>, vector<40x64xf32>, vector<64x64xf32> -> vector<64x64xf32>
    %25 = arith.addf %19, %24 : vector<64x64xf32>
    %26 = vector.extract_strided_slice %1 {offsets = [1, 0, 0], sizes = [8, 8, 40], strides = [1, 1, 1]} : vector<10x10x40xf32> to vector<8x8x40xf32>
    %27 = vector.shape_cast %26 : vector<8x8x40xf32> to vector<64x40xf32>
    %c3 = arith.constant 3 : index
    %c0_15 = arith.constant 0 : index
    %c0_16 = arith.constant 0 : index
    %28 = vector.load %arg2[%c3, %c0_15, %c0_16] : memref<9x40x64xf32, #tpu.memory_space<vmem>>, vector<1x40x64xf32>
    %29 = vector.shape_cast %28 : vector<1x40x64xf32> to vector<40x64xf32>
    %cst_17 = arith.constant dense<0.000000e+00> : vector<64x64xf32>
    %30 = tpu.matmul %27, %29, %cst_17 {dimension_numbers = #tpu.dot_dimension_numbers<[1], [0], [0], [1], [0, 0, 1, 1], [], []>, precision = #tpu.contract_precision<fp32>} : vector<64x40xf32>, vector<40x64xf32>, vector<64x64xf32> -> vector<64x64xf32>
    %31 = arith.addf %25, %30 : vector<64x64xf32>
    %32 = vector.extract_strided_slice %1 {offsets = [1, 1, 0], sizes = [8, 8, 40], strides = [1, 1, 1]} : vector<10x10x40xf32> to vector<8x8x40xf32>
    %33 = vector.shape_cast %32 : vector<8x8x40xf32> to vector<64x40xf32>
    %c4 = arith.constant 4 : index
    %c0_18 = arith.constant 0 : index
    %c0_19 = arith.constant 0 : index
    %34 = vector.load %arg2[%c4, %c0_18, %c0_19] : memref<9x40x64xf32, #tpu.memory_space<vmem>>, vector<1x40x64xf32>
    %35 = vector.shape_cast %34 : vector<1x40x64xf32> to vector<40x64xf32>
    %cst_20 = arith.constant dense<0.000000e+00> : vector<64x64xf32>
    %36 = tpu.matmul %33, %35, %cst_20 {dimension_numbers = #tpu.dot_dimension_numbers<[1], [0], [0], [1], [0, 0, 1, 1], [], []>, precision = #tpu.contract_precision<fp32>} : vector<64x40xf32>, vector<40x64xf32>, vector<64x64xf32> -> vector<64x64xf32>
    %37 = arith.addf %31, %36 : vector<64x64xf32>
    %38 = vector.extract_strided_slice %1 {offsets = [1, 2, 0], sizes = [8, 8, 40], strides = [1, 1, 1]} : vector<10x10x40xf32> to vector<8x8x40xf32>
    %39 = vector.shape_cast %38 : vector<8x8x40xf32> to vector<64x40xf32>
    %c5 = arith.constant 5 : index
    %c0_21 = arith.constant 0 : index
    %c0_22 = arith.constant 0 : index
    %40 = vector.load %arg2[%c5, %c0_21, %c0_22] : memref<9x40x64xf32, #tpu.memory_space<vmem>>, vector<1x40x64xf32>
    %41 = vector.shape_cast %40 : vector<1x40x64xf32> to vector<40x64xf32>
    %cst_23 = arith.constant dense<0.000000e+00> : vector<64x64xf32>
    %42 = tpu.matmul %39, %41, %cst_23 {dimension_numbers = #tpu.dot_dimension_numbers<[1], [0], [0], [1], [0, 0, 1, 1], [], []>, precision = #tpu.contract_precision<fp32>} : vector<64x40xf32>, vector<40x64xf32>, vector<64x64xf32> -> vector<64x64xf32>
    %43 = arith.addf %37, %42 : vector<64x64xf32>
    %44 = vector.extract_strided_slice %1 {offsets = [2, 0, 0], sizes = [8, 8, 40], strides = [1, 1, 1]} : vector<10x10x40xf32> to vector<8x8x40xf32>
    %45 = vector.shape_cast %44 : vector<8x8x40xf32> to vector<64x40xf32>
    %c6 = arith.constant 6 : index
    %c0_24 = arith.constant 0 : index
    %c0_25 = arith.constant 0 : index
    %46 = vector.load %arg2[%c6, %c0_24, %c0_25] : memref<9x40x64xf32, #tpu.memory_space<vmem>>, vector<1x40x64xf32>
    %47 = vector.shape_cast %46 : vector<1x40x64xf32> to vector<40x64xf32>
    %cst_26 = arith.constant dense<0.000000e+00> : vector<64x64xf32>
    %48 = tpu.matmul %45, %47, %cst_26 {dimension_numbers = #tpu.dot_dimension_numbers<[1], [0], [0], [1], [0, 0, 1, 1], [], []>, precision = #tpu.contract_precision<fp32>} : vector<64x40xf32>, vector<40x64xf32>, vector<64x64xf32> -> vector<64x64xf32>
    %49 = arith.addf %43, %48 : vector<64x64xf32>
    %50 = vector.extract_strided_slice %1 {offsets = [2, 1, 0], sizes = [8, 8, 40], strides = [1, 1, 1]} : vector<10x10x40xf32> to vector<8x8x40xf32>
    %51 = vector.shape_cast %50 : vector<8x8x40xf32> to vector<64x40xf32>
    %c7 = arith.constant 7 : index
    %c0_27 = arith.constant 0 : index
    %c0_28 = arith.constant 0 : index
    %52 = vector.load %arg2[%c7, %c0_27, %c0_28] : memref<9x40x64xf32, #tpu.memory_space<vmem>>, vector<1x40x64xf32>
    %53 = vector.shape_cast %52 : vector<1x40x64xf32> to vector<40x64xf32>
    %cst_29 = arith.constant dense<0.000000e+00> : vector<64x64xf32>
    %54 = tpu.matmul %51, %53, %cst_29 {dimension_numbers = #tpu.dot_dimension_numbers<[1], [0], [0], [1], [0, 0, 1, 1], [], []>, precision = #tpu.contract_precision<fp32>} : vector<64x40xf32>, vector<40x64xf32>, vector<64x64xf32> -> vector<64x64xf32>
    %55 = arith.addf %49, %54 : vector<64x64xf32>
    %56 = vector.extract_strided_slice %1 {offsets = [2, 2, 0], sizes = [8, 8, 40], strides = [1, 1, 1]} : vector<10x10x40xf32> to vector<8x8x40xf32>
    %57 = vector.shape_cast %56 : vector<8x8x40xf32> to vector<64x40xf32>
    %c8 = arith.constant 8 : index
    %c0_30 = arith.constant 0 : index
    %c0_31 = arith.constant 0 : index
    %58 = vector.load %arg2[%c8, %c0_30, %c0_31] : memref<9x40x64xf32, #tpu.memory_space<vmem>>, vector<1x40x64xf32>
    %59 = vector.shape_cast %58 : vector<1x40x64xf32> to vector<40x64xf32>
    %cst_32 = arith.constant dense<0.000000e+00> : vector<64x64xf32>
    %60 = tpu.matmul %57, %59, %cst_32 {dimension_numbers = #tpu.dot_dimension_numbers<[1], [0], [0], [1], [0, 0, 1, 1], [], []>, precision = #tpu.contract_precision<fp32>} : vector<64x40xf32>, vector<40x64xf32>, vector<64x64xf32> -> vector<64x64xf32>
    %61 = arith.addf %55, %60 : vector<64x64xf32>
    %62 = vector.broadcast %3 : vector<1x64xf32> to vector<64x64xf32>
    %63 = arith.mulf %61, %62 : vector<64x64xf32>
    %64 = vector.broadcast %4 : vector<1x64xf32> to vector<64x64xf32>
    %65 = arith.addf %63, %64 : vector<64x64xf32>
    %cst_33 = arith.constant 0.000000e+00 : f32
    %66 = vector.broadcast %cst_33 : f32 to vector<64x64xf32>
    %67 = arith.maximumf %65, %66 : vector<64x64xf32>
    %cst_34 = arith.constant 0.000000e+00 : f32
    %68 = vector.broadcast %cst_34 : f32 to vector<10x10x80xf32>
    %c0_35 = arith.constant 0 : index
    %c0_36 = arith.constant 0 : index
    %c0_37 = arith.constant 0 : index
    %69 = vector.load %arg6[%c0_35, %c0_36, %c0_37] : memref<10x10x80xf32, #tpu.memory_space<vmem>>, vector<10x10x80xf32>
    tpu.vector_store %arg6[%c0_35, %c0_36, %c0_37], %68 {strides = array<i32>} : memref<10x10x80xf32, #tpu.memory_space<vmem>>, vector<10x10x80xf32>,
    %70 = vector.shape_cast %67 : vector<64x64xf32> to vector<8x8x64xf32>
    %c1_38 = arith.constant 1 : index
    %c1_39 = arith.constant 1 : index
    %c8_40 = arith.constant 8 : index
    %71 = vector.load %arg6[%c1_38, %c1_39, %c8_40] : memref<10x10x80xf32, #tpu.memory_space<vmem>>, vector<8x8x64xf32>
    tpu.vector_store %arg6[%c1_38, %c1_39, %c8_40], %70 {strides = array<i32>} : memref<10x10x80xf32, #tpu.memory_space<vmem>>, vector<8x8x64xf32>,
    %cst_41 = arith.constant 0.000000e+00 : f32
    %72 = vector.broadcast %cst_41 : f32 to vector<64x64xf32>
    %c0_42 = arith.constant 0 : index
    %c0_43 = arith.constant 0 : index
    %c0_44 = arith.constant 0 : index
    %73 = vector.load %arg6[%c0_42, %c0_43, %c0_44] : memref<10x10x80xf32, #tpu.memory_space<vmem>>, vector<8x8x80xf32>
    %74 = vector.shape_cast %73 : vector<8x8x80xf32> to vector<64x80xf32>
    %c0_45 = arith.constant 0 : index
    %c0_46 = arith.constant 0 : index
    %c0_47 = arith.constant 0 : index
    %75 = vector.load %arg3[%c0_45, %c0_46, %c0_47] : memref<9x80x64xf32, #tpu.memory_space<vmem>>, vector<1x80x64xf32>
    %76 = vector.shape_cast %75 : vector<1x80x64xf32> to vector<80x64xf32>
    %cst_48 = arith.constant dense<0.000000e+00> : vector<64x64xf32>
    %77 = tpu.matmul %74, %76, %cst_48 {dimension_numbers = #tpu.dot_dimension_numbers<[1], [0], [0], [1], [0, 0, 1, 1], [], []>, precision = #tpu.contract_precision<fp32>} : vector<64x80xf32>, vector<80x64xf32>, vector<64x64xf32> -> vector<64x64xf32>
    %78 = arith.addf %72, %77 : vector<64x64xf32>
    %c0_49 = arith.constant 0 : index
    %c1_50 = arith.constant 1 : index
    %c0_51 = arith.constant 0 : index
    %79 = vector.load %arg6[%c0_49, %c1_50, %c0_51] : memref<10x10x80xf32, #tpu.memory_space<vmem>>, vector<8x8x80xf32>
    %80 = vector.shape_cast %79 : vector<8x8x80xf32> to vector<64x80xf32>
    %c1_52 = arith.constant 1 : index
    %c0_53 = arith.constant 0 : index
    %c0_54 = arith.constant 0 : index
    %81 = vector.load %arg3[%c1_52, %c0_53, %c0_54] : memref<9x80x64xf32, #tpu.memory_space<vmem>>, vector<1x80x64xf32>
    %82 = vector.shape_cast %81 : vector<1x80x64xf32> to vector<80x64xf32>
    %cst_55 = arith.constant dense<0.000000e+00> : vector<64x64xf32>
    %83 = tpu.matmul %80, %82, %cst_55 {dimension_numbers = #tpu.dot_dimension_numbers<[1], [0], [0], [1], [0, 0, 1, 1], [], []>, precision = #tpu.contract_precision<fp32>} : vector<64x80xf32>, vector<80x64xf32>, vector<64x64xf32> -> vector<64x64xf32>
    %84 = arith.addf %78, %83 : vector<64x64xf32>
    %c0_56 = arith.constant 0 : index
    %c2_57 = arith.constant 2 : index
    %c0_58 = arith.constant 0 : index
    %85 = vector.load %arg6[%c0_56, %c2_57, %c0_58] : memref<10x10x80xf32, #tpu.memory_space<vmem>>, vector<8x8x80xf32>
    %86 = vector.shape_cast %85 : vector<8x8x80xf32> to vector<64x80xf32>
    %c2_59 = arith.constant 2 : index
    %c0_60 = arith.constant 0 : index
    %c0_61 = arith.constant 0 : index
    %87 = vector.load %arg3[%c2_59, %c0_60, %c0_61] : memref<9x80x64xf32, #tpu.memory_space<vmem>>, vector<1x80x64xf32>
    %88 = vector.shape_cast %87 : vector<1x80x64xf32> to vector<80x64xf32>
    %cst_62 = arith.constant dense<0.000000e+00> : vector<64x64xf32>
    %89 = tpu.matmul %86, %88, %cst_62 {dimension_numbers = #tpu.dot_dimension_numbers<[1], [0], [0], [1], [0, 0, 1, 1], [], []>, precision = #tpu.contract_precision<fp32>} : vector<64x80xf32>, vector<80x64xf32>, vector<64x64xf32> -> vector<64x64xf32>
    %90 = arith.addf %84, %89 : vector<64x64xf32>
    %c1_63 = arith.constant 1 : index
    %c0_64 = arith.constant 0 : index
    %c0_65 = arith.constant 0 : index
    %91 = vector.load %arg6[%c1_63, %c0_64, %c0_65] : memref<10x10x80xf32, #tpu.memory_space<vmem>>, vector<8x8x80xf32>
    %92 = vector.shape_cast %91 : vector<8x8x80xf32> to vector<64x80xf32>
    %c3_66 = arith.constant 3 : index
    %c0_67 = arith.constant 0 : index
    %c0_68 = arith.constant 0 : index
    %93 = vector.load %arg3[%c3_66, %c0_67, %c0_68] : memref<9x80x64xf32, #tpu.memory_space<vmem>>, vector<1x80x64xf32>
    %94 = vector.shape_cast %93 : vector<1x80x64xf32> to vector<80x64xf32>
    %cst_69 = arith.constant dense<0.000000e+00> : vector<64x64xf32>
    %95 = tpu.matmul %92, %94, %cst_69 {dimension_numbers = #tpu.dot_dimension_numbers<[1], [0], [0], [1], [0, 0, 1, 1], [], []>, precision = #tpu.contract_precision<fp32>} : vector<64x80xf32>, vector<80x64xf32>, vector<64x64xf32> -> vector<64x64xf32>
    %96 = arith.addf %90, %95 : vector<64x64xf32>
    %c1_70 = arith.constant 1 : index
    %c1_71 = arith.constant 1 : index
    %c0_72 = arith.constant 0 : index
    %97 = vector.load %arg6[%c1_70, %c1_71, %c0_72] : memref<10x10x80xf32, #tpu.memory_space<vmem>>, vector<8x8x80xf32>
    %98 = vector.shape_cast %97 : vector<8x8x80xf32> to vector<64x80xf32>
    %c4_73 = arith.constant 4 : index
    %c0_74 = arith.constant 0 : index
    %c0_75 = arith.constant 0 : index
    %99 = vector.load %arg3[%c4_73, %c0_74, %c0_75] : memref<9x80x64xf32, #tpu.memory_space<vmem>>, vector<1x80x64xf32>
    %100 = vector.shape_cast %99 : vector<1x80x64xf32> to vector<80x64xf32>
    %cst_76 = arith.constant dense<0.000000e+00> : vector<64x64xf32>
    %101 = tpu.matmul %98, %100, %cst_76 {dimension_numbers = #tpu.dot_dimension_numbers<[1], [0], [0], [1], [0, 0, 1, 1], [], []>, precision = #tpu.contract_precision<fp32>} : vector<64x80xf32>, vector<80x64xf32>, vector<64x64xf32> -> vector<64x64xf32>
    %102 = arith.addf %96, %101 : vector<64x64xf32>
    %c1_77 = arith.constant 1 : index
    %c2_78 = arith.constant 2 : index
    %c0_79 = arith.constant 0 : index
    %103 = vector.load %arg6[%c1_77, %c2_78, %c0_79] : memref<10x10x80xf32, #tpu.memory_space<vmem>>, vector<8x8x80xf32>
    %104 = vector.shape_cast %103 : vector<8x8x80xf32> to vector<64x80xf32>
    %c5_80 = arith.constant 5 : index
    %c0_81 = arith.constant 0 : index
    %c0_82 = arith.constant 0 : index
    %105 = vector.load %arg3[%c5_80, %c0_81, %c0_82] : memref<9x80x64xf32, #tpu.memory_space<vmem>>, vector<1x80x64xf32>
    %106 = vector.shape_cast %105 : vector<1x80x64xf32> to vector<80x64xf32>
    %cst_83 = arith.constant dense<0.000000e+00> : vector<64x64xf32>
    %107 = tpu.matmul %104, %106, %cst_83 {dimension_numbers = #tpu.dot_dimension_numbers<[1], [0], [0], [1], [0, 0, 1, 1], [], []>, precision = #tpu.contract_precision<fp32>} : vector<64x80xf32>, vector<80x64xf32>, vector<64x64xf32> -> vector<64x64xf32>
    %108 = arith.addf %102, %107 : vector<64x64xf32>
    %c2_84 = arith.constant 2 : index
    %c0_85 = arith.constant 0 : index
    %c0_86 = arith.constant 0 : index
    %109 = vector.load %arg6[%c2_84, %c0_85, %c0_86] : memref<10x10x80xf32, #tpu.memory_space<vmem>>, vector<8x8x80xf32>
    %110 = vector.shape_cast %109 : vector<8x8x80xf32> to vector<64x80xf32>
    %c6_87 = arith.constant 6 : index
    %c0_88 = arith.constant 0 : index
    %c0_89 = arith.constant 0 : index
    %111 = vector.load %arg3[%c6_87, %c0_88, %c0_89] : memref<9x80x64xf32, #tpu.memory_space<vmem>>, vector<1x80x64xf32>
    %112 = vector.shape_cast %111 : vector<1x80x64xf32> to vector<80x64xf32>
    %cst_90 = arith.constant dense<0.000000e+00> : vector<64x64xf32>
    %113 = tpu.matmul %110, %112, %cst_90 {dimension_numbers = #tpu.dot_dimension_numbers<[1], [0], [0], [1], [0, 0, 1, 1], [], []>, precision = #tpu.contract_precision<fp32>} : vector<64x80xf32>, vector<80x64xf32>, vector<64x64xf32> -> vector<64x64xf32>
    %114 = arith.addf %108, %113 : vector<64x64xf32>
    %c2_91 = arith.constant 2 : index
    %c1_92 = arith.constant 1 : index
    %c0_93 = arith.constant 0 : index
    %115 = vector.load %arg6[%c2_91, %c1_92, %c0_93] : memref<10x10x80xf32, #tpu.memory_space<vmem>>, vector<8x8x80xf32>
    %116 = vector.shape_cast %115 : vector<8x8x80xf32> to vector<64x80xf32>
    %c7_94 = arith.constant 7 : index
    %c0_95 = arith.constant 0 : index
    %c0_96 = arith.constant 0 : index
    %117 = vector.load %arg3[%c7_94, %c0_95, %c0_96] : memref<9x80x64xf32, #tpu.memory_space<vmem>>, vector<1x80x64xf32>
    %118 = vector.shape_cast %117 : vector<1x80x64xf32> to vector<80x64xf32>
    %cst_97 = arith.constant dense<0.000000e+00> : vector<64x64xf32>
    %119 = tpu.matmul %116, %118, %cst_97 {dimension_numbers = #tpu.dot_dimension_numbers<[1], [0], [0], [1], [0, 0, 1, 1], [], []>, precision = #tpu.contract_precision<fp32>} : vector<64x80xf32>, vector<80x64xf32>, vector<64x64xf32> -> vector<64x64xf32>
    %120 = arith.addf %114, %119 : vector<64x64xf32>
    %c2_98 = arith.constant 2 : index
    %c2_99 = arith.constant 2 : index
    %c0_100 = arith.constant 0 : index
    %121 = vector.load %arg6[%c2_98, %c2_99, %c0_100] : memref<10x10x80xf32, #tpu.memory_space<vmem>>, vector<8x8x80xf32>
    %122 = vector.shape_cast %121 : vector<8x8x80xf32> to vector<64x80xf32>
    %c8_101 = arith.constant 8 : index
    %c0_102 = arith.constant 0 : index
    %c0_103 = arith.constant 0 : index
    %123 = vector.load %arg3[%c8_101, %c0_102, %c0_103] : memref<9x80x64xf32, #tpu.memory_space<vmem>>, vector<1x80x64xf32>
    %124 = vector.shape_cast %123 : vector<1x80x64xf32> to vector<80x64xf32>
    %cst_104 = arith.constant dense<0.000000e+00> : vector<64x64xf32>
    %125 = tpu.matmul %122, %124, %cst_104 {dimension_numbers = #tpu.dot_dimension_numbers<[1], [0], [0], [1], [0, 0, 1, 1], [], []>, precision = #tpu.contract_precision<fp32>} : vector<64x80xf32>, vector<80x64xf32>, vector<64x64xf32> -> vector<64x64xf32>
    %126 = arith.addf %120, %125 : vector<64x64xf32>
    %127 = vector.broadcast %5 : vector<1x64xf32> to vector<64x64xf32>
    %128 = arith.mulf %126, %127 : vector<64x64xf32>
    %129 = vector.broadcast %6 : vector<1x64xf32> to vector<64x64xf32>
    %130 = arith.addf %128, %129 : vector<64x64xf32>
    %cst_105 = arith.constant 0.000000e+00 : f32
    %131 = vector.broadcast %cst_105 : f32 to vector<64x64xf32>
    %132 = arith.maximumf %130, %131 : vector<64x64xf32>
    %c0_106 = arith.constant 0 : index
    %c0_107 = arith.constant 0 : index
    %c0_108 = arith.constant 0 : index
    %133 = vector.load %arg5[%c0_106, %c0_107, %c0_108] : memref<1x64x64xf32, #tpu.memory_space<vmem>>, vector<1x64x64xf32>
    %134 = vector.shape_cast %133 : vector<1x64x64xf32> to vector<64x64xf32>
    %135 = vector.shape_cast %132 : vector<64x64xf32> to vector<1x64x64xf32>
    tpu.vector_store %arg5[%c0_106, %c0_107, %c0_108], %135 {strides = array<i32>} : memref<1x64x64xf32, #tpu.memory_space<vmem>>, vector<1x64x64xf32>,
    return
  }
  func.func @transform_0(%arg0: i32) -> (i32, i32, i32, i32) {
    %c0_i32 = arith.constant 0 : i32
    %c0_i32_0 = arith.constant 0 : i32
    %c0_i32_1 = arith.constant 0 : i32
    %c0_i32_2 = arith.constant 0 : i32
    return %arg0, %c0_i32, %c0_i32_0, %c0_i32_1 : i32, i32, i32, i32
  }
  func.func @transform_1(%arg0: i32) -> (i32, i32, i32) {
    %c0_i32 = arith.constant 0 : i32
    %c0_i32_0 = arith.constant 0 : i32
    %c0_i32_1 = arith.constant 0 : i32
    %c0_i32_2 = arith.constant 0 : i32
    return %c0_i32, %c0_i32_0, %c0_i32_1 : i32, i32, i32
  }
  func.func @transform_2(%arg0: i32) -> (i32, i32, i32) {
    %c0_i32 = arith.constant 0 : i32
    %c0_i32_0 = arith.constant 0 : i32
    %c0_i32_1 = arith.constant 0 : i32
    %c0_i32_2 = arith.constant 0 : i32
    return %c0_i32, %c0_i32_0, %c0_i32_1 : i32, i32, i32
  }
  func.func @transform_3(%arg0: i32) -> (i32, i32) {
    %c0_i32 = arith.constant 0 : i32
    %c0_i32_0 = arith.constant 0 : i32
    %c0_i32_1 = arith.constant 0 : i32
    return %c0_i32, %c0_i32_0 : i32, i32
  }
  func.func @transform_4(%arg0: i32) -> (i32, i32, i32) {
    %c0_i32 = arith.constant 0 : i32
    %c0_i32_0 = arith.constant 0 : i32
    %c0_i32_1 = arith.constant 0 : i32
    return %arg0, %c0_i32, %c0_i32_0 : i32, i32, i32
  }
}

</mosaic_0001>

<llo_original>
// kernel: tpu_custom_call.1
$region0: #{tpu_custom_call.1}
  #allocation0 [shape = 'u32[]', space=smem, size = 0x4, offset = 0x4, fixed_abs, tag = 'smem constant byte address 0x4 - core index']
  #allocation1 [shape = 'u32[72,128]{1,0:T(1,128)}', space=vmem, size = 0x9000, scoped, tag = 'internal scratch']
  #allocation2 [shape = 'f32[10,10,80]{2,1,0:T(8,128)}', space=vmem, size = 0x14000, scoped, tag = 'scratch operand']
  %s0 = inlined_call_operand.vmem [shape: f32[2,10,10,40], index: 0, kind: input, shape index: {}]
  %s1 = inlined_call_operand.vmem [shape: f32[9,40,64], index: 1, kind: input, shape index: {}]
  %s2 = inlined_call_operand.vmem [shape: f32[9,80,64], index: 2, kind: input, shape index: {}]
  %s3 = inlined_call_operand.vmem [shape: f32[4,64], index: 3, kind: input, shape index: {}]
  %s4 = inlined_call_operand.hbm [shape: f32[2,64,64], index: 4, kind: output, shape index: {}]
  %s5 = sld [smem:[#allocation0]]
  $region49: #{tpu_custom_call.1} parent=0
    _
  %s7 = ssub.s32 1, %s5
  %s8 = scalar_select 0, %s7, %s5
  $region1: #{tpu_custom_call.1} parent=0
    #allocation3 [shape = 'u8[65536]{0}', space=vmem, size = 0x10000, scoped, tag = 'output window, operand 0']
    #allocation4 [shape = 's32[2]{0}', space=sflag, size = 0x8, scoped, tag = 'scoped memory for tpu_custom_call.1']
    %9 = vsyncpa [#allocation4], 0
    %s10 = scalar_lea.sflag [#allocation4], 1
    %11 = vsyncpa %s10, 0
    loop: start=0, step=1, limit=4
    $region2: #{tpu_custom_call.1} parent=1 // loop_pre_header
      _
    $region3: #{tpu_custom_call.1} parent=1 // loop_header
      %s13 = sphi 0, %s17
      %p14 = scmp.ge.s32.totalorder %s13, 4
      %s23 = sphi 0, %s25
      %s26 = sphi 0, %s23
      %s27 = sphi 0, %s26
      %s43 = sphi 0, %s27
      %s47 = sphi 0, %s47
      %s49 = sphi 0, %s47
      %s50 = sphi 0, %s49
      %s64 = sphi 0, %s50
      %s68 = sphi 0, %s68
      %s70 = sphi 0, %s68
      %s71 = sphi 0, %s70
      %s85 = sphi 0, %s71
      %s89 = sphi 0, %s89
      %s91 = sphi 0, %s89
      %s92 = sphi 0, %s91
      %s106 = sphi 0, %s92
      %s112 = sphi 0, %s114
      %s115 = sphi 0, %s112
      %s116 = sphi 0, %s115
      %s132 = sphi 0, %s116
    $region4: #{tpu_custom_call.1} parent=1 // loop_header_branch
      %16 = sbr.rel (%p14) target = $region8
    $region5: #{tpu_custom_call.1} parent=1 // loop_body
      %s18 = ssub.s32 %s13, 1
      %s19 = ssub.s32 %s13, 2
      %s20 = sadd.s32 %s13, 1
      %s21 = ssub.s32 %s13, %s20
      %p22 = scmp.eq.s32.totalorder %s21, 0
      %s24 = sadd.s32 %s23, 1
      %s25 = scalar_select %p22, %s23, %s24
      %p28 = pneg %p22
      %p29 = scmp.eq.s32.totalorder %s13, 1
      %p30 = por %p28, %p29
      %p31 = scmp.ne.s32.totalorder %s23, %s26
      %p32 = scmp.eq.s32.totalorder %s13, 0
      %p33 = por %p31, %p32
      %p34 = scmp.ne.s32.totalorder %s23, %s26
      %p35 = scmp.eq.s32.totalorder %s18, 1
      %p36 = por %p34, %p35
      %p37 = scmp.ne.s32.totalorder %s26, %s27
      %p38 = scmp.eq.s32.totalorder %s18, 0
      %p39 = por %p37, %p38
      %p40 = scmp.ne.s32.totalorder %s26, %s27
      %p41 = scmp.eq.s32.totalorder %s19, 1
      %p42 = por %p40, %p41
      %p44 = scmp.ne.s32.totalorder %s27, %s43
      %p45 = scmp.eq.s32.totalorder %s19, 0
      %p46 = por %p44, %p45
      %s48 = sadd.s32 %s47, 1
      %p51 = scmp.eq.s32.totalorder %s13, 1
      %p52 = scmp.ne.s32.totalorder %s47, %s49
      %p53 = scmp.eq.s32.totalorder %s13, 0
      %p54 = por %p52, %p53
      %p55 = scmp.ne.s32.totalorder %s47, %s49
      %p56 = scmp.eq.s32.totalorder %s18, 1
      %p57 = por %p55, %p56
      %p58 = scmp.ne.s32.totalorder %s49, %s50
      %p59 = scmp.eq.s32.totalorder %s18, 0
      %p60 = por %p58, %p59
      %p61 = scmp.ne.s32.totalorder %s49, %s50
      %p62 = scmp.eq.s32.totalorder %s19, 1
      %p63 = por %p61, %p62
      %p65 = scmp.ne.s32.totalorder %s50, %s64
      %p66 = scmp.eq.s32.totalorder %s19, 0
      %p67 = por %p65, %p66
      %s69 = sadd.s32 %s68, 1
      %p72 = scmp.eq.s32.totalorder %s13, 1
      %p73 = scmp.ne.s32.totalorder %s68, %s70
      %p74 = scmp.eq.s32.totalorder %s13, 0
      %p75 = por %p73, %p74
      %p76 = scmp.ne.s32.totalorder %s68, %s70
      %p77 = scmp.eq.s32.totalorder %s18, 1
      %p78 = por %p76, %p77
      %p79 = scmp.ne.s32.totalorder %s70, %s71
      %p80 = scmp.eq.s32.totalorder %s18, 0
      %p81 = por %p79, %p80
      %p82 = scmp.ne.s32.totalorder %s70, %s71
      %p83 = scmp.eq.s32.totalorder %s19, 1
      %p84 = por %p82, %p83
      %p86 = scmp.ne.s32.totalorder %s71, %s85
      %p87 = scmp.eq.s32.totalorder %s19, 0
      %p88 = por %p86, %p87
      %s90 = sadd.s32 %s89, 1
      %p93 = scmp.eq.s32.totalorder %s13, 1
      %p94 = scmp.ne.s32.totalorder %s89, %s91
      %p95 = scmp.eq.s32.totalorder %s13, 0
      %p96 = por %p94, %p95
      %p97 = scmp.ne.s32.totalorder %s89, %s91
      %p98 = scmp.eq.s32.totalorder %s18, 1
      %p99 = por %p97, %p98
      %p100 = scmp.ne.s32.totalorder %s91, %s92
      %p101 = scmp.eq.s32.totalorder %s18, 0
      %p102 = por %p100, %p101
      %p103 = scmp.ne.s32.totalorder %s91, %s92
      %p104 = scmp.eq.s32.totalorder %s19, 1
      %p105 = por %p103, %p104
      %p107 = scmp.ne.s32.totalorder %s92, %s106
      %p108 = scmp.eq.s32.totalorder %s19, 0
      %p109 = por %p107, %p108
      %s110 = ssub.s32 %s13, %s20
      %p111 = scmp.eq.s32.totalorder %s110, 0
      %s113 = sadd.s32 %s112, 1
      %s114 = scalar_select %p111, %s112, %s113
      %p117 = pneg %p111
      %p118 = scmp.eq.s32.totalorder %s13, 1
      %p119 = por %p117, %p118
      %p120 = scmp.ne.s32.totalorder %s112, %s115
      %p121 = scmp.eq.s32.totalorder %s13, 0
      %p122 = por %p120, %p121
      %p123 = scmp.ne.s32.totalorder %s112, %s115
      %p124 = scmp.eq.s32.totalorder %s18, 1
      %p125 = por %p123, %p124
      %p126 = scmp.ne.s32.totalorder %s115, %s116
      %p127 = scmp.eq.s32.totalorder %s18, 0
      %p128 = por %p126, %p127
      %p129 = scmp.ne.s32.totalorder %s115, %s116
      %p130 = scmp.eq.s32.totalorder %s19, 1
      %p131 = por %p129, %p130
      %p133 = scmp.ne.s32.totalorder %s116, %s132
      %p134 = scmp.eq.s32.totalorder %s19, 0
      %p135 = por %p133, %p134
      %p136 = scmp.le.s32.totalorder 1, %s13
      %p137 = scmp.lt.s32.totalorder %s13, 3
      %p138 = pnand %p136, %p137
      %p139 = pneg %p138
      // Predicated region
      $region9: #{tpu_custom_call.1} parent=5 // pred_check
        _
      $region10: #{tpu_custom_call.1} parent=5 // pred_check_branch
        %141 = sbr.rel (%p138) target = $region12
      $region11: #{tpu_custom_call.1} parent=5 // pred_region
        %s142 = ssub.s32 %s13, 1
        // Predicated region
        $region13: #{tpu_custom_call.1} parent=11 // pred_check
          %p143 = pneg %p60
        $region14: #{tpu_custom_call.1} parent=11 // pred_check_branch
          %145 = sbr.rel (%p143) target = $region16
        $region15: #{tpu_custom_call.1} parent=11 // pred_region
          _
        $region16: #{tpu_custom_call.1} parent=11 // pred_fallthru
          _
        // Predicated region
        $region17: #{tpu_custom_call.1} parent=11 // pred_check
          %p146 = pneg %p81
        $region18: #{tpu_custom_call.1} parent=11 // pred_check_branch
          %148 = sbr.rel (%p146) target = $region20
        $region19: #{tpu_custom_call.1} parent=11 // pred_region
          _
        $region20: #{tpu_custom_call.1} parent=11 // pred_fallthru
          _
        // Predicated region
        $region21: #{tpu_custom_call.1} parent=11 // pred_check
          %p149 = pneg %p102
        $region22: #{tpu_custom_call.1} parent=11 // pred_check_branch
          %151 = sbr.rel (%p149) target = $region24
        $region23: #{tpu_custom_call.1} parent=11 // pred_region
          _
        $region24: #{tpu_custom_call.1} parent=11 // pred_fallthru
          _
      $region12: #{tpu_custom_call.1} parent=5 // pred_fallthru
        _
      %p152 = scmp.lt.s32.totalorder %s13, 2
      // Predicated region
      $region25: #{tpu_custom_call.1} parent=5 // pred_check
        %p153 = pneg %p152
      $region26: #{tpu_custom_call.1} parent=5 // pred_check_branch
        %155 = sbr.rel (%p153) target = $region28
      $region27: #{tpu_custom_call.1} parent=5 // pred_region
        // Predicated region
        $region29: #{tpu_custom_call.1} parent=27 // pred_check
          %p156 = pneg %p33
        $region30: #{tpu_custom_call.1} parent=27 // pred_check_branch
          %158 = sbr.rel (%p156) target = $region32
        $region31: #{tpu_custom_call.1} parent=27 // pred_region
          %p159 = scmp.lt.s32.totalorder %s13, 1
          %s160 = scalar_select %p159, %s13, 1
          %s161 = smul.addr %s160, 20
          %s162 = smul.addr %s161, 8
          %s163 = scalar_lea.vmem %s0, %s162
        $region32: #{tpu_custom_call.1} parent=27 // pred_fallthru
          _
      $region28: #{tpu_custom_call.1} parent=5 // pred_fallthru
        _
      %p164 = scmp.le.s32.totalorder 1, %s13
      %p165 = scmp.lt.s32.totalorder %s13, 3
      %p166 = pnand %p164, %p165
      %p167 = pneg %p166
      // Predicated region
      $region33: #{tpu_custom_call.1} parent=5 // pred_check
        _
      $region34: #{tpu_custom_call.1} parent=5 // pred_check_branch
        %169 = sbr.rel (%p166) target = $region36
      $region35: #{tpu_custom_call.1} parent=5 // pred_region
        %s170 = ssub.s32 %s13, 1
        %p171 = scmp.lt.s32.totalorder %s18, 1
        %s172 = scalar_select %p171, %s18, 1
        %s173 = smul.addr %s172, 20
        %s174 = smul.addr %s173, 8
        %s175 = scalar_lea.vmem %s0, %s174
        %p176 = pneg %p39
        %p177 = pneg %p36
        %p178 = pneg %p60
        %p179 = pneg %p57
        %p180 = pneg %p81
        %p181 = pneg %p78
        %p182 = pneg %p102
        %p183 = pneg %p99
        %p184 = pneg %p128
        %p185 = pneg %p125
        %s186 = sand.u32 %s115, 1
        %s187 = scalar_lea.sflag [#allocation4], %s186
        %s188 = sand.u32 %s115, 1
        %s189 = smul.addr %s188, 64
        %s190 = scalar_lea.vmem [#allocation3], %s189
        %p191 = scmp.lt.s32.totalorder %s18, 1
        %s192 = scalar_select %p191, %s18, 1
        %s193 = smul.addr %s192, 20
        %s194 = smul.addr %s193, 8
        %s195 = scalar_lea.vmem %s0, %s194
        %v196 = vld [vmem:[%s195] sm:$0xff]
        %v197 = vld [vmem:[%s195 + $0x8] sm:$0x3]
        %v198 = vld [vmem:[%s195 + $0x10] sm:$0xff]
        %v199 = vld [vmem:[%s195 + $0x18] sm:$0x3]
        %v200 = vld [vmem:[%s195 + $0x20] sm:$0xff]
        %v201 = vld [vmem:[%s195 + $0x28] sm:$0x3]
        %v202 = vld [vmem:[%s195 + $0x30] sm:$0xff]
        %v203 = vld [vmem:[%s195 + $0x38] sm:$0x3]
        %v204 = vld [vmem:[%s195 + $0x40] sm:$0xff]
        %v205 = vld [vmem:[%s195 + $0x48] sm:$0x3]
        %v206 = vld [vmem:[%s195 + $0x50] sm:$0xff]
        %v207 = vld [vmem:[%s195 + $0x58] sm:$0x3]
        %v208 = vld [vmem:[%s195 + $0x60] sm:$0xff]
        %v209 = vld [vmem:[%s195 + $0x68] sm:$0x3]
        %v210 = vld [vmem:[%s195 + $0x70] sm:$0xff]
        %v211 = vld [vmem:[%s195 + $0x78] sm:$0x3]
        %v212 = vld [vmem:[%s195 + $0x80] sm:$0xff]
        %v213 = vld [vmem:[%s195 + $0x88] sm:$0x3]
        %v214 = vld [vmem:[%s195 + $0x90] sm:$0xff]
        %v215 = vld [vmem:[%s195 + $0x98] sm:$0x3]
        %v216 = vld [vmem:[%s3] sm:$0xf]
        %v217 = vld [vmem:[%s1] sm:$0xff]
        %v218 = vld [vmem:[%s1 + $0x8] sm:$0xff]
        %v219 = vld [vmem:[%s1 + $0x10] sm:$0xff]
        %v220 = vld [vmem:[%s1 + $0x18] sm:$0xff]
        %v221 = vld [vmem:[%s1 + $0x20] sm:$0xff]
        %vm238 = vcmask 1046528
        %v239 = vrot.slane %v196, 1
        %v240 = vrot.slane %v197, 1
        %v241 = vsel %vm238, %v239, %v240
        %v242 = vrot.slane %v198, 1
        %v243 = vrot.slane %v199, 1
        %v244 = vsel %vm238, %v242, %v243
        %v245 = vrot.slane %v200, 1
        %v246 = vrot.slane %v201, 1
        %v247 = vsel %vm238, %v245, %v246
        %v248 = vrot.slane %v202, 1
        %v249 = vrot.slane %v203, 1
        %v250 = vsel %vm238, %v248, %v249
        %v251 = vrot.slane %v204, 1
        %v252 = vrot.slane %v205, 1
        %v253 = vsel %vm238, %v251, %v252
        %v254 = vrot.slane %v206, 1
        %v255 = vrot.slane %v207, 1
        %v256 = vsel %vm238, %v254, %v255
        %v257 = vrot.slane %v208, 1
        %v258 = vrot.slane %v209, 1
        %v259 = vsel %vm238, %v257, %v258
        %v260 = vrot.slane %v210, 1
        %v261 = vrot.slane %v211, 1
        %v262 = vsel %vm238, %v260, %v261
        %s263 = scalar_lea.vmem %s1, 40
        %v264 = vld [vmem:[%s263] sm:$0xff]
        %v265 = vld [vmem:[%s263 + $0x8] sm:$0xff]
        %v266 = vld [vmem:[%s263 + $0x10] sm:$0xff]
        %v267 = vld [vmem:[%s263 + $0x18] sm:$0xff]
        %v268 = vld [vmem:[%s263 + $0x20] sm:$0xff]
        %vm269 = vcmask 326656
        %v270 = vsel %vm269, %v241, 0
        %v272 = vsel %vm269, %v244, 0
        %v274 = vsel %vm269, %v247, 0
        %v276 = vsel %vm269, %v250, 0
        %v278 = vsel %vm269, %v253, 0
        %v280 = vsel %vm269, %v256, 0
        %v282 = vsel %vm269, %v259, 0
        %v284 = vsel %vm269, %v262, 0
        %286 = vmatpush.msra.mxu0 0.0
        %287 = vmatpush.msra.mxu0 0.0
        %288 = vmatpush.msra.mxu0 0.0
        %289 = vmatpush.msra.mxu0 0.0
        %290 = vmatpush.msra.mxu0 0.0
        %291 = vmatpush.msra.mxu0 0.0
        %292 = vmatpush.msra.mxu0 0.0
        %293 = vmatpush.msra.mxu0 0.0
        %294 = vmatpush.msra.mxu0 0.0
        %295 = vmatpush.msra.mxu0 0.0
        %296 = vmatpush.msra.mxu0 0.0
        %v297 = vand.u32 %v268, 4294901760
        %298 = vmatpush.msra.mxu0 %v297
        %v299 = vand.u32 %v267, 4294901760
        %300 = vmatpush.msra.mxu0 %v299
        %v301 = vand.u32 %v266, 4294901760
        %302 = vmatpush.msra.mxu0 %v301
        %v303 = vand.u32 %v265, 4294901760
        %304 = vmatpush.msra.mxu0 %v303
        %v305 = vand.u32 %v264, 4294901760
        %306 = vmatpush.msra.mxu0 %v305
        %v307 = vand.u32 %v270, 4294901760
        %v308 = vsub.f32 %v270, %v307
        %v309 = vand.u32 %v308, 4294901760
        %v310 = vsub.f32 %v308, %v309
        %v311 = vand.u32 %v310, 4294901760
        %312 = vmatmul.f32.gmra.mxu0 %v311
        %v313 = vpop.f32.mrf.mxu0
        %v314 = vadd.f32 0.0, %v313
        %v315 = vand.u32 %v272, 4294901760
        %v316 = vsub.f32 %v272, %v315
        %v317 = vand.u32 %v316, 4294901760
        %v318 = vsub.f32 %v316, %v317
        %v319 = vand.u32 %v318, 4294901760
        %320 = vmatmul.f32.gmra.mxu0 %v319
        %v321 = vpop.f32.mrf.mxu0
        %v322 = vadd.f32 0.0, %v321
        %v323 = vand.u32 %v274, 4294901760
        %v324 = vsub.f32 %v274, %v323
        %v325 = vand.u32 %v324, 4294901760
        %v326 = vsub.f32 %v324, %v325
        %v327 = vand.u32 %v326, 4294901760
        %328 = vmatmul.f32.gmra.mxu0 %v327
        %v329 = vpop.f32.mrf.mxu0
        %v330 = vadd.f32 0.0, %v329
        %v331 = vand.u32 %v276, 4294901760
        %v332 = vsub.f32 %v276, %v331
        %v333 = vand.u32 %v332, 4294901760
        %v334 = vsub.f32 %v332, %v333
        %v335 = vand.u32 %v334, 4294901760
        %336 = vmatmul.f32.gmra.mxu0 %v335
        %v337 = vpop.f32.mrf.mxu0
        %v338 = vadd.f32 0.0, %v337
        %v339 = vand.u32 %v278, 4294901760
        %v340 = vsub.f32 %v278, %v339
        %v341 = vand.u32 %v340, 4294901760
        %v342 = vsub.f32 %v340, %v341
        %v343 = vand.u32 %v342, 4294901760
        %344 = vmatmul.f32.gmra.mxu0 %v343
        %v345 = vpop.f32.mrf.mxu0
        %v346 = vadd.f32 0.0, %v345
        %v347 = vand.u32 %v280, 4294901760
        %v348 = vsub.f32 %v280, %v347
        %v349 = vand.u32 %v348, 4294901760
        %v350 = vsub.f32 %v348, %v349
        %v351 = vand.u32 %v350, 4294901760
        %352 = vmatmul.f32.gmra.mxu0 %v351
        %v353 = vpop.f32.mrf.mxu0
        %v354 = vadd.f32 0.0, %v353
        %v355 = vand.u32 %v282, 4294901760
        %v356 = vsub.f32 %v282, %v355
        %v357 = vand.u32 %v356, 4294901760
        %v358 = vsub.f32 %v356, %v357
        %v359 = vand.u32 %v358, 4294901760
        %360 = vmatmul.f32.gmra.mxu0 %v359
        %v361 = vpop.f32.mrf.mxu0
        %v362 = vadd.f32 0.0, %v361
        %v363 = vand.u32 %v284, 4294901760
        %v364 = vsub.f32 %v284, %v363
        %v365 = vand.u32 %v364, 4294901760
        %v366 = vsub.f32 %v364, %v365
        %v367 = vand.u32 %v366, 4294901760
        %368 = vmatmul.f32.gmra.mxu0 %v367
        %v369 = vpop.f32.mrf.mxu0
        %v370 = vadd.f32 0.0, %v369
        %371 = vdwg.mxu0
        %372 = vmatpush.msra.mxu0 0.0
        %373 = vmatpush.msra.mxu0 0.0
        %374 = vmatpush.msra.mxu0 0.0
        %375 = vmatpush.msra.mxu0 0.0
        %376 = vmatpush.msra.mxu0 0.0
        %377 = vmatpush.msra.mxu0 0.0
        %378 = vmatpush.msra.mxu0 0.0
        %379 = vmatpush.msra.mxu0 0.0
        %380 = vmatpush.msra.mxu0 0.0
        %381 = vmatpush.msra.mxu0 0.0
        %382 = vmatpush.msra.mxu0 0.0
        %v383 = vand.u32 %v268, 4294901760
        %v384 = vsub.f32 %v268, %v383
        %v385 = vand.u32 %v384, 4294901760
        %v386 = vsub.f32 %v384, %v385
        %v387 = vand.u32 %v386, 4294901760
        %388 = vmatpush.msra.mxu0 %v387
        %v389 = vand.u32 %v267, 4294901760
        %v390 = vsub.f32 %v267, %v389
        %v391 = vand.u32 %v390, 4294901760
        %v392 = vsub.f32 %v390, %v391
        %v393 = vand.u32 %v392, 4294901760
        %394 = vmatpush.msra.mxu0 %v393
        %v395 = vand.u32 %v266, 4294901760
        %v396 = vsub.f32 %v266, %v395
        %v397 = vand.u32 %v396, 4294901760
        %v398 = vsub.f32 %v396, %v397
        %v399 = vand.u32 %v398, 4294901760
        %400 = vmatpush.msra.mxu0 %v399
        %v401 = vand.u32 %v265, 4294901760
        %v402 = vsub.f32 %v265, %v401
        %v403 = vand.u32 %v402, 4294901760
        %v404 = vsub.f32 %v402, %v403
        %v405 = vand.u32 %v404, 4294901760
        %406 = vmatpush.msra.mxu0 %v405
        %v407 = vand.u32 %v264, 4294901760
        %v408 = vsub.f32 %v264, %v407
        %v409 = vand.u32 %v408, 4294901760
        %v410 = vsub.f32 %v408, %v409
        %v411 = vand.u32 %v410, 4294901760
        %412 = vmatpush.msra.mxu0 %v411
        %v413 = vand.u32 %v270, 4294901760
        %414 = vmatmul.f32.gmra.mxu0 %v413
        %v415 = vpop.f32.mrf.mxu0
        %v416 = vadd.f32 %v314, %v415
        %v417 = vand.u32 %v272, 4294901760
        %418 = vmatmul.f32.gmra.mxu0 %v417
        %v419 = vpop.f32.mrf.mxu0
        %v420 = vadd.f32 %v322, %v419
        %v421 = vand.u32 %v274, 4294901760
        %422 = vmatmul.f32.gmra.mxu0 %v421
        %v423 = vpop.f32.mrf.mxu0
        %v424 = vadd.f32 %v330, %v423
        %v425 = vand.u32 %v276, 4294901760
        %426 = vmatmul.f32.gmra.mxu0 %v425
        %v427 = vpop.f32.mrf.mxu0
        %v428 = vadd.f32 %v338, %v427
        %v429 = vand.u32 %v278, 4294901760
        %430 = vmatmul.f32.gmra.mxu0 %v429
        %v431 = vpop.f32.mrf.mxu0
        %v432 = vadd.f32 %v346, %v431
        %v433 = vand.u32 %v280, 4294901760
        %434 = vmatmul.f32.gmra.mxu0 %v433
        %v435 = vpop.f32.mrf.mxu0
        %v436 = vadd.f32 %v354, %v435
        %v437 = vand.u32 %v282, 4294901760
        %438 = vmatmul.f32.gmra.mxu0 %v437
        %v439 = vpop.f32.mrf.mxu0
        %v440 = vadd.f32 %v362, %v439
        %v441 = vand.u32 %v284, 4294901760
        %442 = vmatmul.f32.gmra.mxu0 %v441
        %v443 = vpop.f32.mrf.mxu0
        %v444 = vadd.f32 %v370, %v443
        %445 = vdwg.mxu0
        %446 = vmatpush.msra.mxu0 0.0
        %447 = vmatpush.msra.mxu0 0.0
        %448 = vmatpush.msra.mxu0 0.0
        %449 = vmatpush.msra.mxu0 0.0
        %450 = vmatpush.msra.mxu0 0.0
        %451 = vmatpush.msra.mxu0 0.0
        %452 = vmatpush.msra.mxu0 0.0
        %453 = vmatpush.msra.mxu0 0.0
        %454 = vmatpush.msra.mxu0 0.0
        %455 = vmatpush.msra.mxu0 0.0
        %456 = vmatpush.msra.mxu0 0.0
        %v457 = vand.u32 %v268, 4294901760
        %v458 = vsub.f32 %v268, %v457
        %459 = vmatpush.msra.mxu0 %v458
        %v460 = vand.u32 %v267, 4294901760
        %v461 = vsub.f32 %v267, %v460
        %462 = vmatpush.msra.mxu0 %v461
        %v463 = vand.u32 %v266, 4294901760
        %v464 = vsub.f32 %v266, %v463
        %465 = vmatpush.msra.mxu0 %v464
        %v466 = vand.u32 %v265, 4294901760
        %v467 = vsub.f32 %v265, %v466
        %468 = vmatpush.msra.mxu0 %v467
        %v469 = vand.u32 %v264, 4294901760
        %v470 = vsub.f32 %v264, %v469
        %471 = vmatpush.msra.mxu0 %v470
        %v472 = vand.u32 %v270, 4294901760
        %v473 = vsub.f32 %v270, %v472
        %474 = vmatmul.f32.gmra.mxu0 %v473
        %v475 = vpop.f32.mrf.mxu0
        %v476 = vadd.f32 %v416, %v475
        %v477 = vand.u32 %v272, 4294901760
        %v478 = vsub.f32 %v272, %v477
        %479 = vmatmul.f32.gmra.mxu0 %v478
        %v480 = vpop.f32.mrf.mxu0
        %v481 = vadd.f32 %v420, %v480
        %v482 = vand.u32 %v274, 4294901760
        %v483 = vsub.f32 %v274, %v482
        %484 = vmatmul.f32.gmra.mxu0 %v483
        %v485 = vpop.f32.mrf.mxu0
        %v486 = vadd.f32 %v424, %v485
        %v487 = vand.u32 %v276, 4294901760
        %v488 = vsub.f32 %v276, %v487
        %489 = vmatmul.f32.gmra.mxu0 %v488
        %v490 = vpop.f32.mrf.mxu0
        %v491 = vadd.f32 %v428, %v490
        %v492 = vand.u32 %v278, 4294901760
        %v493 = vsub.f32 %v278, %v492
        %494 = vmatmul.f32.gmra.mxu0 %v493
        %v495 = vpop.f32.mrf.mxu0
        %v496 = vadd.f32 %v432, %v495
        %v497 = vand.u32 %v280, 4294901760
        %v498 = vsub.f32 %v280, %v497
        %499 = vmatmul.f32.gmra.mxu0 %v498
        %v500 = vpop.f32.mrf.mxu0
        %v501 = vadd.f32 %v436, %v500
        %v502 = vand.u32 %v282, 4294901760
        %v503 = vsub.f32 %v282, %v502
        %504 = vmatmul.f32.gmra.mxu0 %v503
        %v505 = vpop.f32.mrf.mxu0
        %v506 = vadd.f32 %v440, %v505
        %v507 = vand.u32 %v284, 4294901760
        %v508 = vsub.f32 %v284, %v507
        %509 = vmatmul.f32.gmra.mxu0 %v508
        %v510 = vpop.f32.mrf.mxu0
        %v511 = vadd.f32 %v444, %v510
        %512 = vdwg.mxu0
        %513 = vmatpush.msra.mxu0 0.0
        %514 = vmatpush.msra.mxu0 0.0
        %515 = vmatpush.msra.mxu0 0.0
        %516 = vmatpush.msra.mxu0 0.0
        %517 = vmatpush.msra.mxu0 0.0
        %518 = vmatpush.msra.mxu0 0.0
        %519 = vmatpush.msra.mxu0 0.0
        %520 = vmatpush.msra.mxu0 0.0
        %521 = vmatpush.msra.mxu0 0.0
        %522 = vmatpush.msra.mxu0 0.0
        %523 = vmatpush.msra.mxu0 0.0
        %v524 = vand.u32 %v268, 4294901760
        %525 = vmatpush.msra.mxu0 %v524
        %v526 = vand.u32 %v267, 4294901760
        %527 = vmatpush.msra.mxu0 %v526
        %v528 = vand.u32 %v266, 4294901760
        %529 = vmatpush.msra.mxu0 %v528
        %v530 = vand.u32 %v265, 4294901760
        %531 = vmatpush.msra.mxu0 %v530
        %v532 = vand.u32 %v264, 4294901760
        %533 = vmatpush.msra.mxu0 %v532
        %v534 = vand.u32 %v270, 4294901760
        %v535 = vsub.f32 %v270, %v534
        %v536 = vand.u32 %v535, 4294901760
        %537 = vmatmul.f32.gmra.mxu0 %v536
        %v538 = vpop.f32.mrf.mxu0
        %v539 = vadd.f32 %v476, %v538
        %v540 = vand.u32 %v272, 4294901760
        %v541 = vsub.f32 %v272, %v540
        %v542 = vand.u32 %v541, 4294901760
        %543 = vmatmul.f32.gmra.mxu0 %v542
        %v544 = vpop.f32.mrf.mxu0
        %v545 = vadd.f32 %v481, %v544
        %v546 = vand.u32 %v274, 4294901760
        %v547 = vsub.f32 %v274, %v546
        %v548 = vand.u32 %v547, 4294901760
        %549 = vmatmul.f32.gmra.mxu0 %v548
        %v550 = vpop.f32.mrf.mxu0
        %v551 = vadd.f32 %v486, %v550
        %v552 = vand.u32 %v276, 4294901760
        %v553 = vsub.f32 %v276, %v552
        %v554 = vand.u32 %v553, 4294901760
        %555 = vmatmul.f32.gmra.mxu0 %v554
        %v556 = vpop.f32.mrf.mxu0
        %v557 = vadd.f32 %v491, %v556
        %v558 = vand.u32 %v278, 4294901760
        %v559 = vsub.f32 %v278, %v558
        %v560 = vand.u32 %v559, 4294901760
        %561 = vmatmul.f32.gmra.mxu0 %v560
        %v562 = vpop.f32.mrf.mxu0
        %v563 = vadd.f32 %v496, %v562
        %v564 = vand.u32 %v280, 4294901760
        %v565 = vsub.f32 %v280, %v564
        %v566 = vand.u32 %v565, 4294901760
        %567 = vmatmul.f32.gmra.mxu0 %v566
        %v568 = vpop.f32.mrf.mxu0
        %v569 = vadd.f32 %v501, %v568
        %v570 = vand.u32 %v282, 4294901760
        %v571 = vsub.f32 %v282, %v570
        %v572 = vand.u32 %v571, 4294901760
        %573 = vmatmul.f32.gmra.mxu0 %v572
        %v574 = vpop.f32.mrf.mxu0
        %v575 = vadd.f32 %v506, %v574
        %v576 = vand.u32 %v284, 4294901760
        %v577 = vsub.f32 %v284, %v576
        %v578 = vand.u32 %v577, 4294901760
        %579 = vmatmul.f32.gmra.mxu0 %v578
        %v580 = vpop.f32.mrf.mxu0
        %v581 = vadd.f32 %v511, %v580
        %582 = vdwg.mxu0
        %583 = vmatpush.msra.mxu0 0.0
        %584 = vmatpush.msra.mxu0 0.0
        %585 = vmatpush.msra.mxu0 0.0
        %586 = vmatpush.msra.mxu0 0.0
        %587 = vmatpush.msra.mxu0 0.0
        %588 = vmatpush.msra.mxu0 0.0
        %589 = vmatpush.msra.mxu0 0.0
        %590 = vmatpush.msra.mxu0 0.0
        %591 = vmatpush.msra.mxu0 0.0
        %592 = vmatpush.msra.mxu0 0.0
        %593 = vmatpush.msra.mxu0 0.0
        %v594 = vand.u32 %v268, 4294901760
        %v595 = vsub.f32 %v268, %v594
        %v596 = vand.u32 %v595, 4294901760
        %597 = vmatpush.msra.mxu0 %v596
        %v598 = vand.u32 %v267, 4294901760
        %v599 = vsub.f32 %v267, %v598
        %v600 = vand.u32 %v599, 4294901760
        %601 = vmatpush.msra.mxu0 %v600
        %v602 = vand.u32 %v266, 4294901760
        %v603 = vsub.f32 %v266, %v602
        %v604 = vand.u32 %v603, 4294901760
        %605 = vmatpush.msra.mxu0 %v604
        %v606 = vand.u32 %v265, 4294901760
        %v607 = vsub.f32 %v265, %v606
        %v608 = vand.u32 %v607, 4294901760
        %609 = vmatpush.msra.mxu0 %v608
        %v610 = vand.u32 %v264, 4294901760
        %v611 = vsub.f32 %v264, %v610
        %v612 = vand.u32 %v611, 4294901760
        %613 = vmatpush.msra.mxu0 %v612
        %v614 = vand.u32 %v270, 4294901760
        %615 = vmatmul.f32.gmra.mxu0 %v614
        %v616 = vpop.f32.mrf.mxu0
        %v617 = vadd.f32 %v539, %v616
        %v618 = vand.u32 %v272, 4294901760
        %619 = vmatmul.f32.gmra.mxu0 %v618
        %v620 = vpop.f32.mrf.mxu0
        %v621 = vadd.f32 %v545, %v620
        %v622 = vand.u32 %v274, 4294901760
        %623 = vmatmul.f32.gmra.mxu0 %v622
        %v624 = vpop.f32.mrf.mxu0
        %v625 = vadd.f32 %v551, %v624
        %v626 = vand.u32 %v276, 4294901760
        %627 = vmatmul.f32.gmra.mxu0 %v626
        %v628 = vpop.f32.mrf.mxu0
        %v629 = vadd.f32 %v557, %v628
        %v630 = vand.u32 %v278, 4294901760
        %631 = vmatmul.f32.gmra.mxu0 %v630
        %v632 = vpop.f32.mrf.mxu0
        %v633 = vadd.f32 %v563, %v632
        %v634 = vand.u32 %v280, 4294901760
        %635 = vmatmul.f32.gmra.mxu0 %v634
        %v636 = vpop.f32.mrf.mxu0
        %v637 = vadd.f32 %v569, %v636
        %v638 = vand.u32 %v282, 4294901760
        %639 = vmatmul.f32.gmra.mxu0 %v638
        %v640 = vpop.f32.mrf.mxu0
        %v641 = vadd.f32 %v575, %v640
        %v642 = vand.u32 %v284, 4294901760
        %643 = vmatmul.f32.gmra.mxu0 %v642
        %v644 = vpop.f32.mrf.mxu0
        %v645 = vadd.f32 %v581, %v644
        %646 = vdwg.mxu0
        %647 = vmatpush.msra.mxu0 0.0
        %648 = vmatpush.msra.mxu0 0.0
        %649 = vmatpush.msra.mxu0 0.0
        %650 = vmatpush.msra.mxu0 0.0
        %651 = vmatpush.msra.mxu0 0.0
        %652 = vmatpush.msra.mxu0 0.0
        %653 = vmatpush.msra.mxu0 0.0
        %654 = vmatpush.msra.mxu0 0.0
        %655 = vmatpush.msra.mxu0 0.0
        %656 = vmatpush.msra.mxu0 0.0
        %657 = vmatpush.msra.mxu0 0.0
        %v658 = vand.u32 %v268, 4294901760
        %659 = vmatpush.msra.mxu0 %v658
        %v660 = vand.u32 %v267, 4294901760
        %661 = vmatpush.msra.mxu0 %v660
        %v662 = vand.u32 %v266, 4294901760
        %663 = vmatpush.msra.mxu0 %v662
        %v664 = vand.u32 %v265, 4294901760
        %665 = vmatpush.msra.mxu0 %v664
        %v666 = vand.u32 %v264, 4294901760
        %667 = vmatpush.msra.mxu0 %v666
        %v668 = vand.u32 %v270, 4294901760
        %669 = vmatmul.f32.gmra.mxu0 %v668
        %v670 = vpop.f32.mrf.mxu0
        %v671 = vadd.f32 %v617, %v670
        %v672 = vand.u32 %v272, 4294901760
        %673 = vmatmul.f32.gmra.mxu0 %v672
        %v674 = vpop.f32.mrf.mxu0
        %v675 = vadd.f32 %v621, %v674
        %v676 = vand.u32 %v274, 4294901760
        %677 = vmatmul.f32.gmra.mxu0 %v676
        %v678 = vpop.f32.mrf.mxu0
        %v679 = vadd.f32 %v625, %v678
        %v680 = vand.u32 %v276, 4294901760
        %681 = vmatmul.f32.gmra.mxu0 %v680
        %v682 = vpop.f32.mrf.mxu0
        %v683 = vadd.f32 %v629, %v682
        %v684 = vand.u32 %v278, 4294901760
        %685 = vmatmul.f32.gmra.mxu0 %v684
        %v686 = vpop.f32.mrf.mxu0
        %v687 = vadd.f32 %v633, %v686
        %v688 = vand.u32 %v280, 4294901760
        %689 = vmatmul.f32.gmra.mxu0 %v688
        %v690 = vpop.f32.mrf.mxu0
        %v691 = vadd.f32 %v637, %v690
        %v692 = vand.u32 %v282, 4294901760
        %693 = vmatmul.f32.gmra.mxu0 %v692
        %v694 = vpop.f32.mrf.mxu0
        %v695 = vadd.f32 %v641, %v694
        %v696 = vand.u32 %v284, 4294901760
        %697 = vmatmul.f32.gmra.mxu0 %v696
        %v698 = vpop.f32.mrf.mxu0
        %v699 = vadd.f32 %v645, %v698
        %700 = vdwg.mxu0
        %v701 = vsel %vm269, %v196, 0
        %v703 = vsel %vm269, %v198, 0
        %v705 = vsel %vm269, %v200, 0
        %v707 = vsel %vm269, %v202, 0
        %v709 = vsel %vm269, %v204, 0
        %v711 = vsel %vm269, %v206, 0
        %v713 = vsel %vm269, %v208, 0
        %v715 = vsel %vm269, %v210, 0
        %717 = vmatpush.msra.mxu0 0.0
        %718 = vmatpush.msra.mxu0 0.0
        %719 = vmatpush.msra.mxu0 0.0
        %720 = vmatpush.msra.mxu0 0.0
        %721 = vmatpush.msra.mxu0 0.0
        %722 = vmatpush.msra.mxu0 0.0
        %723 = vmatpush.msra.mxu0 0.0
        %724 = vmatpush.msra.mxu0 0.0
        %725 = vmatpush.msra.mxu0 0.0
        %726 = vmatpush.msra.mxu0 0.0
        %727 = vmatpush.msra.mxu0 0.0
        %v728 = vand.u32 %v221, 4294901760
        %729 = vmatpush.msra.mxu0 %v728
        %v730 = vand.u32 %v220, 4294901760
        %731 = vmatpush.msra.mxu0 %v730
        %v732 = vand.u32 %v219, 4294901760
        %733 = vmatpush.msra.mxu0 %v732
        %v734 = vand.u32 %v218, 4294901760
        %735 = vmatpush.msra.mxu0 %v734
        %v736 = vand.u32 %v217, 4294901760
        %737 = vmatpush.msra.mxu0 %v736
        %v738 = vand.u32 %v701, 4294901760
        %v739 = vsub.f32 %v701, %v738
        %v740 = vand.u32 %v739, 4294901760
        %v741 = vsub.f32 %v739, %v740
        %v742 = vand.u32 %v741, 4294901760
        %743 = vmatmul.f32.gmra.mxu0 %v742
        %v744 = vpop.f32.mrf.mxu0
        %v745 = vadd.f32 %v671, %v744
        %v746 = vand.u32 %v703, 4294901760
        %v747 = vsub.f32 %v703, %v746
        %v748 = vand.u32 %v747, 4294901760
        %v749 = vsub.f32 %v747, %v748
        %v750 = vand.u32 %v749, 4294901760
        %751 = vmatmul.f32.gmra.mxu0 %v750
        %v752 = vpop.f32.mrf.mxu0
        %v753 = vadd.f32 %v675, %v752
        %v754 = vand.u32 %v705, 4294901760
        %v755 = vsub.f32 %v705, %v754
        %v756 = vand.u32 %v755, 4294901760
        %v757 = vsub.f32 %v755, %v756
        %v758 = vand.u32 %v757, 4294901760
        %759 = vmatmul.f32.gmra.mxu0 %v758
        %v760 = vpop.f32.mrf.mxu0
        %v761 = vadd.f32 %v679, %v760
        %v762 = vand.u32 %v707, 4294901760
        %v763 = vsub.f32 %v707, %v762
        %v764 = vand.u32 %v763, 4294901760
        %v765 = vsub.f32 %v763, %v764
        %v766 = vand.u32 %v765, 4294901760
        %767 = vmatmul.f32.gmra.mxu0 %v766
        %v768 = vpop.f32.mrf.mxu0
        %v769 = vadd.f32 %v683, %v768
        %v770 = vand.u32 %v709, 4294901760
        %v771 = vsub.f32 %v709, %v770
        %v772 = vand.u32 %v771, 4294901760
        %v773 = vsub.f32 %v771, %v772
        %v774 = vand.u32 %v773, 4294901760
        %775 = vmatmul.f32.gmra.mxu0 %v774
        %v776 = vpop.f32.mrf.mxu0
        %v777 = vadd.f32 %v687, %v776
        %v778 = vand.u32 %v711, 4294901760
        %v779 = vsub.f32 %v711, %v778
        %v780 = vand.u32 %v779, 4294901760
        %v781 = vsub.f32 %v779, %v780
        %v782 = vand.u32 %v781, 4294901760
        %783 = vmatmul.f32.gmra.mxu0 %v782
        %v784 = vpop.f32.mrf.mxu0
        %v785 = vadd.f32 %v691, %v784
        %v786 = vand.u32 %v713, 4294901760
        %v787 = vsub.f32 %v713, %v786
        %v788 = vand.u32 %v787, 4294901760
        %v789 = vsub.f32 %v787, %v788
        %v790 = vand.u32 %v789, 4294901760
        %791 = vmatmul.f32.gmra.mxu0 %v790
        %v792 = vpop.f32.mrf.mxu0
        %v793 = vadd.f32 %v695, %v792
        %v794 = vand.u32 %v715, 4294901760
        %v795 = vsub.f32 %v715, %v794
        %v796 = vand.u32 %v795, 4294901760
        %v797 = vsub.f32 %v795, %v796
        %v798 = vand.u32 %v797, 4294901760
        %799 = vmatmul.f32.gmra.mxu0 %v798
        %v800 = vpop.f32.mrf.mxu0
        %v801 = vadd.f32 %v699, %v800
        %802 = vdwg.mxu0
        %803 = vmatpush.msra.mxu0 0.0
        %804 = vmatpush.msra.mxu0 0.0
        %805 = vmatpush.msra.mxu0 0.0
        %806 = vmatpush.msra.mxu0 0.0
        %807 = vmatpush.msra.mxu0 0.0
        %808 = vmatpush.msra.mxu0 0.0
        %809 = vmatpush.msra.mxu0 0.0
        %810 = vmatpush.msra.mxu0 0.0
        %811 = vmatpush.msra.mxu0 0.0
        %812 = vmatpush.msra.mxu0 0.0
        %813 = vmatpush.msra.mxu0 0.0
        %v814 = vand.u32 %v221, 4294901760
        %v815 = vsub.f32 %v221, %v814
        %v816 = vand.u32 %v815, 4294901760
        %v817 = vsub.f32 %v815, %v816
        %v818 = vand.u32 %v817, 4294901760
        %819 = vmatpush.msra.mxu0 %v818
        %v820 = vand.u32 %v220, 4294901760
        %v821 = vsub.f32 %v220, %v820
        %v822 = vand.u32 %v821, 4294901760
        %v823 = vsub.f32 %v821, %v822
        %v824 = vand.u32 %v823, 4294901760
        %825 = vmatpush.msra.mxu0 %v824
        %v826 = vand.u32 %v219, 4294901760
        %v827 = vsub.f32 %v219, %v826
        %v828 = vand.u32 %v827, 4294901760
        %v829 = vsub.f32 %v827, %v828
        %v830 = vand.u32 %v829, 4294901760
        %831 = vmatpush.msra.mxu0 %v830
        %v832 = vand.u32 %v218, 4294901760
        %v833 = vsub.f32 %v218, %v832
        %v834 = vand.u32 %v833, 4294901760
        %v835 = vsub.f32 %v833, %v834
        %v836 = vand.u32 %v835, 4294901760
        %837 = vmatpush.msra.mxu0 %v836
        %v838 = vand.u32 %v217, 4294901760
        %v839 = vsub.f32 %v217, %v838
        %v840 = vand.u32 %v839, 4294901760
        %v841 = vsub.f32 %v839, %v840
        %v842 = vand.u32 %v841, 4294901760
        %843 = vmatpush.msra.mxu0 %v842
        %v844 = vand.u32 %v701, 4294901760
        %845 = vmatmul.f32.gmra.mxu0 %v844
        %v846 = vpop.f32.mrf.mxu0
        %v847 = vadd.f32 %v745, %v846
        %v848 = vand.u32 %v703, 4294901760
        %849 = vmatmul.f32.gmra.mxu0 %v848
        %v850 = vpop.f32.mrf.mxu0
        %v851 = vadd.f32 %v753, %v850
        %v852 = vand.u32 %v705, 4294901760
        %853 = vmatmul.f32.gmra.mxu0 %v852
        %v854 = vpop.f32.mrf.mxu0
        %v855 = vadd.f32 %v761, %v854
        %v856 = vand.u32 %v707, 4294901760
        %857 = vmatmul.f32.gmra.mxu0 %v856
        %v858 = vpop.f32.mrf.mxu0
        %v859 = vadd.f32 %v769, %v858
        %v860 = vand.u32 %v709, 4294901760
        %861 = vmatmul.f32.gmra.mxu0 %v860
        %v862 = vpop.f32.mrf.mxu0
        %v863 = vadd.f32 %v777, %v862
        %v864 = vand.u32 %v711, 4294901760
        %865 = vmatmul.f32.gmra.mxu0 %v864
        %v866 = vpop.f32.mrf.mxu0
        %v867 = vadd.f32 %v785, %v866
        %v868 = vand.u32 %v713, 4294901760
        %869 = vmatmul.f32.gmra.mxu0 %v868
        %v870 = vpop.f32.mrf.mxu0
        %v871 = vadd.f32 %v793, %v870
        %v872 = vand.u32 %v715, 4294901760
        %873 = vmatmul.f32.gmra.mxu0 %v872
        %v874 = vpop.f32.mrf.mxu0
        %v875 = vadd.f32 %v801, %v874
        %876 = vdwg.mxu0
        %877 = vmatpush.msra.mxu0 0.0
        %878 = vmatpush.msra.mxu0 0.0
        %879 = vmatpush.msra.mxu0 0.0
        %880 = vmatpush.msra.mxu0 0.0
        %881 = vmatpush.msra.mxu0 0.0
        %882 = vmatpush.msra.mxu0 0.0
        %883 = vmatpush.msra.mxu0 0.0
        %884 = vmatpush.msra.mxu0 0.0
        %885 = vmatpush.msra.mxu0 0.0
        %886 = vmatpush.msra.mxu0 0.0
        %887 = vmatpush.msra.mxu0 0.0
        %v888 = vand.u32 %v221, 4294901760
        %v889 = vsub.f32 %v221, %v888
        %890 = vmatpush.msra.mxu0 %v889
        %v891 = vand.u32 %v220, 4294901760
        %v892 = vsub.f32 %v220, %v891
        %893 = vmatpush.msra.mxu0 %v892
        %v894 = vand.u32 %v219, 4294901760
        %v895 = vsub.f32 %v219, %v894
        %896 = vmatpush.msra.mxu0 %v895
        %v897 = vand.u32 %v218, 4294901760
        %v898 = vsub.f32 %v218, %v897
        %899 = vmatpush.msra.mxu0 %v898
        %v900 = vand.u32 %v217, 4294901760
        %v901 = vsub.f32 %v217, %v900
        %902 = vmatpush.msra.mxu0 %v901
        %v903 = vand.u32 %v701, 4294901760
        %v904 = vsub.f32 %v701, %v903
        %905 = vmatmul.f32.gmra.mxu0 %v904
        %v906 = vpop.f32.mrf.mxu0
        %v907 = vadd.f32 %v847, %v906
        %v908 = vand.u32 %v703, 4294901760
        %v909 = vsub.f32 %v703, %v908
        %910 = vmatmul.f32.gmra.mxu0 %v909
        %v911 = vpop.f32.mrf.mxu0
        %v912 = vadd.f32 %v851, %v911
        %v913 = vand.u32 %v705, 4294901760
        %v914 = vsub.f32 %v705, %v913
        %915 = vmatmul.f32.gmra.mxu0 %v914
        %v916 = vpop.f32.mrf.mxu0
        %v917 = vadd.f32 %v855, %v916
        %v918 = vand.u32 %v707, 4294901760
        %v919 = vsub.f32 %v707, %v918
        %920 = vmatmul.f32.gmra.mxu0 %v919
        %v921 = vpop.f32.mrf.mxu0
        %v922 = vadd.f32 %v859, %v921
        %v923 = vand.u32 %v709, 4294901760
        %v924 = vsub.f32 %v709, %v923
        %925 = vmatmul.f32.gmra.mxu0 %v924
        %v926 = vpop.f32.mrf.mxu0
        %v927 = vadd.f32 %v863, %v926
        %v928 = vand.u32 %v711, 4294901760
        %v929 = vsub.f32 %v711, %v928
        %930 = vmatmul.f32.gmra.mxu0 %v929
        %v931 = vpop.f32.mrf.mxu0
        %v932 = vadd.f32 %v867, %v931
        %v933 = vand.u32 %v713, 4294901760
        %v934 = vsub.f32 %v713, %v933
        %935 = vmatmul.f32.gmra.mxu0 %v934
        %v936 = vpop.f32.mrf.mxu0
        %v937 = vadd.f32 %v871, %v936
        %v938 = vand.u32 %v715, 4294901760
        %v939 = vsub.f32 %v715, %v938
        %940 = vmatmul.f32.gmra.mxu0 %v939
        %v941 = vpop.f32.mrf.mxu0
        %v942 = vadd.f32 %v875, %v941
        %943 = vdwg.mxu0
        %944 = vmatpush.msra.mxu0 0.0
        %945 = vmatpush.msra.mxu0 0.0
        %946 = vmatpush.msra.mxu0 0.0
        %947 = vmatpush.msra.mxu0 0.0
        %948 = vmatpush.msra.mxu0 0.0
        %949 = vmatpush.msra.mxu0 0.0
        %950 = vmatpush.msra.mxu0 0.0
        %951 = vmatpush.msra.mxu0 0.0
        %952 = vmatpush.msra.mxu0 0.0
        %953 = vmatpush.msra.mxu0 0.0
        %954 = vmatpush.msra.mxu0 0.0
        %v955 = vand.u32 %v221, 4294901760
        %956 = vmatpush.msra.mxu0 %v955
        %v957 = vand.u32 %v220, 4294901760
        %958 = vmatpush.msra.mxu0 %v957
        %v959 = vand.u32 %v219, 4294901760
        %960 = vmatpush.msra.mxu0 %v959
        %v961 = vand.u32 %v218, 4294901760
        %962 = vmatpush.msra.mxu0 %v961
        %v963 = vand.u32 %v217, 4294901760
        %964 = vmatpush.msra.mxu0 %v963
        %v965 = vand.u32 %v701, 4294901760
        %v966 = vsub.f32 %v701, %v965
        %v967 = vand.u32 %v966, 4294901760
        %968 = vmatmul.f32.gmra.mxu0 %v967
        %v969 = vpop.f32.mrf.mxu0
        %v970 = vadd.f32 %v907, %v969
        %v971 = vand.u32 %v703, 4294901760
        %v972 = vsub.f32 %v703, %v971
        %v973 = vand.u32 %v972, 4294901760
        %974 = vmatmul.f32.gmra.mxu0 %v973
        %v975 = vpop.f32.mrf.mxu0
        %v976 = vadd.f32 %v912, %v975
        %v977 = vand.u32 %v705, 4294901760
        %v978 = vsub.f32 %v705, %v977
        %v979 = vand.u32 %v978, 4294901760
        %980 = vmatmul.f32.gmra.mxu0 %v979
        %v981 = vpop.f32.mrf.mxu0
        %v982 = vadd.f32 %v917, %v981
        %v983 = vand.u32 %v707, 4294901760
        %v984 = vsub.f32 %v707, %v983
        %v985 = vand.u32 %v984, 4294901760
        %986 = vmatmul.f32.gmra.mxu0 %v985
        %v987 = vpop.f32.mrf.mxu0
        %v988 = vadd.f32 %v922, %v987
        %v989 = vand.u32 %v709, 4294901760
        %v990 = vsub.f32 %v709, %v989
        %v991 = vand.u32 %v990, 4294901760
        %992 = vmatmul.f32.gmra.mxu0 %v991
        %v993 = vpop.f32.mrf.mxu0
        %v994 = vadd.f32 %v927, %v993
        %v995 = vand.u32 %v711, 4294901760
        %v996 = vsub.f32 %v711, %v995
        %v997 = vand.u32 %v996, 4294901760
        %998 = vmatmul.f32.gmra.mxu0 %v997
        %v999 = vpop.f32.mrf.mxu0
        %v1000 = vadd.f32 %v932, %v999
        %v1001 = vand.u32 %v713, 4294901760
        %v1002 = vsub.f32 %v713, %v1001
        %v1003 = vand.u32 %v1002, 4294901760
        %1004 = vmatmul.f32.gmra.mxu0 %v1003
        %v1005 = vpop.f32.mrf.mxu0
        %v1006 = vadd.f32 %v937, %v1005
        %v1007 = vand.u32 %v715, 4294901760
        %v1008 = vsub.f32 %v715, %v1007
        %v1009 = vand.u32 %v1008, 4294901760
        %1010 = vmatmul.f32.gmra.mxu0 %v1009
        %v1011 = vpop.f32.mrf.mxu0
        %v1012 = vadd.f32 %v942, %v1011
        %1013 = vdwg.mxu0
        %1014 = vmatpush.msra.mxu0 0.0
        %1015 = vmatpush.msra.mxu0 0.0
        %1016 = vmatpush.msra.mxu0 0.0
        %1017 = vmatpush.msra.mxu0 0.0
        %1018 = vmatpush.msra.mxu0 0.0
        %1019 = vmatpush.msra.mxu0 0.0
        %1020 = vmatpush.msra.mxu0 0.0
        %1021 = vmatpush.msra.mxu0 0.0
        %1022 = vmatpush.msra.mxu0 0.0
        %1023 = vmatpush.msra.mxu0 0.0
        %1024 = vmatpush.msra.mxu0 0.0
        %v1025 = vand.u32 %v221, 4294901760
        %v1026 = vsub.f32 %v221, %v1025
        %v1027 = vand.u32 %v1026, 4294901760
        %1028 = vmatpush.msra.mxu0 %v1027
        %v1029 = vand.u32 %v220, 4294901760
        %v1030 = vsub.f32 %v220, %v1029
        %v1031 = vand.u32 %v1030, 4294901760
        %1032 = vmatpush.msra.mxu0 %v1031
        %v1033 = vand.u32 %v219, 4294901760
        %v1034 = vsub.f32 %v219, %v1033
        %v1035 = vand.u32 %v1034, 4294901760
        %1036 = vmatpush.msra.mxu0 %v1035
        %v1037 = vand.u32 %v218, 4294901760
        %v1038 = vsub.f32 %v218, %v1037
        %v1039 = vand.u32 %v1038, 4294901760
        %1040 = vmatpush.msra.mxu0 %v1039
        %v1041 = vand.u32 %v217, 4294901760
        %v1042 = vsub.f32 %v217, %v1041
        %v1043 = vand.u32 %v1042, 4294901760
        %1044 = vmatpush.msra.mxu0 %v1043
        %v1045 = vand.u32 %v701, 4294901760
        %1046 = vmatmul.f32.gmra.mxu0 %v1045
        %v1047 = vpop.f32.mrf.mxu0
        %v1048 = vadd.f32 %v970, %v1047
        %v1049 = vand.u32 %v703, 4294901760
        %1050 = vmatmul.f32.gmra.mxu0 %v1049
        %v1051 = vpop.f32.mrf.mxu0
        %v1052 = vadd.f32 %v976, %v1051
        %v1053 = vand.u32 %v705, 4294901760
        %1054 = vmatmul.f32.gmra.mxu0 %v1053
        %v1055 = vpop.f32.mrf.mxu0
        %v1056 = vadd.f32 %v982, %v1055
        %v1057 = vand.u32 %v707, 4294901760
        %1058 = vmatmul.f32.gmra.mxu0 %v1057
        %v1059 = vpop.f32.mrf.mxu0
        %v1060 = vadd.f32 %v988, %v1059
        %v1061 = vand.u32 %v709, 4294901760
        %1062 = vmatmul.f32.gmra.mxu0 %v1061
        %v1063 = vpop.f32.mrf.mxu0
        %v1064 = vadd.f32 %v994, %v1063
        %v1065 = vand.u32 %v711, 4294901760
        %1066 = vmatmul.f32.gmra.mxu0 %v1065
        %v1067 = vpop.f32.mrf.mxu0
        %v1068 = vadd.f32 %v1000, %v1067
        %v1069 = vand.u32 %v713, 4294901760
        %1070 = vmatmul.f32.gmra.mxu0 %v1069
        %v1071 = vpop.f32.mrf.mxu0
        %v1072 = vadd.f32 %v1006, %v1071
        %v1073 = vand.u32 %v715, 4294901760
        %1074 = vmatmul.f32.gmra.mxu0 %v1073
        %v1075 = vpop.f32.mrf.mxu0
        %v1076 = vadd.f32 %v1012, %v1075
        %1077 = vdwg.mxu0
        %1078 = vmatpush.msra.mxu0 0.0
        %1079 = vmatpush.msra.mxu0 0.0
        %1080 = vmatpush.msra.mxu0 0.0
        %1081 = vmatpush.msra.mxu0 0.0
        %1082 = vmatpush.msra.mxu0 0.0
        %1083 = vmatpush.msra.mxu0 0.0
        %1084 = vmatpush.msra.mxu0 0.0
        %1085 = vmatpush.msra.mxu0 0.0
        %1086 = vmatpush.msra.mxu0 0.0
        %1087 = vmatpush.msra.mxu0 0.0
        %1088 = vmatpush.msra.mxu0 0.0
        %v1089 = vand.u32 %v221, 4294901760
        %1090 = vmatpush.msra.mxu0 %v1089
        %v1091 = vand.u32 %v220, 4294901760
        %1092 = vmatpush.msra.mxu0 %v1091
        %v1093 = vand.u32 %v219, 4294901760
        %1094 = vmatpush.msra.mxu0 %v1093
        %v1095 = vand.u32 %v218, 4294901760
        %1096 = vmatpush.msra.mxu0 %v1095
        %v1097 = vand.u32 %v217, 4294901760
        %1098 = vmatpush.msra.mxu0 %v1097
        %v1099 = vand.u32 %v701, 4294901760
        %1100 = vmatmul.f32.gmra.mxu0 %v1099
        %v1101 = vpop.f32.mrf.mxu0
        %v1102 = vadd.f32 %v1048, %v1101
        %v1103 = vand.u32 %v703, 4294901760
        %1104 = vmatmul.f32.gmra.mxu0 %v1103
        %v1105 = vpop.f32.mrf.mxu0
        %v1106 = vadd.f32 %v1052, %v1105
        %v1107 = vand.u32 %v705, 4294901760
        %1108 = vmatmul.f32.gmra.mxu0 %v1107
        %v1109 = vpop.f32.mrf.mxu0
        %v1110 = vadd.f32 %v1056, %v1109
        %v1111 = vand.u32 %v707, 4294901760
        %1112 = vmatmul.f32.gmra.mxu0 %v1111
        %v1113 = vpop.f32.mrf.mxu0
        %v1114 = vadd.f32 %v1060, %v1113
        %v1115 = vand.u32 %v709, 4294901760
        %1116 = vmatmul.f32.gmra.mxu0 %v1115
        %v1117 = vpop.f32.mrf.mxu0
        %v1118 = vadd.f32 %v1064, %v1117
        %v1119 = vand.u32 %v711, 4294901760
        %1120 = vmatmul.f32.gmra.mxu0 %v1119
        %v1121 = vpop.f32.mrf.mxu0
        %v1122 = vadd.f32 %v1068, %v1121
        %v1123 = vand.u32 %v713, 4294901760
        %1124 = vmatmul.f32.gmra.mxu0 %v1123
        %v1125 = vpop.f32.mrf.mxu0
        %v1126 = vadd.f32 %v1072, %v1125
        %v1127 = vand.u32 %v715, 4294901760
        %1128 = vmatmul.f32.gmra.mxu0 %v1127
        %v1129 = vpop.f32.mrf.mxu0
        %v1130 = vadd.f32 %v1076, %v1129
        %1131 = vdwg.mxu0
        %vm1132 = vcmask 1045504
        %v1133 = vrot.slane %v196, 2
        %v1134 = vrot.slane %v197, 2
        %v1135 = vsel %vm1132, %v1133, %v1134
        %v1136 = vrot.slane %v198, 2
        %v1137 = vrot.slane %v199, 2
        %v1138 = vsel %vm1132, %v1136, %v1137
        %v1139 = vrot.slane %v200, 2
        %v1140 = vrot.slane %v201, 2
        %v1141 = vsel %vm1132, %v1139, %v1140
        %v1142 = vrot.slane %v202, 2
        %v1143 = vrot.slane %v203, 2
        %v1144 = vsel %vm1132, %v1142, %v1143
        %v1145 = vrot.slane %v204, 2
        %v1146 = vrot.slane %v205, 2
        %v1147 = vsel %vm1132, %v1145, %v1146
        %v1148 = vrot.slane %v206, 2
        %v1149 = vrot.slane %v207, 2
        %v1150 = vsel %vm1132, %v1148, %v1149
        %v1151 = vrot.slane %v208, 2
        %v1152 = vrot.slane %v209, 2
        %v1153 = vsel %vm1132, %v1151, %v1152
        %v1154 = vrot.slane %v210, 2
        %v1155 = vrot.slane %v211, 2
        %v1156 = vsel %vm1132, %v1154, %v1155
        %s1157 = scalar_lea.vmem %s1, 80
        %v1158 = vld [vmem:[%s1157] sm:$0xff]
        %v1159 = vld [vmem:[%s1157 + $0x8] sm:$0xff]
        %v1160 = vld [vmem:[%s1157 + $0x10] sm:$0xff]
        %v1161 = vld [vmem:[%s1157 + $0x18] sm:$0xff]
        %v1162 = vld [vmem:[%s1157 + $0x20] sm:$0xff]
        %v1163 = vsel %vm269, %v1135, 0
        %v1165 = vsel %vm269, %v1138, 0
        %v1167 = vsel %vm269, %v1141, 0
        %v1169 = vsel %vm269, %v1144, 0
        %v1171 = vsel %vm269, %v1147, 0
        %v1173 = vsel %vm269, %v1150, 0
        %v1175 = vsel %vm269, %v1153, 0
        %v1177 = vsel %vm269, %v1156, 0
        %1179 = vmatpush.msra.mxu0 0.0
        %1180 = vmatpush.msra.mxu0 0.0
        %1181 = vmatpush.msra.mxu0 0.0
        %1182 = vmatpush.msra.mxu0 0.0
        %1183 = vmatpush.msra.mxu0 0.0
        %1184 = vmatpush.msra.mxu0 0.0
        %1185 = vmatpush.msra.mxu0 0.0
        %1186 = vmatpush.msra.mxu0 0.0
        %1187 = vmatpush.msra.mxu0 0.0
        %1188 = vmatpush.msra.mxu0 0.0
        %1189 = vmatpush.msra.mxu0 0.0
        %v1190 = vand.u32 %v1162, 4294901760
        %1191 = vmatpush.msra.mxu0 %v1190
        %v1192 = vand.u32 %v1161, 4294901760
        %1193 = vmatpush.msra.mxu0 %v1192
        %v1194 = vand.u32 %v1160, 4294901760
        %1195 = vmatpush.msra.mxu0 %v1194
        %v1196 = vand.u32 %v1159, 4294901760
        %1197 = vmatpush.msra.mxu0 %v1196
        %v1198 = vand.u32 %v1158, 4294901760
        %1199 = vmatpush.msra.mxu0 %v1198
        %v1200 = vand.u32 %v1163, 4294901760
        %v1201 = vsub.f32 %v1163, %v1200
        %v1202 = vand.u32 %v1201, 4294901760
        %v1203 = vsub.f32 %v1201, %v1202
        %v1204 = vand.u32 %v1203, 4294901760
        %1205 = vmatmul.f32.gmra.mxu0 %v1204
        %v1206 = vpop.f32.mrf.mxu0
        %v1207 = vadd.f32 0.0, %v1206
        %v1208 = vand.u32 %v1165, 4294901760
        %v1209 = vsub.f32 %v1165, %v1208
        %v1210 = vand.u32 %v1209, 4294901760
        %v1211 = vsub.f32 %v1209, %v1210
        %v1212 = vand.u32 %v1211, 4294901760
        %1213 = vmatmul.f32.gmra.mxu0 %v1212
        %v1214 = vpop.f32.mrf.mxu0
        %v1215 = vadd.f32 0.0, %v1214
        %v1216 = vand.u32 %v1167, 4294901760
        %v1217 = vsub.f32 %v1167, %v1216
        %v1218 = vand.u32 %v1217, 4294901760
        %v1219 = vsub.f32 %v1217, %v1218
        %v1220 = vand.u32 %v1219, 4294901760
        %1221 = vmatmul.f32.gmra.mxu0 %v1220
        %v1222 = vpop.f32.mrf.mxu0
        %v1223 = vadd.f32 0.0, %v1222
        %v1224 = vand.u32 %v1169, 4294901760
        %v1225 = vsub.f32 %v1169, %v1224
        %v1226 = vand.u32 %v1225, 4294901760
        %v1227 = vsub.f32 %v1225, %v1226
        %v1228 = vand.u32 %v1227, 4294901760
        %1229 = vmatmul.f32.gmra.mxu0 %v1228
        %v1230 = vpop.f32.mrf.mxu0
        %v1231 = vadd.f32 0.0, %v1230
        %v1232 = vand.u32 %v1171, 4294901760
        %v1233 = vsub.f32 %v1171, %v1232
        %v1234 = vand.u32 %v1233, 4294901760
        %v1235 = vsub.f32 %v1233, %v1234
        %v1236 = vand.u32 %v1235, 4294901760
        %1237 = vmatmul.f32.gmra.mxu0 %v1236
        %v1238 = vpop.f32.mrf.mxu0
        %v1239 = vadd.f32 0.0, %v1238
        %v1240 = vand.u32 %v1173, 4294901760
        %v1241 = vsub.f32 %v1173, %v1240
        %v1242 = vand.u32 %v1241, 4294901760
        %v1243 = vsub.f32 %v1241, %v1242
        %v1244 = vand.u32 %v1243, 4294901760
        %1245 = vmatmul.f32.gmra.mxu0 %v1244
        %v1246 = vpop.f32.mrf.mxu0
        %v1247 = vadd.f32 0.0, %v1246
        %v1248 = vand.u32 %v1175, 4294901760
        %v1249 = vsub.f32 %v1175, %v1248
        %v1250 = vand.u32 %v1249, 4294901760
        %v1251 = vsub.f32 %v1249, %v1250
        %v1252 = vand.u32 %v1251, 4294901760
        %1253 = vmatmul.f32.gmra.mxu0 %v1252
        %v1254 = vpop.f32.mrf.mxu0
        %v1255 = vadd.f32 0.0, %v1254
        %v1256 = vand.u32 %v1177, 4294901760
        %v1257 = vsub.f32 %v1177, %v1256
        %v1258 = vand.u32 %v1257, 4294901760
        %v1259 = vsub.f32 %v1257, %v1258
        %v1260 = vand.u32 %v1259, 4294901760
        %1261 = vmatmul.f32.gmra.mxu0 %v1260
        %v1262 = vpop.f32.mrf.mxu0
        %v1263 = vadd.f32 0.0, %v1262
        %1264 = vdwg.mxu0
        %1265 = vmatpush.msra.mxu0 0.0
        %1266 = vmatpush.msra.mxu0 0.0
        %1267 = vmatpush.msra.mxu0 0.0
        %1268 = vmatpush.msra.mxu0 0.0
        %1269 = vmatpush.msra.mxu0 0.0
        %1270 = vmatpush.msra.mxu0 0.0
        %1271 = vmatpush.msra.mxu0 0.0
        %1272 = vmatpush.msra.mxu0 0.0
        %1273 = vmatpush.msra.mxu0 0.0
        %1274 = vmatpush.msra.mxu0 0.0
        %1275 = vmatpush.msra.mxu0 0.0
        %v1276 = vand.u32 %v1162, 4294901760
        %v1277 = vsub.f32 %v1162, %v1276
        %v1278 = vand.u32 %v1277, 4294901760
        %v1279 = vsub.f32 %v1277, %v1278
        %v1280 = vand.u32 %v1279, 4294901760
        %1281 = vmatpush.msra.mxu0 %v1280
        %v1282 = vand.u32 %v1161, 4294901760
        %v1283 = vsub.f32 %v1161, %v1282
        %v1284 = vand.u32 %v1283, 4294901760
        %v1285 = vsub.f32 %v1283, %v1284
        %v1286 = vand.u32 %v1285, 4294901760
        %1287 = vmatpush.msra.mxu0 %v1286
        %v1288 = vand.u32 %v1160, 4294901760
        %v1289 = vsub.f32 %v1160, %v1288
        %v1290 = vand.u32 %v1289, 4294901760
        %v1291 = vsub.f32 %v1289, %v1290
        %v1292 = vand.u32 %v1291, 4294901760
        %1293 = vmatpush.msra.mxu0 %v1292
        %v1294 = vand.u32 %v1159, 4294901760
        %v1295 = vsub.f32 %v1159, %v1294
        %v1296 = vand.u32 %v1295, 4294901760
        %v1297 = vsub.f32 %v1295, %v1296
        %v1298 = vand.u32 %v1297, 4294901760
        %1299 = vmatpush.msra.mxu0 %v1298
        %v1300 = vand.u32 %v1158, 4294901760
        %v1301 = vsub.f32 %v1158, %v1300
        %v1302 = vand.u32 %v1301, 4294901760
        %v1303 = vsub.f32 %v1301, %v1302
        %v1304 = vand.u32 %v1303, 4294901760
        %1305 = vmatpush.msra.mxu0 %v1304
        %v1306 = vand.u32 %v1163, 4294901760
        %1307 = vmatmul.f32.gmra.mxu0 %v1306
        %v1308 = vpop.f32.mrf.mxu0
        %v1309 = vadd.f32 %v1207, %v1308
        %v1310 = vand.u32 %v1165, 4294901760
        %1311 = vmatmul.f32.gmra.mxu0 %v1310
        %v1312 = vpop.f32.mrf.mxu0
        %v1313 = vadd.f32 %v1215, %v1312
        %v1314 = vand.u32 %v1167, 4294901760
        %1315 = vmatmul.f32.gmra.mxu0 %v1314
        %v1316 = vpop.f32.mrf.mxu0
        %v1317 = vadd.f32 %v1223, %v1316
        %v1318 = vand.u32 %v1169, 4294901760
        %1319 = vmatmul.f32.gmra.mxu0 %v1318
        %v1320 = vpop.f32.mrf.mxu0
        %v1321 = vadd.f32 %v1231, %v1320
        %v1322 = vand.u32 %v1171, 4294901760
        %1323 = vmatmul.f32.gmra.mxu0 %v1322
        %v1324 = vpop.f32.mrf.mxu0
        %v1325 = vadd.f32 %v1239, %v1324
        %v1326 = vand.u32 %v1173, 4294901760
        %1327 = vmatmul.f32.gmra.mxu0 %v1326
        %v1328 = vpop.f32.mrf.mxu0
        %v1329 = vadd.f32 %v1247, %v1328
        %v1330 = vand.u32 %v1175, 4294901760
        %1331 = vmatmul.f32.gmra.mxu0 %v1330
        %v1332 = vpop.f32.mrf.mxu0
        %v1333 = vadd.f32 %v1255, %v1332
        %v1334 = vand.u32 %v1177, 4294901760
        %1335 = vmatmul.f32.gmra.mxu0 %v1334
        %v1336 = vpop.f32.mrf.mxu0
        %v1337 = vadd.f32 %v1263, %v1336
        %1338 = vdwg.mxu0
        %1339 = vmatpush.msra.mxu0 0.0
        %1340 = vmatpush.msra.mxu0 0.0
        %1341 = vmatpush.msra.mxu0 0.0
        %1342 = vmatpush.msra.mxu0 0.0
        %1343 = vmatpush.msra.mxu0 0.0
        %1344 = vmatpush.msra.mxu0 0.0
        %1345 = vmatpush.msra.mxu0 0.0
        %1346 = vmatpush.msra.mxu0 0.0
        %1347 = vmatpush.msra.mxu0 0.0
        %1348 = vmatpush.msra.mxu0 0.0
        %1349 = vmatpush.msra.mxu0 0.0
        %v1350 = vand.u32 %v1162, 4294901760
        %v1351 = vsub.f32 %v1162, %v1350
        %1352 = vmatpush.msra.mxu0 %v1351
        %v1353 = vand.u32 %v1161, 4294901760
        %v1354 = vsub.f32 %v1161, %v1353
        %1355 = vmatpush.msra.mxu0 %v1354
        %v1356 = vand.u32 %v1160, 4294901760
        %v1357 = vsub.f32 %v1160, %v1356
        %1358 = vmatpush.msra.mxu0 %v1357
        %v1359 = vand.u32 %v1159, 4294901760
        %v1360 = vsub.f32 %v1159, %v1359
        %1361 = vmatpush.msra.mxu0 %v1360
        %v1362 = vand.u32 %v1158, 4294901760
        %v1363 = vsub.f32 %v1158, %v1362
        %1364 = vmatpush.msra.mxu0 %v1363
        %v1365 = vand.u32 %v1163, 4294901760
        %v1366 = vsub.f32 %v1163, %v1365
        %1367 = vmatmul.f32.gmra.mxu0 %v1366
        %v1368 = vpop.f32.mrf.mxu0
        %v1369 = vadd.f32 %v1309, %v1368
        %v1370 = vand.u32 %v1165, 4294901760
        %v1371 = vsub.f32 %v1165, %v1370
        %1372 = vmatmul.f32.gmra.mxu0 %v1371
        %v1373 = vpop.f32.mrf.mxu0
        %v1374 = vadd.f32 %v1313, %v1373
        %v1375 = vand.u32 %v1167, 4294901760
        %v1376 = vsub.f32 %v1167, %v1375
        %1377 = vmatmul.f32.gmra.mxu0 %v1376
        %v1378 = vpop.f32.mrf.mxu0
        %v1379 = vadd.f32 %v1317, %v1378
        %v1380 = vand.u32 %v1169, 4294901760
        %v1381 = vsub.f32 %v1169, %v1380
        %1382 = vmatmul.f32.gmra.mxu0 %v1381
        %v1383 = vpop.f32.mrf.mxu0
        %v1384 = vadd.f32 %v1321, %v1383
        %v1385 = vand.u32 %v1171, 4294901760
        %v1386 = vsub.f32 %v1171, %v1385
        %1387 = vmatmul.f32.gmra.mxu0 %v1386
        %v1388 = vpop.f32.mrf.mxu0
        %v1389 = vadd.f32 %v1325, %v1388
        %v1390 = vand.u32 %v1173, 4294901760
        %v1391 = vsub.f32 %v1173, %v1390
        %1392 = vmatmul.f32.gmra.mxu0 %v1391
        %v1393 = vpop.f32.mrf.mxu0
        %v1394 = vadd.f32 %v1329, %v1393
        %v1395 = vand.u32 %v1175, 4294901760
        %v1396 = vsub.f32 %v1175, %v1395
        %1397 = vmatmul.f32.gmra.mxu0 %v1396
        %v1398 = vpop.f32.mrf.mxu0
        %v1399 = vadd.f32 %v1333, %v1398
        %v1400 = vand.u32 %v1177, 4294901760
        %v1401 = vsub.f32 %v1177, %v1400
        %1402 = vmatmul.f32.gmra.mxu0 %v1401
        %v1403 = vpop.f32.mrf.mxu0
        %v1404 = vadd.f32 %v1337, %v1403
        %1405 = vdwg.mxu0
        %1406 = vmatpush.msra.mxu0 0.0
        %1407 = vmatpush.msra.mxu0 0.0
        %1408 = vmatpush.msra.mxu0 0.0
        %1409 = vmatpush.msra.mxu0 0.0
        %1410 = vmatpush.msra.mxu0 0.0
        %1411 = vmatpush.msra.mxu0 0.0
        %1412 = vmatpush.msra.mxu0 0.0
        %1413 = vmatpush.msra.mxu0 0.0
        %1414 = vmatpush.msra.mxu0 0.0
        %1415 = vmatpush.msra.mxu0 0.0
        %1416 = vmatpush.msra.mxu0 0.0
        %v1417 = vand.u32 %v1162, 4294901760
        %1418 = vmatpush.msra.mxu0 %v1417
        %v1419 = vand.u32 %v1161, 4294901760
        %1420 = vmatpush.msra.mxu0 %v1419
        %v1421 = vand.u32 %v1160, 4294901760
        %1422 = vmatpush.msra.mxu0 %v1421
        %v1423 = vand.u32 %v1159, 4294901760
        %1424 = vmatpush.msra.mxu0 %v1423
        %v1425 = vand.u32 %v1158, 4294901760
        %1426 = vmatpush.msra.mxu0 %v1425
        %v1427 = vand.u32 %v1163, 4294901760
        %v1428 = vsub.f32 %v1163, %v1427
        %v1429 = vand.u32 %v1428, 4294901760
        %1430 = vmatmul.f32.gmra.mxu0 %v1429
        %v1431 = vpop.f32.mrf.mxu0
        %v1432 = vadd.f32 %v1369, %v1431
        %v1433 = vand.u32 %v1165, 4294901760
        %v1434 = vsub.f32 %v1165, %v1433
        %v1435 = vand.u32 %v1434, 4294901760
        %1436 = vmatmul.f32.gmra.mxu0 %v1435
        %v1437 = vpop.f32.mrf.mxu0
        %v1438 = vadd.f32 %v1374, %v1437
        %v1439 = vand.u32 %v1167, 4294901760
        %v1440 = vsub.f32 %v1167, %v1439
        %v1441 = vand.u32 %v1440, 4294901760
        %1442 = vmatmul.f32.gmra.mxu0 %v1441
        %v1443 = vpop.f32.mrf.mxu0
        %v1444 = vadd.f32 %v1379, %v1443
        %v1445 = vand.u32 %v1169, 4294901760
        %v1446 = vsub.f32 %v1169, %v1445
        %v1447 = vand.u32 %v1446, 4294901760
        %1448 = vmatmul.f32.gmra.mxu0 %v1447
        %v1449 = vpop.f32.mrf.mxu0
        %v1450 = vadd.f32 %v1384, %v1449
        %v1451 = vand.u32 %v1171, 4294901760
        %v1452 = vsub.f32 %v1171, %v1451
        %v1453 = vand.u32 %v1452, 4294901760
        %1454 = vmatmul.f32.gmra.mxu0 %v1453
        %v1455 = vpop.f32.mrf.mxu0
        %v1456 = vadd.f32 %v1389, %v1455
        %v1457 = vand.u32 %v1173, 4294901760
        %v1458 = vsub.f32 %v1173, %v1457
        %v1459 = vand.u32 %v1458, 4294901760
        %1460 = vmatmul.f32.gmra.mxu0 %v1459
        %v1461 = vpop.f32.mrf.mxu0
        %v1462 = vadd.f32 %v1394, %v1461
        %v1463 = vand.u32 %v1175, 4294901760
        %v1464 = vsub.f32 %v1175, %v1463
        %v1465 = vand.u32 %v1464, 4294901760
        %1466 = vmatmul.f32.gmra.mxu0 %v1465
        %v1467 = vpop.f32.mrf.mxu0
        %v1468 = vadd.f32 %v1399, %v1467
        %v1469 = vand.u32 %v1177, 4294901760
        %v1470 = vsub.f32 %v1177, %v1469
        %v1471 = vand.u32 %v1470, 4294901760
        %1472 = vmatmul.f32.gmra.mxu0 %v1471
        %v1473 = vpop.f32.mrf.mxu0
        %v1474 = vadd.f32 %v1404, %v1473
        %1475 = vdwg.mxu0
        %1476 = vmatpush.msra.mxu0 0.0
        %1477 = vmatpush.msra.mxu0 0.0
        %1478 = vmatpush.msra.mxu0 0.0
        %1479 = vmatpush.msra.mxu0 0.0
        %1480 = vmatpush.msra.mxu0 0.0
        %1481 = vmatpush.msra.mxu0 0.0
        %1482 = vmatpush.msra.mxu0 0.0
        %1483 = vmatpush.msra.mxu0 0.0
        %1484 = vmatpush.msra.mxu0 0.0
        %1485 = vmatpush.msra.mxu0 0.0
        %1486 = vmatpush.msra.mxu0 0.0
        %v1487 = vand.u32 %v1162, 4294901760
        %v1488 = vsub.f32 %v1162, %v1487
        %v1489 = vand.u32 %v1488, 4294901760
        %1490 = vmatpush.msra.mxu0 %v1489
        %v1491 = vand.u32 %v1161, 4294901760
        %v1492 = vsub.f32 %v1161, %v1491
        %v1493 = vand.u32 %v1492, 4294901760
        %1494 = vmatpush.msra.mxu0 %v1493
        %v1495 = vand.u32 %v1160, 4294901760
        %v1496 = vsub.f32 %v1160, %v1495
        %v1497 = vand.u32 %v1496, 4294901760
        %1498 = vmatpush.msra.mxu0 %v1497
        %v1499 = vand.u32 %v1159, 4294901760
        %v1500 = vsub.f32 %v1159, %v1499
        %v1501 = vand.u32 %v1500, 4294901760
        %1502 = vmatpush.msra.mxu0 %v1501
        %v1503 = vand.u32 %v1158, 4294901760
        %v1504 = vsub.f32 %v1158, %v1503
        %v1505 = vand.u32 %v1504, 4294901760
        %1506 = vmatpush.msra.mxu0 %v1505
        %v1507 = vand.u32 %v1163, 4294901760
        %1508 = vmatmul.f32.gmra.mxu0 %v1507
        %v1509 = vpop.f32.mrf.mxu0
        %v1510 = vadd.f32 %v1432, %v1509
        %v1511 = vand.u32 %v1165, 4294901760
        %1512 = vmatmul.f32.gmra.mxu0 %v1511
        %v1513 = vpop.f32.mrf.mxu0
        %v1514 = vadd.f32 %v1438, %v1513
        %v1515 = vand.u32 %v1167, 4294901760
        %1516 = vmatmul.f32.gmra.mxu0 %v1515
        %v1517 = vpop.f32.mrf.mxu0
        %v1518 = vadd.f32 %v1444, %v1517
        %v1519 = vand.u32 %v1169, 4294901760
        %1520 = vmatmul.f32.gmra.mxu0 %v1519
        %v1521 = vpop.f32.mrf.mxu0
        %v1522 = vadd.f32 %v1450, %v1521
        %v1523 = vand.u32 %v1171, 4294901760
        %1524 = vmatmul.f32.gmra.mxu0 %v1523
        %v1525 = vpop.f32.mrf.mxu0
        %v1526 = vadd.f32 %v1456, %v1525
        %v1527 = vand.u32 %v1173, 4294901760
        %1528 = vmatmul.f32.gmra.mxu0 %v1527
        %v1529 = vpop.f32.mrf.mxu0
        %v1530 = vadd.f32 %v1462, %v1529
        %v1531 = vand.u32 %v1175, 4294901760
        %1532 = vmatmul.f32.gmra.mxu0 %v1531
        %v1533 = vpop.f32.mrf.mxu0
        %v1534 = vadd.f32 %v1468, %v1533
        %v1535 = vand.u32 %v1177, 4294901760
        %1536 = vmatmul.f32.gmra.mxu0 %v1535
        %v1537 = vpop.f32.mrf.mxu0
        %v1538 = vadd.f32 %v1474, %v1537
        %1539 = vdwg.mxu0
        %1540 = vmatpush.msra.mxu0 0.0
        %1541 = vmatpush.msra.mxu0 0.0
        %1542 = vmatpush.msra.mxu0 0.0
        %1543 = vmatpush.msra.mxu0 0.0
        %1544 = vmatpush.msra.mxu0 0.0
        %1545 = vmatpush.msra.mxu0 0.0
        %1546 = vmatpush.msra.mxu0 0.0
        %1547 = vmatpush.msra.mxu0 0.0
        %1548 = vmatpush.msra.mxu0 0.0
        %1549 = vmatpush.msra.mxu0 0.0
        %1550 = vmatpush.msra.mxu0 0.0
        %v1551 = vand.u32 %v1162, 4294901760
        %1552 = vmatpush.msra.mxu0 %v1551
        %v1553 = vand.u32 %v1161, 4294901760
        %1554 = vmatpush.msra.mxu0 %v1553
        %v1555 = vand.u32 %v1160, 4294901760
        %1556 = vmatpush.msra.mxu0 %v1555
        %v1557 = vand.u32 %v1159, 4294901760
        %1558 = vmatpush.msra.mxu0 %v1557
        %v1559 = vand.u32 %v1158, 4294901760
        %1560 = vmatpush.msra.mxu0 %v1559
        %v1561 = vand.u32 %v1163, 4294901760
        %1562 = vmatmul.f32.gmra.mxu0 %v1561
        %v1563 = vpop.f32.mrf.mxu0
        %v1564 = vadd.f32 %v1510, %v1563
        %v1565 = vand.u32 %v1165, 4294901760
        %1566 = vmatmul.f32.gmra.mxu0 %v1565
        %v1567 = vpop.f32.mrf.mxu0
        %v1568 = vadd.f32 %v1514, %v1567
        %v1569 = vand.u32 %v1167, 4294901760
        %1570 = vmatmul.f32.gmra.mxu0 %v1569
        %v1571 = vpop.f32.mrf.mxu0
        %v1572 = vadd.f32 %v1518, %v1571
        %v1573 = vand.u32 %v1169, 4294901760
        %1574 = vmatmul.f32.gmra.mxu0 %v1573
        %v1575 = vpop.f32.mrf.mxu0
        %v1576 = vadd.f32 %v1522, %v1575
        %v1577 = vand.u32 %v1171, 4294901760
        %1578 = vmatmul.f32.gmra.mxu0 %v1577
        %v1579 = vpop.f32.mrf.mxu0
        %v1580 = vadd.f32 %v1526, %v1579
        %v1581 = vand.u32 %v1173, 4294901760
        %1582 = vmatmul.f32.gmra.mxu0 %v1581
        %v1583 = vpop.f32.mrf.mxu0
        %v1584 = vadd.f32 %v1530, %v1583
        %v1585 = vand.u32 %v1175, 4294901760
        %1586 = vmatmul.f32.gmra.mxu0 %v1585
        %v1587 = vpop.f32.mrf.mxu0
        %v1588 = vadd.f32 %v1534, %v1587
        %v1589 = vand.u32 %v1177, 4294901760
        %1590 = vmatmul.f32.gmra.mxu0 %v1589
        %v1591 = vpop.f32.mrf.mxu0
        %v1592 = vadd.f32 %v1538, %v1591
        %1593 = vdwg.mxu0
        %v1594 = vadd.f32 %v1102, %v1564
        %v1595 = vadd.f32 %v1106, %v1568
        %v1596 = vadd.f32 %v1110, %v1572
        %v1597 = vadd.f32 %v1114, %v1576
        %v1598 = vadd.f32 %v1118, %v1580
        %v1599 = vadd.f32 %v1122, %v1584
        %v1600 = vadd.f32 %v1126, %v1588
        %v1601 = vadd.f32 %v1130, %v1592
        %s1602 = scalar_lea.vmem %s1, 120
        %v1603 = vld [vmem:[%s1602] sm:$0xff]
        %v1604 = vld [vmem:[%s1602 + $0x8] sm:$0xff]
        %v1605 = vld [vmem:[%s1602 + $0x10] sm:$0xff]
        %v1606 = vld [vmem:[%s1602 + $0x18] sm:$0xff]
        %v1607 = vld [vmem:[%s1602 + $0x20] sm:$0xff]
        %v1609 = vsel %vm269, %v212, 0
        %1611 = vmatpush.msra.mxu0 0.0
        %1612 = vmatpush.msra.mxu0 0.0
        %1613 = vmatpush.msra.mxu0 0.0
        %1614 = vmatpush.msra.mxu0 0.0
        %1615 = vmatpush.msra.mxu0 0.0
        %1616 = vmatpush.msra.mxu0 0.0
        %1617 = vmatpush.msra.mxu0 0.0
        %1618 = vmatpush.msra.mxu0 0.0
        %1619 = vmatpush.msra.mxu0 0.0
        %1620 = vmatpush.msra.mxu0 0.0
        %1621 = vmatpush.msra.mxu0 0.0
        %v1622 = vand.u32 %v1607, 4294901760
        %1623 = vmatpush.msra.mxu0 %v1622
        %v1624 = vand.u32 %v1606, 4294901760
        %1625 = vmatpush.msra.mxu0 %v1624
        %v1626 = vand.u32 %v1605, 4294901760
        %1627 = vmatpush.msra.mxu0 %v1626
        %v1628 = vand.u32 %v1604, 4294901760
        %1629 = vmatpush.msra.mxu0 %v1628
        %v1630 = vand.u32 %v1603, 4294901760
        %1631 = vmatpush.msra.mxu0 %v1630
        %v1632 = vand.u32 %v703, 4294901760
        %v1633 = vsub.f32 %v703, %v1632
        %v1634 = vand.u32 %v1633, 4294901760
        %v1635 = vsub.f32 %v1633, %v1634
        %v1636 = vand.u32 %v1635, 4294901760
        %1637 = vmatmul.f32.gmra.mxu0 %v1636
        %v1638 = vpop.f32.mrf.mxu0
        %v1639 = vadd.f32 0.0, %v1638
        %v1640 = vand.u32 %v705, 4294901760
        %v1641 = vsub.f32 %v705, %v1640
        %v1642 = vand.u32 %v1641, 4294901760
        %v1643 = vsub.f32 %v1641, %v1642
        %v1644 = vand.u32 %v1643, 4294901760
        %1645 = vmatmul.f32.gmra.mxu0 %v1644
        %v1646 = vpop.f32.mrf.mxu0
        %v1647 = vadd.f32 0.0, %v1646
        %v1648 = vand.u32 %v707, 4294901760
        %v1649 = vsub.f32 %v707, %v1648
        %v1650 = vand.u32 %v1649, 4294901760
        %v1651 = vsub.f32 %v1649, %v1650
        %v1652 = vand.u32 %v1651, 4294901760
        %1653 = vmatmul.f32.gmra.mxu0 %v1652
        %v1654 = vpop.f32.mrf.mxu0
        %v1655 = vadd.f32 0.0, %v1654
        %v1656 = vand.u32 %v709, 4294901760
        %v1657 = vsub.f32 %v709, %v1656
        %v1658 = vand.u32 %v1657, 4294901760
        %v1659 = vsub.f32 %v1657, %v1658
        %v1660 = vand.u32 %v1659, 4294901760
        %1661 = vmatmul.f32.gmra.mxu0 %v1660
        %v1662 = vpop.f32.mrf.mxu0
        %v1663 = vadd.f32 0.0, %v1662
        %v1664 = vand.u32 %v711, 4294901760
        %v1665 = vsub.f32 %v711, %v1664
        %v1666 = vand.u32 %v1665, 4294901760
        %v1667 = vsub.f32 %v1665, %v1666
        %v1668 = vand.u32 %v1667, 4294901760
        %1669 = vmatmul.f32.gmra.mxu0 %v1668
        %v1670 = vpop.f32.mrf.mxu0
        %v1671 = vadd.f32 0.0, %v1670
        %v1672 = vand.u32 %v713, 4294901760
        %v1673 = vsub.f32 %v713, %v1672
        %v1674 = vand.u32 %v1673, 4294901760
        %v1675 = vsub.f32 %v1673, %v1674
        %v1676 = vand.u32 %v1675, 4294901760
        %1677 = vmatmul.f32.gmra.mxu0 %v1676
        %v1678 = vpop.f32.mrf.mxu0
        %v1679 = vadd.f32 0.0, %v1678
        %v1680 = vand.u32 %v715, 4294901760
        %v1681 = vsub.f32 %v715, %v1680
        %v1682 = vand.u32 %v1681, 4294901760
        %v1683 = vsub.f32 %v1681, %v1682
        %v1684 = vand.u32 %v1683, 4294901760
        %1685 = vmatmul.f32.gmra.mxu0 %v1684
        %v1686 = vpop.f32.mrf.mxu0
        %v1687 = vadd.f32 0.0, %v1686
        %v1688 = vand.u32 %v1609, 4294901760
        %v1689 = vsub.f32 %v1609, %v1688
        %v1690 = vand.u32 %v1689, 4294901760
        %v1691 = vsub.f32 %v1689, %v1690
        %v1692 = vand.u32 %v1691, 4294901760
        %1693 = vmatmul.f32.gmra.mxu0 %v1692
        %v1694 = vpop.f32.mrf.mxu0
        %v1695 = vadd.f32 0.0, %v1694
        %1696 = vdwg.mxu0
        %1697 = vmatpush.msra.mxu0 0.0
        %1698 = vmatpush.msra.mxu0 0.0
        %1699 = vmatpush.msra.mxu0 0.0
        %1700 = vmatpush.msra.mxu0 0.0
        %1701 = vmatpush.msra.mxu0 0.0
        %1702 = vmatpush.msra.mxu0 0.0
        %1703 = vmatpush.msra.mxu0 0.0
        %1704 = vmatpush.msra.mxu0 0.0
        %1705 = vmatpush.msra.mxu0 0.0
        %1706 = vmatpush.msra.mxu0 0.0
        %1707 = vmatpush.msra.mxu0 0.0
        %v1708 = vand.u32 %v1607, 4294901760
        %v1709 = vsub.f32 %v1607, %v1708
        %v1710 = vand.u32 %v1709, 4294901760
        %v1711 = vsub.f32 %v1709, %v1710
        %v1712 = vand.u32 %v1711, 4294901760
        %1713 = vmatpush.msra.mxu0 %v1712
        %v1714 = vand.u32 %v1606, 4294901760
        %v1715 = vsub.f32 %v1606, %v1714
        %v1716 = vand.u32 %v1715, 4294901760
        %v1717 = vsub.f32 %v1715, %v1716
        %v1718 = vand.u32 %v1717, 4294901760
        %1719 = vmatpush.msra.mxu0 %v1718
        %v1720 = vand.u32 %v1605, 4294901760
        %v1721 = vsub.f32 %v1605, %v1720
        %v1722 = vand.u32 %v1721, 4294901760
        %v1723 = vsub.f32 %v1721, %v1722
        %v1724 = vand.u32 %v1723, 4294901760
        %1725 = vmatpush.msra.mxu0 %v1724
        %v1726 = vand.u32 %v1604, 4294901760
        %v1727 = vsub.f32 %v1604, %v1726
        %v1728 = vand.u32 %v1727, 4294901760
        %v1729 = vsub.f32 %v1727, %v1728
        %v1730 = vand.u32 %v1729, 4294901760
        %1731 = vmatpush.msra.mxu0 %v1730
        %v1732 = vand.u32 %v1603, 4294901760
        %v1733 = vsub.f32 %v1603, %v1732
        %v1734 = vand.u32 %v1733, 4294901760
        %v1735 = vsub.f32 %v1733, %v1734
        %v1736 = vand.u32 %v1735, 4294901760
        %1737 = vmatpush.msra.mxu0 %v1736
        %v1738 = vand.u32 %v703, 4294901760
        %1739 = vmatmul.f32.gmra.mxu0 %v1738
        %v1740 = vpop.f32.mrf.mxu0
        %v1741 = vadd.f32 %v1639, %v1740
        %v1742 = vand.u32 %v705, 4294901760
        %1743 = vmatmul.f32.gmra.mxu0 %v1742
        %v1744 = vpop.f32.mrf.mxu0
        %v1745 = vadd.f32 %v1647, %v1744
        %v1746 = vand.u32 %v707, 4294901760
        %1747 = vmatmul.f32.gmra.mxu0 %v1746
        %v1748 = vpop.f32.mrf.mxu0
        %v1749 = vadd.f32 %v1655, %v1748
        %v1750 = vand.u32 %v709, 4294901760
        %1751 = vmatmul.f32.gmra.mxu0 %v1750
        %v1752 = vpop.f32.mrf.mxu0
        %v1753 = vadd.f32 %v1663, %v1752
        %v1754 = vand.u32 %v711, 4294901760
        %1755 = vmatmul.f32.gmra.mxu0 %v1754
        %v1756 = vpop.f32.mrf.mxu0
        %v1757 = vadd.f32 %v1671, %v1756
        %v1758 = vand.u32 %v713, 4294901760
        %1759 = vmatmul.f32.gmra.mxu0 %v1758
        %v1760 = vpop.f32.mrf.mxu0
        %v1761 = vadd.f32 %v1679, %v1760
        %v1762 = vand.u32 %v715, 4294901760
        %1763 = vmatmul.f32.gmra.mxu0 %v1762
        %v1764 = vpop.f32.mrf.mxu0
        %v1765 = vadd.f32 %v1687, %v1764
        %v1766 = vand.u32 %v1609, 4294901760
        %1767 = vmatmul.f32.gmra.mxu0 %v1766
        %v1768 = vpop.f32.mrf.mxu0
        %v1769 = vadd.f32 %v1695, %v1768
        %1770 = vdwg.mxu0
        %1771 = vmatpush.msra.mxu0 0.0
        %1772 = vmatpush.msra.mxu0 0.0
        %1773 = vmatpush.msra.mxu0 0.0
        %1774 = vmatpush.msra.mxu0 0.0
        %1775 = vmatpush.msra.mxu0 0.0
        %1776 = vmatpush.msra.mxu0 0.0
        %1777 = vmatpush.msra.mxu0 0.0
        %1778 = vmatpush.msra.mxu0 0.0
        %1779 = vmatpush.msra.mxu0 0.0
        %1780 = vmatpush.msra.mxu0 0.0
        %1781 = vmatpush.msra.mxu0 0.0
        %v1782 = vand.u32 %v1607, 4294901760
        %v1783 = vsub.f32 %v1607, %v1782
        %1784 = vmatpush.msra.mxu0 %v1783
        %v1785 = vand.u32 %v1606, 4294901760
        %v1786 = vsub.f32 %v1606, %v1785
        %1787 = vmatpush.msra.mxu0 %v1786
        %v1788 = vand.u32 %v1605, 4294901760
        %v1789 = vsub.f32 %v1605, %v1788
        %1790 = vmatpush.msra.mxu0 %v1789
        %v1791 = vand.u32 %v1604, 4294901760
        %v1792 = vsub.f32 %v1604, %v1791
        %1793 = vmatpush.msra.mxu0 %v1792
        %v1794 = vand.u32 %v1603, 4294901760
        %v1795 = vsub.f32 %v1603, %v1794
        %1796 = vmatpush.msra.mxu0 %v1795
        %v1797 = vand.u32 %v703, 4294901760
        %v1798 = vsub.f32 %v703, %v1797
        %1799 = vmatmul.f32.gmra.mxu0 %v1798
        %v1800 = vpop.f32.mrf.mxu0
        %v1801 = vadd.f32 %v1741, %v1800
        %v1802 = vand.u32 %v705, 4294901760
        %v1803 = vsub.f32 %v705, %v1802
        %1804 = vmatmul.f32.gmra.mxu0 %v1803
        %v1805 = vpop.f32.mrf.mxu0
        %v1806 = vadd.f32 %v1745, %v1805
        %v1807 = vand.u32 %v707, 4294901760
        %v1808 = vsub.f32 %v707, %v1807
        %1809 = vmatmul.f32.gmra.mxu0 %v1808
        %v1810 = vpop.f32.mrf.mxu0
        %v1811 = vadd.f32 %v1749, %v1810
        %v1812 = vand.u32 %v709, 4294901760
        %v1813 = vsub.f32 %v709, %v1812
        %1814 = vmatmul.f32.gmra.mxu0 %v1813
        %v1815 = vpop.f32.mrf.mxu0
        %v1816 = vadd.f32 %v1753, %v1815
        %v1817 = vand.u32 %v711, 4294901760
        %v1818 = vsub.f32 %v711, %v1817
        %1819 = vmatmul.f32.gmra.mxu0 %v1818
        %v1820 = vpop.f32.mrf.mxu0
        %v1821 = vadd.f32 %v1757, %v1820
        %v1822 = vand.u32 %v713, 4294901760
        %v1823 = vsub.f32 %v713, %v1822
        %1824 = vmatmul.f32.gmra.mxu0 %v1823
        %v1825 = vpop.f32.mrf.mxu0
        %v1826 = vadd.f32 %v1761, %v1825
        %v1827 = vand.u32 %v715, 4294901760
        %v1828 = vsub.f32 %v715, %v1827
        %1829 = vmatmul.f32.gmra.mxu0 %v1828
        %v1830 = vpop.f32.mrf.mxu0
        %v1831 = vadd.f32 %v1765, %v1830
        %v1832 = vand.u32 %v1609, 4294901760
        %v1833 = vsub.f32 %v1609, %v1832
        %1834 = vmatmul.f32.gmra.mxu0 %v1833
        %v1835 = vpop.f32.mrf.mxu0
        %v1836 = vadd.f32 %v1769, %v1835
        %1837 = vdwg.mxu0
        %1838 = vmatpush.msra.mxu0 0.0
        %1839 = vmatpush.msra.mxu0 0.0
        %1840 = vmatpush.msra.mxu0 0.0
        %1841 = vmatpush.msra.mxu0 0.0
        %1842 = vmatpush.msra.mxu0 0.0
        %1843 = vmatpush.msra.mxu0 0.0
        %1844 = vmatpush.msra.mxu0 0.0
        %1845 = vmatpush.msra.mxu0 0.0
        %1846 = vmatpush.msra.mxu0 0.0
        %1847 = vmatpush.msra.mxu0 0.0
        %1848 = vmatpush.msra.mxu0 0.0
        %v1849 = vand.u32 %v1607, 4294901760
        %1850 = vmatpush.msra.mxu0 %v1849
        %v1851 = vand.u32 %v1606, 4294901760
        %1852 = vmatpush.msra.mxu0 %v1851
        %v1853 = vand.u32 %v1605, 4294901760
        %1854 = vmatpush.msra.mxu0 %v1853
        %v1855 = vand.u32 %v1604, 4294901760
        %1856 = vmatpush.msra.mxu0 %v1855
        %v1857 = vand.u32 %v1603, 4294901760
        %1858 = vmatpush.msra.mxu0 %v1857
        %v1859 = vand.u32 %v703, 4294901760
        %v1860 = vsub.f32 %v703, %v1859
        %v1861 = vand.u32 %v1860, 4294901760
        %1862 = vmatmul.f32.gmra.mxu0 %v1861
        %v1863 = vpop.f32.mrf.mxu0
        %v1864 = vadd.f32 %v1801, %v1863
        %v1865 = vand.u32 %v705, 4294901760
        %v1866 = vsub.f32 %v705, %v1865
        %v1867 = vand.u32 %v1866, 4294901760
        %1868 = vmatmul.f32.gmra.mxu0 %v1867
        %v1869 = vpop.f32.mrf.mxu0
        %v1870 = vadd.f32 %v1806, %v1869
        %v1871 = vand.u32 %v707, 4294901760
        %v1872 = vsub.f32 %v707, %v1871
        %v1873 = vand.u32 %v1872, 4294901760
        %1874 = vmatmul.f32.gmra.mxu0 %v1873
        %v1875 = vpop.f32.mrf.mxu0
        %v1876 = vadd.f32 %v1811, %v1875
        %v1877 = vand.u32 %v709, 4294901760
        %v1878 = vsub.f32 %v709, %v1877
        %v1879 = vand.u32 %v1878, 4294901760
        %1880 = vmatmul.f32.gmra.mxu0 %v1879
        %v1881 = vpop.f32.mrf.mxu0
        %v1882 = vadd.f32 %v1816, %v1881
        %v1883 = vand.u32 %v711, 4294901760
        %v1884 = vsub.f32 %v711, %v1883
        %v1885 = vand.u32 %v1884, 4294901760
        %1886 = vmatmul.f32.gmra.mxu0 %v1885
        %v1887 = vpop.f32.mrf.mxu0
        %v1888 = vadd.f32 %v1821, %v1887
        %v1889 = vand.u32 %v713, 4294901760
        %v1890 = vsub.f32 %v713, %v1889
        %v1891 = vand.u32 %v1890, 4294901760
        %1892 = vmatmul.f32.gmra.mxu0 %v1891
        %v1893 = vpop.f32.mrf.mxu0
        %v1894 = vadd.f32 %v1826, %v1893
        %v1895 = vand.u32 %v715, 4294901760
        %v1896 = vsub.f32 %v715, %v1895
        %v1897 = vand.u32 %v1896, 4294901760
        %1898 = vmatmul.f32.gmra.mxu0 %v1897
        %v1899 = vpop.f32.mrf.mxu0
        %v1900 = vadd.f32 %v1831, %v1899
        %v1901 = vand.u32 %v1609, 4294901760
        %v1902 = vsub.f32 %v1609, %v1901
        %v1903 = vand.u32 %v1902, 4294901760
        %1904 = vmatmul.f32.gmra.mxu0 %v1903
        %v1905 = vpop.f32.mrf.mxu0
        %v1906 = vadd.f32 %v1836, %v1905
        %1907 = vdwg.mxu0
        %1908 = vmatpush.msra.mxu0 0.0
        %1909 = vmatpush.msra.mxu0 0.0
        %1910 = vmatpush.msra.mxu0 0.0
        %1911 = vmatpush.msra.mxu0 0.0
        %1912 = vmatpush.msra.mxu0 0.0
        %1913 = vmatpush.msra.mxu0 0.0
        %1914 = vmatpush.msra.mxu0 0.0
        %1915 = vmatpush.msra.mxu0 0.0
        %1916 = vmatpush.msra.mxu0 0.0
        %1917 = vmatpush.msra.mxu0 0.0
        %1918 = vmatpush.msra.mxu0 0.0
        %v1919 = vand.u32 %v1607, 4294901760
        %v1920 = vsub.f32 %v1607, %v1919
        %v1921 = vand.u32 %v1920, 4294901760
        %1922 = vmatpush.msra.mxu0 %v1921
        %v1923 = vand.u32 %v1606, 4294901760
        %v1924 = vsub.f32 %v1606, %v1923
        %v1925 = vand.u32 %v1924, 4294901760
        %1926 = vmatpush.msra.mxu0 %v1925
        %v1927 = vand.u32 %v1605, 4294901760
        %v1928 = vsub.f32 %v1605, %v1927
        %v1929 = vand.u32 %v1928, 4294901760
        %1930 = vmatpush.msra.mxu0 %v1929
        %v1931 = vand.u32 %v1604, 4294901760
        %v1932 = vsub.f32 %v1604, %v1931
        %v1933 = vand.u32 %v1932, 4294901760
        %1934 = vmatpush.msra.mxu0 %v1933
        %v1935 = vand.u32 %v1603, 4294901760
        %v1936 = vsub.f32 %v1603, %v1935
        %v1937 = vand.u32 %v1936, 4294901760
        %1938 = vmatpush.msra.mxu0 %v1937
        %v1939 = vand.u32 %v703, 4294901760
        %1940 = vmatmul.f32.gmra.mxu0 %v1939
        %v1941 = vpop.f32.mrf.mxu0
        %v1942 = vadd.f32 %v1864, %v1941
        %v1943 = vand.u32 %v705, 4294901760
        %1944 = vmatmul.f32.gmra.mxu0 %v1943
        %v1945 = vpop.f32.mrf.mxu0
        %v1946 = vadd.f32 %v1870, %v1945
        %v1947 = vand.u32 %v707, 4294901760
        %1948 = vmatmul.f32.gmra.mxu0 %v1947
        %v1949 = vpop.f32.mrf.mxu0
        %v1950 = vadd.f32 %v1876, %v1949
        %v1951 = vand.u32 %v709, 4294901760
        %1952 = vmatmul.f32.gmra.mxu0 %v1951
        %v1953 = vpop.f32.mrf.mxu0
        %v1954 = vadd.f32 %v1882, %v1953
        %v1955 = vand.u32 %v711, 4294901760
        %1956 = vmatmul.f32.gmra.mxu0 %v1955
        %v1957 = vpop.f32.mrf.mxu0
        %v1958 = vadd.f32 %v1888, %v1957
        %v1959 = vand.u32 %v713, 4294901760
        %1960 = vmatmul.f32.gmra.mxu0 %v1959
        %v1961 = vpop.f32.mrf.mxu0
        %v1962 = vadd.f32 %v1894, %v1961
        %v1963 = vand.u32 %v715, 4294901760
        %1964 = vmatmul.f32.gmra.mxu0 %v1963
        %v1965 = vpop.f32.mrf.mxu0
        %v1966 = vadd.f32 %v1900, %v1965
        %v1967 = vand.u32 %v1609, 4294901760
        %1968 = vmatmul.f32.gmra.mxu0 %v1967
        %v1969 = vpop.f32.mrf.mxu0
        %v1970 = vadd.f32 %v1906, %v1969
        %1971 = vdwg.mxu0
        %1972 = vmatpush.msra.mxu0 0.0
        %1973 = vmatpush.msra.mxu0 0.0
        %1974 = vmatpush.msra.mxu0 0.0
        %1975 = vmatpush.msra.mxu0 0.0
        %1976 = vmatpush.msra.mxu0 0.0
        %1977 = vmatpush.msra.mxu0 0.0
        %1978 = vmatpush.msra.mxu0 0.0
        %1979 = vmatpush.msra.mxu0 0.0
        %1980 = vmatpush.msra.mxu0 0.0
        %1981 = vmatpush.msra.mxu0 0.0
        %1982 = vmatpush.msra.mxu0 0.0
        %v1983 = vand.u32 %v1607, 4294901760
        %1984 = vmatpush.msra.mxu0 %v1983
        %v1985 = vand.u32 %v1606, 4294901760
        %1986 = vmatpush.msra.mxu0 %v1985
        %v1987 = vand.u32 %v1605, 4294901760
        %1988 = vmatpush.msra.mxu0 %v1987
        %v1989 = vand.u32 %v1604, 4294901760
        %1990 = vmatpush.msra.mxu0 %v1989
        %v1991 = vand.u32 %v1603, 4294901760
        %1992 = vmatpush.msra.mxu0 %v1991
        %v1993 = vand.u32 %v703, 4294901760
        %1994 = vmatmul.f32.gmra.mxu0 %v1993
        %v1995 = vpop.f32.mrf.mxu0
        %v1996 = vadd.f32 %v1942, %v1995
        %v1997 = vand.u32 %v705, 4294901760
        %1998 = vmatmul.f32.gmra.mxu0 %v1997
        %v1999 = vpop.f32.mrf.mxu0
        %v2000 = vadd.f32 %v1946, %v1999
        %v2001 = vand.u32 %v707, 4294901760
        %2002 = vmatmul.f32.gmra.mxu0 %v2001
        %v2003 = vpop.f32.mrf.mxu0
        %v2004 = vadd.f32 %v1950, %v2003
        %v2005 = vand.u32 %v709, 4294901760
        %2006 = vmatmul.f32.gmra.mxu0 %v2005
        %v2007 = vpop.f32.mrf.mxu0
        %v2008 = vadd.f32 %v1954, %v2007
        %v2009 = vand.u32 %v711, 4294901760
        %2010 = vmatmul.f32.gmra.mxu0 %v2009
        %v2011 = vpop.f32.mrf.mxu0
        %v2012 = vadd.f32 %v1958, %v2011
        %v2013 = vand.u32 %v713, 4294901760
        %2014 = vmatmul.f32.gmra.mxu0 %v2013
        %v2015 = vpop.f32.mrf.mxu0
        %v2016 = vadd.f32 %v1962, %v2015
        %v2017 = vand.u32 %v715, 4294901760
        %2018 = vmatmul.f32.gmra.mxu0 %v2017
        %v2019 = vpop.f32.mrf.mxu0
        %v2020 = vadd.f32 %v1966, %v2019
        %v2021 = vand.u32 %v1609, 4294901760
        %2022 = vmatmul.f32.gmra.mxu0 %v2021
        %v2023 = vpop.f32.mrf.mxu0
        %v2024 = vadd.f32 %v1970, %v2023
        %2025 = vdwg.mxu0
        %v2026 = vadd.f32 %v1594, %v1996
        %v2027 = vadd.f32 %v1595, %v2000
        %v2028 = vadd.f32 %v1596, %v2004
        %v2029 = vadd.f32 %v1597, %v2008
        %v2030 = vadd.f32 %v1598, %v2012
        %v2031 = vadd.f32 %v1599, %v2016
        %v2032 = vadd.f32 %v1600, %v2020
        %v2033 = vadd.f32 %v1601, %v2024
        %v2035 = vrot.slane %v212, 1
        %v2036 = vrot.slane %v213, 1
        %v2037 = vsel %vm238, %v2035, %v2036
        %s2038 = scalar_lea.vmem %s1, 160
        %v2039 = vld [vmem:[%s2038] sm:$0xff]
        %v2040 = vld [vmem:[%s2038 + $0x8] sm:$0xff]
        %v2041 = vld [vmem:[%s2038 + $0x10] sm:$0xff]
        %v2042 = vld [vmem:[%s2038 + $0x18] sm:$0xff]
        %v2043 = vld [vmem:[%s2038 + $0x20] sm:$0xff]
        %v2044 = vsel %vm269, %v2037, 0
        %2046 = vmatpush.msra.mxu0 0.0
        %2047 = vmatpush.msra.mxu0 0.0
        %2048 = vmatpush.msra.mxu0 0.0
        %2049 = vmatpush.msra.mxu0 0.0
        %2050 = vmatpush.msra.mxu0 0.0
        %2051 = vmatpush.msra.mxu0 0.0
        %2052 = vmatpush.msra.mxu0 0.0
        %2053 = vmatpush.msra.mxu0 0.0
        %2054 = vmatpush.msra.mxu0 0.0
        %2055 = vmatpush.msra.mxu0 0.0
        %2056 = vmatpush.msra.mxu0 0.0
        %v2057 = vand.u32 %v2043, 4294901760
        %2058 = vmatpush.msra.mxu0 %v2057
        %v2059 = vand.u32 %v2042, 4294901760
        %2060 = vmatpush.msra.mxu0 %v2059
        %v2061 = vand.u32 %v2041, 4294901760
        %2062 = vmatpush.msra.mxu0 %v2061
        %v2063 = vand.u32 %v2040, 4294901760
        %2064 = vmatpush.msra.mxu0 %v2063
        %v2065 = vand.u32 %v2039, 4294901760
        %2066 = vmatpush.msra.mxu0 %v2065
        %v2067 = vand.u32 %v272, 4294901760
        %v2068 = vsub.f32 %v272, %v2067
        %v2069 = vand.u32 %v2068, 4294901760
        %v2070 = vsub.f32 %v2068, %v2069
        %v2071 = vand.u32 %v2070, 4294901760
        %2072 = vmatmul.f32.gmra.mxu0 %v2071
        %v2073 = vpop.f32.mrf.mxu0
        %v2074 = vadd.f32 0.0, %v2073
        %v2075 = vand.u32 %v274, 4294901760
        %v2076 = vsub.f32 %v274, %v2075
        %v2077 = vand.u32 %v2076, 4294901760
        %v2078 = vsub.f32 %v2076, %v2077
        %v2079 = vand.u32 %v2078, 4294901760
        %2080 = vmatmul.f32.gmra.mxu0 %v2079
        %v2081 = vpop.f32.mrf.mxu0
        %v2082 = vadd.f32 0.0, %v2081
        %v2083 = vand.u32 %v276, 4294901760
        %v2084 = vsub.f32 %v276, %v2083
        %v2085 = vand.u32 %v2084, 4294901760
        %v2086 = vsub.f32 %v2084, %v2085
        %v2087 = vand.u32 %v2086, 4294901760
        %2088 = vmatmul.f32.gmra.mxu0 %v2087
        %v2089 = vpop.f32.mrf.mxu0
        %v2090 = vadd.f32 0.0, %v2089
        %v2091 = vand.u32 %v278, 4294901760
        %v2092 = vsub.f32 %v278, %v2091
        %v2093 = vand.u32 %v2092, 4294901760
        %v2094 = vsub.f32 %v2092, %v2093
        %v2095 = vand.u32 %v2094, 4294901760
        %2096 = vmatmul.f32.gmra.mxu0 %v2095
        %v2097 = vpop.f32.mrf.mxu0
        %v2098 = vadd.f32 0.0, %v2097
        %v2099 = vand.u32 %v280, 4294901760
        %v2100 = vsub.f32 %v280, %v2099
        %v2101 = vand.u32 %v2100, 4294901760
        %v2102 = vsub.f32 %v2100, %v2101
        %v2103 = vand.u32 %v2102, 4294901760
        %2104 = vmatmul.f32.gmra.mxu0 %v2103
        %v2105 = vpop.f32.mrf.mxu0
        %v2106 = vadd.f32 0.0, %v2105
        %v2107 = vand.u32 %v282, 4294901760
        %v2108 = vsub.f32 %v282, %v2107
        %v2109 = vand.u32 %v2108, 4294901760
        %v2110 = vsub.f32 %v2108, %v2109
        %v2111 = vand.u32 %v2110, 4294901760
        %2112 = vmatmul.f32.gmra.mxu0 %v2111
        %v2113 = vpop.f32.mrf.mxu0
        %v2114 = vadd.f32 0.0, %v2113
        %v2115 = vand.u32 %v284, 4294901760
        %v2116 = vsub.f32 %v284, %v2115
        %v2117 = vand.u32 %v2116, 4294901760
        %v2118 = vsub.f32 %v2116, %v2117
        %v2119 = vand.u32 %v2118, 4294901760
        %2120 = vmatmul.f32.gmra.mxu0 %v2119
        %v2121 = vpop.f32.mrf.mxu0
        %v2122 = vadd.f32 0.0, %v2121
        %v2123 = vand.u32 %v2044, 4294901760
        %v2124 = vsub.f32 %v2044, %v2123
        %v2125 = vand.u32 %v2124, 4294901760
        %v2126 = vsub.f32 %v2124, %v2125
        %v2127 = vand.u32 %v2126, 4294901760
        %2128 = vmatmul.f32.gmra.mxu0 %v2127
        %v2129 = vpop.f32.mrf.mxu0
        %v2130 = vadd.f32 0.0, %v2129
        %2131 = vdwg.mxu0
        %2132 = vmatpush.msra.mxu0 0.0
        %2133 = vmatpush.msra.mxu0 0.0
        %2134 = vmatpush.msra.mxu0 0.0
        %2135 = vmatpush.msra.mxu0 0.0
        %2136 = vmatpush.msra.mxu0 0.0
        %2137 = vmatpush.msra.mxu0 0.0
        %2138 = vmatpush.msra.mxu0 0.0
        %2139 = vmatpush.msra.mxu0 0.0
        %2140 = vmatpush.msra.mxu0 0.0
        %2141 = vmatpush.msra.mxu0 0.0
        %2142 = vmatpush.msra.mxu0 0.0
        %v2143 = vand.u32 %v2043, 4294901760
        %v2144 = vsub.f32 %v2043, %v2143
        %v2145 = vand.u32 %v2144, 4294901760
        %v2146 = vsub.f32 %v2144, %v2145
        %v2147 = vand.u32 %v2146, 4294901760
        %2148 = vmatpush.msra.mxu0 %v2147
        %v2149 = vand.u32 %v2042, 4294901760
        %v2150 = vsub.f32 %v2042, %v2149
        %v2151 = vand.u32 %v2150, 4294901760
        %v2152 = vsub.f32 %v2150, %v2151
        %v2153 = vand.u32 %v2152, 4294901760
        %2154 = vmatpush.msra.mxu0 %v2153
        %v2155 = vand.u32 %v2041, 4294901760
        %v2156 = vsub.f32 %v2041, %v2155
        %v2157 = vand.u32 %v2156, 4294901760
        %v2158 = vsub.f32 %v2156, %v2157
        %v2159 = vand.u32 %v2158, 4294901760
        %2160 = vmatpush.msra.mxu0 %v2159
        %v2161 = vand.u32 %v2040, 4294901760
        %v2162 = vsub.f32 %v2040, %v2161
        %v2163 = vand.u32 %v2162, 4294901760
        %v2164 = vsub.f32 %v2162, %v2163
        %v2165 = vand.u32 %v2164, 4294901760
        %2166 = vmatpush.msra.mxu0 %v2165
        %v2167 = vand.u32 %v2039, 4294901760
        %v2168 = vsub.f32 %v2039, %v2167
        %v2169 = vand.u32 %v2168, 4294901760
        %v2170 = vsub.f32 %v2168, %v2169
        %v2171 = vand.u32 %v2170, 4294901760
        %2172 = vmatpush.msra.mxu0 %v2171
        %v2173 = vand.u32 %v272, 4294901760
        %2174 = vmatmul.f32.gmra.mxu0 %v2173
        %v2175 = vpop.f32.mrf.mxu0
        %v2176 = vadd.f32 %v2074, %v2175
        %v2177 = vand.u32 %v274, 4294901760
        %2178 = vmatmul.f32.gmra.mxu0 %v2177
        %v2179 = vpop.f32.mrf.mxu0
        %v2180 = vadd.f32 %v2082, %v2179
        %v2181 = vand.u32 %v276, 4294901760
        %2182 = vmatmul.f32.gmra.mxu0 %v2181
        %v2183 = vpop.f32.mrf.mxu0
        %v2184 = vadd.f32 %v2090, %v2183
        %v2185 = vand.u32 %v278, 4294901760
        %2186 = vmatmul.f32.gmra.mxu0 %v2185
        %v2187 = vpop.f32.mrf.mxu0
        %v2188 = vadd.f32 %v2098, %v2187
        %v2189 = vand.u32 %v280, 4294901760
        %2190 = vmatmul.f32.gmra.mxu0 %v2189
        %v2191 = vpop.f32.mrf.mxu0
        %v2192 = vadd.f32 %v2106, %v2191
        %v2193 = vand.u32 %v282, 4294901760
        %2194 = vmatmul.f32.gmra.mxu0 %v2193
        %v2195 = vpop.f32.mrf.mxu0
        %v2196 = vadd.f32 %v2114, %v2195
        %v2197 = vand.u32 %v284, 4294901760
        %2198 = vmatmul.f32.gmra.mxu0 %v2197
        %v2199 = vpop.f32.mrf.mxu0
        %v2200 = vadd.f32 %v2122, %v2199
        %v2201 = vand.u32 %v2044, 4294901760
        %2202 = vmatmul.f32.gmra.mxu0 %v2201
        %v2203 = vpop.f32.mrf.mxu0
        %v2204 = vadd.f32 %v2130, %v2203
        %2205 = vdwg.mxu0
        %2206 = vmatpush.msra.mxu0 0.0
        %2207 = vmatpush.msra.mxu0 0.0
        %2208 = vmatpush.msra.mxu0 0.0
        %2209 = vmatpush.msra.mxu0 0.0
        %2210 = vmatpush.msra.mxu0 0.0
        %2211 = vmatpush.msra.mxu0 0.0
        %2212 = vmatpush.msra.mxu0 0.0
        %2213 = vmatpush.msra.mxu0 0.0
        %2214 = vmatpush.msra.mxu0 0.0
        %2215 = vmatpush.msra.mxu0 0.0
        %2216 = vmatpush.msra.mxu0 0.0
        %v2217 = vand.u32 %v2043, 4294901760
        %v2218 = vsub.f32 %v2043, %v2217
        %2219 = vmatpush.msra.mxu0 %v2218
        %v2220 = vand.u32 %v2042, 4294901760
        %v2221 = vsub.f32 %v2042, %v2220
        %2222 = vmatpush.msra.mxu0 %v2221
        %v2223 = vand.u32 %v2041, 4294901760
        %v2224 = vsub.f32 %v2041, %v2223
        %2225 = vmatpush.msra.mxu0 %v2224
        %v2226 = vand.u32 %v2040, 4294901760
        %v2227 = vsub.f32 %v2040, %v2226
        %2228 = vmatpush.msra.mxu0 %v2227
        %v2229 = vand.u32 %v2039, 4294901760
        %v2230 = vsub.f32 %v2039, %v2229
        %2231 = vmatpush.msra.mxu0 %v2230
        %v2232 = vand.u32 %v272, 4294901760
        %v2233 = vsub.f32 %v272, %v2232
        %2234 = vmatmul.f32.gmra.mxu0 %v2233
        %v2235 = vpop.f32.mrf.mxu0
        %v2236 = vadd.f32 %v2176, %v2235
        %v2237 = vand.u32 %v274, 4294901760
        %v2238 = vsub.f32 %v274, %v2237
        %2239 = vmatmul.f32.gmra.mxu0 %v2238
        %v2240 = vpop.f32.mrf.mxu0
        %v2241 = vadd.f32 %v2180, %v2240
        %v2242 = vand.u32 %v276, 4294901760
        %v2243 = vsub.f32 %v276, %v2242
        %2244 = vmatmul.f32.gmra.mxu0 %v2243
        %v2245 = vpop.f32.mrf.mxu0
        %v2246 = vadd.f32 %v2184, %v2245
        %v2247 = vand.u32 %v278, 4294901760
        %v2248 = vsub.f32 %v278, %v2247
        %2249 = vmatmul.f32.gmra.mxu0 %v2248
        %v2250 = vpop.f32.mrf.mxu0
        %v2251 = vadd.f32 %v2188, %v2250
        %v2252 = vand.u32 %v280, 4294901760
        %v2253 = vsub.f32 %v280, %v2252
        %2254 = vmatmul.f32.gmra.mxu0 %v2253
        %v2255 = vpop.f32.mrf.mxu0
        %v2256 = vadd.f32 %v2192, %v2255
        %v2257 = vand.u32 %v282, 4294901760
        %v2258 = vsub.f32 %v282, %v2257
        %2259 = vmatmul.f32.gmra.mxu0 %v2258
        %v2260 = vpop.f32.mrf.mxu0
        %v2261 = vadd.f32 %v2196, %v2260
        %v2262 = vand.u32 %v284, 4294901760
        %v2263 = vsub.f32 %v284, %v2262
        %2264 = vmatmul.f32.gmra.mxu0 %v2263
        %v2265 = vpop.f32.mrf.mxu0
        %v2266 = vadd.f32 %v2200, %v2265
        %v2267 = vand.u32 %v2044, 4294901760
        %v2268 = vsub.f32 %v2044, %v2267
        %2269 = vmatmul.f32.gmra.mxu0 %v2268
        %v2270 = vpop.f32.mrf.mxu0
        %v2271 = vadd.f32 %v2204, %v2270
        %2272 = vdwg.mxu0
        %2273 = vmatpush.msra.mxu0 0.0
        %2274 = vmatpush.msra.mxu0 0.0
        %2275 = vmatpush.msra.mxu0 0.0
        %2276 = vmatpush.msra.mxu0 0.0
        %2277 = vmatpush.msra.mxu0 0.0
        %2278 = vmatpush.msra.mxu0 0.0
        %2279 = vmatpush.msra.mxu0 0.0
        %2280 = vmatpush.msra.mxu0 0.0
        %2281 = vmatpush.msra.mxu0 0.0
        %2282 = vmatpush.msra.mxu0 0.0
        %2283 = vmatpush.msra.mxu0 0.0
        %v2284 = vand.u32 %v2043, 4294901760
        %2285 = vmatpush.msra.mxu0 %v2284
        %v2286 = vand.u32 %v2042, 4294901760
        %2287 = vmatpush.msra.mxu0 %v2286
        %v2288 = vand.u32 %v2041, 4294901760
        %2289 = vmatpush.msra.mxu0 %v2288
        %v2290 = vand.u32 %v2040, 4294901760
        %2291 = vmatpush.msra.mxu0 %v2290
        %v2292 = vand.u32 %v2039, 4294901760
        %2293 = vmatpush.msra.mxu0 %v2292
        %v2294 = vand.u32 %v272, 4294901760
        %v2295 = vsub.f32 %v272, %v2294
        %v2296 = vand.u32 %v2295, 4294901760
        %2297 = vmatmul.f32.gmra.mxu0 %v2296
        %v2298 = vpop.f32.mrf.mxu0
        %v2299 = vadd.f32 %v2236, %v2298
        %v2300 = vand.u32 %v274, 4294901760
        %v2301 = vsub.f32 %v274, %v2300
        %v2302 = vand.u32 %v2301, 4294901760
        %2303 = vmatmul.f32.gmra.mxu0 %v2302
        %v2304 = vpop.f32.mrf.mxu0
        %v2305 = vadd.f32 %v2241, %v2304
        %v2306 = vand.u32 %v276, 4294901760
        %v2307 = vsub.f32 %v276, %v2306
        %v2308 = vand.u32 %v2307, 4294901760
        %2309 = vmatmul.f32.gmra.mxu0 %v2308
        %v2310 = vpop.f32.mrf.mxu0
        %v2311 = vadd.f32 %v2246, %v2310
        %v2312 = vand.u32 %v278, 4294901760
        %v2313 = vsub.f32 %v278, %v2312
        %v2314 = vand.u32 %v2313, 4294901760
        %2315 = vmatmul.f32.gmra.mxu0 %v2314
        %v2316 = vpop.f32.mrf.mxu0
        %v2317 = vadd.f32 %v2251, %v2316
        %v2318 = vand.u32 %v280, 4294901760
        %v2319 = vsub.f32 %v280, %v2318
        %v2320 = vand.u32 %v2319, 4294901760
        %2321 = vmatmul.f32.gmra.mxu0 %v2320
        %v2322 = vpop.f32.mrf.mxu0
        %v2323 = vadd.f32 %v2256, %v2322
        %v2324 = vand.u32 %v282, 4294901760
        %v2325 = vsub.f32 %v282, %v2324
        %v2326 = vand.u32 %v2325, 4294901760
        %2327 = vmatmul.f32.gmra.mxu0 %v2326
        %v2328 = vpop.f32.mrf.mxu0
        %v2329 = vadd.f32 %v2261, %v2328
        %v2330 = vand.u32 %v284, 4294901760
        %v2331 = vsub.f32 %v284, %v2330
        %v2332 = vand.u32 %v2331, 4294901760
        %2333 = vmatmul.f32.gmra.mxu0 %v2332
        %v2334 = vpop.f32.mrf.mxu0
        %v2335 = vadd.f32 %v2266, %v2334
        %v2336 = vand.u32 %v2044, 4294901760
        %v2337 = vsub.f32 %v2044, %v2336
        %v2338 = vand.u32 %v2337, 4294901760
        %2339 = vmatmul.f32.gmra.mxu0 %v2338
        %v2340 = vpop.f32.mrf.mxu0
        %v2341 = vadd.f32 %v2271, %v2340
        %2342 = vdwg.mxu0
        %2343 = vmatpush.msra.mxu0 0.0
        %2344 = vmatpush.msra.mxu0 0.0
        %2345 = vmatpush.msra.mxu0 0.0
        %2346 = vmatpush.msra.mxu0 0.0
        %2347 = vmatpush.msra.mxu0 0.0
        %2348 = vmatpush.msra.mxu0 0.0
        %2349 = vmatpush.msra.mxu0 0.0
        %2350 = vmatpush.msra.mxu0 0.0
        %2351 = vmatpush.msra.mxu0 0.0
        %2352 = vmatpush.msra.mxu0 0.0
        %2353 = vmatpush.msra.mxu0 0.0
        %v2354 = vand.u32 %v2043, 4294901760
        %v2355 = vsub.f32 %v2043, %v2354
        %v2356 = vand.u32 %v2355, 4294901760
        %2357 = vmatpush.msra.mxu0 %v2356
        %v2358 = vand.u32 %v2042, 4294901760
        %v2359 = vsub.f32 %v2042, %v2358
        %v2360 = vand.u32 %v2359, 4294901760
        %2361 = vmatpush.msra.mxu0 %v2360
        %v2362 = vand.u32 %v2041, 4294901760
        %v2363 = vsub.f32 %v2041, %v2362
        %v2364 = vand.u32 %v2363, 4294901760
        %2365 = vmatpush.msra.mxu0 %v2364
        %v2366 = vand.u32 %v2040, 4294901760
        %v2367 = vsub.f32 %v2040, %v2366
        %v2368 = vand.u32 %v2367, 4294901760
        %2369 = vmatpush.msra.mxu0 %v2368
        %v2370 = vand.u32 %v2039, 4294901760
        %v2371 = vsub.f32 %v2039, %v2370
        %v2372 = vand.u32 %v2371, 4294901760
        %2373 = vmatpush.msra.mxu0 %v2372
        %v2374 = vand.u32 %v272, 4294901760
        %2375 = vmatmul.f32.gmra.mxu0 %v2374
        %v2376 = vpop.f32.mrf.mxu0
        %v2377 = vadd.f32 %v2299, %v2376
        %v2378 = vand.u32 %v274, 4294901760
        %2379 = vmatmul.f32.gmra.mxu0 %v2378
        %v2380 = vpop.f32.mrf.mxu0
        %v2381 = vadd.f32 %v2305, %v2380
        %v2382 = vand.u32 %v276, 4294901760
        %2383 = vmatmul.f32.gmra.mxu0 %v2382
        %v2384 = vpop.f32.mrf.mxu0
        %v2385 = vadd.f32 %v2311, %v2384
        %v2386 = vand.u32 %v278, 4294901760
        %2387 = vmatmul.f32.gmra.mxu0 %v2386
        %v2388 = vpop.f32.mrf.mxu0
        %v2389 = vadd.f32 %v2317, %v2388
        %v2390 = vand.u32 %v280, 4294901760
        %2391 = vmatmul.f32.gmra.mxu0 %v2390
        %v2392 = vpop.f32.mrf.mxu0
        %v2393 = vadd.f32 %v2323, %v2392
        %v2394 = vand.u32 %v282, 4294901760
        %2395 = vmatmul.f32.gmra.mxu0 %v2394
        %v2396 = vpop.f32.mrf.mxu0
        %v2397 = vadd.f32 %v2329, %v2396
        %v2398 = vand.u32 %v284, 4294901760
        %2399 = vmatmul.f32.gmra.mxu0 %v2398
        %v2400 = vpop.f32.mrf.mxu0
        %v2401 = vadd.f32 %v2335, %v2400
        %v2402 = vand.u32 %v2044, 4294901760
        %2403 = vmatmul.f32.gmra.mxu0 %v2402
        %v2404 = vpop.f32.mrf.mxu0
        %v2405 = vadd.f32 %v2341, %v2404
        %2406 = vdwg.mxu0
        %2407 = vmatpush.msra.mxu0 0.0
        %2408 = vmatpush.msra.mxu0 0.0
        %2409 = vmatpush.msra.mxu0 0.0
        %2410 = vmatpush.msra.mxu0 0.0
        %2411 = vmatpush.msra.mxu0 0.0
        %2412 = vmatpush.msra.mxu0 0.0
        %2413 = vmatpush.msra.mxu0 0.0
        %2414 = vmatpush.msra.mxu0 0.0
        %2415 = vmatpush.msra.mxu0 0.0
        %2416 = vmatpush.msra.mxu0 0.0
        %2417 = vmatpush.msra.mxu0 0.0
        %v2418 = vand.u32 %v2043, 4294901760
        %2419 = vmatpush.msra.mxu0 %v2418
        %v2420 = vand.u32 %v2042, 4294901760
        %2421 = vmatpush.msra.mxu0 %v2420
        %v2422 = vand.u32 %v2041, 4294901760
        %2423 = vmatpush.msra.mxu0 %v2422
        %v2424 = vand.u32 %v2040, 4294901760
        %2425 = vmatpush.msra.mxu0 %v2424
        %v2426 = vand.u32 %v2039, 4294901760
        %2427 = vmatpush.msra.mxu0 %v2426
        %v2428 = vand.u32 %v272, 4294901760
        %2429 = vmatmul.f32.gmra.mxu0 %v2428
        %v2430 = vpop.f32.mrf.mxu0
        %v2431 = vadd.f32 %v2377, %v2430
        %v2432 = vand.u32 %v274, 4294901760
        %2433 = vmatmul.f32.gmra.mxu0 %v2432
        %v2434 = vpop.f32.mrf.mxu0
        %v2435 = vadd.f32 %v2381, %v2434
        %v2436 = vand.u32 %v276, 4294901760
        %2437 = vmatmul.f32.gmra.mxu0 %v2436
        %v2438 = vpop.f32.mrf.mxu0
        %v2439 = vadd.f32 %v2385, %v2438
        %v2440 = vand.u32 %v278, 4294901760
        %2441 = vmatmul.f32.gmra.mxu0 %v2440
        %v2442 = vpop.f32.mrf.mxu0
        %v2443 = vadd.f32 %v2389, %v2442
        %v2444 = vand.u32 %v280, 4294901760
        %2445 = vmatmul.f32.gmra.mxu0 %v2444
        %v2446 = vpop.f32.mrf.mxu0
        %v2447 = vadd.f32 %v2393, %v2446
        %v2448 = vand.u32 %v282, 4294901760
        %2449 = vmatmul.f32.gmra.mxu0 %v2448
        %v2450 = vpop.f32.mrf.mxu0
        %v2451 = vadd.f32 %v2397, %v2450
        %v2452 = vand.u32 %v284, 4294901760
        %2453 = vmatmul.f32.gmra.mxu0 %v2452
        %v2454 = vpop.f32.mrf.mxu0
        %v2455 = vadd.f32 %v2401, %v2454
        %v2456 = vand.u32 %v2044, 4294901760
        %2457 = vmatmul.f32.gmra.mxu0 %v2456
        %v2458 = vpop.f32.mrf.mxu0
        %v2459 = vadd.f32 %v2405, %v2458
        %2460 = vdwg.mxu0
        %v2461 = vadd.f32 %v2026, %v2431
        %v2462 = vadd.f32 %v2027, %v2435
        %v2463 = vadd.f32 %v2028, %v2439
        %v2464 = vadd.f32 %v2029, %v2443
        %v2465 = vadd.f32 %v2030, %v2447
        %v2466 = vadd.f32 %v2031, %v2451
        %v2467 = vadd.f32 %v2032, %v2455
        %v2468 = vadd.f32 %v2033, %v2459
        %v2469 = vrot.slane %v212, 2
        %v2470 = vrot.slane %v213, 2
        %v2471 = vsel %vm1132, %v2469, %v2470
        %s2472 = scalar_lea.vmem %s1, 200
        %v2473 = vld [vmem:[%s2472] sm:$0xff]
        %v2474 = vld [vmem:[%s2472 + $0x8] sm:$0xff]
        %v2475 = vld [vmem:[%s2472 + $0x10] sm:$0xff]
        %v2476 = vld [vmem:[%s2472 + $0x18] sm:$0xff]
        %v2477 = vld [vmem:[%s2472 + $0x20] sm:$0xff]
        %v2478 = vsel %vm269, %v2471, 0
        %2480 = vmatpush.msra.mxu0 0.0
        %2481 = vmatpush.msra.mxu0 0.0
        %2482 = vmatpush.msra.mxu0 0.0
        %2483 = vmatpush.msra.mxu0 0.0
        %2484 = vmatpush.msra.mxu0 0.0
        %2485 = vmatpush.msra.mxu0 0.0
        %2486 = vmatpush.msra.mxu0 0.0
        %2487 = vmatpush.msra.mxu0 0.0
        %2488 = vmatpush.msra.mxu0 0.0
        %2489 = vmatpush.msra.mxu0 0.0
        %2490 = vmatpush.msra.mxu0 0.0
        %v2491 = vand.u32 %v2477, 4294901760
        %2492 = vmatpush.msra.mxu0 %v2491
        %v2493 = vand.u32 %v2476, 4294901760
        %2494 = vmatpush.msra.mxu0 %v2493
        %v2495 = vand.u32 %v2475, 4294901760
        %2496 = vmatpush.msra.mxu0 %v2495
        %v2497 = vand.u32 %v2474, 4294901760
        %2498 = vmatpush.msra.mxu0 %v2497
        %v2499 = vand.u32 %v2473, 4294901760
        %2500 = vmatpush.msra.mxu0 %v2499
        %v2501 = vand.u32 %v1165, 4294901760
        %v2502 = vsub.f32 %v1165, %v2501
        %v2503 = vand.u32 %v2502, 4294901760
        %v2504 = vsub.f32 %v2502, %v2503
        %v2505 = vand.u32 %v2504, 4294901760
        %2506 = vmatmul.f32.gmra.mxu0 %v2505
        %v2507 = vpop.f32.mrf.mxu0
        %v2508 = vadd.f32 0.0, %v2507
        %v2509 = vand.u32 %v1167, 4294901760
        %v2510 = vsub.f32 %v1167, %v2509
        %v2511 = vand.u32 %v2510, 4294901760
        %v2512 = vsub.f32 %v2510, %v2511
        %v2513 = vand.u32 %v2512, 4294901760
        %2514 = vmatmul.f32.gmra.mxu0 %v2513
        %v2515 = vpop.f32.mrf.mxu0
        %v2516 = vadd.f32 0.0, %v2515
        %v2517 = vand.u32 %v1169, 4294901760
        %v2518 = vsub.f32 %v1169, %v2517
        %v2519 = vand.u32 %v2518, 4294901760
        %v2520 = vsub.f32 %v2518, %v2519
        %v2521 = vand.u32 %v2520, 4294901760
        %2522 = vmatmul.f32.gmra.mxu0 %v2521
        %v2523 = vpop.f32.mrf.mxu0
        %v2524 = vadd.f32 0.0, %v2523
        %v2525 = vand.u32 %v1171, 4294901760
        %v2526 = vsub.f32 %v1171, %v2525
        %v2527 = vand.u32 %v2526, 4294901760
        %v2528 = vsub.f32 %v2526, %v2527
        %v2529 = vand.u32 %v2528, 4294901760
        %2530 = vmatmul.f32.gmra.mxu0 %v2529
        %v2531 = vpop.f32.mrf.mxu0
        %v2532 = vadd.f32 0.0, %v2531
        %v2533 = vand.u32 %v1173, 4294901760
        %v2534 = vsub.f32 %v1173, %v2533
        %v2535 = vand.u32 %v2534, 4294901760
        %v2536 = vsub.f32 %v2534, %v2535
        %v2537 = vand.u32 %v2536, 4294901760
        %2538 = vmatmul.f32.gmra.mxu0 %v2537
        %v2539 = vpop.f32.mrf.mxu0
        %v2540 = vadd.f32 0.0, %v2539
        %v2541 = vand.u32 %v1175, 4294901760
        %v2542 = vsub.f32 %v1175, %v2541
        %v2543 = vand.u32 %v2542, 4294901760
        %v2544 = vsub.f32 %v2542, %v2543
        %v2545 = vand.u32 %v2544, 4294901760
        %2546 = vmatmul.f32.gmra.mxu0 %v2545
        %v2547 = vpop.f32.mrf.mxu0
        %v2548 = vadd.f32 0.0, %v2547
        %v2549 = vand.u32 %v1177, 4294901760
        %v2550 = vsub.f32 %v1177, %v2549
        %v2551 = vand.u32 %v2550, 4294901760
        %v2552 = vsub.f32 %v2550, %v2551
        %v2553 = vand.u32 %v2552, 4294901760
        %2554 = vmatmul.f32.gmra.mxu0 %v2553
        %v2555 = vpop.f32.mrf.mxu0
        %v2556 = vadd.f32 0.0, %v2555
        %v2557 = vand.u32 %v2478, 4294901760
        %v2558 = vsub.f32 %v2478, %v2557
        %v2559 = vand.u32 %v2558, 4294901760
        %v2560 = vsub.f32 %v2558, %v2559
        %v2561 = vand.u32 %v2560, 4294901760
        %2562 = vmatmul.f32.gmra.mxu0 %v2561
        %v2563 = vpop.f32.mrf.mxu0
        %v2564 = vadd.f32 0.0, %v2563
        %2565 = vdwg.mxu0
        %2566 = vmatpush.msra.mxu0 0.0
        %2567 = vmatpush.msra.mxu0 0.0
        %2568 = vmatpush.msra.mxu0 0.0
        %2569 = vmatpush.msra.mxu0 0.0
        %2570 = vmatpush.msra.mxu0 0.0
        %2571 = vmatpush.msra.mxu0 0.0
        %2572 = vmatpush.msra.mxu0 0.0
        %2573 = vmatpush.msra.mxu0 0.0
        %2574 = vmatpush.msra.mxu0 0.0
        %2575 = vmatpush.msra.mxu0 0.0
        %2576 = vmatpush.msra.mxu0 0.0
        %v2577 = vand.u32 %v2477, 4294901760
        %v2578 = vsub.f32 %v2477, %v2577
        %v2579 = vand.u32 %v2578, 4294901760
        %v2580 = vsub.f32 %v2578, %v2579
        %v2581 = vand.u32 %v2580, 4294901760
        %2582 = vmatpush.msra.mxu0 %v2581
        %v2583 = vand.u32 %v2476, 4294901760
        %v2584 = vsub.f32 %v2476, %v2583
        %v2585 = vand.u32 %v2584, 4294901760
        %v2586 = vsub.f32 %v2584, %v2585
        %v2587 = vand.u32 %v2586, 4294901760
        %2588 = vmatpush.msra.mxu0 %v2587
        %v2589 = vand.u32 %v2475, 4294901760
        %v2590 = vsub.f32 %v2475, %v2589
        %v2591 = vand.u32 %v2590, 4294901760
        %v2592 = vsub.f32 %v2590, %v2591
        %v2593 = vand.u32 %v2592, 4294901760
        %2594 = vmatpush.msra.mxu0 %v2593
        %v2595 = vand.u32 %v2474, 4294901760
        %v2596 = vsub.f32 %v2474, %v2595
        %v2597 = vand.u32 %v2596, 4294901760
        %v2598 = vsub.f32 %v2596, %v2597
        %v2599 = vand.u32 %v2598, 4294901760
        %2600 = vmatpush.msra.mxu0 %v2599
        %v2601 = vand.u32 %v2473, 4294901760
        %v2602 = vsub.f32 %v2473, %v2601
        %v2603 = vand.u32 %v2602, 4294901760
        %v2604 = vsub.f32 %v2602, %v2603
        %v2605 = vand.u32 %v2604, 4294901760
        %2606 = vmatpush.msra.mxu0 %v2605
        %v2607 = vand.u32 %v1165, 4294901760
        %2608 = vmatmul.f32.gmra.mxu0 %v2607
        %v2609 = vpop.f32.mrf.mxu0
        %v2610 = vadd.f32 %v2508, %v2609
        %v2611 = vand.u32 %v1167, 4294901760
        %2612 = vmatmul.f32.gmra.mxu0 %v2611
        %v2613 = vpop.f32.mrf.mxu0
        %v2614 = vadd.f32 %v2516, %v2613
        %v2615 = vand.u32 %v1169, 4294901760
        %2616 = vmatmul.f32.gmra.mxu0 %v2615
        %v2617 = vpop.f32.mrf.mxu0
        %v2618 = vadd.f32 %v2524, %v2617
        %v2619 = vand.u32 %v1171, 4294901760
        %2620 = vmatmul.f32.gmra.mxu0 %v2619
        %v2621 = vpop.f32.mrf.mxu0
        %v2622 = vadd.f32 %v2532, %v2621
        %v2623 = vand.u32 %v1173, 4294901760
        %2624 = vmatmul.f32.gmra.mxu0 %v2623
        %v2625 = vpop.f32.mrf.mxu0
        %v2626 = vadd.f32 %v2540, %v2625
        %v2627 = vand.u32 %v1175, 4294901760
        %2628 = vmatmul.f32.gmra.mxu0 %v2627
        %v2629 = vpop.f32.mrf.mxu0
        %v2630 = vadd.f32 %v2548, %v2629
        %v2631 = vand.u32 %v1177, 4294901760
        %2632 = vmatmul.f32.gmra.mxu0 %v2631
        %v2633 = vpop.f32.mrf.mxu0
        %v2634 = vadd.f32 %v2556, %v2633
        %v2635 = vand.u32 %v2478, 4294901760
        %2636 = vmatmul.f32.gmra.mxu0 %v2635
        %v2637 = vpop.f32.mrf.mxu0
        %v2638 = vadd.f32 %v2564, %v2637
        %2639 = vdwg.mxu0
        %2640 = vmatpush.msra.mxu0 0.0
        %2641 = vmatpush.msra.mxu0 0.0
        %2642 = vmatpush.msra.mxu0 0.0
        %2643 = vmatpush.msra.mxu0 0.0
        %2644 = vmatpush.msra.mxu0 0.0
        %2645 = vmatpush.msra.mxu0 0.0
        %2646 = vmatpush.msra.mxu0 0.0
        %2647 = vmatpush.msra.mxu0 0.0
        %2648 = vmatpush.msra.mxu0 0.0
        %2649 = vmatpush.msra.mxu0 0.0
        %2650 = vmatpush.msra.mxu0 0.0
        %v2651 = vand.u32 %v2477, 4294901760
        %v2652 = vsub.f32 %v2477, %v2651
        %2653 = vmatpush.msra.mxu0 %v2652
        %v2654 = vand.u32 %v2476, 4294901760
        %v2655 = vsub.f32 %v2476, %v2654
        %2656 = vmatpush.msra.mxu0 %v2655
        %v2657 = vand.u32 %v2475, 4294901760
        %v2658 = vsub.f32 %v2475, %v2657
        %2659 = vmatpush.msra.mxu0 %v2658
        %v2660 = vand.u32 %v2474, 4294901760
        %v2661 = vsub.f32 %v2474, %v2660
        %2662 = vmatpush.msra.mxu0 %v2661
        %v2663 = vand.u32 %v2473, 4294901760
        %v2664 = vsub.f32 %v2473, %v2663
        %2665 = vmatpush.msra.mxu0 %v2664
        %v2666 = vand.u32 %v1165, 4294901760
        %v2667 = vsub.f32 %v1165, %v2666
        %2668 = vmatmul.f32.gmra.mxu0 %v2667
        %v2669 = vpop.f32.mrf.mxu0
        %v2670 = vadd.f32 %v2610, %v2669
        %v2671 = vand.u32 %v1167, 4294901760
        %v2672 = vsub.f32 %v1167, %v2671
        %2673 = vmatmul.f32.gmra.mxu0 %v2672
        %v2674 = vpop.f32.mrf.mxu0
        %v2675 = vadd.f32 %v2614, %v2674
        %v2676 = vand.u32 %v1169, 4294901760
        %v2677 = vsub.f32 %v1169, %v2676
        %2678 = vmatmul.f32.gmra.mxu0 %v2677
        %v2679 = vpop.f32.mrf.mxu0
        %v2680 = vadd.f32 %v2618, %v2679
        %v2681 = vand.u32 %v1171, 4294901760
        %v2682 = vsub.f32 %v1171, %v2681
        %2683 = vmatmul.f32.gmra.mxu0 %v2682
        %v2684 = vpop.f32.mrf.mxu0
        %v2685 = vadd.f32 %v2622, %v2684
        %v2686 = vand.u32 %v1173, 4294901760
        %v2687 = vsub.f32 %v1173, %v2686
        %2688 = vmatmul.f32.gmra.mxu0 %v2687
        %v2689 = vpop.f32.mrf.mxu0
        %v2690 = vadd.f32 %v2626, %v2689
        %v2691 = vand.u32 %v1175, 4294901760
        %v2692 = vsub.f32 %v1175, %v2691
        %2693 = vmatmul.f32.gmra.mxu0 %v2692
        %v2694 = vpop.f32.mrf.mxu0
        %v2695 = vadd.f32 %v2630, %v2694
        %v2696 = vand.u32 %v1177, 4294901760
        %v2697 = vsub.f32 %v1177, %v2696
        %2698 = vmatmul.f32.gmra.mxu0 %v2697
        %v2699 = vpop.f32.mrf.mxu0
        %v2700 = vadd.f32 %v2634, %v2699
        %v2701 = vand.u32 %v2478, 4294901760
        %v2702 = vsub.f32 %v2478, %v2701
        %2703 = vmatmul.f32.gmra.mxu0 %v2702
        %v2704 = vpop.f32.mrf.mxu0
        %v2705 = vadd.f32 %v2638, %v2704
        %2706 = vdwg.mxu0
        %2707 = vmatpush.msra.mxu0 0.0
        %2708 = vmatpush.msra.mxu0 0.0
        %2709 = vmatpush.msra.mxu0 0.0
        %2710 = vmatpush.msra.mxu0 0.0
        %2711 = vmatpush.msra.mxu0 0.0
        %2712 = vmatpush.msra.mxu0 0.0
        %2713 = vmatpush.msra.mxu0 0.0
        %2714 = vmatpush.msra.mxu0 0.0
        %2715 = vmatpush.msra.mxu0 0.0
        %2716 = vmatpush.msra.mxu0 0.0
        %2717 = vmatpush.msra.mxu0 0.0
        %v2718 = vand.u32 %v2477, 4294901760
        %2719 = vmatpush.msra.mxu0 %v2718
        %v2720 = vand.u32 %v2476, 4294901760
        %2721 = vmatpush.msra.mxu0 %v2720
        %v2722 = vand.u32 %v2475, 4294901760
        %2723 = vmatpush.msra.mxu0 %v2722
        %v2724 = vand.u32 %v2474, 4294901760
        %2725 = vmatpush.msra.mxu0 %v2724
        %v2726 = vand.u32 %v2473, 4294901760
        %2727 = vmatpush.msra.mxu0 %v2726
        %v2728 = vand.u32 %v1165, 4294901760
        %v2729 = vsub.f32 %v1165, %v2728
        %v2730 = vand.u32 %v2729, 4294901760
        %2731 = vmatmul.f32.gmra.mxu0 %v2730
        %v2732 = vpop.f32.mrf.mxu0
        %v2733 = vadd.f32 %v2670, %v2732
        %v2734 = vand.u32 %v1167, 4294901760
        %v2735 = vsub.f32 %v1167, %v2734
        %v2736 = vand.u32 %v2735, 4294901760
        %2737 = vmatmul.f32.gmra.mxu0 %v2736
        %v2738 = vpop.f32.mrf.mxu0
        %v2739 = vadd.f32 %v2675, %v2738
        %v2740 = vand.u32 %v1169, 4294901760
        %v2741 = vsub.f32 %v1169, %v2740
        %v2742 = vand.u32 %v2741, 4294901760
        %2743 = vmatmul.f32.gmra.mxu0 %v2742
        %v2744 = vpop.f32.mrf.mxu0
        %v2745 = vadd.f32 %v2680, %v2744
        %v2746 = vand.u32 %v1171, 4294901760
        %v2747 = vsub.f32 %v1171, %v2746
        %v2748 = vand.u32 %v2747, 4294901760
        %2749 = vmatmul.f32.gmra.mxu0 %v2748
        %v2750 = vpop.f32.mrf.mxu0
        %v2751 = vadd.f32 %v2685, %v2750
        %v2752 = vand.u32 %v1173, 4294901760
        %v2753 = vsub.f32 %v1173, %v2752
        %v2754 = vand.u32 %v2753, 4294901760
        %2755 = vmatmul.f32.gmra.mxu0 %v2754
        %v2756 = vpop.f32.mrf.mxu0
        %v2757 = vadd.f32 %v2690, %v2756
        %v2758 = vand.u32 %v1175, 4294901760
        %v2759 = vsub.f32 %v1175, %v2758
        %v2760 = vand.u32 %v2759, 4294901760
        %2761 = vmatmul.f32.gmra.mxu0 %v2760
        %v2762 = vpop.f32.mrf.mxu0
        %v2763 = vadd.f32 %v2695, %v2762
        %v2764 = vand.u32 %v1177, 4294901760
        %v2765 = vsub.f32 %v1177, %v2764
        %v2766 = vand.u32 %v2765, 4294901760
        %2767 = vmatmul.f32.gmra.mxu0 %v2766
        %v2768 = vpop.f32.mrf.mxu0
        %v2769 = vadd.f32 %v2700, %v2768
        %v2770 = vand.u32 %v2478, 4294901760
        %v2771 = vsub.f32 %v2478, %v2770
        %v2772 = vand.u32 %v2771, 4294901760
        %2773 = vmatmul.f32.gmra.mxu0 %v2772
        %v2774 = vpop.f32.mrf.mxu0
        %v2775 = vadd.f32 %v2705, %v2774
        %2776 = vdwg.mxu0
        %2777 = vmatpush.msra.mxu0 0.0
        %2778 = vmatpush.msra.mxu0 0.0
        %2779 = vmatpush.msra.mxu0 0.0
        %2780 = vmatpush.msra.mxu0 0.0
        %2781 = vmatpush.msra.mxu0 0.0
        %2782 = vmatpush.msra.mxu0 0.0
        %2783 = vmatpush.msra.mxu0 0.0
        %2784 = vmatpush.msra.mxu0 0.0
        %2785 = vmatpush.msra.mxu0 0.0
        %2786 = vmatpush.msra.mxu0 0.0
        %2787 = vmatpush.msra.mxu0 0.0
        %v2788 = vand.u32 %v2477, 4294901760
        %v2789 = vsub.f32 %v2477, %v2788
        %v2790 = vand.u32 %v2789, 4294901760
        %2791 = vmatpush.msra.mxu0 %v2790
        %v2792 = vand.u32 %v2476, 4294901760
        %v2793 = vsub.f32 %v2476, %v2792
        %v2794 = vand.u32 %v2793, 4294901760
        %2795 = vmatpush.msra.mxu0 %v2794
        %v2796 = vand.u32 %v2475, 4294901760
        %v2797 = vsub.f32 %v2475, %v2796
        %v2798 = vand.u32 %v2797, 4294901760
        %2799 = vmatpush.msra.mxu0 %v2798
        %v2800 = vand.u32 %v2474, 4294901760
        %v2801 = vsub.f32 %v2474, %v2800
        %v2802 = vand.u32 %v2801, 4294901760
        %2803 = vmatpush.msra.mxu0 %v2802
        %v2804 = vand.u32 %v2473, 4294901760
        %v2805 = vsub.f32 %v2473, %v2804
        %v2806 = vand.u32 %v2805, 4294901760
        %2807 = vmatpush.msra.mxu0 %v2806
        %v2808 = vand.u32 %v1165, 4294901760
        %2809 = vmatmul.f32.gmra.mxu0 %v2808
        %v2810 = vpop.f32.mrf.mxu0
        %v2811 = vadd.f32 %v2733, %v2810
        %v2812 = vand.u32 %v1167, 4294901760
        %2813 = vmatmul.f32.gmra.mxu0 %v2812
        %v2814 = vpop.f32.mrf.mxu0
        %v2815 = vadd.f32 %v2739, %v2814
        %v2816 = vand.u32 %v1169, 4294901760
        %2817 = vmatmul.f32.gmra.mxu0 %v2816
        %v2818 = vpop.f32.mrf.mxu0
        %v2819 = vadd.f32 %v2745, %v2818
        %v2820 = vand.u32 %v1171, 4294901760
        %2821 = vmatmul.f32.gmra.mxu0 %v2820
        %v2822 = vpop.f32.mrf.mxu0
        %v2823 = vadd.f32 %v2751, %v2822
        %v2824 = vand.u32 %v1173, 4294901760
        %2825 = vmatmul.f32.gmra.mxu0 %v2824
        %v2826 = vpop.f32.mrf.mxu0
        %v2827 = vadd.f32 %v2757, %v2826
        %v2828 = vand.u32 %v1175, 4294901760
        %2829 = vmatmul.f32.gmra.mxu0 %v2828
        %v2830 = vpop.f32.mrf.mxu0
        %v2831 = vadd.f32 %v2763, %v2830
        %v2832 = vand.u32 %v1177, 4294901760
        %2833 = vmatmul.f32.gmra.mxu0 %v2832
        %v2834 = vpop.f32.mrf.mxu0
        %v2835 = vadd.f32 %v2769, %v2834
        %v2836 = vand.u32 %v2478, 4294901760
        %2837 = vmatmul.f32.gmra.mxu0 %v2836
        %v2838 = vpop.f32.mrf.mxu0
        %v2839 = vadd.f32 %v2775, %v2838
        %2840 = vdwg.mxu0
        %2841 = vmatpush.msra.mxu0 0.0
        %2842 = vmatpush.msra.mxu0 0.0
        %2843 = vmatpush.msra.mxu0 0.0
        %2844 = vmatpush.msra.mxu0 0.0
        %2845 = vmatpush.msra.mxu0 0.0
        %2846 = vmatpush.msra.mxu0 0.0
        %2847 = vmatpush.msra.mxu0 0.0
        %2848 = vmatpush.msra.mxu0 0.0
        %2849 = vmatpush.msra.mxu0 0.0
        %2850 = vmatpush.msra.mxu0 0.0
        %2851 = vmatpush.msra.mxu0 0.0
        %v2852 = vand.u32 %v2477, 4294901760
        %2853 = vmatpush.msra.mxu0 %v2852
        %v2854 = vand.u32 %v2476, 4294901760
        %2855 = vmatpush.msra.mxu0 %v2854
        %v2856 = vand.u32 %v2475, 4294901760
        %2857 = vmatpush.msra.mxu0 %v2856
        %v2858 = vand.u32 %v2474, 4294901760
        %2859 = vmatpush.msra.mxu0 %v2858
        %v2860 = vand.u32 %v2473, 4294901760
        %2861 = vmatpush.msra.mxu0 %v2860
        %v2862 = vand.u32 %v1165, 4294901760
        %2863 = vmatmul.f32.gmra.mxu0 %v2862
        %v2864 = vpop.f32.mrf.mxu0
        %v2865 = vadd.f32 %v2811, %v2864
        %v2866 = vand.u32 %v1167, 4294901760
        %2867 = vmatmul.f32.gmra.mxu0 %v2866
        %v2868 = vpop.f32.mrf.mxu0
        %v2869 = vadd.f32 %v2815, %v2868
        %v2870 = vand.u32 %v1169, 4294901760
        %2871 = vmatmul.f32.gmra.mxu0 %v2870
        %v2872 = vpop.f32.mrf.mxu0
        %v2873 = vadd.f32 %v2819, %v2872
        %v2874 = vand.u32 %v1171, 4294901760
        %2875 = vmatmul.f32.gmra.mxu0 %v2874
        %v2876 = vpop.f32.mrf.mxu0
        %v2877 = vadd.f32 %v2823, %v2876
        %v2878 = vand.u32 %v1173, 4294901760
        %2879 = vmatmul.f32.gmra.mxu0 %v2878
        %v2880 = vpop.f32.mrf.mxu0
        %v2881 = vadd.f32 %v2827, %v2880
        %v2882 = vand.u32 %v1175, 4294901760
        %2883 = vmatmul.f32.gmra.mxu0 %v2882
        %v2884 = vpop.f32.mrf.mxu0
        %v2885 = vadd.f32 %v2831, %v2884
        %v2886 = vand.u32 %v1177, 4294901760
        %2887 = vmatmul.f32.gmra.mxu0 %v2886
        %v2888 = vpop.f32.mrf.mxu0
        %v2889 = vadd.f32 %v2835, %v2888
        %v2890 = vand.u32 %v2478, 4294901760
        %2891 = vmatmul.f32.gmra.mxu0 %v2890
        %v2892 = vpop.f32.mrf.mxu0
        %v2893 = vadd.f32 %v2839, %v2892
        %2894 = vdwg.mxu0
        %v2895 = vadd.f32 %v2461, %v2865
        %v2896 = vadd.f32 %v2462, %v2869
        %v2897 = vadd.f32 %v2463, %v2873
        %v2898 = vadd.f32 %v2464, %v2877
        %v2899 = vadd.f32 %v2465, %v2881
        %v2900 = vadd.f32 %v2466, %v2885
        %v2901 = vadd.f32 %v2467, %v2889
        %v2902 = vadd.f32 %v2468, %v2893
        %s2903 = scalar_lea.vmem %s1, 240
        %v2904 = vld [vmem:[%s2903] sm:$0xff]
        %v2905 = vld [vmem:[%s2903 + $0x8] sm:$0xff]
        %v2906 = vld [vmem:[%s2903 + $0x10] sm:$0xff]
        %v2907 = vld [vmem:[%s2903 + $0x18] sm:$0xff]
        %v2908 = vld [vmem:[%s2903 + $0x20] sm:$0xff]
        %v2910 = vsel %vm269, %v214, 0
        %2912 = vmatpush.msra.mxu0 0.0
        %2913 = vmatpush.msra.mxu0 0.0
        %2914 = vmatpush.msra.mxu0 0.0
        %2915 = vmatpush.msra.mxu0 0.0
        %2916 = vmatpush.msra.mxu0 0.0
        %2917 = vmatpush.msra.mxu0 0.0
        %2918 = vmatpush.msra.mxu0 0.0
        %2919 = vmatpush.msra.mxu0 0.0
        %2920 = vmatpush.msra.mxu0 0.0
        %2921 = vmatpush.msra.mxu0 0.0
        %2922 = vmatpush.msra.mxu0 0.0
        %v2923 = vand.u32 %v2908, 4294901760
        %2924 = vmatpush.msra.mxu0 %v2923
        %v2925 = vand.u32 %v2907, 4294901760
        %2926 = vmatpush.msra.mxu0 %v2925
        %v2927 = vand.u32 %v2906, 4294901760
        %2928 = vmatpush.msra.mxu0 %v2927
        %v2929 = vand.u32 %v2905, 4294901760
        %2930 = vmatpush.msra.mxu0 %v2929
        %v2931 = vand.u32 %v2904, 4294901760
        %2932 = vmatpush.msra.mxu0 %v2931
        %v2933 = vand.u32 %v705, 4294901760
        %v2934 = vsub.f32 %v705, %v2933
        %v2935 = vand.u32 %v2934, 4294901760
        %v2936 = vsub.f32 %v2934, %v2935
        %v2937 = vand.u32 %v2936, 4294901760
        %2938 = vmatmul.f32.gmra.mxu0 %v2937
        %v2939 = vpop.f32.mrf.mxu0
        %v2940 = vadd.f32 0.0, %v2939
        %v2941 = vand.u32 %v707, 4294901760
        %v2942 = vsub.f32 %v707, %v2941
        %v2943 = vand.u32 %v2942, 4294901760
        %v2944 = vsub.f32 %v2942, %v2943
        %v2945 = vand.u32 %v2944, 4294901760
        %2946 = vmatmul.f32.gmra.mxu0 %v2945
        %v2947 = vpop.f32.mrf.mxu0
        %v2948 = vadd.f32 0.0, %v2947
        %v2949 = vand.u32 %v709, 4294901760
        %v2950 = vsub.f32 %v709, %v2949
        %v2951 = vand.u32 %v2950, 4294901760
        %v2952 = vsub.f32 %v2950, %v2951
        %v2953 = vand.u32 %v2952, 4294901760
        %2954 = vmatmul.f32.gmra.mxu0 %v2953
        %v2955 = vpop.f32.mrf.mxu0
        %v2956 = vadd.f32 0.0, %v2955
        %v2957 = vand.u32 %v711, 4294901760
        %v2958 = vsub.f32 %v711, %v2957
        %v2959 = vand.u32 %v2958, 4294901760
        %v2960 = vsub.f32 %v2958, %v2959
        %v2961 = vand.u32 %v2960, 4294901760
        %2962 = vmatmul.f32.gmra.mxu0 %v2961
        %v2963 = vpop.f32.mrf.mxu0
        %v2964 = vadd.f32 0.0, %v2963
        %v2965 = vand.u32 %v713, 4294901760
        %v2966 = vsub.f32 %v713, %v2965
        %v2967 = vand.u32 %v2966, 4294901760
        %v2968 = vsub.f32 %v2966, %v2967
        %v2969 = vand.u32 %v2968, 4294901760
        %2970 = vmatmul.f32.gmra.mxu0 %v2969
        %v2971 = vpop.f32.mrf.mxu0
        %v2972 = vadd.f32 0.0, %v2971
        %v2973 = vand.u32 %v715, 4294901760
        %v2974 = vsub.f32 %v715, %v2973
        %v2975 = vand.u32 %v2974, 4294901760
        %v2976 = vsub.f32 %v2974, %v2975
        %v2977 = vand.u32 %v2976, 4294901760
        %2978 = vmatmul.f32.gmra.mxu0 %v2977
        %v2979 = vpop.f32.mrf.mxu0
        %v2980 = vadd.f32 0.0, %v2979
        %v2981 = vand.u32 %v1609, 4294901760
        %v2982 = vsub.f32 %v1609, %v2981
        %v2983 = vand.u32 %v2982, 4294901760
        %v2984 = vsub.f32 %v2982, %v2983
        %v2985 = vand.u32 %v2984, 4294901760
        %2986 = vmatmul.f32.gmra.mxu0 %v2985
        %v2987 = vpop.f32.mrf.mxu0
        %v2988 = vadd.f32 0.0, %v2987
        %v2989 = vand.u32 %v2910, 4294901760
        %v2990 = vsub.f32 %v2910, %v2989
        %v2991 = vand.u32 %v2990, 4294901760
        %v2992 = vsub.f32 %v2990, %v2991
        %v2993 = vand.u32 %v2992, 4294901760
        %2994 = vmatmul.f32.gmra.mxu0 %v2993
        %v2995 = vpop.f32.mrf.mxu0
        %v2996 = vadd.f32 0.0, %v2995
        %2997 = vdwg.mxu0
        %2998 = vmatpush.msra.mxu0 0.0
        %2999 = vmatpush.msra.mxu0 0.0
        %3000 = vmatpush.msra.mxu0 0.0
        %3001 = vmatpush.msra.mxu0 0.0
        %3002 = vmatpush.msra.mxu0 0.0
        %3003 = vmatpush.msra.mxu0 0.0
        %3004 = vmatpush.msra.mxu0 0.0
        %3005 = vmatpush.msra.mxu0 0.0
        %3006 = vmatpush.msra.mxu0 0.0
        %3007 = vmatpush.msra.mxu0 0.0
        %3008 = vmatpush.msra.mxu0 0.0
        %v3009 = vand.u32 %v2908, 4294901760
        %v3010 = vsub.f32 %v2908, %v3009
        %v3011 = vand.u32 %v3010, 4294901760
        %v3012 = vsub.f32 %v3010, %v3011
        %v3013 = vand.u32 %v3012, 4294901760
        %3014 = vmatpush.msra.mxu0 %v3013
        %v3015 = vand.u32 %v2907, 4294901760
        %v3016 = vsub.f32 %v2907, %v3015
        %v3017 = vand.u32 %v3016, 4294901760
        %v3018 = vsub.f32 %v3016, %v3017
        %v3019 = vand.u32 %v3018, 4294901760
        %3020 = vmatpush.msra.mxu0 %v3019
        %v3021 = vand.u32 %v2906, 4294901760
        %v3022 = vsub.f32 %v2906, %v3021
        %v3023 = vand.u32 %v3022, 4294901760
        %v3024 = vsub.f32 %v3022, %v3023
        %v3025 = vand.u32 %v3024, 4294901760
        %3026 = vmatpush.msra.mxu0 %v3025
        %v3027 = vand.u32 %v2905, 4294901760
        %v3028 = vsub.f32 %v2905, %v3027
        %v3029 = vand.u32 %v3028, 4294901760
        %v3030 = vsub.f32 %v3028, %v3029
        %v3031 = vand.u32 %v3030, 4294901760
        %3032 = vmatpush.msra.mxu0 %v3031
        %v3033 = vand.u32 %v2904, 4294901760
        %v3034 = vsub.f32 %v2904, %v3033
        %v3035 = vand.u32 %v3034, 4294901760
        %v3036 = vsub.f32 %v3034, %v3035
        %v3037 = vand.u32 %v3036, 4294901760
        %3038 = vmatpush.msra.mxu0 %v3037
        %v3039 = vand.u32 %v705, 4294901760
        %3040 = vmatmul.f32.gmra.mxu0 %v3039
        %v3041 = vpop.f32.mrf.mxu0
        %v3042 = vadd.f32 %v2940, %v3041
        %v3043 = vand.u32 %v707, 4294901760
        %3044 = vmatmul.f32.gmra.mxu0 %v3043
        %v3045 = vpop.f32.mrf.mxu0
        %v3046 = vadd.f32 %v2948, %v3045
        %v3047 = vand.u32 %v709, 4294901760
        %3048 = vmatmul.f32.gmra.mxu0 %v3047
        %v3049 = vpop.f32.mrf.mxu0
        %v3050 = vadd.f32 %v2956, %v3049
        %v3051 = vand.u32 %v711, 4294901760
        %3052 = vmatmul.f32.gmra.mxu0 %v3051
        %v3053 = vpop.f32.mrf.mxu0
        %v3054 = vadd.f32 %v2964, %v3053
        %v3055 = vand.u32 %v713, 4294901760
        %3056 = vmatmul.f32.gmra.mxu0 %v3055
        %v3057 = vpop.f32.mrf.mxu0
        %v3058 = vadd.f32 %v2972, %v3057
        %v3059 = vand.u32 %v715, 4294901760
        %3060 = vmatmul.f32.gmra.mxu0 %v3059
        %v3061 = vpop.f32.mrf.mxu0
        %v3062 = vadd.f32 %v2980, %v3061
        %v3063 = vand.u32 %v1609, 4294901760
        %3064 = vmatmul.f32.gmra.mxu0 %v3063
        %v3065 = vpop.f32.mrf.mxu0
        %v3066 = vadd.f32 %v2988, %v3065
        %v3067 = vand.u32 %v2910, 4294901760
        %3068 = vmatmul.f32.gmra.mxu0 %v3067
        %v3069 = vpop.f32.mrf.mxu0
        %v3070 = vadd.f32 %v2996, %v3069
        %3071 = vdwg.mxu0
        %3072 = vmatpush.msra.mxu0 0.0
        %3073 = vmatpush.msra.mxu0 0.0
        %3074 = vmatpush.msra.mxu0 0.0
        %3075 = vmatpush.msra.mxu0 0.0
        %3076 = vmatpush.msra.mxu0 0.0
        %3077 = vmatpush.msra.mxu0 0.0
        %3078 = vmatpush.msra.mxu0 0.0
        %3079 = vmatpush.msra.mxu0 0.0
        %3080 = vmatpush.msra.mxu0 0.0
        %3081 = vmatpush.msra.mxu0 0.0
        %3082 = vmatpush.msra.mxu0 0.0
        %v3083 = vand.u32 %v2908, 4294901760
        %v3084 = vsub.f32 %v2908, %v3083
        %3085 = vmatpush.msra.mxu0 %v3084
        %v3086 = vand.u32 %v2907, 4294901760
        %v3087 = vsub.f32 %v2907, %v3086
        %3088 = vmatpush.msra.mxu0 %v3087
        %v3089 = vand.u32 %v2906, 4294901760
        %v3090 = vsub.f32 %v2906, %v3089
        %3091 = vmatpush.msra.mxu0 %v3090
        %v3092 = vand.u32 %v2905, 4294901760
        %v3093 = vsub.f32 %v2905, %v3092
        %3094 = vmatpush.msra.mxu0 %v3093
        %v3095 = vand.u32 %v2904, 4294901760
        %v3096 = vsub.f32 %v2904, %v3095
        %3097 = vmatpush.msra.mxu0 %v3096
        %v3098 = vand.u32 %v705, 4294901760
        %v3099 = vsub.f32 %v705, %v3098
        %3100 = vmatmul.f32.gmra.mxu0 %v3099
        %v3101 = vpop.f32.mrf.mxu0
        %v3102 = vadd.f32 %v3042, %v3101
        %v3103 = vand.u32 %v707, 4294901760
        %v3104 = vsub.f32 %v707, %v3103
        %3105 = vmatmul.f32.gmra.mxu0 %v3104
        %v3106 = vpop.f32.mrf.mxu0
        %v3107 = vadd.f32 %v3046, %v3106
        %v3108 = vand.u32 %v709, 4294901760
        %v3109 = vsub.f32 %v709, %v3108
        %3110 = vmatmul.f32.gmra.mxu0 %v3109
        %v3111 = vpop.f32.mrf.mxu0
        %v3112 = vadd.f32 %v3050, %v3111
        %v3113 = vand.u32 %v711, 4294901760
        %v3114 = vsub.f32 %v711, %v3113
        %3115 = vmatmul.f32.gmra.mxu0 %v3114
        %v3116 = vpop.f32.mrf.mxu0
        %v3117 = vadd.f32 %v3054, %v3116
        %v3118 = vand.u32 %v713, 4294901760
        %v3119 = vsub.f32 %v713, %v3118
        %3120 = vmatmul.f32.gmra.mxu0 %v3119
        %v3121 = vpop.f32.mrf.mxu0
        %v3122 = vadd.f32 %v3058, %v3121
        %v3123 = vand.u32 %v715, 4294901760
        %v3124 = vsub.f32 %v715, %v3123
        %3125 = vmatmul.f32.gmra.mxu0 %v3124
        %v3126 = vpop.f32.mrf.mxu0
        %v3127 = vadd.f32 %v3062, %v3126
        %v3128 = vand.u32 %v1609, 4294901760
        %v3129 = vsub.f32 %v1609, %v3128
        %3130 = vmatmul.f32.gmra.mxu0 %v3129
        %v3131 = vpop.f32.mrf.mxu0
        %v3132 = vadd.f32 %v3066, %v3131
        %v3133 = vand.u32 %v2910, 4294901760
        %v3134 = vsub.f32 %v2910, %v3133
        %3135 = vmatmul.f32.gmra.mxu0 %v3134
        %v3136 = vpop.f32.mrf.mxu0
        %v3137 = vadd.f32 %v3070, %v3136
        %3138 = vdwg.mxu0
        %3139 = vmatpush.msra.mxu0 0.0
        %3140 = vmatpush.msra.mxu0 0.0
        %3141 = vmatpush.msra.mxu0 0.0
        %3142 = vmatpush.msra.mxu0 0.0
        %3143 = vmatpush.msra.mxu0 0.0
        %3144 = vmatpush.msra.mxu0 0.0
        %3145 = vmatpush.msra.mxu0 0.0
        %3146 = vmatpush.msra.mxu0 0.0
        %3147 = vmatpush.msra.mxu0 0.0
        %3148 = vmatpush.msra.mxu0 0.0
        %3149 = vmatpush.msra.mxu0 0.0
        %v3150 = vand.u32 %v2908, 4294901760
        %3151 = vmatpush.msra.mxu0 %v3150
        %v3152 = vand.u32 %v2907, 4294901760
        %3153 = vmatpush.msra.mxu0 %v3152
        %v3154 = vand.u32 %v2906, 4294901760
        %3155 = vmatpush.msra.mxu0 %v3154
        %v3156 = vand.u32 %v2905, 4294901760
        %3157 = vmatpush.msra.mxu0 %v3156
        %v3158 = vand.u32 %v2904, 4294901760
        %3159 = vmatpush.msra.mxu0 %v3158
        %v3160 = vand.u32 %v705, 4294901760
        %v3161 = vsub.f32 %v705, %v3160
        %v3162 = vand.u32 %v3161, 4294901760
        %3163 = vmatmul.f32.gmra.mxu0 %v3162
        %v3164 = vpop.f32.mrf.mxu0
        %v3165 = vadd.f32 %v3102, %v3164
        %v3166 = vand.u32 %v707, 4294901760
        %v3167 = vsub.f32 %v707, %v3166
        %v3168 = vand.u32 %v3167, 4294901760
        %3169 = vmatmul.f32.gmra.mxu0 %v3168
        %v3170 = vpop.f32.mrf.mxu0
        %v3171 = vadd.f32 %v3107, %v3170
        %v3172 = vand.u32 %v709, 4294901760
        %v3173 = vsub.f32 %v709, %v3172
        %v3174 = vand.u32 %v3173, 4294901760
        %3175 = vmatmul.f32.gmra.mxu0 %v3174
        %v3176 = vpop.f32.mrf.mxu0
        %v3177 = vadd.f32 %v3112, %v3176
        %v3178 = vand.u32 %v711, 4294901760
        %v3179 = vsub.f32 %v711, %v3178
        %v3180 = vand.u32 %v3179, 4294901760
        %3181 = vmatmul.f32.gmra.mxu0 %v3180
        %v3182 = vpop.f32.mrf.mxu0
        %v3183 = vadd.f32 %v3117, %v3182
        %v3184 = vand.u32 %v713, 4294901760
        %v3185 = vsub.f32 %v713, %v3184
        %v3186 = vand.u32 %v3185, 4294901760
        %3187 = vmatmul.f32.gmra.mxu0 %v3186
        %v3188 = vpop.f32.mrf.mxu0
        %v3189 = vadd.f32 %v3122, %v3188
        %v3190 = vand.u32 %v715, 4294901760
        %v3191 = vsub.f32 %v715, %v3190
        %v3192 = vand.u32 %v3191, 4294901760
        %3193 = vmatmul.f32.gmra.mxu0 %v3192
        %v3194 = vpop.f32.mrf.mxu0
        %v3195 = vadd.f32 %v3127, %v3194
        %v3196 = vand.u32 %v1609, 4294901760
        %v3197 = vsub.f32 %v1609, %v3196
        %v3198 = vand.u32 %v3197, 4294901760
        %3199 = vmatmul.f32.gmra.mxu0 %v3198
        %v3200 = vpop.f32.mrf.mxu0
        %v3201 = vadd.f32 %v3132, %v3200
        %v3202 = vand.u32 %v2910, 4294901760
        %v3203 = vsub.f32 %v2910, %v3202
        %v3204 = vand.u32 %v3203, 4294901760
        %3205 = vmatmul.f32.gmra.mxu0 %v3204
        %v3206 = vpop.f32.mrf.mxu0
        %v3207 = vadd.f32 %v3137, %v3206
        %3208 = vdwg.mxu0
        %3209 = vmatpush.msra.mxu0 0.0
        %3210 = vmatpush.msra.mxu0 0.0
        %3211 = vmatpush.msra.mxu0 0.0
        %3212 = vmatpush.msra.mxu0 0.0
        %3213 = vmatpush.msra.mxu0 0.0
        %3214 = vmatpush.msra.mxu0 0.0
        %3215 = vmatpush.msra.mxu0 0.0
        %3216 = vmatpush.msra.mxu0 0.0
        %3217 = vmatpush.msra.mxu0 0.0
        %3218 = vmatpush.msra.mxu0 0.0
        %3219 = vmatpush.msra.mxu0 0.0
        %v3220 = vand.u32 %v2908, 4294901760
        %v3221 = vsub.f32 %v2908, %v3220
        %v3222 = vand.u32 %v3221, 4294901760
        %3223 = vmatpush.msra.mxu0 %v3222
        %v3224 = vand.u32 %v2907, 4294901760
        %v3225 = vsub.f32 %v2907, %v3224
        %v3226 = vand.u32 %v3225, 4294901760
        %3227 = vmatpush.msra.mxu0 %v3226
        %v3228 = vand.u32 %v2906, 4294901760
        %v3229 = vsub.f32 %v2906, %v3228
        %v3230 = vand.u32 %v3229, 4294901760
        %3231 = vmatpush.msra.mxu0 %v3230
        %v3232 = vand.u32 %v2905, 4294901760
        %v3233 = vsub.f32 %v2905, %v3232
        %v3234 = vand.u32 %v3233, 4294901760
        %3235 = vmatpush.msra.mxu0 %v3234
        %v3236 = vand.u32 %v2904, 4294901760
        %v3237 = vsub.f32 %v2904, %v3236
        %v3238 = vand.u32 %v3237, 4294901760
        %3239 = vmatpush.msra.mxu0 %v3238
        %v3240 = vand.u32 %v705, 4294901760
        %3241 = vmatmul.f32.gmra.mxu0 %v3240
        %v3242 = vpop.f32.mrf.mxu0
        %v3243 = vadd.f32 %v3165, %v3242
        %v3244 = vand.u32 %v707, 4294901760
        %3245 = vmatmul.f32.gmra.mxu0 %v3244
        %v3246 = vpop.f32.mrf.mxu0
        %v3247 = vadd.f32 %v3171, %v3246
        %v3248 = vand.u32 %v709, 4294901760
        %3249 = vmatmul.f32.gmra.mxu0 %v3248
        %v3250 = vpop.f32.mrf.mxu0
        %v3251 = vadd.f32 %v3177, %v3250
        %v3252 = vand.u32 %v711, 4294901760
        %3253 = vmatmul.f32.gmra.mxu0 %v3252
        %v3254 = vpop.f32.mrf.mxu0
        %v3255 = vadd.f32 %v3183, %v3254
        %v3256 = vand.u32 %v713, 4294901760
        %3257 = vmatmul.f32.gmra.mxu0 %v3256
        %v3258 = vpop.f32.mrf.mxu0
        %v3259 = vadd.f32 %v3189, %v3258
        %v3260 = vand.u32 %v715, 4294901760
        %3261 = vmatmul.f32.gmra.mxu0 %v3260
        %v3262 = vpop.f32.mrf.mxu0
        %v3263 = vadd.f32 %v3195, %v3262
        %v3264 = vand.u32 %v1609, 4294901760
        %3265 = vmatmul.f32.gmra.mxu0 %v3264
        %v3266 = vpop.f32.mrf.mxu0
        %v3267 = vadd.f32 %v3201, %v3266
        %v3268 = vand.u32 %v2910, 4294901760
        %3269 = vmatmul.f32.gmra.mxu0 %v3268
        %v3270 = vpop.f32.mrf.mxu0
        %v3271 = vadd.f32 %v3207, %v3270
        %3272 = vdwg.mxu0
        %3273 = vmatpush.msra.mxu0 0.0
        %3274 = vmatpush.msra.mxu0 0.0
        %3275 = vmatpush.msra.mxu0 0.0
        %3276 = vmatpush.msra.mxu0 0.0
        %3277 = vmatpush.msra.mxu0 0.0
        %3278 = vmatpush.msra.mxu0 0.0
        %3279 = vmatpush.msra.mxu0 0.0
        %3280 = vmatpush.msra.mxu0 0.0
        %3281 = vmatpush.msra.mxu0 0.0
        %3282 = vmatpush.msra.mxu0 0.0
        %3283 = vmatpush.msra.mxu0 0.0
        %v3284 = vand.u32 %v2908, 4294901760
        %3285 = vmatpush.msra.mxu0 %v3284
        %v3286 = vand.u32 %v2907, 4294901760
        %3287 = vmatpush.msra.mxu0 %v3286
        %v3288 = vand.u32 %v2906, 4294901760
        %3289 = vmatpush.msra.mxu0 %v3288
        %v3290 = vand.u32 %v2905, 4294901760
        %3291 = vmatpush.msra.mxu0 %v3290
        %v3292 = vand.u32 %v2904, 4294901760
        %3293 = vmatpush.msra.mxu0 %v3292
        %v3294 = vand.u32 %v705, 4294901760
        %3295 = vmatmul.f32.gmra.mxu0 %v3294
        %v3296 = vpop.f32.mrf.mxu0
        %v3297 = vadd.f32 %v3243, %v3296
        %v3298 = vand.u32 %v707, 4294901760
        %3299 = vmatmul.f32.gmra.mxu0 %v3298
        %v3300 = vpop.f32.mrf.mxu0
        %v3301 = vadd.f32 %v3247, %v3300
        %v3302 = vand.u32 %v709, 4294901760
        %3303 = vmatmul.f32.gmra.mxu0 %v3302
        %v3304 = vpop.f32.mrf.mxu0
        %v3305 = vadd.f32 %v3251, %v3304
        %v3306 = vand.u32 %v711, 4294901760
        %3307 = vmatmul.f32.gmra.mxu0 %v3306
        %v3308 = vpop.f32.mrf.mxu0
        %v3309 = vadd.f32 %v3255, %v3308
        %v3310 = vand.u32 %v713, 4294901760
        %3311 = vmatmul.f32.gmra.mxu0 %v3310
        %v3312 = vpop.f32.mrf.mxu0
        %v3313 = vadd.f32 %v3259, %v3312
        %v3314 = vand.u32 %v715, 4294901760
        %3315 = vmatmul.f32.gmra.mxu0 %v3314
        %v3316 = vpop.f32.mrf.mxu0
        %v3317 = vadd.f32 %v3263, %v3316
        %v3318 = vand.u32 %v1609, 4294901760
        %3319 = vmatmul.f32.gmra.mxu0 %v3318
        %v3320 = vpop.f32.mrf.mxu0
        %v3321 = vadd.f32 %v3267, %v3320
        %v3322 = vand.u32 %v2910, 4294901760
        %3323 = vmatmul.f32.gmra.mxu0 %v3322
        %v3324 = vpop.f32.mrf.mxu0
        %v3325 = vadd.f32 %v3271, %v3324
        %3326 = vdwg.mxu0
        %v3327 = vadd.f32 %v2895, %v3297
        %v3328 = vadd.f32 %v2896, %v3301
        %v3329 = vadd.f32 %v2897, %v3305
        %v3330 = vadd.f32 %v2898, %v3309
        %v3331 = vadd.f32 %v2899, %v3313
        %v3332 = vadd.f32 %v2900, %v3317
        %v3333 = vadd.f32 %v2901, %v3321
        %v3334 = vadd.f32 %v2902, %v3325
        %v3336 = vrot.slane %v214, 1
        %v3337 = vrot.slane %v215, 1
        %v3338 = vsel %vm238, %v3336, %v3337
        %s3339 = scalar_lea.vmem %s1, 280
        %v3340 = vld [vmem:[%s3339] sm:$0xff]
        %v3341 = vld [vmem:[%s3339 + $0x8] sm:$0xff]
        %v3342 = vld [vmem:[%s3339 + $0x10] sm:$0xff]
        %v3343 = vld [vmem:[%s3339 + $0x18] sm:$0xff]
        %v3344 = vld [vmem:[%s3339 + $0x20] sm:$0xff]
        %v3345 = vsel %vm269, %v3338, 0
        %3347 = vmatpush.msra.mxu0 0.0
        %3348 = vmatpush.msra.mxu0 0.0
        %3349 = vmatpush.msra.mxu0 0.0
        %3350 = vmatpush.msra.mxu0 0.0
        %3351 = vmatpush.msra.mxu0 0.0
        %3352 = vmatpush.msra.mxu0 0.0
        %3353 = vmatpush.msra.mxu0 0.0
        %3354 = vmatpush.msra.mxu0 0.0
        %3355 = vmatpush.msra.mxu0 0.0
        %3356 = vmatpush.msra.mxu0 0.0
        %3357 = vmatpush.msra.mxu0 0.0
        %v3358 = vand.u32 %v3344, 4294901760
        %3359 = vmatpush.msra.mxu0 %v3358
        %v3360 = vand.u32 %v3343, 4294901760
        %3361 = vmatpush.msra.mxu0 %v3360
        %v3362 = vand.u32 %v3342, 4294901760
        %3363 = vmatpush.msra.mxu0 %v3362
        %v3364 = vand.u32 %v3341, 4294901760
        %3365 = vmatpush.msra.mxu0 %v3364
        %v3366 = vand.u32 %v3340, 4294901760
        %3367 = vmatpush.msra.mxu0 %v3366
        %v3368 = vand.u32 %v274, 4294901760
        %v3369 = vsub.f32 %v274, %v3368
        %v3370 = vand.u32 %v3369, 4294901760
        %v3371 = vsub.f32 %v3369, %v3370
        %v3372 = vand.u32 %v3371, 4294901760
        %3373 = vmatmul.f32.gmra.mxu0 %v3372
        %v3374 = vpop.f32.mrf.mxu0
        %v3375 = vadd.f32 0.0, %v3374
        %v3376 = vand.u32 %v276, 4294901760
        %v3377 = vsub.f32 %v276, %v3376
        %v3378 = vand.u32 %v3377, 4294901760
        %v3379 = vsub.f32 %v3377, %v3378
        %v3380 = vand.u32 %v3379, 4294901760
        %3381 = vmatmul.f32.gmra.mxu0 %v3380
        %v3382 = vpop.f32.mrf.mxu0
        %v3383 = vadd.f32 0.0, %v3382
        %v3384 = vand.u32 %v278, 4294901760
        %v3385 = vsub.f32 %v278, %v3384
        %v3386 = vand.u32 %v3385, 4294901760
        %v3387 = vsub.f32 %v3385, %v3386
        %v3388 = vand.u32 %v3387, 4294901760
        %3389 = vmatmul.f32.gmra.mxu0 %v3388
        %v3390 = vpop.f32.mrf.mxu0
        %v3391 = vadd.f32 0.0, %v3390
        %v3392 = vand.u32 %v280, 4294901760
        %v3393 = vsub.f32 %v280, %v3392
        %v3394 = vand.u32 %v3393, 4294901760
        %v3395 = vsub.f32 %v3393, %v3394
        %v3396 = vand.u32 %v3395, 4294901760
        %3397 = vmatmul.f32.gmra.mxu0 %v3396
        %v3398 = vpop.f32.mrf.mxu0
        %v3399 = vadd.f32 0.0, %v3398
        %v3400 = vand.u32 %v282, 4294901760
        %v3401 = vsub.f32 %v282, %v3400
        %v3402 = vand.u32 %v3401, 4294901760
        %v3403 = vsub.f32 %v3401, %v3402
        %v3404 = vand.u32 %v3403, 4294901760
        %3405 = vmatmul.f32.gmra.mxu0 %v3404
        %v3406 = vpop.f32.mrf.mxu0
        %v3407 = vadd.f32 0.0, %v3406
        %v3408 = vand.u32 %v284, 4294901760
        %v3409 = vsub.f32 %v284, %v3408
        %v3410 = vand.u32 %v3409, 4294901760
        %v3411 = vsub.f32 %v3409, %v3410
        %v3412 = vand.u32 %v3411, 4294901760
        %3413 = vmatmul.f32.gmra.mxu0 %v3412
        %v3414 = vpop.f32.mrf.mxu0
        %v3415 = vadd.f32 0.0, %v3414
        %v3416 = vand.u32 %v2044, 4294901760
        %v3417 = vsub.f32 %v2044, %v3416
        %v3418 = vand.u32 %v3417, 4294901760
        %v3419 = vsub.f32 %v3417, %v3418
        %v3420 = vand.u32 %v3419, 4294901760
        %3421 = vmatmul.f32.gmra.mxu0 %v3420
        %v3422 = vpop.f32.mrf.mxu0
        %v3423 = vadd.f32 0.0, %v3422
        %v3424 = vand.u32 %v3345, 4294901760
        %v3425 = vsub.f32 %v3345, %v3424
        %v3426 = vand.u32 %v3425, 4294901760
        %v3427 = vsub.f32 %v3425, %v3426
        %v3428 = vand.u32 %v3427, 4294901760
        %3429 = vmatmul.f32.gmra.mxu0 %v3428
        %v3430 = vpop.f32.mrf.mxu0
        %v3431 = vadd.f32 0.0, %v3430
        %3432 = vdwg.mxu0
        %3433 = vmatpush.msra.mxu0 0.0
        %3434 = vmatpush.msra.mxu0 0.0
        %3435 = vmatpush.msra.mxu0 0.0
        %3436 = vmatpush.msra.mxu0 0.0
        %3437 = vmatpush.msra.mxu0 0.0
        %3438 = vmatpush.msra.mxu0 0.0
        %3439 = vmatpush.msra.mxu0 0.0
        %3440 = vmatpush.msra.mxu0 0.0
        %3441 = vmatpush.msra.mxu0 0.0
        %3442 = vmatpush.msra.mxu0 0.0
        %3443 = vmatpush.msra.mxu0 0.0
        %v3444 = vand.u32 %v3344, 4294901760
        %v3445 = vsub.f32 %v3344, %v3444
        %v3446 = vand.u32 %v3445, 4294901760
        %v3447 = vsub.f32 %v3445, %v3446
        %v3448 = vand.u32 %v3447, 4294901760
        %3449 = vmatpush.msra.mxu0 %v3448
        %v3450 = vand.u32 %v3343, 4294901760
        %v3451 = vsub.f32 %v3343, %v3450
        %v3452 = vand.u32 %v3451, 4294901760
        %v3453 = vsub.f32 %v3451, %v3452
        %v3454 = vand.u32 %v3453, 4294901760
        %3455 = vmatpush.msra.mxu0 %v3454
        %v3456 = vand.u32 %v3342, 4294901760
        %v3457 = vsub.f32 %v3342, %v3456
        %v3458 = vand.u32 %v3457, 4294901760
        %v3459 = vsub.f32 %v3457, %v3458
        %v3460 = vand.u32 %v3459, 4294901760
        %3461 = vmatpush.msra.mxu0 %v3460
        %v3462 = vand.u32 %v3341, 4294901760
        %v3463 = vsub.f32 %v3341, %v3462
        %v3464 = vand.u32 %v3463, 4294901760
        %v3465 = vsub.f32 %v3463, %v3464
        %v3466 = vand.u32 %v3465, 4294901760
        %3467 = vmatpush.msra.mxu0 %v3466
        %v3468 = vand.u32 %v3340, 4294901760
        %v3469 = vsub.f32 %v3340, %v3468
        %v3470 = vand.u32 %v3469, 4294901760
        %v3471 = vsub.f32 %v3469, %v3470
        %v3472 = vand.u32 %v3471, 4294901760
        %3473 = vmatpush.msra.mxu0 %v3472
        %v3474 = vand.u32 %v274, 4294901760
        %3475 = vmatmul.f32.gmra.mxu0 %v3474
        %v3476 = vpop.f32.mrf.mxu0
        %v3477 = vadd.f32 %v3375, %v3476
        %v3478 = vand.u32 %v276, 4294901760
        %3479 = vmatmul.f32.gmra.mxu0 %v3478
        %v3480 = vpop.f32.mrf.mxu0
        %v3481 = vadd.f32 %v3383, %v3480
        %v3482 = vand.u32 %v278, 4294901760
        %3483 = vmatmul.f32.gmra.mxu0 %v3482
        %v3484 = vpop.f32.mrf.mxu0
        %v3485 = vadd.f32 %v3391, %v3484
        %v3486 = vand.u32 %v280, 4294901760
        %3487 = vmatmul.f32.gmra.mxu0 %v3486
        %v3488 = vpop.f32.mrf.mxu0
        %v3489 = vadd.f32 %v3399, %v3488
        %v3490 = vand.u32 %v282, 4294901760
        %3491 = vmatmul.f32.gmra.mxu0 %v3490
        %v3492 = vpop.f32.mrf.mxu0
        %v3493 = vadd.f32 %v3407, %v3492
        %v3494 = vand.u32 %v284, 4294901760
        %3495 = vmatmul.f32.gmra.mxu0 %v3494
        %v3496 = vpop.f32.mrf.mxu0
        %v3497 = vadd.f32 %v3415, %v3496
        %v3498 = vand.u32 %v2044, 4294901760
        %3499 = vmatmul.f32.gmra.mxu0 %v3498
        %v3500 = vpop.f32.mrf.mxu0
        %v3501 = vadd.f32 %v3423, %v3500
        %v3502 = vand.u32 %v3345, 4294901760
        %3503 = vmatmul.f32.gmra.mxu0 %v3502
        %v3504 = vpop.f32.mrf.mxu0
        %v3505 = vadd.f32 %v3431, %v3504
        %3506 = vdwg.mxu0
        %3507 = vmatpush.msra.mxu0 0.0
        %3508 = vmatpush.msra.mxu0 0.0
        %3509 = vmatpush.msra.mxu0 0.0
        %3510 = vmatpush.msra.mxu0 0.0
        %3511 = vmatpush.msra.mxu0 0.0
        %3512 = vmatpush.msra.mxu0 0.0
        %3513 = vmatpush.msra.mxu0 0.0
        %3514 = vmatpush.msra.mxu0 0.0
        %3515 = vmatpush.msra.mxu0 0.0
        %3516 = vmatpush.msra.mxu0 0.0
        %3517 = vmatpush.msra.mxu0 0.0
        %v3518 = vand.u32 %v3344, 4294901760
        %v3519 = vsub.f32 %v3344, %v3518
        %3520 = vmatpush.msra.mxu0 %v3519
        %v3521 = vand.u32 %v3343, 4294901760
        %v3522 = vsub.f32 %v3343, %v3521
        %3523 = vmatpush.msra.mxu0 %v3522
        %v3524 = vand.u32 %v3342, 4294901760
        %v3525 = vsub.f32 %v3342, %v3524
        %3526 = vmatpush.msra.mxu0 %v3525
        %v3527 = vand.u32 %v3341, 4294901760
        %v3528 = vsub.f32 %v3341, %v3527
        %3529 = vmatpush.msra.mxu0 %v3528
        %v3530 = vand.u32 %v3340, 4294901760
        %v3531 = vsub.f32 %v3340, %v3530
        %3532 = vmatpush.msra.mxu0 %v3531
        %v3533 = vand.u32 %v274, 4294901760
        %v3534 = vsub.f32 %v274, %v3533
        %3535 = vmatmul.f32.gmra.mxu0 %v3534
        %v3536 = vpop.f32.mrf.mxu0
        %v3537 = vadd.f32 %v3477, %v3536
        %v3538 = vand.u32 %v276, 4294901760
        %v3539 = vsub.f32 %v276, %v3538
        %3540 = vmatmul.f32.gmra.mxu0 %v3539
        %v3541 = vpop.f32.mrf.mxu0
        %v3542 = vadd.f32 %v3481, %v3541
        %v3543 = vand.u32 %v278, 4294901760
        %v3544 = vsub.f32 %v278, %v3543
        %3545 = vmatmul.f32.gmra.mxu0 %v3544
        %v3546 = vpop.f32.mrf.mxu0
        %v3547 = vadd.f32 %v3485, %v3546
        %v3548 = vand.u32 %v280, 4294901760
        %v3549 = vsub.f32 %v280, %v3548
        %3550 = vmatmul.f32.gmra.mxu0 %v3549
        %v3551 = vpop.f32.mrf.mxu0
        %v3552 = vadd.f32 %v3489, %v3551
        %v3553 = vand.u32 %v282, 4294901760
        %v3554 = vsub.f32 %v282, %v3553
        %3555 = vmatmul.f32.gmra.mxu0 %v3554
        %v3556 = vpop.f32.mrf.mxu0
        %v3557 = vadd.f32 %v3493, %v3556
        %v3558 = vand.u32 %v284, 4294901760
        %v3559 = vsub.f32 %v284, %v3558
        %3560 = vmatmul.f32.gmra.mxu0 %v3559
        %v3561 = vpop.f32.mrf.mxu0
        %v3562 = vadd.f32 %v3497, %v3561
        %v3563 = vand.u32 %v2044, 4294901760
        %v3564 = vsub.f32 %v2044, %v3563
        %3565 = vmatmul.f32.gmra.mxu0 %v3564
        %v3566 = vpop.f32.mrf.mxu0
        %v3567 = vadd.f32 %v3501, %v3566
        %v3568 = vand.u32 %v3345, 4294901760
        %v3569 = vsub.f32 %v3345, %v3568
        %3570 = vmatmul.f32.gmra.mxu0 %v3569
        %v3571 = vpop.f32.mrf.mxu0
        %v3572 = vadd.f32 %v3505, %v3571
        %3573 = vdwg.mxu0
        %3574 = vmatpush.msra.mxu0 0.0
        %3575 = vmatpush.msra.mxu0 0.0
        %3576 = vmatpush.msra.mxu0 0.0
        %3577 = vmatpush.msra.mxu0 0.0
        %3578 = vmatpush.msra.mxu0 0.0
        %3579 = vmatpush.msra.mxu0 0.0
        %3580 = vmatpush.msra.mxu0 0.0
        %3581 = vmatpush.msra.mxu0 0.0
        %3582 = vmatpush.msra.mxu0 0.0
        %3583 = vmatpush.msra.mxu0 0.0
        %3584 = vmatpush.msra.mxu0 0.0
        %v3585 = vand.u32 %v3344, 4294901760
        %3586 = vmatpush.msra.mxu0 %v3585
        %v3587 = vand.u32 %v3343, 4294901760
        %3588 = vmatpush.msra.mxu0 %v3587
        %v3589 = vand.u32 %v3342, 4294901760
        %3590 = vmatpush.msra.mxu0 %v3589
        %v3591 = vand.u32 %v3341, 4294901760
        %3592 = vmatpush.msra.mxu0 %v3591
        %v3593 = vand.u32 %v3340, 4294901760
        %3594 = vmatpush.msra.mxu0 %v3593
        %v3595 = vand.u32 %v274, 4294901760
        %v3596 = vsub.f32 %v274, %v3595
        %v3597 = vand.u32 %v3596, 4294901760
        %3598 = vmatmul.f32.gmra.mxu0 %v3597
        %v3599 = vpop.f32.mrf.mxu0
        %v3600 = vadd.f32 %v3537, %v3599
        %v3601 = vand.u32 %v276, 4294901760
        %v3602 = vsub.f32 %v276, %v3601
        %v3603 = vand.u32 %v3602, 4294901760
        %3604 = vmatmul.f32.gmra.mxu0 %v3603
        %v3605 = vpop.f32.mrf.mxu0
        %v3606 = vadd.f32 %v3542, %v3605
        %v3607 = vand.u32 %v278, 4294901760
        %v3608 = vsub.f32 %v278, %v3607
        %v3609 = vand.u32 %v3608, 4294901760
        %3610 = vmatmul.f32.gmra.mxu0 %v3609
        %v3611 = vpop.f32.mrf.mxu0
        %v3612 = vadd.f32 %v3547, %v3611
        %v3613 = vand.u32 %v280, 4294901760
        %v3614 = vsub.f32 %v280, %v3613
        %v3615 = vand.u32 %v3614, 4294901760
        %3616 = vmatmul.f32.gmra.mxu0 %v3615
        %v3617 = vpop.f32.mrf.mxu0
        %v3618 = vadd.f32 %v3552, %v3617
        %v3619 = vand.u32 %v282, 4294901760
        %v3620 = vsub.f32 %v282, %v3619
        %v3621 = vand.u32 %v3620, 4294901760
        %3622 = vmatmul.f32.gmra.mxu0 %v3621
        %v3623 = vpop.f32.mrf.mxu0
        %v3624 = vadd.f32 %v3557, %v3623
        %v3625 = vand.u32 %v284, 4294901760
        %v3626 = vsub.f32 %v284, %v3625
        %v3627 = vand.u32 %v3626, 4294901760
        %3628 = vmatmul.f32.gmra.mxu0 %v3627
        %v3629 = vpop.f32.mrf.mxu0
        %v3630 = vadd.f32 %v3562, %v3629
        %v3631 = vand.u32 %v2044, 4294901760
        %v3632 = vsub.f32 %v2044, %v3631
        %v3633 = vand.u32 %v3632, 4294901760
        %3634 = vmatmul.f32.gmra.mxu0 %v3633
        %v3635 = vpop.f32.mrf.mxu0
        %v3636 = vadd.f32 %v3567, %v3635
        %v3637 = vand.u32 %v3345, 4294901760
        %v3638 = vsub.f32 %v3345, %v3637
        %v3639 = vand.u32 %v3638, 4294901760
        %3640 = vmatmul.f32.gmra.mxu0 %v3639
        %v3641 = vpop.f32.mrf.mxu0
        %v3642 = vadd.f32 %v3572, %v3641
        %3643 = vdwg.mxu0
        %3644 = vmatpush.msra.mxu0 0.0
        %3645 = vmatpush.msra.mxu0 0.0
        %3646 = vmatpush.msra.mxu0 0.0
        %3647 = vmatpush.msra.mxu0 0.0
        %3648 = vmatpush.msra.mxu0 0.0
        %3649 = vmatpush.msra.mxu0 0.0
        %3650 = vmatpush.msra.mxu0 0.0
        %3651 = vmatpush.msra.mxu0 0.0
        %3652 = vmatpush.msra.mxu0 0.0
        %3653 = vmatpush.msra.mxu0 0.0
        %3654 = vmatpush.msra.mxu0 0.0
        %v3655 = vand.u32 %v3344, 4294901760
        %v3656 = vsub.f32 %v3344, %v3655
        %v3657 = vand.u32 %v3656, 4294901760
        %3658 = vmatpush.msra.mxu0 %v3657
        %v3659 = vand.u32 %v3343, 4294901760
        %v3660 = vsub.f32 %v3343, %v3659
        %v3661 = vand.u32 %v3660, 4294901760
        %3662 = vmatpush.msra.mxu0 %v3661
        %v3663 = vand.u32 %v3342, 4294901760
        %v3664 = vsub.f32 %v3342, %v3663
        %v3665 = vand.u32 %v3664, 4294901760
        %3666 = vmatpush.msra.mxu0 %v3665
        %v3667 = vand.u32 %v3341, 4294901760
        %v3668 = vsub.f32 %v3341, %v3667
        %v3669 = vand.u32 %v3668, 4294901760
        %3670 = vmatpush.msra.mxu0 %v3669
        %v3671 = vand.u32 %v3340, 4294901760
        %v3672 = vsub.f32 %v3340, %v3671
        %v3673 = vand.u32 %v3672, 4294901760
        %3674 = vmatpush.msra.mxu0 %v3673
        %v3675 = vand.u32 %v274, 4294901760
        %3676 = vmatmul.f32.gmra.mxu0 %v3675
        %v3677 = vpop.f32.mrf.mxu0
        %v3678 = vadd.f32 %v3600, %v3677
        %v3679 = vand.u32 %v276, 4294901760
        %3680 = vmatmul.f32.gmra.mxu0 %v3679
        %v3681 = vpop.f32.mrf.mxu0
        %v3682 = vadd.f32 %v3606, %v3681
        %v3683 = vand.u32 %v278, 4294901760
        %3684 = vmatmul.f32.gmra.mxu0 %v3683
        %v3685 = vpop.f32.mrf.mxu0
        %v3686 = vadd.f32 %v3612, %v3685
        %v3687 = vand.u32 %v280, 4294901760
        %3688 = vmatmul.f32.gmra.mxu0 %v3687
        %v3689 = vpop.f32.mrf.mxu0
        %v3690 = vadd.f32 %v3618, %v3689
        %v3691 = vand.u32 %v282, 4294901760
        %3692 = vmatmul.f32.gmra.mxu0 %v3691
        %v3693 = vpop.f32.mrf.mxu0
        %v3694 = vadd.f32 %v3624, %v3693
        %v3695 = vand.u32 %v284, 4294901760
        %3696 = vmatmul.f32.gmra.mxu0 %v3695
        %v3697 = vpop.f32.mrf.mxu0
        %v3698 = vadd.f32 %v3630, %v3697
        %v3699 = vand.u32 %v2044, 4294901760
        %3700 = vmatmul.f32.gmra.mxu0 %v3699
        %v3701 = vpop.f32.mrf.mxu0
        %v3702 = vadd.f32 %v3636, %v3701
        %v3703 = vand.u32 %v3345, 4294901760
        %3704 = vmatmul.f32.gmra.mxu0 %v3703
        %v3705 = vpop.f32.mrf.mxu0
        %v3706 = vadd.f32 %v3642, %v3705
        %3707 = vdwg.mxu0
        %3708 = vmatpush.msra.mxu0 0.0
        %3709 = vmatpush.msra.mxu0 0.0
        %3710 = vmatpush.msra.mxu0 0.0
        %3711 = vmatpush.msra.mxu0 0.0
        %3712 = vmatpush.msra.mxu0 0.0
        %3713 = vmatpush.msra.mxu0 0.0
        %3714 = vmatpush.msra.mxu0 0.0
        %3715 = vmatpush.msra.mxu0 0.0
        %3716 = vmatpush.msra.mxu0 0.0
        %3717 = vmatpush.msra.mxu0 0.0
        %3718 = vmatpush.msra.mxu0 0.0
        %v3719 = vand.u32 %v3344, 4294901760
        %3720 = vmatpush.msra.mxu0 %v3719
        %v3721 = vand.u32 %v3343, 4294901760
        %3722 = vmatpush.msra.mxu0 %v3721
        %v3723 = vand.u32 %v3342, 4294901760
        %3724 = vmatpush.msra.mxu0 %v3723
        %v3725 = vand.u32 %v3341, 4294901760
        %3726 = vmatpush.msra.mxu0 %v3725
        %v3727 = vand.u32 %v3340, 4294901760
        %3728 = vmatpush.msra.mxu0 %v3727
        %v3729 = vand.u32 %v274, 4294901760
        %3730 = vmatmul.f32.gmra.mxu0 %v3729
        %v3731 = vpop.f32.mrf.mxu0
        %v3732 = vadd.f32 %v3678, %v3731
        %v3733 = vand.u32 %v276, 4294901760
        %3734 = vmatmul.f32.gmra.mxu0 %v3733
        %v3735 = vpop.f32.mrf.mxu0
        %v3736 = vadd.f32 %v3682, %v3735
        %v3737 = vand.u32 %v278, 4294901760
        %3738 = vmatmul.f32.gmra.mxu0 %v3737
        %v3739 = vpop.f32.mrf.mxu0
        %v3740 = vadd.f32 %v3686, %v3739
        %v3741 = vand.u32 %v280, 4294901760
        %3742 = vmatmul.f32.gmra.mxu0 %v3741
        %v3743 = vpop.f32.mrf.mxu0
        %v3744 = vadd.f32 %v3690, %v3743
        %v3745 = vand.u32 %v282, 4294901760
        %3746 = vmatmul.f32.gmra.mxu0 %v3745
        %v3747 = vpop.f32.mrf.mxu0
        %v3748 = vadd.f32 %v3694, %v3747
        %v3749 = vand.u32 %v284, 4294901760
        %3750 = vmatmul.f32.gmra.mxu0 %v3749
        %v3751 = vpop.f32.mrf.mxu0
        %v3752 = vadd.f32 %v3698, %v3751
        %v3753 = vand.u32 %v2044, 4294901760
        %3754 = vmatmul.f32.gmra.mxu0 %v3753
        %v3755 = vpop.f32.mrf.mxu0
        %v3756 = vadd.f32 %v3702, %v3755
        %v3757 = vand.u32 %v3345, 4294901760
        %3758 = vmatmul.f32.gmra.mxu0 %v3757
        %v3759 = vpop.f32.mrf.mxu0
        %v3760 = vadd.f32 %v3706, %v3759
        %3761 = vdwg.mxu0
        %v3762 = vadd.f32 %v3327, %v3732
        %v3763 = vadd.f32 %v3328, %v3736
        %v3764 = vadd.f32 %v3329, %v3740
        %v3765 = vadd.f32 %v3330, %v3744
        %v3766 = vadd.f32 %v3331, %v3748
        %v3767 = vadd.f32 %v3332, %v3752
        %v3768 = vadd.f32 %v3333, %v3756
        %v3769 = vadd.f32 %v3334, %v3760
        %v3770 = vrot.slane %v214, 2
        %v3771 = vrot.slane %v215, 2
        %v3772 = vsel %vm1132, %v3770, %v3771
        %s3773 = scalar_lea.vmem %s1, 320
        %v3774 = vld [vmem:[%s3773] sm:$0xff]
        %v3775 = vld [vmem:[%s3773 + $0x8] sm:$0xff]
        %v3776 = vld [vmem:[%s3773 + $0x10] sm:$0xff]
        %v3777 = vld [vmem:[%s3773 + $0x18] sm:$0xff]
        %v3778 = vld [vmem:[%s3773 + $0x20] sm:$0xff]
        %v3779 = vsel %vm269, %v3772, 0
        %3781 = vmatpush.msra.mxu0 0.0
        %3782 = vmatpush.msra.mxu0 0.0
        %3783 = vmatpush.msra.mxu0 0.0
        %3784 = vmatpush.msra.mxu0 0.0
        %3785 = vmatpush.msra.mxu0 0.0
        %3786 = vmatpush.msra.mxu0 0.0
        %3787 = vmatpush.msra.mxu0 0.0
        %3788 = vmatpush.msra.mxu0 0.0
        %3789 = vmatpush.msra.mxu0 0.0
        %3790 = vmatpush.msra.mxu0 0.0
        %3791 = vmatpush.msra.mxu0 0.0
        %v3792 = vand.u32 %v3778, 4294901760
        %3793 = vmatpush.msra.mxu0 %v3792
        %v3794 = vand.u32 %v3777, 4294901760
        %3795 = vmatpush.msra.mxu0 %v3794
        %v3796 = vand.u32 %v3776, 4294901760
        %3797 = vmatpush.msra.mxu0 %v3796
        %v3798 = vand.u32 %v3775, 4294901760
        %3799 = vmatpush.msra.mxu0 %v3798
        %v3800 = vand.u32 %v3774, 4294901760
        %3801 = vmatpush.msra.mxu0 %v3800
        %v3802 = vand.u32 %v1167, 4294901760
        %v3803 = vsub.f32 %v1167, %v3802
        %v3804 = vand.u32 %v3803, 4294901760
        %v3805 = vsub.f32 %v3803, %v3804
        %v3806 = vand.u32 %v3805, 4294901760
        %3807 = vmatmul.f32.gmra.mxu0 %v3806
        %v3808 = vpop.f32.mrf.mxu0
        %v3809 = vadd.f32 0.0, %v3808
        %v3810 = vand.u32 %v1169, 4294901760
        %v3811 = vsub.f32 %v1169, %v3810
        %v3812 = vand.u32 %v3811, 4294901760
        %v3813 = vsub.f32 %v3811, %v3812
        %v3814 = vand.u32 %v3813, 4294901760
        %3815 = vmatmul.f32.gmra.mxu0 %v3814
        %v3816 = vpop.f32.mrf.mxu0
        %v3817 = vadd.f32 0.0, %v3816
        %v3818 = vand.u32 %v1171, 4294901760
        %v3819 = vsub.f32 %v1171, %v3818
        %v3820 = vand.u32 %v3819, 4294901760
        %v3821 = vsub.f32 %v3819, %v3820
        %v3822 = vand.u32 %v3821, 4294901760
        %3823 = vmatmul.f32.gmra.mxu0 %v3822
        %v3824 = vpop.f32.mrf.mxu0
        %v3825 = vadd.f32 0.0, %v3824
        %v3826 = vand.u32 %v1173, 4294901760
        %v3827 = vsub.f32 %v1173, %v3826
        %v3828 = vand.u32 %v3827, 4294901760
        %v3829 = vsub.f32 %v3827, %v3828
        %v3830 = vand.u32 %v3829, 4294901760
        %3831 = vmatmul.f32.gmra.mxu0 %v3830
        %v3832 = vpop.f32.mrf.mxu0
        %v3833 = vadd.f32 0.0, %v3832
        %v3834 = vand.u32 %v1175, 4294901760
        %v3835 = vsub.f32 %v1175, %v3834
        %v3836 = vand.u32 %v3835, 4294901760
        %v3837 = vsub.f32 %v3835, %v3836
        %v3838 = vand.u32 %v3837, 4294901760
        %3839 = vmatmul.f32.gmra.mxu0 %v3838
        %v3840 = vpop.f32.mrf.mxu0
        %v3841 = vadd.f32 0.0, %v3840
        %v3842 = vand.u32 %v1177, 4294901760
        %v3843 = vsub.f32 %v1177, %v3842
        %v3844 = vand.u32 %v3843, 4294901760
        %v3845 = vsub.f32 %v3843, %v3844
        %v3846 = vand.u32 %v3845, 4294901760
        %3847 = vmatmul.f32.gmra.mxu0 %v3846
        %v3848 = vpop.f32.mrf.mxu0
        %v3849 = vadd.f32 0.0, %v3848
        %v3850 = vand.u32 %v2478, 4294901760
        %v3851 = vsub.f32 %v2478, %v3850
        %v3852 = vand.u32 %v3851, 4294901760
        %v3853 = vsub.f32 %v3851, %v3852
        %v3854 = vand.u32 %v3853, 4294901760
        %3855 = vmatmul.f32.gmra.mxu0 %v3854
        %v3856 = vpop.f32.mrf.mxu0
        %v3857 = vadd.f32 0.0, %v3856
        %v3858 = vand.u32 %v3779, 4294901760
        %v3859 = vsub.f32 %v3779, %v3858
        %v3860 = vand.u32 %v3859, 4294901760
        %v3861 = vsub.f32 %v3859, %v3860
        %v3862 = vand.u32 %v3861, 4294901760
        %3863 = vmatmul.f32.gmra.mxu0 %v3862
        %v3864 = vpop.f32.mrf.mxu0
        %v3865 = vadd.f32 0.0, %v3864
        %3866 = vdwg.mxu0
        %3867 = vmatpush.msra.mxu0 0.0
        %3868 = vmatpush.msra.mxu0 0.0
        %3869 = vmatpush.msra.mxu0 0.0
        %3870 = vmatpush.msra.mxu0 0.0
        %3871 = vmatpush.msra.mxu0 0.0
        %3872 = vmatpush.msra.mxu0 0.0
        %3873 = vmatpush.msra.mxu0 0.0
        %3874 = vmatpush.msra.mxu0 0.0
        %3875 = vmatpush.msra.mxu0 0.0
        %3876 = vmatpush.msra.mxu0 0.0
        %3877 = vmatpush.msra.mxu0 0.0
        %v3878 = vand.u32 %v3778, 4294901760
        %v3879 = vsub.f32 %v3778, %v3878
        %v3880 = vand.u32 %v3879, 4294901760
        %v3881 = vsub.f32 %v3879, %v3880
        %v3882 = vand.u32 %v3881, 4294901760
        %3883 = vmatpush.msra.mxu0 %v3882
        %v3884 = vand.u32 %v3777, 4294901760
        %v3885 = vsub.f32 %v3777, %v3884
        %v3886 = vand.u32 %v3885, 4294901760
        %v3887 = vsub.f32 %v3885, %v3886
        %v3888 = vand.u32 %v3887, 4294901760
        %3889 = vmatpush.msra.mxu0 %v3888
        %v3890 = vand.u32 %v3776, 4294901760
        %v3891 = vsub.f32 %v3776, %v3890
        %v3892 = vand.u32 %v3891, 4294901760
        %v3893 = vsub.f32 %v3891, %v3892
        %v3894 = vand.u32 %v3893, 4294901760
        %3895 = vmatpush.msra.mxu0 %v3894
        %v3896 = vand.u32 %v3775, 4294901760
        %v3897 = vsub.f32 %v3775, %v3896
        %v3898 = vand.u32 %v3897, 4294901760
        %v3899 = vsub.f32 %v3897, %v3898
        %v3900 = vand.u32 %v3899, 4294901760
        %3901 = vmatpush.msra.mxu0 %v3900
        %v3902 = vand.u32 %v3774, 4294901760
        %v3903 = vsub.f32 %v3774, %v3902
        %v3904 = vand.u32 %v3903, 4294901760
        %v3905 = vsub.f32 %v3903, %v3904
        %v3906 = vand.u32 %v3905, 4294901760
        %3907 = vmatpush.msra.mxu0 %v3906
        %v3908 = vand.u32 %v1167, 4294901760
        %3909 = vmatmul.f32.gmra.mxu0 %v3908
        %v3910 = vpop.f32.mrf.mxu0
        %v3911 = vadd.f32 %v3809, %v3910
        %v3912 = vand.u32 %v1169, 4294901760
        %3913 = vmatmul.f32.gmra.mxu0 %v3912
        %v3914 = vpop.f32.mrf.mxu0
        %v3915 = vadd.f32 %v3817, %v3914
        %v3916 = vand.u32 %v1171, 4294901760
        %3917 = vmatmul.f32.gmra.mxu0 %v3916
        %v3918 = vpop.f32.mrf.mxu0
        %v3919 = vadd.f32 %v3825, %v3918
        %v3920 = vand.u32 %v1173, 4294901760
        %3921 = vmatmul.f32.gmra.mxu0 %v3920
        %v3922 = vpop.f32.mrf.mxu0
        %v3923 = vadd.f32 %v3833, %v3922
        %v3924 = vand.u32 %v1175, 4294901760
        %3925 = vmatmul.f32.gmra.mxu0 %v3924
        %v3926 = vpop.f32.mrf.mxu0
        %v3927 = vadd.f32 %v3841, %v3926
        %v3928 = vand.u32 %v1177, 4294901760
        %3929 = vmatmul.f32.gmra.mxu0 %v3928
        %v3930 = vpop.f32.mrf.mxu0
        %v3931 = vadd.f32 %v3849, %v3930
        %v3932 = vand.u32 %v2478, 4294901760
        %3933 = vmatmul.f32.gmra.mxu0 %v3932
        %v3934 = vpop.f32.mrf.mxu0
        %v3935 = vadd.f32 %v3857, %v3934
        %v3936 = vand.u32 %v3779, 4294901760
        %3937 = vmatmul.f32.gmra.mxu0 %v3936
        %v3938 = vpop.f32.mrf.mxu0
        %v3939 = vadd.f32 %v3865, %v3938
        %3940 = vdwg.mxu0
        %3941 = vmatpush.msra.mxu0 0.0
        %3942 = vmatpush.msra.mxu0 0.0
        %3943 = vmatpush.msra.mxu0 0.0
        %3944 = vmatpush.msra.mxu0 0.0
        %3945 = vmatpush.msra.mxu0 0.0
        %3946 = vmatpush.msra.mxu0 0.0
        %3947 = vmatpush.msra.mxu0 0.0
        %3948 = vmatpush.msra.mxu0 0.0
        %3949 = vmatpush.msra.mxu0 0.0
        %3950 = vmatpush.msra.mxu0 0.0
        %3951 = vmatpush.msra.mxu0 0.0
        %v3952 = vand.u32 %v3778, 4294901760
        %v3953 = vsub.f32 %v3778, %v3952
        %3954 = vmatpush.msra.mxu0 %v3953
        %v3955 = vand.u32 %v3777, 4294901760
        %v3956 = vsub.f32 %v3777, %v3955
        %3957 = vmatpush.msra.mxu0 %v3956
        %v3958 = vand.u32 %v3776, 4294901760
        %v3959 = vsub.f32 %v3776, %v3958
        %3960 = vmatpush.msra.mxu0 %v3959
        %v3961 = vand.u32 %v3775, 4294901760
        %v3962 = vsub.f32 %v3775, %v3961
        %3963 = vmatpush.msra.mxu0 %v3962
        %v3964 = vand.u32 %v3774, 4294901760
        %v3965 = vsub.f32 %v3774, %v3964
        %3966 = vmatpush.msra.mxu0 %v3965
        %v3967 = vand.u32 %v1167, 4294901760
        %v3968 = vsub.f32 %v1167, %v3967
        %3969 = vmatmul.f32.gmra.mxu0 %v3968
        %v3970 = vpop.f32.mrf.mxu0
        %v3971 = vadd.f32 %v3911, %v3970
        %v3972 = vand.u32 %v1169, 4294901760
        %v3973 = vsub.f32 %v1169, %v3972
        %3974 = vmatmul.f32.gmra.mxu0 %v3973
        %v3975 = vpop.f32.mrf.mxu0
        %v3976 = vadd.f32 %v3915, %v3975
        %v3977 = vand.u32 %v1171, 4294901760
        %v3978 = vsub.f32 %v1171, %v3977
        %3979 = vmatmul.f32.gmra.mxu0 %v3978
        %v3980 = vpop.f32.mrf.mxu0
        %v3981 = vadd.f32 %v3919, %v3980
        %v3982 = vand.u32 %v1173, 4294901760
        %v3983 = vsub.f32 %v1173, %v3982
        %3984 = vmatmul.f32.gmra.mxu0 %v3983
        %v3985 = vpop.f32.mrf.mxu0
        %v3986 = vadd.f32 %v3923, %v3985
        %v3987 = vand.u32 %v1175, 4294901760
        %v3988 = vsub.f32 %v1175, %v3987
        %3989 = vmatmul.f32.gmra.mxu0 %v3988
        %v3990 = vpop.f32.mrf.mxu0
        %v3991 = vadd.f32 %v3927, %v3990
        %v3992 = vand.u32 %v1177, 4294901760
        %v3993 = vsub.f32 %v1177, %v3992
        %3994 = vmatmul.f32.gmra.mxu0 %v3993
        %v3995 = vpop.f32.mrf.mxu0
        %v3996 = vadd.f32 %v3931, %v3995
        %v3997 = vand.u32 %v2478, 4294901760
        %v3998 = vsub.f32 %v2478, %v3997
        %3999 = vmatmul.f32.gmra.mxu0 %v3998
        %v4000 = vpop.f32.mrf.mxu0
        %v4001 = vadd.f32 %v3935, %v4000
        %v4002 = vand.u32 %v3779, 4294901760
        %v4003 = vsub.f32 %v3779, %v4002
        %4004 = vmatmul.f32.gmra.mxu0 %v4003
        %v4005 = vpop.f32.mrf.mxu0
        %v4006 = vadd.f32 %v3939, %v4005
        %4007 = vdwg.mxu0
        %4008 = vmatpush.msra.mxu0 0.0
        %4009 = vmatpush.msra.mxu0 0.0
        %4010 = vmatpush.msra.mxu0 0.0
        %4011 = vmatpush.msra.mxu0 0.0
        %4012 = vmatpush.msra.mxu0 0.0
        %4013 = vmatpush.msra.mxu0 0.0
        %4014 = vmatpush.msra.mxu0 0.0
        %4015 = vmatpush.msra.mxu0 0.0
        %4016 = vmatpush.msra.mxu0 0.0
        %4017 = vmatpush.msra.mxu0 0.0
        %4018 = vmatpush.msra.mxu0 0.0
        %v4019 = vand.u32 %v3778, 4294901760
        %4020 = vmatpush.msra.mxu0 %v4019
        %v4021 = vand.u32 %v3777, 4294901760
        %4022 = vmatpush.msra.mxu0 %v4021
        %v4023 = vand.u32 %v3776, 4294901760
        %4024 = vmatpush.msra.mxu0 %v4023
        %v4025 = vand.u32 %v3775, 4294901760
        %4026 = vmatpush.msra.mxu0 %v4025
        %v4027 = vand.u32 %v3774, 4294901760
        %4028 = vmatpush.msra.mxu0 %v4027
        %v4029 = vand.u32 %v1167, 4294901760
        %v4030 = vsub.f32 %v1167, %v4029
        %v4031 = vand.u32 %v4030, 4294901760
        %4032 = vmatmul.f32.gmra.mxu0 %v4031
        %v4033 = vpop.f32.mrf.mxu0
        %v4034 = vadd.f32 %v3971, %v4033
        %v4035 = vand.u32 %v1169, 4294901760
        %v4036 = vsub.f32 %v1169, %v4035
        %v4037 = vand.u32 %v4036, 4294901760
        %4038 = vmatmul.f32.gmra.mxu0 %v4037
        %v4039 = vpop.f32.mrf.mxu0
        %v4040 = vadd.f32 %v3976, %v4039
        %v4041 = vand.u32 %v1171, 4294901760
        %v4042 = vsub.f32 %v1171, %v4041
        %v4043 = vand.u32 %v4042, 4294901760
        %4044 = vmatmul.f32.gmra.mxu0 %v4043
        %v4045 = vpop.f32.mrf.mxu0
        %v4046 = vadd.f32 %v3981, %v4045
        %v4047 = vand.u32 %v1173, 4294901760
        %v4048 = vsub.f32 %v1173, %v4047
        %v4049 = vand.u32 %v4048, 4294901760
        %4050 = vmatmul.f32.gmra.mxu0 %v4049
        %v4051 = vpop.f32.mrf.mxu0
        %v4052 = vadd.f32 %v3986, %v4051
        %v4053 = vand.u32 %v1175, 4294901760
        %v4054 = vsub.f32 %v1175, %v4053
        %v4055 = vand.u32 %v4054, 4294901760
        %4056 = vmatmul.f32.gmra.mxu0 %v4055
        %v4057 = vpop.f32.mrf.mxu0
        %v4058 = vadd.f32 %v3991, %v4057
        %v4059 = vand.u32 %v1177, 4294901760
        %v4060 = vsub.f32 %v1177, %v4059
        %v4061 = vand.u32 %v4060, 4294901760
        %4062 = vmatmul.f32.gmra.mxu0 %v4061
        %v4063 = vpop.f32.mrf.mxu0
        %v4064 = vadd.f32 %v3996, %v4063
        %v4065 = vand.u32 %v2478, 4294901760
        %v4066 = vsub.f32 %v2478, %v4065
        %v4067 = vand.u32 %v4066, 4294901760
        %4068 = vmatmul.f32.gmra.mxu0 %v4067
        %v4069 = vpop.f32.mrf.mxu0
        %v4070 = vadd.f32 %v4001, %v4069
        %v4071 = vand.u32 %v3779, 4294901760
        %v4072 = vsub.f32 %v3779, %v4071
        %v4073 = vand.u32 %v4072, 4294901760
        %4074 = vmatmul.f32.gmra.mxu0 %v4073
        %v4075 = vpop.f32.mrf.mxu0
        %v4076 = vadd.f32 %v4006, %v4075
        %4077 = vdwg.mxu0
        %4078 = vmatpush.msra.mxu0 0.0
        %4079 = vmatpush.msra.mxu0 0.0
        %4080 = vmatpush.msra.mxu0 0.0
        %4081 = vmatpush.msra.mxu0 0.0
        %4082 = vmatpush.msra.mxu0 0.0
        %4083 = vmatpush.msra.mxu0 0.0
        %4084 = vmatpush.msra.mxu0 0.0
        %4085 = vmatpush.msra.mxu0 0.0
        %4086 = vmatpush.msra.mxu0 0.0
        %4087 = vmatpush.msra.mxu0 0.0
        %4088 = vmatpush.msra.mxu0 0.0
        %v4089 = vand.u32 %v3778, 4294901760
        %v4090 = vsub.f32 %v3778, %v4089
        %v4091 = vand.u32 %v4090, 4294901760
        %4092 = vmatpush.msra.mxu0 %v4091
        %v4093 = vand.u32 %v3777, 4294901760
        %v4094 = vsub.f32 %v3777, %v4093
        %v4095 = vand.u32 %v4094, 4294901760
        %4096 = vmatpush.msra.mxu0 %v4095
        %v4097 = vand.u32 %v3776, 4294901760
        %v4098 = vsub.f32 %v3776, %v4097
        %v4099 = vand.u32 %v4098, 4294901760
        %4100 = vmatpush.msra.mxu0 %v4099
        %v4101 = vand.u32 %v3775, 4294901760
        %v4102 = vsub.f32 %v3775, %v4101
        %v4103 = vand.u32 %v4102, 4294901760
        %4104 = vmatpush.msra.mxu0 %v4103
        %v4105 = vand.u32 %v3774, 4294901760
        %v4106 = vsub.f32 %v3774, %v4105
        %v4107 = vand.u32 %v4106, 4294901760
        %4108 = vmatpush.msra.mxu0 %v4107
        %v4109 = vand.u32 %v1167, 4294901760
        %4110 = vmatmul.f32.gmra.mxu0 %v4109
        %v4111 = vpop.f32.mrf.mxu0
        %v4112 = vadd.f32 %v4034, %v4111
        %v4113 = vand.u32 %v1169, 4294901760
        %4114 = vmatmul.f32.gmra.mxu0 %v4113
        %v4115 = vpop.f32.mrf.mxu0
        %v4116 = vadd.f32 %v4040, %v4115
        %v4117 = vand.u32 %v1171, 4294901760
        %4118 = vmatmul.f32.gmra.mxu0 %v4117
        %v4119 = vpop.f32.mrf.mxu0
        %v4120 = vadd.f32 %v4046, %v4119
        %v4121 = vand.u32 %v1173, 4294901760
        %4122 = vmatmul.f32.gmra.mxu0 %v4121
        %v4123 = vpop.f32.mrf.mxu0
        %v4124 = vadd.f32 %v4052, %v4123
        %v4125 = vand.u32 %v1175, 4294901760
        %4126 = vmatmul.f32.gmra.mxu0 %v4125
        %v4127 = vpop.f32.mrf.mxu0
        %v4128 = vadd.f32 %v4058, %v4127
        %v4129 = vand.u32 %v1177, 4294901760
        %4130 = vmatmul.f32.gmra.mxu0 %v4129
        %v4131 = vpop.f32.mrf.mxu0
        %v4132 = vadd.f32 %v4064, %v4131
        %v4133 = vand.u32 %v2478, 4294901760
        %4134 = vmatmul.f32.gmra.mxu0 %v4133
        %v4135 = vpop.f32.mrf.mxu0
        %v4136 = vadd.f32 %v4070, %v4135
        %v4137 = vand.u32 %v3779, 4294901760
        %4138 = vmatmul.f32.gmra.mxu0 %v4137
        %v4139 = vpop.f32.mrf.mxu0
        %v4140 = vadd.f32 %v4076, %v4139
        %4141 = vdwg.mxu0
        %4142 = vmatpush.msra.mxu0 0.0
        %4143 = vmatpush.msra.mxu0 0.0
        %4144 = vmatpush.msra.mxu0 0.0
        %4145 = vmatpush.msra.mxu0 0.0
        %4146 = vmatpush.msra.mxu0 0.0
        %4147 = vmatpush.msra.mxu0 0.0
        %4148 = vmatpush.msra.mxu0 0.0
        %4149 = vmatpush.msra.mxu0 0.0
        %4150 = vmatpush.msra.mxu0 0.0
        %4151 = vmatpush.msra.mxu0 0.0
        %4152 = vmatpush.msra.mxu0 0.0
        %v4153 = vand.u32 %v3778, 4294901760
        %4154 = vmatpush.msra.mxu0 %v4153
        %v4155 = vand.u32 %v3777, 4294901760
        %4156 = vmatpush.msra.mxu0 %v4155
        %v4157 = vand.u32 %v3776, 4294901760
        %4158 = vmatpush.msra.mxu0 %v4157
        %v4159 = vand.u32 %v3775, 4294901760
        %4160 = vmatpush.msra.mxu0 %v4159
        %v4161 = vand.u32 %v3774, 4294901760
        %4162 = vmatpush.msra.mxu0 %v4161
        %v4163 = vand.u32 %v1167, 4294901760
        %4164 = vmatmul.f32.gmra.mxu0 %v4163
        %v4165 = vpop.f32.mrf.mxu0
        %v4166 = vadd.f32 %v4112, %v4165
        %v4167 = vand.u32 %v1169, 4294901760
        %4168 = vmatmul.f32.gmra.mxu0 %v4167
        %v4169 = vpop.f32.mrf.mxu0
        %v4170 = vadd.f32 %v4116, %v4169
        %v4171 = vand.u32 %v1171, 4294901760
        %4172 = vmatmul.f32.gmra.mxu0 %v4171
        %v4173 = vpop.f32.mrf.mxu0
        %v4174 = vadd.f32 %v4120, %v4173
        %v4175 = vand.u32 %v1173, 4294901760
        %4176 = vmatmul.f32.gmra.mxu0 %v4175
        %v4177 = vpop.f32.mrf.mxu0
        %v4178 = vadd.f32 %v4124, %v4177
        %v4179 = vand.u32 %v1175, 4294901760
        %4180 = vmatmul.f32.gmra.mxu0 %v4179
        %v4181 = vpop.f32.mrf.mxu0
        %v4182 = vadd.f32 %v4128, %v4181
        %v4183 = vand.u32 %v1177, 4294901760
        %4184 = vmatmul.f32.gmra.mxu0 %v4183
        %v4185 = vpop.f32.mrf.mxu0
        %v4186 = vadd.f32 %v4132, %v4185
        %v4187 = vand.u32 %v2478, 4294901760
        %4188 = vmatmul.f32.gmra.mxu0 %v4187
        %v4189 = vpop.f32.mrf.mxu0
        %v4190 = vadd.f32 %v4136, %v4189
        %v4191 = vand.u32 %v3779, 4294901760
        %4192 = vmatmul.f32.gmra.mxu0 %v4191
        %v4193 = vpop.f32.mrf.mxu0
        %v4194 = vadd.f32 %v4140, %v4193
        %4195 = vdwg.mxu0
        %v4196 = vadd.f32 %v3762, %v4166
        %v4197 = vadd.f32 %v3763, %v4170
        %v4198 = vadd.f32 %v3764, %v4174
        %v4199 = vadd.f32 %v3765, %v4178
        %v4200 = vadd.f32 %v3766, %v4182
        %v4201 = vadd.f32 %v3767, %v4186
        %v4202 = vadd.f32 %v3768, %v4190
        %v4203 = vadd.f32 %v3769, %v4194
        %v4204 = vperm.slane %v216, 0
        %v4205 = vmul.f32 %v4196, %v4204
        %v4206 = vmul.f32 %v4197, %v4204
        %v4207 = vmul.f32 %v4198, %v4204
        %v4208 = vmul.f32 %v4199, %v4204
        %v4209 = vmul.f32 %v4200, %v4204
        %v4210 = vmul.f32 %v4201, %v4204
        %v4211 = vmul.f32 %v4202, %v4204
        %v4212 = vmul.f32 %v4203, %v4204
        %v4213 = vperm.slane %v216, 1
        %v4214 = vadd.f32 %v4205, %v4213
        %v4215 = vadd.f32 %v4206, %v4213
        %v4216 = vadd.f32 %v4207, %v4213
        %v4217 = vadd.f32 %v4208, %v4213
        %v4218 = vadd.f32 %v4209, %v4213
        %v4219 = vadd.f32 %v4210, %v4213
        %v4220 = vadd.f32 %v4211, %v4213
        %v4221 = vadd.f32 %v4212, %v4213
        %v4222 = vmax.f32 %v4214, 0.0
        %v4223 = vmax.f32 %v4215, 0.0
        %v4224 = vmax.f32 %v4216, 0.0
        %v4225 = vmax.f32 %v4217, 0.0
        %v4226 = vmax.f32 %v4218, 0.0
        %v4227 = vmax.f32 %v4219, 0.0
        %v4228 = vmax.f32 %v4220, 0.0
        %v4229 = vmax.f32 %v4221, 0.0
        %vm4230 = vcmask 654336
        %4231 = vst.msk [vmem:[#allocation2] sm:$0xff] %vm4230, 0.0
        %vm4232 = vcmask 648192
        %4233 = vst.msk [vmem:[#allocation2 + $0x8] sm:$0x3] %vm4232, 0.0
        %4234 = vst.msk [vmem:[#allocation2 + $0x10] sm:$0xff] %vm4230, 0.0
        %4235 = vst.msk [vmem:[#allocation2 + $0x18] sm:$0x3] %vm4232, 0.0
        %4236 = vst.msk [vmem:[#allocation2 + $0x20] sm:$0xff] %vm4230, 0.0
        %4237 = vst.msk [vmem:[#allocation2 + $0x28] sm:$0x3] %vm4232, 0.0
        %4238 = vst.msk [vmem:[#allocation2 + $0x30] sm:$0xff] %vm4230, 0.0
        %4239 = vst.msk [vmem:[#allocation2 + $0x38] sm:$0x3] %vm4232, 0.0
        %4240 = vst.msk [vmem:[#allocation2 + $0x40] sm:$0xff] %vm4230, 0.0
        %4241 = vst.msk [vmem:[#allocation2 + $0x48] sm:$0x3] %vm4232, 0.0
        %4242 = vst.msk [vmem:[#allocation2 + $0x50] sm:$0xff] %vm4230, 0.0
        %4243 = vst.msk [vmem:[#allocation2 + $0x58] sm:$0x3] %vm4232, 0.0
        %4244 = vst.msk [vmem:[#allocation2 + $0x60] sm:$0xff] %vm4230, 0.0
        %4245 = vst.msk [vmem:[#allocation2 + $0x68] sm:$0x3] %vm4232, 0.0
        %4246 = vst.msk [vmem:[#allocation2 + $0x70] sm:$0xff] %vm4230, 0.0
        %4247 = vst.msk [vmem:[#allocation2 + $0x78] sm:$0x3] %vm4232, 0.0
        %4248 = vst.msk [vmem:[#allocation2 + $0x80] sm:$0xff] %vm4230, 0.0
        %4249 = vst.msk [vmem:[#allocation2 + $0x88] sm:$0x3] %vm4232, 0.0
        %4250 = vst.msk [vmem:[#allocation2 + $0x90] sm:$0xff] %vm4230, 0.0
        %4251 = vst.msk [vmem:[#allocation2 + $0x98] sm:$0x3] %vm4232, 0.0
        %4260 = vrot.lane.b32.xlu0 %v4222, 8
        %v4261 = vpop.permute.xlu0 %4260
        %4262 = vrot.lane.b32.xlu0 %v4223, 8
        %v4263 = vpop.permute.xlu0 %4262
        %4264 = vrot.lane.b32.xlu0 %v4224, 8
        %v4265 = vpop.permute.xlu0 %4264
        %4266 = vrot.lane.b32.xlu0 %v4225, 8
        %v4267 = vpop.permute.xlu0 %4266
        %4268 = vrot.lane.b32.xlu0 %v4226, 8
        %v4269 = vpop.permute.xlu0 %4268
        %4270 = vrot.lane.b32.xlu0 %v4227, 8
        %v4271 = vpop.permute.xlu0 %4270
        %4272 = vrot.lane.b32.xlu0 %v4228, 8
        %v4273 = vpop.permute.xlu0 %4272
        %4274 = vrot.lane.b32.xlu0 %v4229, 8
        %v4275 = vpop.permute.xlu0 %4274
        %s4284 = scalar_lea.vmem [#allocation2], 16
        %vm4285 = vcmask 588864
        %4286 = vst.msk [vmem:[%s4284 + $0x1] sm:$0xff] %vm4285, %v4261
        %4287 = vst.msk [vmem:[%s4284 + $0x11] sm:$0xff] %vm4285, %v4263
        %4288 = vst.msk [vmem:[%s4284 + $0x21] sm:$0xff] %vm4285, %v4265
        %4289 = vst.msk [vmem:[%s4284 + $0x31] sm:$0xff] %vm4285, %v4267
        %4290 = vst.msk [vmem:[%s4284 + $0x41] sm:$0xff] %vm4285, %v4269
        %4291 = vst.msk [vmem:[%s4284 + $0x51] sm:$0xff] %vm4285, %v4271
        %4292 = vst.msk [vmem:[%s4284 + $0x61] sm:$0xff] %vm4285, %v4273
        %4293 = vst.msk [vmem:[%s4284 + $0x71] sm:$0xff] %vm4285, %v4275
        %v4294 = vld [vmem:[#allocation2] sm:$0xff]
        %v4295 = vld [vmem:[#allocation2 + $0x10] sm:$0xff]
        %v4296 = vld [vmem:[#allocation2 + $0x20] sm:$0xff]
        %v4297 = vld [vmem:[#allocation2 + $0x30] sm:$0xff]
        %v4298 = vld [vmem:[#allocation2 + $0x40] sm:$0xff]
        %v4299 = vld [vmem:[#allocation2 + $0x50] sm:$0xff]
        %v4300 = vld [vmem:[#allocation2 + $0x60] sm:$0xff]
        %v4301 = vld [vmem:[#allocation2 + $0x70] sm:$0xff]
        %v4302 = vld [vmem:[%s2] sm:$0xff]
        %v4303 = vld [vmem:[%s2 + $0x8] sm:$0xff]
        %v4304 = vld [vmem:[%s2 + $0x10] sm:$0xff]
        %v4305 = vld [vmem:[%s2 + $0x18] sm:$0xff]
        %v4306 = vld [vmem:[%s2 + $0x20] sm:$0xff]
        %v4307 = vld [vmem:[%s2 + $0x28] sm:$0xff]
        %v4308 = vld [vmem:[%s2 + $0x30] sm:$0xff]
        %v4309 = vld [vmem:[%s2 + $0x38] sm:$0xff]
        %v4310 = vld [vmem:[%s2 + $0x40] sm:$0xff]
        %v4311 = vld [vmem:[%s2 + $0x48] sm:$0xff]
        %v4312 = vld [vmem:[#allocation2 + $0x1] sm:$0xff]
        %v4313 = vld [vmem:[#allocation2 + $0x11] sm:$0xff]
        %v4314 = vld [vmem:[#allocation2 + $0x21] sm:$0xff]
        %v4315 = vld [vmem:[#allocation2 + $0x31] sm:$0xff]
        %v4316 = vld [vmem:[#allocation2 + $0x41] sm:$0xff]
        %v4317 = vld [vmem:[#allocation2 + $0x51] sm:$0xff]
        %v4318 = vld [vmem:[#allocation2 + $0x61] sm:$0xff]
        %v4319 = vld [vmem:[#allocation2 + $0x71] sm:$0xff]
        %s4320 = scalar_lea.vmem %s2, 80
        %v4321 = vld [vmem:[%s4320] sm:$0xff]
        %v4322 = vld [vmem:[%s4320 + $0x8] sm:$0xff]
        %v4323 = vld [vmem:[%s4320 + $0x10] sm:$0xff]
        %v4324 = vld [vmem:[%s4320 + $0x18] sm:$0xff]
        %v4325 = vld [vmem:[%s4320 + $0x20] sm:$0xff]
        %v4326 = vld [vmem:[%s4320 + $0x28] sm:$0xff]
        %v4327 = vld [vmem:[%s4320 + $0x30] sm:$0xff]
        %v4328 = vld [vmem:[%s4320 + $0x38] sm:$0xff]
        %v4329 = vld [vmem:[%s4320 + $0x40] sm:$0xff]
        %v4330 = vld [vmem:[%s4320 + $0x48] sm:$0xff]
        %v4332 = vsel %vm4230, %v4312, 0
        %v4335 = vsel %vm4230, %v4313, 0
        %v4338 = vsel %vm4230, %v4314, 0
        %v4341 = vsel %vm4230, %v4315, 0
        %v4344 = vsel %vm4230, %v4316, 0
        %v4347 = vsel %vm4230, %v4317, 0
        %v4350 = vsel %vm4230, %v4318, 0
        %v4353 = vsel %vm4230, %v4319, 0
        %4355 = vmatpush.msra.mxu0 0.0
        %4356 = vmatpush.msra.mxu0 0.0
        %4357 = vmatpush.msra.mxu0 0.0
        %4358 = vmatpush.msra.mxu0 0.0
        %4359 = vmatpush.msra.mxu0 0.0
        %4360 = vmatpush.msra.mxu0 0.0
        %v4361 = vand.u32 %v4330, 4294901760
        %4362 = vmatpush.msra.mxu0 %v4361
        %v4363 = vand.u32 %v4329, 4294901760
        %4364 = vmatpush.msra.mxu0 %v4363
        %v4365 = vand.u32 %v4328, 4294901760
        %4366 = vmatpush.msra.mxu0 %v4365
        %v4367 = vand.u32 %v4327, 4294901760
        %4368 = vmatpush.msra.mxu0 %v4367
        %v4369 = vand.u32 %v4326, 4294901760
        %4370 = vmatpush.msra.mxu0 %v4369
        %v4371 = vand.u32 %v4325, 4294901760
        %4372 = vmatpush.msra.mxu0 %v4371
        %v4373 = vand.u32 %v4324, 4294901760
        %4374 = vmatpush.msra.mxu0 %v4373
        %v4375 = vand.u32 %v4323, 4294901760
        %4376 = vmatpush.msra.mxu0 %v4375
        %v4377 = vand.u32 %v4322, 4294901760
        %4378 = vmatpush.msra.mxu0 %v4377
        %v4379 = vand.u32 %v4321, 4294901760
        %4380 = vmatpush.msra.mxu0 %v4379
        %v4381 = vand.u32 %v4332, 4294901760
        %v4382 = vsub.f32 %v4332, %v4381
        %v4383 = vand.u32 %v4382, 4294901760
        %v4384 = vsub.f32 %v4382, %v4383
        %v4385 = vand.u32 %v4384, 4294901760
        %4386 = vmatmul.f32.gmra.mxu0 %v4385
        %v4387 = vpop.f32.mrf.mxu0
        %v4388 = vadd.f32 0.0, %v4387
        %v4389 = vand.u32 %v4335, 4294901760
        %v4390 = vsub.f32 %v4335, %v4389
        %v4391 = vand.u32 %v4390, 4294901760
        %v4392 = vsub.f32 %v4390, %v4391
        %v4393 = vand.u32 %v4392, 4294901760
        %4394 = vmatmul.f32.gmra.mxu0 %v4393
        %v4395 = vpop.f32.mrf.mxu0
        %v4396 = vadd.f32 0.0, %v4395
        %v4397 = vand.u32 %v4338, 4294901760
        %v4398 = vsub.f32 %v4338, %v4397
        %v4399 = vand.u32 %v4398, 4294901760
        %v4400 = vsub.f32 %v4398, %v4399
        %v4401 = vand.u32 %v4400, 4294901760
        %4402 = vmatmul.f32.gmra.mxu0 %v4401
        %v4403 = vpop.f32.mrf.mxu0
        %v4404 = vadd.f32 0.0, %v4403
        %v4405 = vand.u32 %v4341, 4294901760
        %v4406 = vsub.f32 %v4341, %v4405
        %v4407 = vand.u32 %v4406, 4294901760
        %v4408 = vsub.f32 %v4406, %v4407
        %v4409 = vand.u32 %v4408, 4294901760
        %4410 = vmatmul.f32.gmra.mxu0 %v4409
        %v4411 = vpop.f32.mrf.mxu0
        %v4412 = vadd.f32 0.0, %v4411
        %v4413 = vand.u32 %v4344, 4294901760
        %v4414 = vsub.f32 %v4344, %v4413
        %v4415 = vand.u32 %v4414, 4294901760
        %v4416 = vsub.f32 %v4414, %v4415
        %v4417 = vand.u32 %v4416, 4294901760
        %4418 = vmatmul.f32.gmra.mxu0 %v4417
        %v4419 = vpop.f32.mrf.mxu0
        %v4420 = vadd.f32 0.0, %v4419
        %v4421 = vand.u32 %v4347, 4294901760
        %v4422 = vsub.f32 %v4347, %v4421
        %v4423 = vand.u32 %v4422, 4294901760
        %v4424 = vsub.f32 %v4422, %v4423
        %v4425 = vand.u32 %v4424, 4294901760
        %4426 = vmatmul.f32.gmra.mxu0 %v4425
        %v4427 = vpop.f32.mrf.mxu0
        %v4428 = vadd.f32 0.0, %v4427
        %v4429 = vand.u32 %v4350, 4294901760
        %v4430 = vsub.f32 %v4350, %v4429
        %v4431 = vand.u32 %v4430, 4294901760
        %v4432 = vsub.f32 %v4430, %v4431
        %v4433 = vand.u32 %v4432, 4294901760
        %4434 = vmatmul.f32.gmra.mxu0 %v4433
        %v4435 = vpop.f32.mrf.mxu0
        %v4436 = vadd.f32 0.0, %v4435
        %v4437 = vand.u32 %v4353, 4294901760
        %v4438 = vsub.f32 %v4353, %v4437
        %v4439 = vand.u32 %v4438, 4294901760
        %v4440 = vsub.f32 %v4438, %v4439
        %v4441 = vand.u32 %v4440, 4294901760
        %4442 = vmatmul.f32.gmra.mxu0 %v4441
        %v4443 = vpop.f32.mrf.mxu0
        %v4444 = vadd.f32 0.0, %v4443
        %4445 = vdwg.mxu0
        %4446 = vmatpush.msra.mxu0 0.0
        %4447 = vmatpush.msra.mxu0 0.0
        %4448 = vmatpush.msra.mxu0 0.0
        %4449 = vmatpush.msra.mxu0 0.0
        %4450 = vmatpush.msra.mxu0 0.0
        %4451 = vmatpush.msra.mxu0 0.0
        %v4452 = vand.u32 %v4330, 4294901760
        %v4453 = vsub.f32 %v4330, %v4452
        %v4454 = vand.u32 %v4453, 4294901760
        %v4455 = vsub.f32 %v4453, %v4454
        %v4456 = vand.u32 %v4455, 4294901760
        %4457 = vmatpush.msra.mxu0 %v4456
        %v4458 = vand.u32 %v4329, 4294901760
        %v4459 = vsub.f32 %v4329, %v4458
        %v4460 = vand.u32 %v4459, 4294901760
        %v4461 = vsub.f32 %v4459, %v4460
        %v4462 = vand.u32 %v4461, 4294901760
        %4463 = vmatpush.msra.mxu0 %v4462
        %v4464 = vand.u32 %v4328, 4294901760
        %v4465 = vsub.f32 %v4328, %v4464
        %v4466 = vand.u32 %v4465, 4294901760
        %v4467 = vsub.f32 %v4465, %v4466
        %v4468 = vand.u32 %v4467, 4294901760
        %4469 = vmatpush.msra.mxu0 %v4468
        %v4470 = vand.u32 %v4327, 4294901760
        %v4471 = vsub.f32 %v4327, %v4470
        %v4472 = vand.u32 %v4471, 4294901760
        %v4473 = vsub.f32 %v4471, %v4472
        %v4474 = vand.u32 %v4473, 4294901760
        %4475 = vmatpush.msra.mxu0 %v4474
        %v4476 = vand.u32 %v4326, 4294901760
        %v4477 = vsub.f32 %v4326, %v4476
        %v4478 = vand.u32 %v4477, 4294901760
        %v4479 = vsub.f32 %v4477, %v4478
        %v4480 = vand.u32 %v4479, 4294901760
        %4481 = vmatpush.msra.mxu0 %v4480
        %v4482 = vand.u32 %v4325, 4294901760
        %v4483 = vsub.f32 %v4325, %v4482
        %v4484 = vand.u32 %v4483, 4294901760
        %v4485 = vsub.f32 %v4483, %v4484
        %v4486 = vand.u32 %v4485, 4294901760
        %4487 = vmatpush.msra.mxu0 %v4486
        %v4488 = vand.u32 %v4324, 4294901760
        %v4489 = vsub.f32 %v4324, %v4488
        %v4490 = vand.u32 %v4489, 4294901760
        %v4491 = vsub.f32 %v4489, %v4490
        %v4492 = vand.u32 %v4491, 4294901760
        %4493 = vmatpush.msra.mxu0 %v4492
        %v4494 = vand.u32 %v4323, 4294901760
        %v4495 = vsub.f32 %v4323, %v4494
        %v4496 = vand.u32 %v4495, 4294901760
        %v4497 = vsub.f32 %v4495, %v4496
        %v4498 = vand.u32 %v4497, 4294901760
        %4499 = vmatpush.msra.mxu0 %v4498
        %v4500 = vand.u32 %v4322, 4294901760
        %v4501 = vsub.f32 %v4322, %v4500
        %v4502 = vand.u32 %v4501, 4294901760
        %v4503 = vsub.f32 %v4501, %v4502
        %v4504 = vand.u32 %v4503, 4294901760
        %4505 = vmatpush.msra.mxu0 %v4504
        %v4506 = vand.u32 %v4321, 4294901760
        %v4507 = vsub.f32 %v4321, %v4506
        %v4508 = vand.u32 %v4507, 4294901760
        %v4509 = vsub.f32 %v4507, %v4508
        %v4510 = vand.u32 %v4509, 4294901760
        %4511 = vmatpush.msra.mxu0 %v4510
        %v4512 = vand.u32 %v4332, 4294901760
        %4513 = vmatmul.f32.gmra.mxu0 %v4512
        %v4514 = vpop.f32.mrf.mxu0
        %v4515 = vadd.f32 %v4388, %v4514
        %v4516 = vand.u32 %v4335, 4294901760
        %4517 = vmatmul.f32.gmra.mxu0 %v4516
        %v4518 = vpop.f32.mrf.mxu0
        %v4519 = vadd.f32 %v4396, %v4518
        %v4520 = vand.u32 %v4338, 4294901760
        %4521 = vmatmul.f32.gmra.mxu0 %v4520
        %v4522 = vpop.f32.mrf.mxu0
        %v4523 = vadd.f32 %v4404, %v4522
        %v4524 = vand.u32 %v4341, 4294901760
        %4525 = vmatmul.f32.gmra.mxu0 %v4524
        %v4526 = vpop.f32.mrf.mxu0
        %v4527 = vadd.f32 %v4412, %v4526
        %v4528 = vand.u32 %v4344, 4294901760
        %4529 = vmatmul.f32.gmra.mxu0 %v4528
        %v4530 = vpop.f32.mrf.mxu0
        %v4531 = vadd.f32 %v4420, %v4530
        %v4532 = vand.u32 %v4347, 4294901760
        %4533 = vmatmul.f32.gmra.mxu0 %v4532
        %v4534 = vpop.f32.mrf.mxu0
        %v4535 = vadd.f32 %v4428, %v4534
        %v4536 = vand.u32 %v4350, 4294901760
        %4537 = vmatmul.f32.gmra.mxu0 %v4536
        %v4538 = vpop.f32.mrf.mxu0
        %v4539 = vadd.f32 %v4436, %v4538
        %v4540 = vand.u32 %v4353, 4294901760
        %4541 = vmatmul.f32.gmra.mxu0 %v4540
        %v4542 = vpop.f32.mrf.mxu0
        %v4543 = vadd.f32 %v4444, %v4542
        %4544 = vdwg.mxu0
        %4545 = vmatpush.msra.mxu0 0.0
        %4546 = vmatpush.msra.mxu0 0.0
        %4547 = vmatpush.msra.mxu0 0.0
        %4548 = vmatpush.msra.mxu0 0.0
        %4549 = vmatpush.msra.mxu0 0.0
        %4550 = vmatpush.msra.mxu0 0.0
        %v4551 = vand.u32 %v4330, 4294901760
        %v4552 = vsub.f32 %v4330, %v4551
        %4553 = vmatpush.msra.mxu0 %v4552
        %v4554 = vand.u32 %v4329, 4294901760
        %v4555 = vsub.f32 %v4329, %v4554
        %4556 = vmatpush.msra.mxu0 %v4555
        %v4557 = vand.u32 %v4328, 4294901760
        %v4558 = vsub.f32 %v4328, %v4557
        %4559 = vmatpush.msra.mxu0 %v4558
        %v4560 = vand.u32 %v4327, 4294901760
        %v4561 = vsub.f32 %v4327, %v4560
        %4562 = vmatpush.msra.mxu0 %v4561
        %v4563 = vand.u32 %v4326, 4294901760
        %v4564 = vsub.f32 %v4326, %v4563
        %4565 = vmatpush.msra.mxu0 %v4564
        %v4566 = vand.u32 %v4325, 4294901760
        %v4567 = vsub.f32 %v4325, %v4566
        %4568 = vmatpush.msra.mxu0 %v4567
        %v4569 = vand.u32 %v4324, 4294901760
        %v4570 = vsub.f32 %v4324, %v4569
        %4571 = vmatpush.msra.mxu0 %v4570
        %v4572 = vand.u32 %v4323, 4294901760
        %v4573 = vsub.f32 %v4323, %v4572
        %4574 = vmatpush.msra.mxu0 %v4573
        %v4575 = vand.u32 %v4322, 4294901760
        %v4576 = vsub.f32 %v4322, %v4575
        %4577 = vmatpush.msra.mxu0 %v4576
        %v4578 = vand.u32 %v4321, 4294901760
        %v4579 = vsub.f32 %v4321, %v4578
        %4580 = vmatpush.msra.mxu0 %v4579
        %v4581 = vand.u32 %v4332, 4294901760
        %v4582 = vsub.f32 %v4332, %v4581
        %4583 = vmatmul.f32.gmra.mxu0 %v4582
        %v4584 = vpop.f32.mrf.mxu0
        %v4585 = vadd.f32 %v4515, %v4584
        %v4586 = vand.u32 %v4335, 4294901760
        %v4587 = vsub.f32 %v4335, %v4586
        %4588 = vmatmul.f32.gmra.mxu0 %v4587
        %v4589 = vpop.f32.mrf.mxu0
        %v4590 = vadd.f32 %v4519, %v4589
        %v4591 = vand.u32 %v4338, 4294901760
        %v4592 = vsub.f32 %v4338, %v4591
        %4593 = vmatmul.f32.gmra.mxu0 %v4592
        %v4594 = vpop.f32.mrf.mxu0
        %v4595 = vadd.f32 %v4523, %v4594
        %v4596 = vand.u32 %v4341, 4294901760
        %v4597 = vsub.f32 %v4341, %v4596
        %4598 = vmatmul.f32.gmra.mxu0 %v4597
        %v4599 = vpop.f32.mrf.mxu0
        %v4600 = vadd.f32 %v4527, %v4599
        %v4601 = vand.u32 %v4344, 4294901760
        %v4602 = vsub.f32 %v4344, %v4601
        %4603 = vmatmul.f32.gmra.mxu0 %v4602
        %v4604 = vpop.f32.mrf.mxu0
        %v4605 = vadd.f32 %v4531, %v4604
        %v4606 = vand.u32 %v4347, 4294901760
        %v4607 = vsub.f32 %v4347, %v4606
        %4608 = vmatmul.f32.gmra.mxu0 %v4607
        %v4609 = vpop.f32.mrf.mxu0
        %v4610 = vadd.f32 %v4535, %v4609
        %v4611 = vand.u32 %v4350, 4294901760
        %v4612 = vsub.f32 %v4350, %v4611
        %4613 = vmatmul.f32.gmra.mxu0 %v4612
        %v4614 = vpop.f32.mrf.mxu0
        %v4615 = vadd.f32 %v4539, %v4614
        %v4616 = vand.u32 %v4353, 4294901760
        %v4617 = vsub.f32 %v4353, %v4616
        %4618 = vmatmul.f32.gmra.mxu0 %v4617
        %v4619 = vpop.f32.mrf.mxu0
        %v4620 = vadd.f32 %v4543, %v4619
        %4621 = vdwg.mxu0
        %4622 = vmatpush.msra.mxu0 0.0
        %4623 = vmatpush.msra.mxu0 0.0
        %4624 = vmatpush.msra.mxu0 0.0
        %4625 = vmatpush.msra.mxu0 0.0
        %4626 = vmatpush.msra.mxu0 0.0
        %4627 = vmatpush.msra.mxu0 0.0
        %v4628 = vand.u32 %v4330, 4294901760
        %4629 = vmatpush.msra.mxu0 %v4628
        %v4630 = vand.u32 %v4329, 4294901760
        %4631 = vmatpush.msra.mxu0 %v4630
        %v4632 = vand.u32 %v4328, 4294901760
        %4633 = vmatpush.msra.mxu0 %v4632
        %v4634 = vand.u32 %v4327, 4294901760
        %4635 = vmatpush.msra.mxu0 %v4634
        %v4636 = vand.u32 %v4326, 4294901760
        %4637 = vmatpush.msra.mxu0 %v4636
        %v4638 = vand.u32 %v4325, 4294901760
        %4639 = vmatpush.msra.mxu0 %v4638
        %v4640 = vand.u32 %v4324, 4294901760
        %4641 = vmatpush.msra.mxu0 %v4640
        %v4642 = vand.u32 %v4323, 4294901760
        %4643 = vmatpush.msra.mxu0 %v4642
        %v4644 = vand.u32 %v4322, 4294901760
        %4645 = vmatpush.msra.mxu0 %v4644
        %v4646 = vand.u32 %v4321, 4294901760
        %4647 = vmatpush.msra.mxu0 %v4646
        %v4648 = vand.u32 %v4332, 4294901760
        %v4649 = vsub.f32 %v4332, %v4648
        %v4650 = vand.u32 %v4649, 4294901760
        %4651 = vmatmul.f32.gmra.mxu0 %v4650
        %v4652 = vpop.f32.mrf.mxu0
        %v4653 = vadd.f32 %v4585, %v4652
        %v4654 = vand.u32 %v4335, 4294901760
        %v4655 = vsub.f32 %v4335, %v4654
        %v4656 = vand.u32 %v4655, 4294901760
        %4657 = vmatmul.f32.gmra.mxu0 %v4656
        %v4658 = vpop.f32.mrf.mxu0
        %v4659 = vadd.f32 %v4590, %v4658
        %v4660 = vand.u32 %v4338, 4294901760
        %v4661 = vsub.f32 %v4338, %v4660
        %v4662 = vand.u32 %v4661, 4294901760
        %4663 = vmatmul.f32.gmra.mxu0 %v4662
        %v4664 = vpop.f32.mrf.mxu0
        %v4665 = vadd.f32 %v4595, %v4664
        %v4666 = vand.u32 %v4341, 4294901760
        %v4667 = vsub.f32 %v4341, %v4666
        %v4668 = vand.u32 %v4667, 4294901760
        %4669 = vmatmul.f32.gmra.mxu0 %v4668
        %v4670 = vpop.f32.mrf.mxu0
        %v4671 = vadd.f32 %v4600, %v4670
        %v4672 = vand.u32 %v4344, 4294901760
        %v4673 = vsub.f32 %v4344, %v4672
        %v4674 = vand.u32 %v4673, 4294901760
        %4675 = vmatmul.f32.gmra.mxu0 %v4674
        %v4676 = vpop.f32.mrf.mxu0
        %v4677 = vadd.f32 %v4605, %v4676
        %v4678 = vand.u32 %v4347, 4294901760
        %v4679 = vsub.f32 %v4347, %v4678
        %v4680 = vand.u32 %v4679, 4294901760
        %4681 = vmatmul.f32.gmra.mxu0 %v4680
        %v4682 = vpop.f32.mrf.mxu0
        %v4683 = vadd.f32 %v4610, %v4682
        %v4684 = vand.u32 %v4350, 4294901760
        %v4685 = vsub.f32 %v4350, %v4684
        %v4686 = vand.u32 %v4685, 4294901760
        %4687 = vmatmul.f32.gmra.mxu0 %v4686
        %v4688 = vpop.f32.mrf.mxu0
        %v4689 = vadd.f32 %v4615, %v4688
        %v4690 = vand.u32 %v4353, 4294901760
        %v4691 = vsub.f32 %v4353, %v4690
        %v4692 = vand.u32 %v4691, 4294901760
        %4693 = vmatmul.f32.gmra.mxu0 %v4692
        %v4694 = vpop.f32.mrf.mxu0
        %v4695 = vadd.f32 %v4620, %v4694
        %4696 = vdwg.mxu0
        %4697 = vmatpush.msra.mxu0 0.0
        %4698 = vmatpush.msra.mxu0 0.0
        %4699 = vmatpush.msra.mxu0 0.0
        %4700 = vmatpush.msra.mxu0 0.0
        %4701 = vmatpush.msra.mxu0 0.0
        %4702 = vmatpush.msra.mxu0 0.0
        %v4703 = vand.u32 %v4330, 4294901760
        %v4704 = vsub.f32 %v4330, %v4703
        %v4705 = vand.u32 %v4704, 4294901760
        %4706 = vmatpush.msra.mxu0 %v4705
        %v4707 = vand.u32 %v4329, 4294901760
        %v4708 = vsub.f32 %v4329, %v4707
        %v4709 = vand.u32 %v4708, 4294901760
        %4710 = vmatpush.msra.mxu0 %v4709
        %v4711 = vand.u32 %v4328, 4294901760
        %v4712 = vsub.f32 %v4328, %v4711
        %v4713 = vand.u32 %v4712, 4294901760
        %4714 = vmatpush.msra.mxu0 %v4713
        %v4715 = vand.u32 %v4327, 4294901760
        %v4716 = vsub.f32 %v4327, %v4715
        %v4717 = vand.u32 %v4716, 4294901760
        %4718 = vmatpush.msra.mxu0 %v4717
        %v4719 = vand.u32 %v4326, 4294901760
        %v4720 = vsub.f32 %v4326, %v4719
        %v4721 = vand.u32 %v4720, 4294901760
        %4722 = vmatpush.msra.mxu0 %v4721
        %v4723 = vand.u32 %v4325, 4294901760
        %v4724 = vsub.f32 %v4325, %v4723
        %v4725 = vand.u32 %v4724, 4294901760
        %4726 = vmatpush.msra.mxu0 %v4725
        %v4727 = vand.u32 %v4324, 4294901760
        %v4728 = vsub.f32 %v4324, %v4727
        %v4729 = vand.u32 %v4728, 4294901760
        %4730 = vmatpush.msra.mxu0 %v4729
        %v4731 = vand.u32 %v4323, 4294901760
        %v4732 = vsub.f32 %v4323, %v4731
        %v4733 = vand.u32 %v4732, 4294901760
        %4734 = vmatpush.msra.mxu0 %v4733
        %v4735 = vand.u32 %v4322, 4294901760
        %v4736 = vsub.f32 %v4322, %v4735
        %v4737 = vand.u32 %v4736, 4294901760
        %4738 = vmatpush.msra.mxu0 %v4737
        %v4739 = vand.u32 %v4321, 4294901760
        %v4740 = vsub.f32 %v4321, %v4739
        %v4741 = vand.u32 %v4740, 4294901760
        %4742 = vmatpush.msra.mxu0 %v4741
        %v4743 = vand.u32 %v4332, 4294901760
        %4744 = vmatmul.f32.gmra.mxu0 %v4743
        %v4745 = vpop.f32.mrf.mxu0
        %v4746 = vadd.f32 %v4653, %v4745
        %v4747 = vand.u32 %v4335, 4294901760
        %4748 = vmatmul.f32.gmra.mxu0 %v4747
        %v4749 = vpop.f32.mrf.mxu0
        %v4750 = vadd.f32 %v4659, %v4749
        %v4751 = vand.u32 %v4338, 4294901760
        %4752 = vmatmul.f32.gmra.mxu0 %v4751
        %v4753 = vpop.f32.mrf.mxu0
        %v4754 = vadd.f32 %v4665, %v4753
        %v4755 = vand.u32 %v4341, 4294901760
        %4756 = vmatmul.f32.gmra.mxu0 %v4755
        %v4757 = vpop.f32.mrf.mxu0
        %v4758 = vadd.f32 %v4671, %v4757
        %v4759 = vand.u32 %v4344, 4294901760
        %4760 = vmatmul.f32.gmra.mxu0 %v4759
        %v4761 = vpop.f32.mrf.mxu0
        %v4762 = vadd.f32 %v4677, %v4761
        %v4763 = vand.u32 %v4347, 4294901760
        %4764 = vmatmul.f32.gmra.mxu0 %v4763
        %v4765 = vpop.f32.mrf.mxu0
        %v4766 = vadd.f32 %v4683, %v4765
        %v4767 = vand.u32 %v4350, 4294901760
        %4768 = vmatmul.f32.gmra.mxu0 %v4767
        %v4769 = vpop.f32.mrf.mxu0
        %v4770 = vadd.f32 %v4689, %v4769
        %v4771 = vand.u32 %v4353, 4294901760
        %4772 = vmatmul.f32.gmra.mxu0 %v4771
        %v4773 = vpop.f32.mrf.mxu0
        %v4774 = vadd.f32 %v4695, %v4773
        %4775 = vdwg.mxu0
        %4776 = vmatpush.msra.mxu0 0.0
        %4777 = vmatpush.msra.mxu0 0.0
        %4778 = vmatpush.msra.mxu0 0.0
        %4779 = vmatpush.msra.mxu0 0.0
        %4780 = vmatpush.msra.mxu0 0.0
        %4781 = vmatpush.msra.mxu0 0.0
        %v4782 = vand.u32 %v4330, 4294901760
        %4783 = vmatpush.msra.mxu0 %v4782
        %v4784 = vand.u32 %v4329, 4294901760
        %4785 = vmatpush.msra.mxu0 %v4784
        %v4786 = vand.u32 %v4328, 4294901760
        %4787 = vmatpush.msra.mxu0 %v4786
        %v4788 = vand.u32 %v4327, 4294901760
        %4789 = vmatpush.msra.mxu0 %v4788
        %v4790 = vand.u32 %v4326, 4294901760
        %4791 = vmatpush.msra.mxu0 %v4790
        %v4792 = vand.u32 %v4325, 4294901760
        %4793 = vmatpush.msra.mxu0 %v4792
        %v4794 = vand.u32 %v4324, 4294901760
        %4795 = vmatpush.msra.mxu0 %v4794
        %v4796 = vand.u32 %v4323, 4294901760
        %4797 = vmatpush.msra.mxu0 %v4796
        %v4798 = vand.u32 %v4322, 4294901760
        %4799 = vmatpush.msra.mxu0 %v4798
        %v4800 = vand.u32 %v4321, 4294901760
        %4801 = vmatpush.msra.mxu0 %v4800
        %v4802 = vand.u32 %v4332, 4294901760
        %4803 = vmatmul.f32.gmra.mxu0 %v4802
        %v4804 = vpop.f32.mrf.mxu0
        %v4805 = vadd.f32 %v4746, %v4804
        %v4806 = vand.u32 %v4335, 4294901760
        %4807 = vmatmul.f32.gmra.mxu0 %v4806
        %v4808 = vpop.f32.mrf.mxu0
        %v4809 = vadd.f32 %v4750, %v4808
        %v4810 = vand.u32 %v4338, 4294901760
        %4811 = vmatmul.f32.gmra.mxu0 %v4810
        %v4812 = vpop.f32.mrf.mxu0
        %v4813 = vadd.f32 %v4754, %v4812
        %v4814 = vand.u32 %v4341, 4294901760
        %4815 = vmatmul.f32.gmra.mxu0 %v4814
        %v4816 = vpop.f32.mrf.mxu0
        %v4817 = vadd.f32 %v4758, %v4816
        %v4818 = vand.u32 %v4344, 4294901760
        %4819 = vmatmul.f32.gmra.mxu0 %v4818
        %v4820 = vpop.f32.mrf.mxu0
        %v4821 = vadd.f32 %v4762, %v4820
        %v4822 = vand.u32 %v4347, 4294901760
        %4823 = vmatmul.f32.gmra.mxu0 %v4822
        %v4824 = vpop.f32.mrf.mxu0
        %v4825 = vadd.f32 %v4766, %v4824
        %v4826 = vand.u32 %v4350, 4294901760
        %4827 = vmatmul.f32.gmra.mxu0 %v4826
        %v4828 = vpop.f32.mrf.mxu0
        %v4829 = vadd.f32 %v4770, %v4828
        %v4830 = vand.u32 %v4353, 4294901760
        %4831 = vmatmul.f32.gmra.mxu0 %v4830
        %v4832 = vpop.f32.mrf.mxu0
        %v4833 = vadd.f32 %v4774, %v4832
        %4834 = vdwg.mxu0
        %v4836 = vsel %vm4230, %v4294, 0
        %v4839 = vsel %vm4230, %v4295, 0
        %v4842 = vsel %vm4230, %v4296, 0
        %v4845 = vsel %vm4230, %v4297, 0
        %v4848 = vsel %vm4230, %v4298, 0
        %v4851 = vsel %vm4230, %v4299, 0
        %v4854 = vsel %vm4230, %v4300, 0
        %v4857 = vsel %vm4230, %v4301, 0
        %4859 = vmatpush.msra.mxu0 0.0
        %4860 = vmatpush.msra.mxu0 0.0
        %4861 = vmatpush.msra.mxu0 0.0
        %4862 = vmatpush.msra.mxu0 0.0
        %4863 = vmatpush.msra.mxu0 0.0
        %4864 = vmatpush.msra.mxu0 0.0
        %v4865 = vand.u32 %v4311, 4294901760
        %4866 = vmatpush.msra.mxu0 %v4865
        %v4867 = vand.u32 %v4310, 4294901760
        %4868 = vmatpush.msra.mxu0 %v4867
        %v4869 = vand.u32 %v4309, 4294901760
        %4870 = vmatpush.msra.mxu0 %v4869
        %v4871 = vand.u32 %v4308, 4294901760
        %4872 = vmatpush.msra.mxu0 %v4871
        %v4873 = vand.u32 %v4307, 4294901760
        %4874 = vmatpush.msra.mxu0 %v4873
        %v4875 = vand.u32 %v4306, 4294901760
        %4876 = vmatpush.msra.mxu0 %v4875
        %v4877 = vand.u32 %v4305, 4294901760
        %4878 = vmatpush.msra.mxu0 %v4877
        %v4879 = vand.u32 %v4304, 4294901760
        %4880 = vmatpush.msra.mxu0 %v4879
        %v4881 = vand.u32 %v4303, 4294901760
        %4882 = vmatpush.msra.mxu0 %v4881
        %v4883 = vand.u32 %v4302, 4294901760
        %4884 = vmatpush.msra.mxu0 %v4883
        %v4885 = vand.u32 %v4836, 4294901760
        %v4886 = vsub.f32 %v4836, %v4885
        %v4887 = vand.u32 %v4886, 4294901760
        %v4888 = vsub.f32 %v4886, %v4887
        %v4889 = vand.u32 %v4888, 4294901760
        %4890 = vmatmul.f32.gmra.mxu0 %v4889
        %v4891 = vpop.f32.mrf.mxu0
        %v4892 = vadd.f32 %v4805, %v4891
        %v4893 = vand.u32 %v4839, 4294901760
        %v4894 = vsub.f32 %v4839, %v4893
        %v4895 = vand.u32 %v4894, 4294901760
        %v4896 = vsub.f32 %v4894, %v4895
        %v4897 = vand.u32 %v4896, 4294901760
        %4898 = vmatmul.f32.gmra.mxu0 %v4897
        %v4899 = vpop.f32.mrf.mxu0
        %v4900 = vadd.f32 %v4809, %v4899
        %v4901 = vand.u32 %v4842, 4294901760
        %v4902 = vsub.f32 %v4842, %v4901
        %v4903 = vand.u32 %v4902, 4294901760
        %v4904 = vsub.f32 %v4902, %v4903
        %v4905 = vand.u32 %v4904, 4294901760
        %4906 = vmatmul.f32.gmra.mxu0 %v4905
        %v4907 = vpop.f32.mrf.mxu0
        %v4908 = vadd.f32 %v4813, %v4907
        %v4909 = vand.u32 %v4845, 4294901760
        %v4910 = vsub.f32 %v4845, %v4909
        %v4911 = vand.u32 %v4910, 4294901760
        %v4912 = vsub.f32 %v4910, %v4911
        %v4913 = vand.u32 %v4912, 4294901760
        %4914 = vmatmul.f32.gmra.mxu0 %v4913
        %v4915 = vpop.f32.mrf.mxu0
        %v4916 = vadd.f32 %v4817, %v4915
        %v4917 = vand.u32 %v4848, 4294901760
        %v4918 = vsub.f32 %v4848, %v4917
        %v4919 = vand.u32 %v4918, 4294901760
        %v4920 = vsub.f32 %v4918, %v4919
        %v4921 = vand.u32 %v4920, 4294901760
        %4922 = vmatmul.f32.gmra.mxu0 %v4921
        %v4923 = vpop.f32.mrf.mxu0
        %v4924 = vadd.f32 %v4821, %v4923
        %v4925 = vand.u32 %v4851, 4294901760
        %v4926 = vsub.f32 %v4851, %v4925
        %v4927 = vand.u32 %v4926, 4294901760
        %v4928 = vsub.f32 %v4926, %v4927
        %v4929 = vand.u32 %v4928, 4294901760
        %4930 = vmatmul.f32.gmra.mxu0 %v4929
        %v4931 = vpop.f32.mrf.mxu0
        %v4932 = vadd.f32 %v4825, %v4931
        %v4933 = vand.u32 %v4854, 4294901760
        %v4934 = vsub.f32 %v4854, %v4933
        %v4935 = vand.u32 %v4934, 4294901760
        %v4936 = vsub.f32 %v4934, %v4935
        %v4937 = vand.u32 %v4936, 4294901760
        %4938 = vmatmul.f32.gmra.mxu0 %v4937
        %v4939 = vpop.f32.mrf.mxu0
        %v4940 = vadd.f32 %v4829, %v4939
        %v4941 = vand.u32 %v4857, 4294901760
        %v4942 = vsub.f32 %v4857, %v4941
        %v4943 = vand.u32 %v4942, 4294901760
        %v4944 = vsub.f32 %v4942, %v4943
        %v4945 = vand.u32 %v4944, 4294901760
        %4946 = vmatmul.f32.gmra.mxu0 %v4945
        %v4947 = vpop.f32.mrf.mxu0
        %v4948 = vadd.f32 %v4833, %v4947
        %4949 = vdwg.mxu0
        %4950 = vmatpush.msra.mxu0 0.0
        %4951 = vmatpush.msra.mxu0 0.0
        %4952 = vmatpush.msra.mxu0 0.0
        %4953 = vmatpush.msra.mxu0 0.0
        %4954 = vmatpush.msra.mxu0 0.0
        %4955 = vmatpush.msra.mxu0 0.0
        %v4956 = vand.u32 %v4311, 4294901760
        %v4957 = vsub.f32 %v4311, %v4956
        %v4958 = vand.u32 %v4957, 4294901760
        %v4959 = vsub.f32 %v4957, %v4958
        %v4960 = vand.u32 %v4959, 4294901760
        %4961 = vmatpush.msra.mxu0 %v4960
        %v4962 = vand.u32 %v4310, 4294901760
        %v4963 = vsub.f32 %v4310, %v4962
        %v4964 = vand.u32 %v4963, 4294901760
        %v4965 = vsub.f32 %v4963, %v4964
        %v4966 = vand.u32 %v4965, 4294901760
        %4967 = vmatpush.msra.mxu0 %v4966
        %v4968 = vand.u32 %v4309, 4294901760
        %v4969 = vsub.f32 %v4309, %v4968
        %v4970 = vand.u32 %v4969, 4294901760
        %v4971 = vsub.f32 %v4969, %v4970
        %v4972 = vand.u32 %v4971, 4294901760
        %4973 = vmatpush.msra.mxu0 %v4972
        %v4974 = vand.u32 %v4308, 4294901760
        %v4975 = vsub.f32 %v4308, %v4974
        %v4976 = vand.u32 %v4975, 4294901760
        %v4977 = vsub.f32 %v4975, %v4976
        %v4978 = vand.u32 %v4977, 4294901760
        %4979 = vmatpush.msra.mxu0 %v4978
        %v4980 = vand.u32 %v4307, 4294901760
        %v4981 = vsub.f32 %v4307, %v4980
        %v4982 = vand.u32 %v4981, 4294901760
        %v4983 = vsub.f32 %v4981, %v4982
        %v4984 = vand.u32 %v4983, 4294901760
        %4985 = vmatpush.msra.mxu0 %v4984
        %v4986 = vand.u32 %v4306, 4294901760
        %v4987 = vsub.f32 %v4306, %v4986
        %v4988 = vand.u32 %v4987, 4294901760
        %v4989 = vsub.f32 %v4987, %v4988
        %v4990 = vand.u32 %v4989, 4294901760
        %4991 = vmatpush.msra.mxu0 %v4990
        %v4992 = vand.u32 %v4305, 4294901760
        %v4993 = vsub.f32 %v4305, %v4992
        %v4994 = vand.u32 %v4993, 4294901760
        %v4995 = vsub.f32 %v4993, %v4994
        %v4996 = vand.u32 %v4995, 4294901760
        %4997 = vmatpush.msra.mxu0 %v4996
        %v4998 = vand.u32 %v4304, 4294901760
        %v4999 = vsub.f32 %v4304, %v4998
        %v5000 = vand.u32 %v4999, 4294901760
        %v5001 = vsub.f32 %v4999, %v5000
        %v5002 = vand.u32 %v5001, 4294901760
        %5003 = vmatpush.msra.mxu0 %v5002
        %v5004 = vand.u32 %v4303, 4294901760
        %v5005 = vsub.f32 %v4303, %v5004
        %v5006 = vand.u32 %v5005, 4294901760
        %v5007 = vsub.f32 %v5005, %v5006
        %v5008 = vand.u32 %v5007, 4294901760
        %5009 = vmatpush.msra.mxu0 %v5008
        %v5010 = vand.u32 %v4302, 4294901760
        %v5011 = vsub.f32 %v4302, %v5010
        %v5012 = vand.u32 %v5011, 4294901760
        %v5013 = vsub.f32 %v5011, %v5012
        %v5014 = vand.u32 %v5013, 4294901760
        %5015 = vmatpush.msra.mxu0 %v5014
        %v5016 = vand.u32 %v4836, 4294901760
        %5017 = vmatmul.f32.gmra.mxu0 %v5016
        %v5018 = vpop.f32.mrf.mxu0
        %v5019 = vadd.f32 %v4892, %v5018
        %v5020 = vand.u32 %v4839, 4294901760
        %5021 = vmatmul.f32.gmra.mxu0 %v5020
        %v5022 = vpop.f32.mrf.mxu0
        %v5023 = vadd.f32 %v4900, %v5022
        %v5024 = vand.u32 %v4842, 4294901760
        %5025 = vmatmul.f32.gmra.mxu0 %v5024
        %v5026 = vpop.f32.mrf.mxu0
        %v5027 = vadd.f32 %v4908, %v5026
        %v5028 = vand.u32 %v4845, 4294901760
        %5029 = vmatmul.f32.gmra.mxu0 %v5028
        %v5030 = vpop.f32.mrf.mxu0
        %v5031 = vadd.f32 %v4916, %v5030
        %v5032 = vand.u32 %v4848, 4294901760
        %5033 = vmatmul.f32.gmra.mxu0 %v5032
        %v5034 = vpop.f32.mrf.mxu0
        %v5035 = vadd.f32 %v4924, %v5034
        %v5036 = vand.u32 %v4851, 4294901760
        %5037 = vmatmul.f32.gmra.mxu0 %v5036
        %v5038 = vpop.f32.mrf.mxu0
        %v5039 = vadd.f32 %v4932, %v5038
        %v5040 = vand.u32 %v4854, 4294901760
        %5041 = vmatmul.f32.gmra.mxu0 %v5040
        %v5042 = vpop.f32.mrf.mxu0
        %v5043 = vadd.f32 %v4940, %v5042
        %v5044 = vand.u32 %v4857, 4294901760
        %5045 = vmatmul.f32.gmra.mxu0 %v5044
        %v5046 = vpop.f32.mrf.mxu0
        %v5047 = vadd.f32 %v4948, %v5046
        %5048 = vdwg.mxu0
        %5049 = vmatpush.msra.mxu0 0.0
        %5050 = vmatpush.msra.mxu0 0.0
        %5051 = vmatpush.msra.mxu0 0.0
        %5052 = vmatpush.msra.mxu0 0.0
        %5053 = vmatpush.msra.mxu0 0.0
        %5054 = vmatpush.msra.mxu0 0.0
        %v5055 = vand.u32 %v4311, 4294901760
        %v5056 = vsub.f32 %v4311, %v5055
        %5057 = vmatpush.msra.mxu0 %v5056
        %v5058 = vand.u32 %v4310, 4294901760
        %v5059 = vsub.f32 %v4310, %v5058
        %5060 = vmatpush.msra.mxu0 %v5059
        %v5061 = vand.u32 %v4309, 4294901760
        %v5062 = vsub.f32 %v4309, %v5061
        %5063 = vmatpush.msra.mxu0 %v5062
        %v5064 = vand.u32 %v4308, 4294901760
        %v5065 = vsub.f32 %v4308, %v5064
        %5066 = vmatpush.msra.mxu0 %v5065
        %v5067 = vand.u32 %v4307, 4294901760
        %v5068 = vsub.f32 %v4307, %v5067
        %5069 = vmatpush.msra.mxu0 %v5068
        %v5070 = vand.u32 %v4306, 4294901760
        %v5071 = vsub.f32 %v4306, %v5070
        %5072 = vmatpush.msra.mxu0 %v5071
        %v5073 = vand.u32 %v4305, 4294901760
        %v5074 = vsub.f32 %v4305, %v5073
        %5075 = vmatpush.msra.mxu0 %v5074
        %v5076 = vand.u32 %v4304, 4294901760
        %v5077 = vsub.f32 %v4304, %v5076
        %5078 = vmatpush.msra.mxu0 %v5077
        %v5079 = vand.u32 %v4303, 4294901760
        %v5080 = vsub.f32 %v4303, %v5079
        %5081 = vmatpush.msra.mxu0 %v5080
        %v5082 = vand.u32 %v4302, 4294901760
        %v5083 = vsub.f32 %v4302, %v5082
        %5084 = vmatpush.msra.mxu0 %v5083
        %v5085 = vand.u32 %v4836, 4294901760
        %v5086 = vsub.f32 %v4836, %v5085
        %5087 = vmatmul.f32.gmra.mxu0 %v5086
        %v5088 = vpop.f32.mrf.mxu0
        %v5089 = vadd.f32 %v5019, %v5088
        %v5090 = vand.u32 %v4839, 4294901760
        %v5091 = vsub.f32 %v4839, %v5090
        %5092 = vmatmul.f32.gmra.mxu0 %v5091
        %v5093 = vpop.f32.mrf.mxu0
        %v5094 = vadd.f32 %v5023, %v5093
        %v5095 = vand.u32 %v4842, 4294901760
        %v5096 = vsub.f32 %v4842, %v5095
        %5097 = vmatmul.f32.gmra.mxu0 %v5096
        %v5098 = vpop.f32.mrf.mxu0
        %v5099 = vadd.f32 %v5027, %v5098
        %v5100 = vand.u32 %v4845, 4294901760
        %v5101 = vsub.f32 %v4845, %v5100
        %5102 = vmatmul.f32.gmra.mxu0 %v5101
        %v5103 = vpop.f32.mrf.mxu0
        %v5104 = vadd.f32 %v5031, %v5103
        %v5105 = vand.u32 %v4848, 4294901760
        %v5106 = vsub.f32 %v4848, %v5105
        %5107 = vmatmul.f32.gmra.mxu0 %v5106
        %v5108 = vpop.f32.mrf.mxu0
        %v5109 = vadd.f32 %v5035, %v5108
        %v5110 = vand.u32 %v4851, 4294901760
        %v5111 = vsub.f32 %v4851, %v5110
        %5112 = vmatmul.f32.gmra.mxu0 %v5111
        %v5113 = vpop.f32.mrf.mxu0
        %v5114 = vadd.f32 %v5039, %v5113
        %v5115 = vand.u32 %v4854, 4294901760
        %v5116 = vsub.f32 %v4854, %v5115
        %5117 = vmatmul.f32.gmra.mxu0 %v5116
        %v5118 = vpop.f32.mrf.mxu0
        %v5119 = vadd.f32 %v5043, %v5118
        %v5120 = vand.u32 %v4857, 4294901760
        %v5121 = vsub.f32 %v4857, %v5120
        %5122 = vmatmul.f32.gmra.mxu0 %v5121
        %v5123 = vpop.f32.mrf.mxu0
        %v5124 = vadd.f32 %v5047, %v5123
        %5125 = vdwg.mxu0
        %5126 = vmatpush.msra.mxu0 0.0
        %5127 = vmatpush.msra.mxu0 0.0
        %5128 = vmatpush.msra.mxu0 0.0
        %5129 = vmatpush.msra.mxu0 0.0
        %5130 = vmatpush.msra.mxu0 0.0
        %5131 = vmatpush.msra.mxu0 0.0
        %v5132 = vand.u32 %v4311, 4294901760
        %5133 = vmatpush.msra.mxu0 %v5132
        %v5134 = vand.u32 %v4310, 4294901760
        %5135 = vmatpush.msra.mxu0 %v5134
        %v5136 = vand.u32 %v4309, 4294901760
        %5137 = vmatpush.msra.mxu0 %v5136
        %v5138 = vand.u32 %v4308, 4294901760
        %5139 = vmatpush.msra.mxu0 %v5138
        %v5140 = vand.u32 %v4307, 4294901760
        %5141 = vmatpush.msra.mxu0 %v5140
        %v5142 = vand.u32 %v4306, 4294901760
        %5143 = vmatpush.msra.mxu0 %v5142
        %v5144 = vand.u32 %v4305, 4294901760
        %5145 = vmatpush.msra.mxu0 %v5144
        %v5146 = vand.u32 %v4304, 4294901760
        %5147 = vmatpush.msra.mxu0 %v5146
        %v5148 = vand.u32 %v4303, 4294901760
        %5149 = vmatpush.msra.mxu0 %v5148
        %v5150 = vand.u32 %v4302, 4294901760
        %5151 = vmatpush.msra.mxu0 %v5150
        %v5152 = vand.u32 %v4836, 4294901760
        %v5153 = vsub.f32 %v4836, %v5152
        %v5154 = vand.u32 %v5153, 4294901760
        %5155 = vmatmul.f32.gmra.mxu0 %v5154
        %v5156 = vpop.f32.mrf.mxu0
        %v5157 = vadd.f32 %v5089, %v5156
        %v5158 = vand.u32 %v4839, 4294901760
        %v5159 = vsub.f32 %v4839, %v5158
        %v5160 = vand.u32 %v5159, 4294901760
        %5161 = vmatmul.f32.gmra.mxu0 %v5160
        %v5162 = vpop.f32.mrf.mxu0
        %v5163 = vadd.f32 %v5094, %v5162
        %v5164 = vand.u32 %v4842, 4294901760
        %v5165 = vsub.f32 %v4842, %v5164
        %v5166 = vand.u32 %v5165, 4294901760
        %5167 = vmatmul.f32.gmra.mxu0 %v5166
        %v5168 = vpop.f32.mrf.mxu0
        %v5169 = vadd.f32 %v5099, %v5168
        %v5170 = vand.u32 %v4845, 4294901760
        %v5171 = vsub.f32 %v4845, %v5170
        %v5172 = vand.u32 %v5171, 4294901760
        %5173 = vmatmul.f32.gmra.mxu0 %v5172
        %v5174 = vpop.f32.mrf.mxu0
        %v5175 = vadd.f32 %v5104, %v5174
        %v5176 = vand.u32 %v4848, 4294901760
        %v5177 = vsub.f32 %v4848, %v5176
        %v5178 = vand.u32 %v5177, 4294901760
        %5179 = vmatmul.f32.gmra.mxu0 %v5178
        %v5180 = vpop.f32.mrf.mxu0
        %v5181 = vadd.f32 %v5109, %v5180
        %v5182 = vand.u32 %v4851, 4294901760
        %v5183 = vsub.f32 %v4851, %v5182
        %v5184 = vand.u32 %v5183, 4294901760
        %5185 = vmatmul.f32.gmra.mxu0 %v5184
        %v5186 = vpop.f32.mrf.mxu0
        %v5187 = vadd.f32 %v5114, %v5186
        %v5188 = vand.u32 %v4854, 4294901760
        %v5189 = vsub.f32 %v4854, %v5188
        %v5190 = vand.u32 %v5189, 4294901760
        %5191 = vmatmul.f32.gmra.mxu0 %v5190
        %v5192 = vpop.f32.mrf.mxu0
        %v5193 = vadd.f32 %v5119, %v5192
        %v5194 = vand.u32 %v4857, 4294901760
        %v5195 = vsub.f32 %v4857, %v5194
        %v5196 = vand.u32 %v5195, 4294901760
        %5197 = vmatmul.f32.gmra.mxu0 %v5196
        %v5198 = vpop.f32.mrf.mxu0
        %v5199 = vadd.f32 %v5124, %v5198
        %5200 = vdwg.mxu0
        %5201 = vmatpush.msra.mxu0 0.0
        %5202 = vmatpush.msra.mxu0 0.0
        %5203 = vmatpush.msra.mxu0 0.0
        %5204 = vmatpush.msra.mxu0 0.0
        %5205 = vmatpush.msra.mxu0 0.0
        %5206 = vmatpush.msra.mxu0 0.0
        %v5207 = vand.u32 %v4311, 4294901760
        %v5208 = vsub.f32 %v4311, %v5207
        %v5209 = vand.u32 %v5208, 4294901760
        %5210 = vmatpush.msra.mxu0 %v5209
        %v5211 = vand.u32 %v4310, 4294901760
        %v5212 = vsub.f32 %v4310, %v5211
        %v5213 = vand.u32 %v5212, 4294901760
        %5214 = vmatpush.msra.mxu0 %v5213
        %v5215 = vand.u32 %v4309, 4294901760
        %v5216 = vsub.f32 %v4309, %v5215
        %v5217 = vand.u32 %v5216, 4294901760
        %5218 = vmatpush.msra.mxu0 %v5217
        %v5219 = vand.u32 %v4308, 4294901760
        %v5220 = vsub.f32 %v4308, %v5219
        %v5221 = vand.u32 %v5220, 4294901760
        %5222 = vmatpush.msra.mxu0 %v5221
        %v5223 = vand.u32 %v4307, 4294901760
        %v5224 = vsub.f32 %v4307, %v5223
        %v5225 = vand.u32 %v5224, 4294901760
        %5226 = vmatpush.msra.mxu0 %v5225
        %v5227 = vand.u32 %v4306, 4294901760
        %v5228 = vsub.f32 %v4306, %v5227
        %v5229 = vand.u32 %v5228, 4294901760
        %5230 = vmatpush.msra.mxu0 %v5229
        %v5231 = vand.u32 %v4305, 4294901760
        %v5232 = vsub.f32 %v4305, %v5231
        %v5233 = vand.u32 %v5232, 4294901760
        %5234 = vmatpush.msra.mxu0 %v5233
        %v5235 = vand.u32 %v4304, 4294901760
        %v5236 = vsub.f32 %v4304, %v5235
        %v5237 = vand.u32 %v5236, 4294901760
        %5238 = vmatpush.msra.mxu0 %v5237
        %v5239 = vand.u32 %v4303, 4294901760
        %v5240 = vsub.f32 %v4303, %v5239
        %v5241 = vand.u32 %v5240, 4294901760
        %5242 = vmatpush.msra.mxu0 %v5241
        %v5243 = vand.u32 %v4302, 4294901760
        %v5244 = vsub.f32 %v4302, %v5243
        %v5245 = vand.u32 %v5244, 4294901760
        %5246 = vmatpush.msra.mxu0 %v5245
        %v5247 = vand.u32 %v4836, 4294901760
        %5248 = vmatmul.f32.gmra.mxu0 %v5247
        %v5249 = vpop.f32.mrf.mxu0
        %v5250 = vadd.f32 %v5157, %v5249
        %v5251 = vand.u32 %v4839, 4294901760
        %5252 = vmatmul.f32.gmra.mxu0 %v5251
        %v5253 = vpop.f32.mrf.mxu0
        %v5254 = vadd.f32 %v5163, %v5253
        %v5255 = vand.u32 %v4842, 4294901760
        %5256 = vmatmul.f32.gmra.mxu0 %v5255
        %v5257 = vpop.f32.mrf.mxu0
        %v5258 = vadd.f32 %v5169, %v5257
        %v5259 = vand.u32 %v4845, 4294901760
        %5260 = vmatmul.f32.gmra.mxu0 %v5259
        %v5261 = vpop.f32.mrf.mxu0
        %v5262 = vadd.f32 %v5175, %v5261
        %v5263 = vand.u32 %v4848, 4294901760
        %5264 = vmatmul.f32.gmra.mxu0 %v5263
        %v5265 = vpop.f32.mrf.mxu0
        %v5266 = vadd.f32 %v5181, %v5265
        %v5267 = vand.u32 %v4851, 4294901760
        %5268 = vmatmul.f32.gmra.mxu0 %v5267
        %v5269 = vpop.f32.mrf.mxu0
        %v5270 = vadd.f32 %v5187, %v5269
        %v5271 = vand.u32 %v4854, 4294901760
        %5272 = vmatmul.f32.gmra.mxu0 %v5271
        %v5273 = vpop.f32.mrf.mxu0
        %v5274 = vadd.f32 %v5193, %v5273
        %v5275 = vand.u32 %v4857, 4294901760
        %5276 = vmatmul.f32.gmra.mxu0 %v5275
        %v5277 = vpop.f32.mrf.mxu0
        %v5278 = vadd.f32 %v5199, %v5277
        %5279 = vdwg.mxu0
        %5280 = vmatpush.msra.mxu0 0.0
        %5281 = vmatpush.msra.mxu0 0.0
        %5282 = vmatpush.msra.mxu0 0.0
        %5283 = vmatpush.msra.mxu0 0.0
        %5284 = vmatpush.msra.mxu0 0.0
        %5285 = vmatpush.msra.mxu0 0.0
        %v5286 = vand.u32 %v4311, 4294901760
        %5287 = vmatpush.msra.mxu0 %v5286
        %v5288 = vand.u32 %v4310, 4294901760
        %5289 = vmatpush.msra.mxu0 %v5288
        %v5290 = vand.u32 %v4309, 4294901760
        %5291 = vmatpush.msra.mxu0 %v5290
        %v5292 = vand.u32 %v4308, 4294901760
        %5293 = vmatpush.msra.mxu0 %v5292
        %v5294 = vand.u32 %v4307, 4294901760
        %5295 = vmatpush.msra.mxu0 %v5294
        %v5296 = vand.u32 %v4306, 4294901760
        %5297 = vmatpush.msra.mxu0 %v5296
        %v5298 = vand.u32 %v4305, 4294901760
        %5299 = vmatpush.msra.mxu0 %v5298
        %v5300 = vand.u32 %v4304, 4294901760
        %5301 = vmatpush.msra.mxu0 %v5300
        %v5302 = vand.u32 %v4303, 4294901760
        %5303 = vmatpush.msra.mxu0 %v5302
        %v5304 = vand.u32 %v4302, 4294901760
        %5305 = vmatpush.msra.mxu0 %v5304
        %v5306 = vand.u32 %v4836, 4294901760
        %5307 = vmatmul.f32.gmra.mxu0 %v5306
        %v5308 = vpop.f32.mrf.mxu0
        %v5309 = vadd.f32 %v5250, %v5308
        %v5310 = vand.u32 %v4839, 4294901760
        %5311 = vmatmul.f32.gmra.mxu0 %v5310
        %v5312 = vpop.f32.mrf.mxu0
        %v5313 = vadd.f32 %v5254, %v5312
        %v5314 = vand.u32 %v4842, 4294901760
        %5315 = vmatmul.f32.gmra.mxu0 %v5314
        %v5316 = vpop.f32.mrf.mxu0
        %v5317 = vadd.f32 %v5258, %v5316
        %v5318 = vand.u32 %v4845, 4294901760
        %5319 = vmatmul.f32.gmra.mxu0 %v5318
        %v5320 = vpop.f32.mrf.mxu0
        %v5321 = vadd.f32 %v5262, %v5320
        %v5322 = vand.u32 %v4848, 4294901760
        %5323 = vmatmul.f32.gmra.mxu0 %v5322
        %v5324 = vpop.f32.mrf.mxu0
        %v5325 = vadd.f32 %v5266, %v5324
        %v5326 = vand.u32 %v4851, 4294901760
        %5327 = vmatmul.f32.gmra.mxu0 %v5326
        %v5328 = vpop.f32.mrf.mxu0
        %v5329 = vadd.f32 %v5270, %v5328
        %v5330 = vand.u32 %v4854, 4294901760
        %5331 = vmatmul.f32.gmra.mxu0 %v5330
        %v5332 = vpop.f32.mrf.mxu0
        %v5333 = vadd.f32 %v5274, %v5332
        %v5334 = vand.u32 %v4857, 4294901760
        %5335 = vmatmul.f32.gmra.mxu0 %v5334
        %v5336 = vpop.f32.mrf.mxu0
        %v5337 = vadd.f32 %v5278, %v5336
        %5338 = vdwg.mxu0
        %v5339 = vld [vmem:[#allocation2 + $0x2] sm:$0xff]
        %v5340 = vld [vmem:[#allocation2 + $0x12] sm:$0xff]
        %v5341 = vld [vmem:[#allocation2 + $0x22] sm:$0xff]
        %v5342 = vld [vmem:[#allocation2 + $0x32] sm:$0xff]
        %v5343 = vld [vmem:[#allocation2 + $0x42] sm:$0xff]
        %v5344 = vld [vmem:[#allocation2 + $0x52] sm:$0xff]
        %v5345 = vld [vmem:[#allocation2 + $0x62] sm:$0xff]
        %v5346 = vld [vmem:[#allocation2 + $0x72] sm:$0xff]
        %s5347 = scalar_lea.vmem %s2, 160
        %v5348 = vld [vmem:[%s5347] sm:$0xff]
        %v5349 = vld [vmem:[%s5347 + $0x8] sm:$0xff]
        %v5350 = vld [vmem:[%s5347 + $0x10] sm:$0xff]
        %v5351 = vld [vmem:[%s5347 + $0x18] sm:$0xff]
        %v5352 = vld [vmem:[%s5347 + $0x20] sm:$0xff]
        %v5353 = vld [vmem:[%s5347 + $0x28] sm:$0xff]
        %v5354 = vld [vmem:[%s5347 + $0x30] sm:$0xff]
        %v5355 = vld [vmem:[%s5347 + $0x38] sm:$0xff]
        %v5356 = vld [vmem:[%s5347 + $0x40] sm:$0xff]
        %v5357 = vld [vmem:[%s5347 + $0x48] sm:$0xff]
        %v5359 = vsel %vm4230, %v5339, 0
        %v5362 = vsel %vm4230, %v5340, 0
        %v5365 = vsel %vm4230, %v5341, 0
        %v5368 = vsel %vm4230, %v5342, 0
        %v5371 = vsel %vm4230, %v5343, 0
        %v5374 = vsel %vm4230, %v5344, 0
        %v5377 = vsel %vm4230, %v5345, 0
        %v5380 = vsel %vm4230, %v5346, 0
        %5382 = vmatpush.msra.mxu0 0.0
        %5383 = vmatpush.msra.mxu0 0.0
        %5384 = vmatpush.msra.mxu0 0.0
        %5385 = vmatpush.msra.mxu0 0.0
        %5386 = vmatpush.msra.mxu0 0.0
        %5387 = vmatpush.msra.mxu0 0.0
        %v5388 = vand.u32 %v5357, 4294901760
        %5389 = vmatpush.msra.mxu0 %v5388
        %v5390 = vand.u32 %v5356, 4294901760
        %5391 = vmatpush.msra.mxu0 %v5390
        %v5392 = vand.u32 %v5355, 4294901760
        %5393 = vmatpush.msra.mxu0 %v5392
        %v5394 = vand.u32 %v5354, 4294901760
        %5395 = vmatpush.msra.mxu0 %v5394
        %v5396 = vand.u32 %v5353, 4294901760
        %5397 = vmatpush.msra.mxu0 %v5396
        %v5398 = vand.u32 %v5352, 4294901760
        %5399 = vmatpush.msra.mxu0 %v5398
        %v5400 = vand.u32 %v5351, 4294901760
        %5401 = vmatpush.msra.mxu0 %v5400
        %v5402 = vand.u32 %v5350, 4294901760
        %5403 = vmatpush.msra.mxu0 %v5402
        %v5404 = vand.u32 %v5349, 4294901760
        %5405 = vmatpush.msra.mxu0 %v5404
        %v5406 = vand.u32 %v5348, 4294901760
        %5407 = vmatpush.msra.mxu0 %v5406
        %v5408 = vand.u32 %v5359, 4294901760
        %v5409 = vsub.f32 %v5359, %v5408
        %v5410 = vand.u32 %v5409, 4294901760
        %v5411 = vsub.f32 %v5409, %v5410
        %v5412 = vand.u32 %v5411, 4294901760
        %5413 = vmatmul.f32.gmra.mxu0 %v5412
        %v5414 = vpop.f32.mrf.mxu0
        %v5415 = vadd.f32 0.0, %v5414
        %v5416 = vand.u32 %v5362, 4294901760
        %v5417 = vsub.f32 %v5362, %v5416
        %v5418 = vand.u32 %v5417, 4294901760
        %v5419 = vsub.f32 %v5417, %v5418
        %v5420 = vand.u32 %v5419, 4294901760
        %5421 = vmatmul.f32.gmra.mxu0 %v5420
        %v5422 = vpop.f32.mrf.mxu0
        %v5423 = vadd.f32 0.0, %v5422
        %v5424 = vand.u32 %v5365, 4294901760
        %v5425 = vsub.f32 %v5365, %v5424
        %v5426 = vand.u32 %v5425, 4294901760
        %v5427 = vsub.f32 %v5425, %v5426
        %v5428 = vand.u32 %v5427, 4294901760
        %5429 = vmatmul.f32.gmra.mxu0 %v5428
        %v5430 = vpop.f32.mrf.mxu0
        %v5431 = vadd.f32 0.0, %v5430
        %v5432 = vand.u32 %v5368, 4294901760
        %v5433 = vsub.f32 %v5368, %v5432
        %v5434 = vand.u32 %v5433, 4294901760
        %v5435 = vsub.f32 %v5433, %v5434
        %v5436 = vand.u32 %v5435, 4294901760
        %5437 = vmatmul.f32.gmra.mxu0 %v5436
        %v5438 = vpop.f32.mrf.mxu0
        %v5439 = vadd.f32 0.0, %v5438
        %v5440 = vand.u32 %v5371, 4294901760
        %v5441 = vsub.f32 %v5371, %v5440
        %v5442 = vand.u32 %v5441, 4294901760
        %v5443 = vsub.f32 %v5441, %v5442
        %v5444 = vand.u32 %v5443, 4294901760
        %5445 = vmatmul.f32.gmra.mxu0 %v5444
        %v5446 = vpop.f32.mrf.mxu0
        %v5447 = vadd.f32 0.0, %v5446
        %v5448 = vand.u32 %v5374, 4294901760
        %v5449 = vsub.f32 %v5374, %v5448
        %v5450 = vand.u32 %v5449, 4294901760
        %v5451 = vsub.f32 %v5449, %v5450
        %v5452 = vand.u32 %v5451, 4294901760
        %5453 = vmatmul.f32.gmra.mxu0 %v5452
        %v5454 = vpop.f32.mrf.mxu0
        %v5455 = vadd.f32 0.0, %v5454
        %v5456 = vand.u32 %v5377, 4294901760
        %v5457 = vsub.f32 %v5377, %v5456
        %v5458 = vand.u32 %v5457, 4294901760
        %v5459 = vsub.f32 %v5457, %v5458
        %v5460 = vand.u32 %v5459, 4294901760
        %5461 = vmatmul.f32.gmra.mxu0 %v5460
        %v5462 = vpop.f32.mrf.mxu0
        %v5463 = vadd.f32 0.0, %v5462
        %v5464 = vand.u32 %v5380, 4294901760
        %v5465 = vsub.f32 %v5380, %v5464
        %v5466 = vand.u32 %v5465, 4294901760
        %v5467 = vsub.f32 %v5465, %v5466
        %v5468 = vand.u32 %v5467, 4294901760
        %5469 = vmatmul.f32.gmra.mxu0 %v5468
        %v5470 = vpop.f32.mrf.mxu0
        %v5471 = vadd.f32 0.0, %v5470
        %5472 = vdwg.mxu0
        %5473 = vmatpush.msra.mxu0 0.0
        %5474 = vmatpush.msra.mxu0 0.0
        %5475 = vmatpush.msra.mxu0 0.0
        %5476 = vmatpush.msra.mxu0 0.0
        %5477 = vmatpush.msra.mxu0 0.0
        %5478 = vmatpush.msra.mxu0 0.0
        %v5479 = vand.u32 %v5357, 4294901760
        %v5480 = vsub.f32 %v5357, %v5479
        %v5481 = vand.u32 %v5480, 4294901760
        %v5482 = vsub.f32 %v5480, %v5481
        %v5483 = vand.u32 %v5482, 4294901760
        %5484 = vmatpush.msra.mxu0 %v5483
        %v5485 = vand.u32 %v5356, 4294901760
        %v5486 = vsub.f32 %v5356, %v5485
        %v5487 = vand.u32 %v5486, 4294901760
        %v5488 = vsub.f32 %v5486, %v5487
        %v5489 = vand.u32 %v5488, 4294901760
        %5490 = vmatpush.msra.mxu0 %v5489
        %v5491 = vand.u32 %v5355, 4294901760
        %v5492 = vsub.f32 %v5355, %v5491
        %v5493 = vand.u32 %v5492, 4294901760
        %v5494 = vsub.f32 %v5492, %v5493
        %v5495 = vand.u32 %v5494, 4294901760
        %5496 = vmatpush.msra.mxu0 %v5495
        %v5497 = vand.u32 %v5354, 4294901760
        %v5498 = vsub.f32 %v5354, %v5497
        %v5499 = vand.u32 %v5498, 4294901760
        %v5500 = vsub.f32 %v5498, %v5499
        %v5501 = vand.u32 %v5500, 4294901760
        %5502 = vmatpush.msra.mxu0 %v5501
        %v5503 = vand.u32 %v5353, 4294901760
        %v5504 = vsub.f32 %v5353, %v5503
        %v5505 = vand.u32 %v5504, 4294901760
        %v5506 = vsub.f32 %v5504, %v5505
        %v5507 = vand.u32 %v5506, 4294901760
        %5508 = vmatpush.msra.mxu0 %v5507
        %v5509 = vand.u32 %v5352, 4294901760
        %v5510 = vsub.f32 %v5352, %v5509
        %v5511 = vand.u32 %v5510, 4294901760
        %v5512 = vsub.f32 %v5510, %v5511
        %v5513 = vand.u32 %v5512, 4294901760
        %5514 = vmatpush.msra.mxu0 %v5513
        %v5515 = vand.u32 %v5351, 4294901760
        %v5516 = vsub.f32 %v5351, %v5515
        %v5517 = vand.u32 %v5516, 4294901760
        %v5518 = vsub.f32 %v5516, %v5517
        %v5519 = vand.u32 %v5518, 4294901760
        %5520 = vmatpush.msra.mxu0 %v5519
        %v5521 = vand.u32 %v5350, 4294901760
        %v5522 = vsub.f32 %v5350, %v5521
        %v5523 = vand.u32 %v5522, 4294901760
        %v5524 = vsub.f32 %v5522, %v5523
        %v5525 = vand.u32 %v5524, 4294901760
        %5526 = vmatpush.msra.mxu0 %v5525
        %v5527 = vand.u32 %v5349, 4294901760
        %v5528 = vsub.f32 %v5349, %v5527
        %v5529 = vand.u32 %v5528, 4294901760
        %v5530 = vsub.f32 %v5528, %v5529
        %v5531 = vand.u32 %v5530, 4294901760
        %5532 = vmatpush.msra.mxu0 %v5531
        %v5533 = vand.u32 %v5348, 4294901760
        %v5534 = vsub.f32 %v5348, %v5533
        %v5535 = vand.u32 %v5534, 4294901760
        %v5536 = vsub.f32 %v5534, %v5535
        %v5537 = vand.u32 %v5536, 4294901760
        %5538 = vmatpush.msra.mxu0 %v5537
        %v5539 = vand.u32 %v5359, 4294901760
        %5540 = vmatmul.f32.gmra.mxu0 %v5539
        %v5541 = vpop.f32.mrf.mxu0
        %v5542 = vadd.f32 %v5415, %v5541
        %v5543 = vand.u32 %v5362, 4294901760
        %5544 = vmatmul.f32.gmra.mxu0 %v5543
        %v5545 = vpop.f32.mrf.mxu0
        %v5546 = vadd.f32 %v5423, %v5545
        %v5547 = vand.u32 %v5365, 4294901760
        %5548 = vmatmul.f32.gmra.mxu0 %v5547
        %v5549 = vpop.f32.mrf.mxu0
        %v5550 = vadd.f32 %v5431, %v5549
        %v5551 = vand.u32 %v5368, 4294901760
        %5552 = vmatmul.f32.gmra.mxu0 %v5551
        %v5553 = vpop.f32.mrf.mxu0
        %v5554 = vadd.f32 %v5439, %v5553
        %v5555 = vand.u32 %v5371, 4294901760
        %5556 = vmatmul.f32.gmra.mxu0 %v5555
        %v5557 = vpop.f32.mrf.mxu0
        %v5558 = vadd.f32 %v5447, %v5557
        %v5559 = vand.u32 %v5374, 4294901760
        %5560 = vmatmul.f32.gmra.mxu0 %v5559
        %v5561 = vpop.f32.mrf.mxu0
        %v5562 = vadd.f32 %v5455, %v5561
        %v5563 = vand.u32 %v5377, 4294901760
        %5564 = vmatmul.f32.gmra.mxu0 %v5563
        %v5565 = vpop.f32.mrf.mxu0
        %v5566 = vadd.f32 %v5463, %v5565
        %v5567 = vand.u32 %v5380, 4294901760
        %5568 = vmatmul.f32.gmra.mxu0 %v5567
        %v5569 = vpop.f32.mrf.mxu0
        %v5570 = vadd.f32 %v5471, %v5569
        %5571 = vdwg.mxu0
        %5572 = vmatpush.msra.mxu0 0.0
        %5573 = vmatpush.msra.mxu0 0.0
        %5574 = vmatpush.msra.mxu0 0.0
        %5575 = vmatpush.msra.mxu0 0.0
        %5576 = vmatpush.msra.mxu0 0.0
        %5577 = vmatpush.msra.mxu0 0.0
        %v5578 = vand.u32 %v5357, 4294901760
        %v5579 = vsub.f32 %v5357, %v5578
        %5580 = vmatpush.msra.mxu0 %v5579
        %v5581 = vand.u32 %v5356, 4294901760
        %v5582 = vsub.f32 %v5356, %v5581
        %5583 = vmatpush.msra.mxu0 %v5582
        %v5584 = vand.u32 %v5355, 4294901760
        %v5585 = vsub.f32 %v5355, %v5584
        %5586 = vmatpush.msra.mxu0 %v5585
        %v5587 = vand.u32 %v5354, 4294901760
        %v5588 = vsub.f32 %v5354, %v5587
        %5589 = vmatpush.msra.mxu0 %v5588
        %v5590 = vand.u32 %v5353, 4294901760
        %v5591 = vsub.f32 %v5353, %v5590
        %5592 = vmatpush.msra.mxu0 %v5591
        %v5593 = vand.u32 %v5352, 4294901760
        %v5594 = vsub.f32 %v5352, %v5593
        %5595 = vmatpush.msra.mxu0 %v5594
        %v5596 = vand.u32 %v5351, 4294901760
        %v5597 = vsub.f32 %v5351, %v5596
        %5598 = vmatpush.msra.mxu0 %v5597
        %v5599 = vand.u32 %v5350, 4294901760
        %v5600 = vsub.f32 %v5350, %v5599
        %5601 = vmatpush.msra.mxu0 %v5600
        %v5602 = vand.u32 %v5349, 4294901760
        %v5603 = vsub.f32 %v5349, %v5602
        %5604 = vmatpush.msra.mxu0 %v5603
        %v5605 = vand.u32 %v5348, 4294901760
        %v5606 = vsub.f32 %v5348, %v5605
        %5607 = vmatpush.msra.mxu0 %v5606
        %v5608 = vand.u32 %v5359, 4294901760
        %v5609 = vsub.f32 %v5359, %v5608
        %5610 = vmatmul.f32.gmra.mxu0 %v5609
        %v5611 = vpop.f32.mrf.mxu0
        %v5612 = vadd.f32 %v5542, %v5611
        %v5613 = vand.u32 %v5362, 4294901760
        %v5614 = vsub.f32 %v5362, %v5613
        %5615 = vmatmul.f32.gmra.mxu0 %v5614
        %v5616 = vpop.f32.mrf.mxu0
        %v5617 = vadd.f32 %v5546, %v5616
        %v5618 = vand.u32 %v5365, 4294901760
        %v5619 = vsub.f32 %v5365, %v5618
        %5620 = vmatmul.f32.gmra.mxu0 %v5619
        %v5621 = vpop.f32.mrf.mxu0
        %v5622 = vadd.f32 %v5550, %v5621
        %v5623 = vand.u32 %v5368, 4294901760
        %v5624 = vsub.f32 %v5368, %v5623
        %5625 = vmatmul.f32.gmra.mxu0 %v5624
        %v5626 = vpop.f32.mrf.mxu0
        %v5627 = vadd.f32 %v5554, %v5626
        %v5628 = vand.u32 %v5371, 4294901760
        %v5629 = vsub.f32 %v5371, %v5628
        %5630 = vmatmul.f32.gmra.mxu0 %v5629
        %v5631 = vpop.f32.mrf.mxu0
        %v5632 = vadd.f32 %v5558, %v5631
        %v5633 = vand.u32 %v5374, 4294901760
        %v5634 = vsub.f32 %v5374, %v5633
        %5635 = vmatmul.f32.gmra.mxu0 %v5634
        %v5636 = vpop.f32.mrf.mxu0
        %v5637 = vadd.f32 %v5562, %v5636
        %v5638 = vand.u32 %v5377, 4294901760
        %v5639 = vsub.f32 %v5377, %v5638
        %5640 = vmatmul.f32.gmra.mxu0 %v5639
        %v5641 = vpop.f32.mrf.mxu0
        %v5642 = vadd.f32 %v5566, %v5641
        %v5643 = vand.u32 %v5380, 4294901760
        %v5644 = vsub.f32 %v5380, %v5643
        %5645 = vmatmul.f32.gmra.mxu0 %v5644
        %v5646 = vpop.f32.mrf.mxu0
        %v5647 = vadd.f32 %v5570, %v5646
        %5648 = vdwg.mxu0
        %5649 = vmatpush.msra.mxu0 0.0
        %5650 = vmatpush.msra.mxu0 0.0
        %5651 = vmatpush.msra.mxu0 0.0
        %5652 = vmatpush.msra.mxu0 0.0
        %5653 = vmatpush.msra.mxu0 0.0
        %5654 = vmatpush.msra.mxu0 0.0
        %v5655 = vand.u32 %v5357, 4294901760
        %5656 = vmatpush.msra.mxu0 %v5655
        %v5657 = vand.u32 %v5356, 4294901760
        %5658 = vmatpush.msra.mxu0 %v5657
        %v5659 = vand.u32 %v5355, 4294901760
        %5660 = vmatpush.msra.mxu0 %v5659
        %v5661 = vand.u32 %v5354, 4294901760
        %5662 = vmatpush.msra.mxu0 %v5661
        %v5663 = vand.u32 %v5353, 4294901760
        %5664 = vmatpush.msra.mxu0 %v5663
        %v5665 = vand.u32 %v5352, 4294901760
        %5666 = vmatpush.msra.mxu0 %v5665
        %v5667 = vand.u32 %v5351, 4294901760
        %5668 = vmatpush.msra.mxu0 %v5667
        %v5669 = vand.u32 %v5350, 4294901760
        %5670 = vmatpush.msra.mxu0 %v5669
        %v5671 = vand.u32 %v5349, 4294901760
        %5672 = vmatpush.msra.mxu0 %v5671
        %v5673 = vand.u32 %v5348, 4294901760
        %5674 = vmatpush.msra.mxu0 %v5673
        %v5675 = vand.u32 %v5359, 4294901760
        %v5676 = vsub.f32 %v5359, %v5675
        %v5677 = vand.u32 %v5676, 4294901760
        %5678 = vmatmul.f32.gmra.mxu0 %v5677
        %v5679 = vpop.f32.mrf.mxu0
        %v5680 = vadd.f32 %v5612, %v5679
        %v5681 = vand.u32 %v5362, 4294901760
        %v5682 = vsub.f32 %v5362, %v5681
        %v5683 = vand.u32 %v5682, 4294901760
        %5684 = vmatmul.f32.gmra.mxu0 %v5683
        %v5685 = vpop.f32.mrf.mxu0
        %v5686 = vadd.f32 %v5617, %v5685
        %v5687 = vand.u32 %v5365, 4294901760
        %v5688 = vsub.f32 %v5365, %v5687
        %v5689 = vand.u32 %v5688, 4294901760
        %5690 = vmatmul.f32.gmra.mxu0 %v5689
        %v5691 = vpop.f32.mrf.mxu0
        %v5692 = vadd.f32 %v5622, %v5691
        %v5693 = vand.u32 %v5368, 4294901760
        %v5694 = vsub.f32 %v5368, %v5693
        %v5695 = vand.u32 %v5694, 4294901760
        %5696 = vmatmul.f32.gmra.mxu0 %v5695
        %v5697 = vpop.f32.mrf.mxu0
        %v5698 = vadd.f32 %v5627, %v5697
        %v5699 = vand.u32 %v5371, 4294901760
        %v5700 = vsub.f32 %v5371, %v5699
        %v5701 = vand.u32 %v5700, 4294901760
        %5702 = vmatmul.f32.gmra.mxu0 %v5701
        %v5703 = vpop.f32.mrf.mxu0
        %v5704 = vadd.f32 %v5632, %v5703
        %v5705 = vand.u32 %v5374, 4294901760
        %v5706 = vsub.f32 %v5374, %v5705
        %v5707 = vand.u32 %v5706, 4294901760
        %5708 = vmatmul.f32.gmra.mxu0 %v5707
        %v5709 = vpop.f32.mrf.mxu0
        %v5710 = vadd.f32 %v5637, %v5709
        %v5711 = vand.u32 %v5377, 4294901760
        %v5712 = vsub.f32 %v5377, %v5711
        %v5713 = vand.u32 %v5712, 4294901760
        %5714 = vmatmul.f32.gmra.mxu0 %v5713
        %v5715 = vpop.f32.mrf.mxu0
        %v5716 = vadd.f32 %v5642, %v5715
        %v5717 = vand.u32 %v5380, 4294901760
        %v5718 = vsub.f32 %v5380, %v5717
        %v5719 = vand.u32 %v5718, 4294901760
        %5720 = vmatmul.f32.gmra.mxu0 %v5719
        %v5721 = vpop.f32.mrf.mxu0
        %v5722 = vadd.f32 %v5647, %v5721
        %5723 = vdwg.mxu0
        %5724 = vmatpush.msra.mxu0 0.0
        %5725 = vmatpush.msra.mxu0 0.0
        %5726 = vmatpush.msra.mxu0 0.0
        %5727 = vmatpush.msra.mxu0 0.0
        %5728 = vmatpush.msra.mxu0 0.0
        %5729 = vmatpush.msra.mxu0 0.0
        %v5730 = vand.u32 %v5357, 4294901760
        %v5731 = vsub.f32 %v5357, %v5730
        %v5732 = vand.u32 %v5731, 4294901760
        %5733 = vmatpush.msra.mxu0 %v5732
        %v5734 = vand.u32 %v5356, 4294901760
        %v5735 = vsub.f32 %v5356, %v5734
        %v5736 = vand.u32 %v5735, 4294901760
        %5737 = vmatpush.msra.mxu0 %v5736
        %v5738 = vand.u32 %v5355, 4294901760
        %v5739 = vsub.f32 %v5355, %v5738
        %v5740 = vand.u32 %v5739, 4294901760
        %5741 = vmatpush.msra.mxu0 %v5740
        %v5742 = vand.u32 %v5354, 4294901760
        %v5743 = vsub.f32 %v5354, %v5742
        %v5744 = vand.u32 %v5743, 4294901760
        %5745 = vmatpush.msra.mxu0 %v5744
        %v5746 = vand.u32 %v5353, 4294901760
        %v5747 = vsub.f32 %v5353, %v5746
        %v5748 = vand.u32 %v5747, 4294901760
        %5749 = vmatpush.msra.mxu0 %v5748
        %v5750 = vand.u32 %v5352, 4294901760
        %v5751 = vsub.f32 %v5352, %v5750
        %v5752 = vand.u32 %v5751, 4294901760
        %5753 = vmatpush.msra.mxu0 %v5752
        %v5754 = vand.u32 %v5351, 4294901760
        %v5755 = vsub.f32 %v5351, %v5754
        %v5756 = vand.u32 %v5755, 4294901760
        %5757 = vmatpush.msra.mxu0 %v5756
        %v5758 = vand.u32 %v5350, 4294901760
        %v5759 = vsub.f32 %v5350, %v5758
        %v5760 = vand.u32 %v5759, 4294901760
        %5761 = vmatpush.msra.mxu0 %v5760
        %v5762 = vand.u32 %v5349, 4294901760
        %v5763 = vsub.f32 %v5349, %v5762
        %v5764 = vand.u32 %v5763, 4294901760
        %5765 = vmatpush.msra.mxu0 %v5764
        %v5766 = vand.u32 %v5348, 4294901760
        %v5767 = vsub.f32 %v5348, %v5766
        %v5768 = vand.u32 %v5767, 4294901760
        %5769 = vmatpush.msra.mxu0 %v5768
        %v5770 = vand.u32 %v5359, 4294901760
        %5771 = vmatmul.f32.gmra.mxu0 %v5770
        %v5772 = vpop.f32.mrf.mxu0
        %v5773 = vadd.f32 %v5680, %v5772
        %v5774 = vand.u32 %v5362, 4294901760
        %5775 = vmatmul.f32.gmra.mxu0 %v5774
        %v5776 = vpop.f32.mrf.mxu0
        %v5777 = vadd.f32 %v5686, %v5776
        %v5778 = vand.u32 %v5365, 4294901760
        %5779 = vmatmul.f32.gmra.mxu0 %v5778
        %v5780 = vpop.f32.mrf.mxu0
        %v5781 = vadd.f32 %v5692, %v5780
        %v5782 = vand.u32 %v5368, 4294901760
        %5783 = vmatmul.f32.gmra.mxu0 %v5782
        %v5784 = vpop.f32.mrf.mxu0
        %v5785 = vadd.f32 %v5698, %v5784
        %v5786 = vand.u32 %v5371, 4294901760
        %5787 = vmatmul.f32.gmra.mxu0 %v5786
        %v5788 = vpop.f32.mrf.mxu0
        %v5789 = vadd.f32 %v5704, %v5788
        %v5790 = vand.u32 %v5374, 4294901760
        %5791 = vmatmul.f32.gmra.mxu0 %v5790
        %v5792 = vpop.f32.mrf.mxu0
        %v5793 = vadd.f32 %v5710, %v5792
        %v5794 = vand.u32 %v5377, 4294901760
        %5795 = vmatmul.f32.gmra.mxu0 %v5794
        %v5796 = vpop.f32.mrf.mxu0
        %v5797 = vadd.f32 %v5716, %v5796
        %v5798 = vand.u32 %v5380, 4294901760
        %5799 = vmatmul.f32.gmra.mxu0 %v5798
        %v5800 = vpop.f32.mrf.mxu0
        %v5801 = vadd.f32 %v5722, %v5800
        %5802 = vdwg.mxu0
        %5803 = vmatpush.msra.mxu0 0.0
        %5804 = vmatpush.msra.mxu0 0.0
        %5805 = vmatpush.msra.mxu0 0.0
        %5806 = vmatpush.msra.mxu0 0.0
        %5807 = vmatpush.msra.mxu0 0.0
        %5808 = vmatpush.msra.mxu0 0.0
        %v5809 = vand.u32 %v5357, 4294901760
        %5810 = vmatpush.msra.mxu0 %v5809
        %v5811 = vand.u32 %v5356, 4294901760
        %5812 = vmatpush.msra.mxu0 %v5811
        %v5813 = vand.u32 %v5355, 4294901760
        %5814 = vmatpush.msra.mxu0 %v5813
        %v5815 = vand.u32 %v5354, 4294901760
        %5816 = vmatpush.msra.mxu0 %v5815
        %v5817 = vand.u32 %v5353, 4294901760
        %5818 = vmatpush.msra.mxu0 %v5817
        %v5819 = vand.u32 %v5352, 4294901760
        %5820 = vmatpush.msra.mxu0 %v5819
        %v5821 = vand.u32 %v5351, 4294901760
        %5822 = vmatpush.msra.mxu0 %v5821
        %v5823 = vand.u32 %v5350, 4294901760
        %5824 = vmatpush.msra.mxu0 %v5823
        %v5825 = vand.u32 %v5349, 4294901760
        %5826 = vmatpush.msra.mxu0 %v5825
        %v5827 = vand.u32 %v5348, 4294901760
        %5828 = vmatpush.msra.mxu0 %v5827
        %v5829 = vand.u32 %v5359, 4294901760
        %5830 = vmatmul.f32.gmra.mxu0 %v5829
        %v5831 = vpop.f32.mrf.mxu0
        %v5832 = vadd.f32 %v5773, %v5831
        %v5833 = vand.u32 %v5362, 4294901760
        %5834 = vmatmul.f32.gmra.mxu0 %v5833
        %v5835 = vpop.f32.mrf.mxu0
        %v5836 = vadd.f32 %v5777, %v5835
        %v5837 = vand.u32 %v5365, 4294901760
        %5838 = vmatmul.f32.gmra.mxu0 %v5837
        %v5839 = vpop.f32.mrf.mxu0
        %v5840 = vadd.f32 %v5781, %v5839
        %v5841 = vand.u32 %v5368, 4294901760
        %5842 = vmatmul.f32.gmra.mxu0 %v5841
        %v5843 = vpop.f32.mrf.mxu0
        %v5844 = vadd.f32 %v5785, %v5843
        %v5845 = vand.u32 %v5371, 4294901760
        %5846 = vmatmul.f32.gmra.mxu0 %v5845
        %v5847 = vpop.f32.mrf.mxu0
        %v5848 = vadd.f32 %v5789, %v5847
        %v5849 = vand.u32 %v5374, 4294901760
        %5850 = vmatmul.f32.gmra.mxu0 %v5849
        %v5851 = vpop.f32.mrf.mxu0
        %v5852 = vadd.f32 %v5793, %v5851
        %v5853 = vand.u32 %v5377, 4294901760
        %5854 = vmatmul.f32.gmra.mxu0 %v5853
        %v5855 = vpop.f32.mrf.mxu0
        %v5856 = vadd.f32 %v5797, %v5855
        %v5857 = vand.u32 %v5380, 4294901760
        %5858 = vmatmul.f32.gmra.mxu0 %v5857
        %v5859 = vpop.f32.mrf.mxu0
        %v5860 = vadd.f32 %v5801, %v5859
        %5861 = vdwg.mxu0
        %v5862 = vadd.f32 %v5309, %v5832
        %v5863 = vadd.f32 %v5313, %v5836
        %v5864 = vadd.f32 %v5317, %v5840
        %v5865 = vadd.f32 %v5321, %v5844
        %v5866 = vadd.f32 %v5325, %v5848
        %v5867 = vadd.f32 %v5329, %v5852
        %v5868 = vadd.f32 %v5333, %v5856
        %v5869 = vadd.f32 %v5337, %v5860
        %v5870 = vld [vmem:[%s4284] sm:$0xff]
        %v5871 = vld [vmem:[%s4284 + $0x10] sm:$0xff]
        %v5872 = vld [vmem:[%s4284 + $0x20] sm:$0xff]
        %v5873 = vld [vmem:[%s4284 + $0x30] sm:$0xff]
        %v5874 = vld [vmem:[%s4284 + $0x40] sm:$0xff]
        %v5875 = vld [vmem:[%s4284 + $0x50] sm:$0xff]
        %v5876 = vld [vmem:[%s4284 + $0x60] sm:$0xff]
        %v5877 = vld [vmem:[%s4284 + $0x70] sm:$0xff]
        %s5878 = scalar_lea.vmem %s2, 240
        %v5879 = vld [vmem:[%s5878] sm:$0xff]
        %v5880 = vld [vmem:[%s5878 + $0x8] sm:$0xff]
        %v5881 = vld [vmem:[%s5878 + $0x10] sm:$0xff]
        %v5882 = vld [vmem:[%s5878 + $0x18] sm:$0xff]
        %v5883 = vld [vmem:[%s5878 + $0x20] sm:$0xff]
        %v5884 = vld [vmem:[%s5878 + $0x28] sm:$0xff]
        %v5885 = vld [vmem:[%s5878 + $0x30] sm:$0xff]
        %v5886 = vld [vmem:[%s5878 + $0x38] sm:$0xff]
        %v5887 = vld [vmem:[%s5878 + $0x40] sm:$0xff]
        %v5888 = vld [vmem:[%s5878 + $0x48] sm:$0xff]
        %v5890 = vsel %vm4230, %v5870, 0
        %v5893 = vsel %vm4230, %v5871, 0
        %v5896 = vsel %vm4230, %v5872, 0
        %v5899 = vsel %vm4230, %v5873, 0
        %v5902 = vsel %vm4230, %v5874, 0
        %v5905 = vsel %vm4230, %v5875, 0
        %v5908 = vsel %vm4230, %v5876, 0
        %v5911 = vsel %vm4230, %v5877, 0
        %5913 = vmatpush.msra.mxu0 0.0
        %5914 = vmatpush.msra.mxu0 0.0
        %5915 = vmatpush.msra.mxu0 0.0
        %5916 = vmatpush.msra.mxu0 0.0
        %5917 = vmatpush.msra.mxu0 0.0
        %5918 = vmatpush.msra.mxu0 0.0
        %v5919 = vand.u32 %v5888, 4294901760
        %5920 = vmatpush.msra.mxu0 %v5919
        %v5921 = vand.u32 %v5887, 4294901760
        %5922 = vmatpush.msra.mxu0 %v5921
        %v5923 = vand.u32 %v5886, 4294901760
        %5924 = vmatpush.msra.mxu0 %v5923
        %v5925 = vand.u32 %v5885, 4294901760
        %5926 = vmatpush.msra.mxu0 %v5925
        %v5927 = vand.u32 %v5884, 4294901760
        %5928 = vmatpush.msra.mxu0 %v5927
        %v5929 = vand.u32 %v5883, 4294901760
        %5930 = vmatpush.msra.mxu0 %v5929
        %v5931 = vand.u32 %v5882, 4294901760
        %5932 = vmatpush.msra.mxu0 %v5931
        %v5933 = vand.u32 %v5881, 4294901760
        %5934 = vmatpush.msra.mxu0 %v5933
        %v5935 = vand.u32 %v5880, 4294901760
        %5936 = vmatpush.msra.mxu0 %v5935
        %v5937 = vand.u32 %v5879, 4294901760
        %5938 = vmatpush.msra.mxu0 %v5937
        %v5939 = vand.u32 %v5890, 4294901760
        %v5940 = vsub.f32 %v5890, %v5939
        %v5941 = vand.u32 %v5940, 4294901760
        %v5942 = vsub.f32 %v5940, %v5941
        %v5943 = vand.u32 %v5942, 4294901760
        %5944 = vmatmul.f32.gmra.mxu0 %v5943
        %v5945 = vpop.f32.mrf.mxu0
        %v5946 = vadd.f32 0.0, %v5945
        %v5947 = vand.u32 %v5893, 4294901760
        %v5948 = vsub.f32 %v5893, %v5947
        %v5949 = vand.u32 %v5948, 4294901760
        %v5950 = vsub.f32 %v5948, %v5949
        %v5951 = vand.u32 %v5950, 4294901760
        %5952 = vmatmul.f32.gmra.mxu0 %v5951
        %v5953 = vpop.f32.mrf.mxu0
        %v5954 = vadd.f32 0.0, %v5953
        %v5955 = vand.u32 %v5896, 4294901760
        %v5956 = vsub.f32 %v5896, %v5955
        %v5957 = vand.u32 %v5956, 4294901760
        %v5958 = vsub.f32 %v5956, %v5957
        %v5959 = vand.u32 %v5958, 4294901760
        %5960 = vmatmul.f32.gmra.mxu0 %v5959
        %v5961 = vpop.f32.mrf.mxu0
        %v5962 = vadd.f32 0.0, %v5961
        %v5963 = vand.u32 %v5899, 4294901760
        %v5964 = vsub.f32 %v5899, %v5963
        %v5965 = vand.u32 %v5964, 4294901760
        %v5966 = vsub.f32 %v5964, %v5965
        %v5967 = vand.u32 %v5966, 4294901760
        %5968 = vmatmul.f32.gmra.mxu0 %v5967
        %v5969 = vpop.f32.mrf.mxu0
        %v5970 = vadd.f32 0.0, %v5969
        %v5971 = vand.u32 %v5902, 4294901760
        %v5972 = vsub.f32 %v5902, %v5971
        %v5973 = vand.u32 %v5972, 4294901760
        %v5974 = vsub.f32 %v5972, %v5973
        %v5975 = vand.u32 %v5974, 4294901760
        %5976 = vmatmul.f32.gmra.mxu0 %v5975
        %v5977 = vpop.f32.mrf.mxu0
        %v5978 = vadd.f32 0.0, %v5977
        %v5979 = vand.u32 %v5905, 4294901760
        %v5980 = vsub.f32 %v5905, %v5979
        %v5981 = vand.u32 %v5980, 4294901760
        %v5982 = vsub.f32 %v5980, %v5981
        %v5983 = vand.u32 %v5982, 4294901760
        %5984 = vmatmul.f32.gmra.mxu0 %v5983
        %v5985 = vpop.f32.mrf.mxu0
        %v5986 = vadd.f32 0.0, %v5985
        %v5987 = vand.u32 %v5908, 4294901760
        %v5988 = vsub.f32 %v5908, %v5987
        %v5989 = vand.u32 %v5988, 4294901760
        %v5990 = vsub.f32 %v5988, %v5989
        %v5991 = vand.u32 %v5990, 4294901760
        %5992 = vmatmul.f32.gmra.mxu0 %v5991
        %v5993 = vpop.f32.mrf.mxu0
        %v5994 = vadd.f32 0.0, %v5993
        %v5995 = vand.u32 %v5911, 4294901760
        %v5996 = vsub.f32 %v5911, %v5995
        %v5997 = vand.u32 %v5996, 4294901760
        %v5998 = vsub.f32 %v5996, %v5997
        %v5999 = vand.u32 %v5998, 4294901760
        %6000 = vmatmul.f32.gmra.mxu0 %v5999
        %v6001 = vpop.f32.mrf.mxu0
        %v6002 = vadd.f32 0.0, %v6001
        %6003 = vdwg.mxu0
        %6004 = vmatpush.msra.mxu0 0.0
        %6005 = vmatpush.msra.mxu0 0.0
        %6006 = vmatpush.msra.mxu0 0.0
        %6007 = vmatpush.msra.mxu0 0.0
        %6008 = vmatpush.msra.mxu0 0.0
        %6009 = vmatpush.msra.mxu0 0.0
        %v6010 = vand.u32 %v5888, 4294901760
        %v6011 = vsub.f32 %v5888, %v6010
        %v6012 = vand.u32 %v6011, 4294901760
        %v6013 = vsub.f32 %v6011, %v6012
        %v6014 = vand.u32 %v6013, 4294901760
        %6015 = vmatpush.msra.mxu0 %v6014
        %v6016 = vand.u32 %v5887, 4294901760
        %v6017 = vsub.f32 %v5887, %v6016
        %v6018 = vand.u32 %v6017, 4294901760
        %v6019 = vsub.f32 %v6017, %v6018
        %v6020 = vand.u32 %v6019, 4294901760
        %6021 = vmatpush.msra.mxu0 %v6020
        %v6022 = vand.u32 %v5886, 4294901760
        %v6023 = vsub.f32 %v5886, %v6022
        %v6024 = vand.u32 %v6023, 4294901760
        %v6025 = vsub.f32 %v6023, %v6024
        %v6026 = vand.u32 %v6025, 4294901760
        %6027 = vmatpush.msra.mxu0 %v6026
        %v6028 = vand.u32 %v5885, 4294901760
        %v6029 = vsub.f32 %v5885, %v6028
        %v6030 = vand.u32 %v6029, 4294901760
        %v6031 = vsub.f32 %v6029, %v6030
        %v6032 = vand.u32 %v6031, 4294901760
        %6033 = vmatpush.msra.mxu0 %v6032
        %v6034 = vand.u32 %v5884, 4294901760
        %v6035 = vsub.f32 %v5884, %v6034
        %v6036 = vand.u32 %v6035, 4294901760
        %v6037 = vsub.f32 %v6035, %v6036
        %v6038 = vand.u32 %v6037, 4294901760
        %6039 = vmatpush.msra.mxu0 %v6038
        %v6040 = vand.u32 %v5883, 4294901760
        %v6041 = vsub.f32 %v5883, %v6040
        %v6042 = vand.u32 %v6041, 4294901760
        %v6043 = vsub.f32 %v6041, %v6042
        %v6044 = vand.u32 %v6043, 4294901760
        %6045 = vmatpush.msra.mxu0 %v6044
        %v6046 = vand.u32 %v5882, 4294901760
        %v6047 = vsub.f32 %v5882, %v6046
        %v6048 = vand.u32 %v6047, 4294901760
        %v6049 = vsub.f32 %v6047, %v6048
        %v6050 = vand.u32 %v6049, 4294901760
        %6051 = vmatpush.msra.mxu0 %v6050
        %v6052 = vand.u32 %v5881, 4294901760
        %v6053 = vsub.f32 %v5881, %v6052
        %v6054 = vand.u32 %v6053, 4294901760
        %v6055 = vsub.f32 %v6053, %v6054
        %v6056 = vand.u32 %v6055, 4294901760
        %6057 = vmatpush.msra.mxu0 %v6056
        %v6058 = vand.u32 %v5880, 4294901760
        %v6059 = vsub.f32 %v5880, %v6058
        %v6060 = vand.u32 %v6059, 4294901760
        %v6061 = vsub.f32 %v6059, %v6060
        %v6062 = vand.u32 %v6061, 4294901760
        %6063 = vmatpush.msra.mxu0 %v6062
        %v6064 = vand.u32 %v5879, 4294901760
        %v6065 = vsub.f32 %v5879, %v6064
        %v6066 = vand.u32 %v6065, 4294901760
        %v6067 = vsub.f32 %v6065, %v6066
        %v6068 = vand.u32 %v6067, 4294901760
        %6069 = vmatpush.msra.mxu0 %v6068
        %v6070 = vand.u32 %v5890, 4294901760
        %6071 = vmatmul.f32.gmra.mxu0 %v6070
        %v6072 = vpop.f32.mrf.mxu0
        %v6073 = vadd.f32 %v5946, %v6072
        %v6074 = vand.u32 %v5893, 4294901760
        %6075 = vmatmul.f32.gmra.mxu0 %v6074
        %v6076 = vpop.f32.mrf.mxu0
        %v6077 = vadd.f32 %v5954, %v6076
        %v6078 = vand.u32 %v5896, 4294901760
        %6079 = vmatmul.f32.gmra.mxu0 %v6078
        %v6080 = vpop.f32.mrf.mxu0
        %v6081 = vadd.f32 %v5962, %v6080
        %v6082 = vand.u32 %v5899, 4294901760
        %6083 = vmatmul.f32.gmra.mxu0 %v6082
        %v6084 = vpop.f32.mrf.mxu0
        %v6085 = vadd.f32 %v5970, %v6084
        %v6086 = vand.u32 %v5902, 4294901760
        %6087 = vmatmul.f32.gmra.mxu0 %v6086
        %v6088 = vpop.f32.mrf.mxu0
        %v6089 = vadd.f32 %v5978, %v6088
        %v6090 = vand.u32 %v5905, 4294901760
        %6091 = vmatmul.f32.gmra.mxu0 %v6090
        %v6092 = vpop.f32.mrf.mxu0
        %v6093 = vadd.f32 %v5986, %v6092
        %v6094 = vand.u32 %v5908, 4294901760
        %6095 = vmatmul.f32.gmra.mxu0 %v6094
        %v6096 = vpop.f32.mrf.mxu0
        %v6097 = vadd.f32 %v5994, %v6096
        %v6098 = vand.u32 %v5911, 4294901760
        %6099 = vmatmul.f32.gmra.mxu0 %v6098
        %v6100 = vpop.f32.mrf.mxu0
        %v6101 = vadd.f32 %v6002, %v6100
        %6102 = vdwg.mxu0
        %6103 = vmatpush.msra.mxu0 0.0
        %6104 = vmatpush.msra.mxu0 0.0
        %6105 = vmatpush.msra.mxu0 0.0
        %6106 = vmatpush.msra.mxu0 0.0
        %6107 = vmatpush.msra.mxu0 0.0
        %6108 = vmatpush.msra.mxu0 0.0
        %v6109 = vand.u32 %v5888, 4294901760
        %v6110 = vsub.f32 %v5888, %v6109
        %6111 = vmatpush.msra.mxu0 %v6110
        %v6112 = vand.u32 %v5887, 4294901760
        %v6113 = vsub.f32 %v5887, %v6112
        %6114 = vmatpush.msra.mxu0 %v6113
        %v6115 = vand.u32 %v5886, 4294901760
        %v6116 = vsub.f32 %v5886, %v6115
        %6117 = vmatpush.msra.mxu0 %v6116
        %v6118 = vand.u32 %v5885, 4294901760
        %v6119 = vsub.f32 %v5885, %v6118
        %6120 = vmatpush.msra.mxu0 %v6119
        %v6121 = vand.u32 %v5884, 4294901760
        %v6122 = vsub.f32 %v5884, %v6121
        %6123 = vmatpush.msra.mxu0 %v6122
        %v6124 = vand.u32 %v5883, 4294901760
        %v6125 = vsub.f32 %v5883, %v6124
        %6126 = vmatpush.msra.mxu0 %v6125
        %v6127 = vand.u32 %v5882, 4294901760
        %v6128 = vsub.f32 %v5882, %v6127
        %6129 = vmatpush.msra.mxu0 %v6128
        %v6130 = vand.u32 %v5881, 4294901760
        %v6131 = vsub.f32 %v5881, %v6130
        %6132 = vmatpush.msra.mxu0 %v6131
        %v6133 = vand.u32 %v5880, 4294901760
        %v6134 = vsub.f32 %v5880, %v6133
        %6135 = vmatpush.msra.mxu0 %v6134
        %v6136 = vand.u32 %v5879, 4294901760
        %v6137 = vsub.f32 %v5879, %v6136
        %6138 = vmatpush.msra.mxu0 %v6137
        %v6139 = vand.u32 %v5890, 4294901760
        %v6140 = vsub.f32 %v5890, %v6139
        %6141 = vmatmul.f32.gmra.mxu0 %v6140
        %v6142 = vpop.f32.mrf.mxu0
        %v6143 = vadd.f32 %v6073, %v6142
        %v6144 = vand.u32 %v5893, 4294901760
        %v6145 = vsub.f32 %v5893, %v6144
        %6146 = vmatmul.f32.gmra.mxu0 %v6145
        %v6147 = vpop.f32.mrf.mxu0
        %v6148 = vadd.f32 %v6077, %v6147
        %v6149 = vand.u32 %v5896, 4294901760
        %v6150 = vsub.f32 %v5896, %v6149
        %6151 = vmatmul.f32.gmra.mxu0 %v6150
        %v6152 = vpop.f32.mrf.mxu0
        %v6153 = vadd.f32 %v6081, %v6152
        %v6154 = vand.u32 %v5899, 4294901760
        %v6155 = vsub.f32 %v5899, %v6154
        %6156 = vmatmul.f32.gmra.mxu0 %v6155
        %v6157 = vpop.f32.mrf.mxu0
        %v6158 = vadd.f32 %v6085, %v6157
        %v6159 = vand.u32 %v5902, 4294901760
        %v6160 = vsub.f32 %v5902, %v6159
        %6161 = vmatmul.f32.gmra.mxu0 %v6160
        %v6162 = vpop.f32.mrf.mxu0
        %v6163 = vadd.f32 %v6089, %v6162
        %v6164 = vand.u32 %v5905, 4294901760
        %v6165 = vsub.f32 %v5905, %v6164
        %6166 = vmatmul.f32.gmra.mxu0 %v6165
        %v6167 = vpop.f32.mrf.mxu0
        %v6168 = vadd.f32 %v6093, %v6167
        %v6169 = vand.u32 %v5908, 4294901760
        %v6170 = vsub.f32 %v5908, %v6169
        %6171 = vmatmul.f32.gmra.mxu0 %v6170
        %v6172 = vpop.f32.mrf.mxu0
        %v6173 = vadd.f32 %v6097, %v6172
        %v6174 = vand.u32 %v5911, 4294901760
        %v6175 = vsub.f32 %v5911, %v6174
        %6176 = vmatmul.f32.gmra.mxu0 %v6175
        %v6177 = vpop.f32.mrf.mxu0
        %v6178 = vadd.f32 %v6101, %v6177
        %6179 = vdwg.mxu0
        %6180 = vmatpush.msra.mxu0 0.0
        %6181 = vmatpush.msra.mxu0 0.0
        %6182 = vmatpush.msra.mxu0 0.0
        %6183 = vmatpush.msra.mxu0 0.0
        %6184 = vmatpush.msra.mxu0 0.0
        %6185 = vmatpush.msra.mxu0 0.0
        %v6186 = vand.u32 %v5888, 4294901760
        %6187 = vmatpush.msra.mxu0 %v6186
        %v6188 = vand.u32 %v5887, 4294901760
        %6189 = vmatpush.msra.mxu0 %v6188
        %v6190 = vand.u32 %v5886, 4294901760
        %6191 = vmatpush.msra.mxu0 %v6190
        %v6192 = vand.u32 %v5885, 4294901760
        %6193 = vmatpush.msra.mxu0 %v6192
        %v6194 = vand.u32 %v5884, 4294901760
        %6195 = vmatpush.msra.mxu0 %v6194
        %v6196 = vand.u32 %v5883, 4294901760
        %6197 = vmatpush.msra.mxu0 %v6196
        %v6198 = vand.u32 %v5882, 4294901760
        %6199 = vmatpush.msra.mxu0 %v6198
        %v6200 = vand.u32 %v5881, 4294901760
        %6201 = vmatpush.msra.mxu0 %v6200
        %v6202 = vand.u32 %v5880, 4294901760
        %6203 = vmatpush.msra.mxu0 %v6202
        %v6204 = vand.u32 %v5879, 4294901760
        %6205 = vmatpush.msra.mxu0 %v6204
        %v6206 = vand.u32 %v5890, 4294901760
        %v6207 = vsub.f32 %v5890, %v6206
        %v6208 = vand.u32 %v6207, 4294901760
        %6209 = vmatmul.f32.gmra.mxu0 %v6208
        %v6210 = vpop.f32.mrf.mxu0
        %v6211 = vadd.f32 %v6143, %v6210
        %v6212 = vand.u32 %v5893, 4294901760
        %v6213 = vsub.f32 %v5893, %v6212
        %v6214 = vand.u32 %v6213, 4294901760
        %6215 = vmatmul.f32.gmra.mxu0 %v6214
        %v6216 = vpop.f32.mrf.mxu0
        %v6217 = vadd.f32 %v6148, %v6216
        %v6218 = vand.u32 %v5896, 4294901760
        %v6219 = vsub.f32 %v5896, %v6218
        %v6220 = vand.u32 %v6219, 4294901760
        %6221 = vmatmul.f32.gmra.mxu0 %v6220
        %v6222 = vpop.f32.mrf.mxu0
        %v6223 = vadd.f32 %v6153, %v6222
        %v6224 = vand.u32 %v5899, 4294901760
        %v6225 = vsub.f32 %v5899, %v6224
        %v6226 = vand.u32 %v6225, 4294901760
        %6227 = vmatmul.f32.gmra.mxu0 %v6226
        %v6228 = vpop.f32.mrf.mxu0
        %v6229 = vadd.f32 %v6158, %v6228
        %v6230 = vand.u32 %v5902, 4294901760
        %v6231 = vsub.f32 %v5902, %v6230
        %v6232 = vand.u32 %v6231, 4294901760
        %6233 = vmatmul.f32.gmra.mxu0 %v6232
        %v6234 = vpop.f32.mrf.mxu0
        %v6235 = vadd.f32 %v6163, %v6234
        %v6236 = vand.u32 %v5905, 4294901760
        %v6237 = vsub.f32 %v5905, %v6236
        %v6238 = vand.u32 %v6237, 4294901760
        %6239 = vmatmul.f32.gmra.mxu0 %v6238
        %v6240 = vpop.f32.mrf.mxu0
        %v6241 = vadd.f32 %v6168, %v6240
        %v6242 = vand.u32 %v5908, 4294901760
        %v6243 = vsub.f32 %v5908, %v6242
        %v6244 = vand.u32 %v6243, 4294901760
        %6245 = vmatmul.f32.gmra.mxu0 %v6244
        %v6246 = vpop.f32.mrf.mxu0
        %v6247 = vadd.f32 %v6173, %v6246
        %v6248 = vand.u32 %v5911, 4294901760
        %v6249 = vsub.f32 %v5911, %v6248
        %v6250 = vand.u32 %v6249, 4294901760
        %6251 = vmatmul.f32.gmra.mxu0 %v6250
        %v6252 = vpop.f32.mrf.mxu0
        %v6253 = vadd.f32 %v6178, %v6252
        %6254 = vdwg.mxu0
        %6255 = vmatpush.msra.mxu0 0.0
        %6256 = vmatpush.msra.mxu0 0.0
        %6257 = vmatpush.msra.mxu0 0.0
        %6258 = vmatpush.msra.mxu0 0.0
        %6259 = vmatpush.msra.mxu0 0.0
        %6260 = vmatpush.msra.mxu0 0.0
        %v6261 = vand.u32 %v5888, 4294901760
        %v6262 = vsub.f32 %v5888, %v6261
        %v6263 = vand.u32 %v6262, 4294901760
        %6264 = vmatpush.msra.mxu0 %v6263
        %v6265 = vand.u32 %v5887, 4294901760
        %v6266 = vsub.f32 %v5887, %v6265
        %v6267 = vand.u32 %v6266, 4294901760
        %6268 = vmatpush.msra.mxu0 %v6267
        %v6269 = vand.u32 %v5886, 4294901760
        %v6270 = vsub.f32 %v5886, %v6269
        %v6271 = vand.u32 %v6270, 4294901760
        %6272 = vmatpush.msra.mxu0 %v6271
        %v6273 = vand.u32 %v5885, 4294901760
        %v6274 = vsub.f32 %v5885, %v6273
        %v6275 = vand.u32 %v6274, 4294901760
        %6276 = vmatpush.msra.mxu0 %v6275
        %v6277 = vand.u32 %v5884, 4294901760
        %v6278 = vsub.f32 %v5884, %v6277
        %v6279 = vand.u32 %v6278, 4294901760
        %6280 = vmatpush.msra.mxu0 %v6279
        %v6281 = vand.u32 %v5883, 4294901760
        %v6282 = vsub.f32 %v5883, %v6281
        %v6283 = vand.u32 %v6282, 4294901760
        %6284 = vmatpush.msra.mxu0 %v6283
        %v6285 = vand.u32 %v5882, 4294901760
        %v6286 = vsub.f32 %v5882, %v6285
        %v6287 = vand.u32 %v6286, 4294901760
        %6288 = vmatpush.msra.mxu0 %v6287
        %v6289 = vand.u32 %v5881, 4294901760
        %v6290 = vsub.f32 %v5881, %v6289
        %v6291 = vand.u32 %v6290, 4294901760
        %6292 = vmatpush.msra.mxu0 %v6291
        %v6293 = vand.u32 %v5880, 4294901760
        %v6294 = vsub.f32 %v5880, %v6293
        %v6295 = vand.u32 %v6294, 4294901760
        %6296 = vmatpush.msra.mxu0 %v6295
        %v6297 = vand.u32 %v5879, 4294901760
        %v6298 = vsub.f32 %v5879, %v6297
        %v6299 = vand.u32 %v6298, 4294901760
        %6300 = vmatpush.msra.mxu0 %v6299
        %v6301 = vand.u32 %v5890, 4294901760
        %6302 = vmatmul.f32.gmra.mxu0 %v6301
        %v6303 = vpop.f32.mrf.mxu0
        %v6304 = vadd.f32 %v6211, %v6303
        %v6305 = vand.u32 %v5893, 4294901760
        %6306 = vmatmul.f32.gmra.mxu0 %v6305
        %v6307 = vpop.f32.mrf.mxu0
        %v6308 = vadd.f32 %v6217, %v6307
        %v6309 = vand.u32 %v5896, 4294901760
        %6310 = vmatmul.f32.gmra.mxu0 %v6309
        %v6311 = vpop.f32.mrf.mxu0
        %v6312 = vadd.f32 %v6223, %v6311
        %v6313 = vand.u32 %v5899, 4294901760
        %6314 = vmatmul.f32.gmra.mxu0 %v6313
        %v6315 = vpop.f32.mrf.mxu0
        %v6316 = vadd.f32 %v6229, %v6315
        %v6317 = vand.u32 %v5902, 4294901760
        %6318 = vmatmul.f32.gmra.mxu0 %v6317
        %v6319 = vpop.f32.mrf.mxu0
        %v6320 = vadd.f32 %v6235, %v6319
        %v6321 = vand.u32 %v5905, 4294901760
        %6322 = vmatmul.f32.gmra.mxu0 %v6321
        %v6323 = vpop.f32.mrf.mxu0
        %v6324 = vadd.f32 %v6241, %v6323
        %v6325 = vand.u32 %v5908, 4294901760
        %6326 = vmatmul.f32.gmra.mxu0 %v6325
        %v6327 = vpop.f32.mrf.mxu0
        %v6328 = vadd.f32 %v6247, %v6327
        %v6329 = vand.u32 %v5911, 4294901760
        %6330 = vmatmul.f32.gmra.mxu0 %v6329
        %v6331 = vpop.f32.mrf.mxu0
        %v6332 = vadd.f32 %v6253, %v6331
        %6333 = vdwg.mxu0
        %6334 = vmatpush.msra.mxu0 0.0
        %6335 = vmatpush.msra.mxu0 0.0
        %6336 = vmatpush.msra.mxu0 0.0
        %6337 = vmatpush.msra.mxu0 0.0
        %6338 = vmatpush.msra.mxu0 0.0
        %6339 = vmatpush.msra.mxu0 0.0
        %v6340 = vand.u32 %v5888, 4294901760
        %6341 = vmatpush.msra.mxu0 %v6340
        %v6342 = vand.u32 %v5887, 4294901760
        %6343 = vmatpush.msra.mxu0 %v6342
        %v6344 = vand.u32 %v5886, 4294901760
        %6345 = vmatpush.msra.mxu0 %v6344
        %v6346 = vand.u32 %v5885, 4294901760
        %6347 = vmatpush.msra.mxu0 %v6346
        %v6348 = vand.u32 %v5884, 4294901760
        %6349 = vmatpush.msra.mxu0 %v6348
        %v6350 = vand.u32 %v5883, 4294901760
        %6351 = vmatpush.msra.mxu0 %v6350
        %v6352 = vand.u32 %v5882, 4294901760
        %6353 = vmatpush.msra.mxu0 %v6352
        %v6354 = vand.u32 %v5881, 4294901760
        %6355 = vmatpush.msra.mxu0 %v6354
        %v6356 = vand.u32 %v5880, 4294901760
        %6357 = vmatpush.msra.mxu0 %v6356
        %v6358 = vand.u32 %v5879, 4294901760
        %6359 = vmatpush.msra.mxu0 %v6358
        %v6360 = vand.u32 %v5890, 4294901760
        %6361 = vmatmul.f32.gmra.mxu0 %v6360
        %v6362 = vpop.f32.mrf.mxu0
        %v6363 = vadd.f32 %v6304, %v6362
        %v6364 = vand.u32 %v5893, 4294901760
        %6365 = vmatmul.f32.gmra.mxu0 %v6364
        %v6366 = vpop.f32.mrf.mxu0
        %v6367 = vadd.f32 %v6308, %v6366
        %v6368 = vand.u32 %v5896, 4294901760
        %6369 = vmatmul.f32.gmra.mxu0 %v6368
        %v6370 = vpop.f32.mrf.mxu0
        %v6371 = vadd.f32 %v6312, %v6370
        %v6372 = vand.u32 %v5899, 4294901760
        %6373 = vmatmul.f32.gmra.mxu0 %v6372
        %v6374 = vpop.f32.mrf.mxu0
        %v6375 = vadd.f32 %v6316, %v6374
        %v6376 = vand.u32 %v5902, 4294901760
        %6377 = vmatmul.f32.gmra.mxu0 %v6376
        %v6378 = vpop.f32.mrf.mxu0
        %v6379 = vadd.f32 %v6320, %v6378
        %v6380 = vand.u32 %v5905, 4294901760
        %6381 = vmatmul.f32.gmra.mxu0 %v6380
        %v6382 = vpop.f32.mrf.mxu0
        %v6383 = vadd.f32 %v6324, %v6382
        %v6384 = vand.u32 %v5908, 4294901760
        %6385 = vmatmul.f32.gmra.mxu0 %v6384
        %v6386 = vpop.f32.mrf.mxu0
        %v6387 = vadd.f32 %v6328, %v6386
        %v6388 = vand.u32 %v5911, 4294901760
        %6389 = vmatmul.f32.gmra.mxu0 %v6388
        %v6390 = vpop.f32.mrf.mxu0
        %v6391 = vadd.f32 %v6332, %v6390
        %6392 = vdwg.mxu0
        %v6393 = vadd.f32 %v5862, %v6363
        %v6394 = vadd.f32 %v5863, %v6367
        %v6395 = vadd.f32 %v5864, %v6371
        %v6396 = vadd.f32 %v5865, %v6375
        %v6397 = vadd.f32 %v5866, %v6379
        %v6398 = vadd.f32 %v5867, %v6383
        %v6399 = vadd.f32 %v5868, %v6387
        %v6400 = vadd.f32 %v5869, %v6391
        %v6401 = vld [vmem:[%s4284 + $0x1] sm:$0xff]
        %v6402 = vld [vmem:[%s4284 + $0x11] sm:$0xff]
        %v6403 = vld [vmem:[%s4284 + $0x21] sm:$0xff]
        %v6404 = vld [vmem:[%s4284 + $0x31] sm:$0xff]
        %v6405 = vld [vmem:[%s4284 + $0x41] sm:$0xff]
        %v6406 = vld [vmem:[%s4284 + $0x51] sm:$0xff]
        %v6407 = vld [vmem:[%s4284 + $0x61] sm:$0xff]
        %v6408 = vld [vmem:[%s4284 + $0x71] sm:$0xff]
        %s6409 = scalar_lea.vmem %s2, 320
        %v6410 = vld [vmem:[%s6409] sm:$0xff]
        %v6411 = vld [vmem:[%s6409 + $0x8] sm:$0xff]
        %v6412 = vld [vmem:[%s6409 + $0x10] sm:$0xff]
        %v6413 = vld [vmem:[%s6409 + $0x18] sm:$0xff]
        %v6414 = vld [vmem:[%s6409 + $0x20] sm:$0xff]
        %v6415 = vld [vmem:[%s6409 + $0x28] sm:$0xff]
        %v6416 = vld [vmem:[%s6409 + $0x30] sm:$0xff]
        %v6417 = vld [vmem:[%s6409 + $0x38] sm:$0xff]
        %v6418 = vld [vmem:[%s6409 + $0x40] sm:$0xff]
        %v6419 = vld [vmem:[%s6409 + $0x48] sm:$0xff]
        %v6421 = vsel %vm4230, %v6401, 0
        %v6424 = vsel %vm4230, %v6402, 0
        %v6427 = vsel %vm4230, %v6403, 0
        %v6430 = vsel %vm4230, %v6404, 0
        %v6433 = vsel %vm4230, %v6405, 0
        %v6436 = vsel %vm4230, %v6406, 0
        %v6439 = vsel %vm4230, %v6407, 0
        %v6442 = vsel %vm4230, %v6408, 0
        %6444 = vmatpush.msra.mxu0 0.0
        %6445 = vmatpush.msra.mxu0 0.0
        %6446 = vmatpush.msra.mxu0 0.0
        %6447 = vmatpush.msra.mxu0 0.0
        %6448 = vmatpush.msra.mxu0 0.0
        %6449 = vmatpush.msra.mxu0 0.0
        %v6450 = vand.u32 %v6419, 4294901760
        %6451 = vmatpush.msra.mxu0 %v6450
        %v6452 = vand.u32 %v6418, 4294901760
        %6453 = vmatpush.msra.mxu0 %v6452
        %v6454 = vand.u32 %v6417, 4294901760
        %6455 = vmatpush.msra.mxu0 %v6454
        %v6456 = vand.u32 %v6416, 4294901760
        %6457 = vmatpush.msra.mxu0 %v6456
        %v6458 = vand.u32 %v6415, 4294901760
        %6459 = vmatpush.msra.mxu0 %v6458
        %v6460 = vand.u32 %v6414, 4294901760
        %6461 = vmatpush.msra.mxu0 %v6460
        %v6462 = vand.u32 %v6413, 4294901760
        %6463 = vmatpush.msra.mxu0 %v6462
        %v6464 = vand.u32 %v6412, 4294901760
        %6465 = vmatpush.msra.mxu0 %v6464
        %v6466 = vand.u32 %v6411, 4294901760
        %6467 = vmatpush.msra.mxu0 %v6466
        %v6468 = vand.u32 %v6410, 4294901760
        %6469 = vmatpush.msra.mxu0 %v6468
        %v6470 = vand.u32 %v6421, 4294901760
        %v6471 = vsub.f32 %v6421, %v6470
        %v6472 = vand.u32 %v6471, 4294901760
        %v6473 = vsub.f32 %v6471, %v6472
        %v6474 = vand.u32 %v6473, 4294901760
        %6475 = vmatmul.f32.gmra.mxu0 %v6474
        %v6476 = vpop.f32.mrf.mxu0
        %v6477 = vadd.f32 0.0, %v6476
        %v6478 = vand.u32 %v6424, 4294901760
        %v6479 = vsub.f32 %v6424, %v6478
        %v6480 = vand.u32 %v6479, 4294901760
        %v6481 = vsub.f32 %v6479, %v6480
        %v6482 = vand.u32 %v6481, 4294901760
        %6483 = vmatmul.f32.gmra.mxu0 %v6482
        %v6484 = vpop.f32.mrf.mxu0
        %v6485 = vadd.f32 0.0, %v6484
        %v6486 = vand.u32 %v6427, 4294901760
        %v6487 = vsub.f32 %v6427, %v6486
        %v6488 = vand.u32 %v6487, 4294901760
        %v6489 = vsub.f32 %v6487, %v6488
        %v6490 = vand.u32 %v6489, 4294901760
        %6491 = vmatmul.f32.gmra.mxu0 %v6490
        %v6492 = vpop.f32.mrf.mxu0
        %v6493 = vadd.f32 0.0, %v6492
        %v6494 = vand.u32 %v6430, 4294901760
        %v6495 = vsub.f32 %v6430, %v6494
        %v6496 = vand.u32 %v6495, 4294901760
        %v6497 = vsub.f32 %v6495, %v6496
        %v6498 = vand.u32 %v6497, 4294901760
        %6499 = vmatmul.f32.gmra.mxu0 %v6498
        %v6500 = vpop.f32.mrf.mxu0
        %v6501 = vadd.f32 0.0, %v6500
        %v6502 = vand.u32 %v6433, 4294901760
        %v6503 = vsub.f32 %v6433, %v6502
        %v6504 = vand.u32 %v6503, 4294901760
        %v6505 = vsub.f32 %v6503, %v6504
        %v6506 = vand.u32 %v6505, 4294901760
        %6507 = vmatmul.f32.gmra.mxu0 %v6506
        %v6508 = vpop.f32.mrf.mxu0
        %v6509 = vadd.f32 0.0, %v6508
        %v6510 = vand.u32 %v6436, 4294901760
        %v6511 = vsub.f32 %v6436, %v6510
        %v6512 = vand.u32 %v6511, 4294901760
        %v6513 = vsub.f32 %v6511, %v6512
        %v6514 = vand.u32 %v6513, 4294901760
        %6515 = vmatmul.f32.gmra.mxu0 %v6514
        %v6516 = vpop.f32.mrf.mxu0
        %v6517 = vadd.f32 0.0, %v6516
        %v6518 = vand.u32 %v6439, 4294901760
        %v6519 = vsub.f32 %v6439, %v6518
        %v6520 = vand.u32 %v6519, 4294901760
        %v6521 = vsub.f32 %v6519, %v6520
        %v6522 = vand.u32 %v6521, 4294901760
        %6523 = vmatmul.f32.gmra.mxu0 %v6522
        %v6524 = vpop.f32.mrf.mxu0
        %v6525 = vadd.f32 0.0, %v6524
        %v6526 = vand.u32 %v6442, 4294901760
        %v6527 = vsub.f32 %v6442, %v6526
        %v6528 = vand.u32 %v6527, 4294901760
        %v6529 = vsub.f32 %v6527, %v6528
        %v6530 = vand.u32 %v6529, 4294901760
        %6531 = vmatmul.f32.gmra.mxu0 %v6530
        %v6532 = vpop.f32.mrf.mxu0
        %v6533 = vadd.f32 0.0, %v6532
        %6534 = vdwg.mxu0
        %6535 = vmatpush.msra.mxu0 0.0
        %6536 = vmatpush.msra.mxu0 0.0
        %6537 = vmatpush.msra.mxu0 0.0
        %6538 = vmatpush.msra.mxu0 0.0
        %6539 = vmatpush.msra.mxu0 0.0
        %6540 = vmatpush.msra.mxu0 0.0
        %v6541 = vand.u32 %v6419, 4294901760
        %v6542 = vsub.f32 %v6419, %v6541
        %v6543 = vand.u32 %v6542, 4294901760
        %v6544 = vsub.f32 %v6542, %v6543
        %v6545 = vand.u32 %v6544, 4294901760
        %6546 = vmatpush.msra.mxu0 %v6545
        %v6547 = vand.u32 %v6418, 4294901760
        %v6548 = vsub.f32 %v6418, %v6547
        %v6549 = vand.u32 %v6548, 4294901760
        %v6550 = vsub.f32 %v6548, %v6549
        %v6551 = vand.u32 %v6550, 4294901760
        %6552 = vmatpush.msra.mxu0 %v6551
        %v6553 = vand.u32 %v6417, 4294901760
        %v6554 = vsub.f32 %v6417, %v6553
        %v6555 = vand.u32 %v6554, 4294901760
        %v6556 = vsub.f32 %v6554, %v6555
        %v6557 = vand.u32 %v6556, 4294901760
        %6558 = vmatpush.msra.mxu0 %v6557
        %v6559 = vand.u32 %v6416, 4294901760
        %v6560 = vsub.f32 %v6416, %v6559
        %v6561 = vand.u32 %v6560, 4294901760
        %v6562 = vsub.f32 %v6560, %v6561
        %v6563 = vand.u32 %v6562, 4294901760
        %6564 = vmatpush.msra.mxu0 %v6563
        %v6565 = vand.u32 %v6415, 4294901760
        %v6566 = vsub.f32 %v6415, %v6565
        %v6567 = vand.u32 %v6566, 4294901760
        %v6568 = vsub.f32 %v6566, %v6567
        %v6569 = vand.u32 %v6568, 4294901760
        %6570 = vmatpush.msra.mxu0 %v6569
        %v6571 = vand.u32 %v6414, 4294901760
        %v6572 = vsub.f32 %v6414, %v6571
        %v6573 = vand.u32 %v6572, 4294901760
        %v6574 = vsub.f32 %v6572, %v6573
        %v6575 = vand.u32 %v6574, 4294901760
        %6576 = vmatpush.msra.mxu0 %v6575
        %v6577 = vand.u32 %v6413, 4294901760
        %v6578 = vsub.f32 %v6413, %v6577
        %v6579 = vand.u32 %v6578, 4294901760
        %v6580 = vsub.f32 %v6578, %v6579
        %v6581 = vand.u32 %v6580, 4294901760
        %6582 = vmatpush.msra.mxu0 %v6581
        %v6583 = vand.u32 %v6412, 4294901760
        %v6584 = vsub.f32 %v6412, %v6583
        %v6585 = vand.u32 %v6584, 4294901760
        %v6586 = vsub.f32 %v6584, %v6585
        %v6587 = vand.u32 %v6586, 4294901760
        %6588 = vmatpush.msra.mxu0 %v6587
        %v6589 = vand.u32 %v6411, 4294901760
        %v6590 = vsub.f32 %v6411, %v6589
        %v6591 = vand.u32 %v6590, 4294901760
        %v6592 = vsub.f32 %v6590, %v6591
        %v6593 = vand.u32 %v6592, 4294901760
        %6594 = vmatpush.msra.mxu0 %v6593
        %v6595 = vand.u32 %v6410, 4294901760
        %v6596 = vsub.f32 %v6410, %v6595
        %v6597 = vand.u32 %v6596, 4294901760
        %v6598 = vsub.f32 %v6596, %v6597
        %v6599 = vand.u32 %v6598, 4294901760
        %6600 = vmatpush.msra.mxu0 %v6599
        %v6601 = vand.u32 %v6421, 4294901760
        %6602 = vmatmul.f32.gmra.mxu0 %v6601
        %v6603 = vpop.f32.mrf.mxu0
        %v6604 = vadd.f32 %v6477, %v6603
        %v6605 = vand.u32 %v6424, 4294901760
        %6606 = vmatmul.f32.gmra.mxu0 %v6605
        %v6607 = vpop.f32.mrf.mxu0
        %v6608 = vadd.f32 %v6485, %v6607
        %v6609 = vand.u32 %v6427, 4294901760
        %6610 = vmatmul.f32.gmra.mxu0 %v6609
        %v6611 = vpop.f32.mrf.mxu0
        %v6612 = vadd.f32 %v6493, %v6611
        %v6613 = vand.u32 %v6430, 4294901760
        %6614 = vmatmul.f32.gmra.mxu0 %v6613
        %v6615 = vpop.f32.mrf.mxu0
        %v6616 = vadd.f32 %v6501, %v6615
        %v6617 = vand.u32 %v6433, 4294901760
        %6618 = vmatmul.f32.gmra.mxu0 %v6617
        %v6619 = vpop.f32.mrf.mxu0
        %v6620 = vadd.f32 %v6509, %v6619
        %v6621 = vand.u32 %v6436, 4294901760
        %6622 = vmatmul.f32.gmra.mxu0 %v6621
        %v6623 = vpop.f32.mrf.mxu0
        %v6624 = vadd.f32 %v6517, %v6623
        %v6625 = vand.u32 %v6439, 4294901760
        %6626 = vmatmul.f32.gmra.mxu0 %v6625
        %v6627 = vpop.f32.mrf.mxu0
        %v6628 = vadd.f32 %v6525, %v6627
        %v6629 = vand.u32 %v6442, 4294901760
        %6630 = vmatmul.f32.gmra.mxu0 %v6629
        %v6631 = vpop.f32.mrf.mxu0
        %v6632 = vadd.f32 %v6533, %v6631
        %6633 = vdwg.mxu0
        %6634 = vmatpush.msra.mxu0 0.0
        %6635 = vmatpush.msra.mxu0 0.0
        %6636 = vmatpush.msra.mxu0 0.0
        %6637 = vmatpush.msra.mxu0 0.0
        %6638 = vmatpush.msra.mxu0 0.0
        %6639 = vmatpush.msra.mxu0 0.0
        %v6640 = vand.u32 %v6419, 4294901760
        %v6641 = vsub.f32 %v6419, %v6640
        %6642 = vmatpush.msra.mxu0 %v6641
        %v6643 = vand.u32 %v6418, 4294901760
        %v6644 = vsub.f32 %v6418, %v6643
        %6645 = vmatpush.msra.mxu0 %v6644
        %v6646 = vand.u32 %v6417, 4294901760
        %v6647 = vsub.f32 %v6417, %v6646
        %6648 = vmatpush.msra.mxu0 %v6647
        %v6649 = vand.u32 %v6416, 4294901760
        %v6650 = vsub.f32 %v6416, %v6649
        %6651 = vmatpush.msra.mxu0 %v6650
        %v6652 = vand.u32 %v6415, 4294901760
        %v6653 = vsub.f32 %v6415, %v6652
        %6654 = vmatpush.msra.mxu0 %v6653
        %v6655 = vand.u32 %v6414, 4294901760
        %v6656 = vsub.f32 %v6414, %v6655
        %6657 = vmatpush.msra.mxu0 %v6656
        %v6658 = vand.u32 %v6413, 4294901760
        %v6659 = vsub.f32 %v6413, %v6658
        %6660 = vmatpush.msra.mxu0 %v6659
        %v6661 = vand.u32 %v6412, 4294901760
        %v6662 = vsub.f32 %v6412, %v6661
        %6663 = vmatpush.msra.mxu0 %v6662
        %v6664 = vand.u32 %v6411, 4294901760
        %v6665 = vsub.f32 %v6411, %v6664
        %6666 = vmatpush.msra.mxu0 %v6665
        %v6667 = vand.u32 %v6410, 4294901760
        %v6668 = vsub.f32 %v6410, %v6667
        %6669 = vmatpush.msra.mxu0 %v6668
        %v6670 = vand.u32 %v6421, 4294901760
        %v6671 = vsub.f32 %v6421, %v6670
        %6672 = vmatmul.f32.gmra.mxu0 %v6671
        %v6673 = vpop.f32.mrf.mxu0
        %v6674 = vadd.f32 %v6604, %v6673
        %v6675 = vand.u32 %v6424, 4294901760
        %v6676 = vsub.f32 %v6424, %v6675
        %6677 = vmatmul.f32.gmra.mxu0 %v6676
        %v6678 = vpop.f32.mrf.mxu0
        %v6679 = vadd.f32 %v6608, %v6678
        %v6680 = vand.u32 %v6427, 4294901760
        %v6681 = vsub.f32 %v6427, %v6680
        %6682 = vmatmul.f32.gmra.mxu0 %v6681
        %v6683 = vpop.f32.mrf.mxu0
        %v6684 = vadd.f32 %v6612, %v6683
        %v6685 = vand.u32 %v6430, 4294901760
        %v6686 = vsub.f32 %v6430, %v6685
        %6687 = vmatmul.f32.gmra.mxu0 %v6686
        %v6688 = vpop.f32.mrf.mxu0
        %v6689 = vadd.f32 %v6616, %v6688
        %v6690 = vand.u32 %v6433, 4294901760
        %v6691 = vsub.f32 %v6433, %v6690
        %6692 = vmatmul.f32.gmra.mxu0 %v6691
        %v6693 = vpop.f32.mrf.mxu0
        %v6694 = vadd.f32 %v6620, %v6693
        %v6695 = vand.u32 %v6436, 4294901760
        %v6696 = vsub.f32 %v6436, %v6695
        %6697 = vmatmul.f32.gmra.mxu0 %v6696
        %v6698 = vpop.f32.mrf.mxu0
        %v6699 = vadd.f32 %v6624, %v6698
        %v6700 = vand.u32 %v6439, 4294901760
        %v6701 = vsub.f32 %v6439, %v6700
        %6702 = vmatmul.f32.gmra.mxu0 %v6701
        %v6703 = vpop.f32.mrf.mxu0
        %v6704 = vadd.f32 %v6628, %v6703
        %v6705 = vand.u32 %v6442, 4294901760
        %v6706 = vsub.f32 %v6442, %v6705
        %6707 = vmatmul.f32.gmra.mxu0 %v6706
        %v6708 = vpop.f32.mrf.mxu0
        %v6709 = vadd.f32 %v6632, %v6708
        %6710 = vdwg.mxu0
        %6711 = vmatpush.msra.mxu0 0.0
        %6712 = vmatpush.msra.mxu0 0.0
        %6713 = vmatpush.msra.mxu0 0.0
        %6714 = vmatpush.msra.mxu0 0.0
        %6715 = vmatpush.msra.mxu0 0.0
        %6716 = vmatpush.msra.mxu0 0.0
        %v6717 = vand.u32 %v6419, 4294901760
        %6718 = vmatpush.msra.mxu0 %v6717
        %v6719 = vand.u32 %v6418, 4294901760
        %6720 = vmatpush.msra.mxu0 %v6719
        %v6721 = vand.u32 %v6417, 4294901760
        %6722 = vmatpush.msra.mxu0 %v6721
        %v6723 = vand.u32 %v6416, 4294901760
        %6724 = vmatpush.msra.mxu0 %v6723
        %v6725 = vand.u32 %v6415, 4294901760
        %6726 = vmatpush.msra.mxu0 %v6725
        %v6727 = vand.u32 %v6414, 4294901760
        %6728 = vmatpush.msra.mxu0 %v6727
        %v6729 = vand.u32 %v6413, 4294901760
        %6730 = vmatpush.msra.mxu0 %v6729
        %v6731 = vand.u32 %v6412, 4294901760
        %6732 = vmatpush.msra.mxu0 %v6731
        %v6733 = vand.u32 %v6411, 4294901760
        %6734 = vmatpush.msra.mxu0 %v6733
        %v6735 = vand.u32 %v6410, 4294901760
        %6736 = vmatpush.msra.mxu0 %v6735
        %v6737 = vand.u32 %v6421, 4294901760
        %v6738 = vsub.f32 %v6421, %v6737
        %v6739 = vand.u32 %v6738, 4294901760
        %6740 = vmatmul.f32.gmra.mxu0 %v6739
        %v6741 = vpop.f32.mrf.mxu0
        %v6742 = vadd.f32 %v6674, %v6741
        %v6743 = vand.u32 %v6424, 4294901760
        %v6744 = vsub.f32 %v6424, %v6743
        %v6745 = vand.u32 %v6744, 4294901760
        %6746 = vmatmul.f32.gmra.mxu0 %v6745
        %v6747 = vpop.f32.mrf.mxu0
        %v6748 = vadd.f32 %v6679, %v6747
        %v6749 = vand.u32 %v6427, 4294901760
        %v6750 = vsub.f32 %v6427, %v6749
        %v6751 = vand.u32 %v6750, 4294901760
        %6752 = vmatmul.f32.gmra.mxu0 %v6751
        %v6753 = vpop.f32.mrf.mxu0
        %v6754 = vadd.f32 %v6684, %v6753
        %v6755 = vand.u32 %v6430, 4294901760
        %v6756 = vsub.f32 %v6430, %v6755
        %v6757 = vand.u32 %v6756, 4294901760
        %6758 = vmatmul.f32.gmra.mxu0 %v6757
        %v6759 = vpop.f32.mrf.mxu0
        %v6760 = vadd.f32 %v6689, %v6759
        %v6761 = vand.u32 %v6433, 4294901760
        %v6762 = vsub.f32 %v6433, %v6761
        %v6763 = vand.u32 %v6762, 4294901760
        %6764 = vmatmul.f32.gmra.mxu0 %v6763
        %v6765 = vpop.f32.mrf.mxu0
        %v6766 = vadd.f32 %v6694, %v6765
        %v6767 = vand.u32 %v6436, 4294901760
        %v6768 = vsub.f32 %v6436, %v6767
        %v6769 = vand.u32 %v6768, 4294901760
        %6770 = vmatmul.f32.gmra.mxu0 %v6769
        %v6771 = vpop.f32.mrf.mxu0
        %v6772 = vadd.f32 %v6699, %v6771
        %v6773 = vand.u32 %v6439, 4294901760
        %v6774 = vsub.f32 %v6439, %v6773
        %v6775 = vand.u32 %v6774, 4294901760
        %6776 = vmatmul.f32.gmra.mxu0 %v6775
        %v6777 = vpop.f32.mrf.mxu0
        %v6778 = vadd.f32 %v6704, %v6777
        %v6779 = vand.u32 %v6442, 4294901760
        %v6780 = vsub.f32 %v6442, %v6779
        %v6781 = vand.u32 %v6780, 4294901760
        %6782 = vmatmul.f32.gmra.mxu0 %v6781
        %v6783 = vpop.f32.mrf.mxu0
        %v6784 = vadd.f32 %v6709, %v6783
        %6785 = vdwg.mxu0
        %6786 = vmatpush.msra.mxu0 0.0
        %6787 = vmatpush.msra.mxu0 0.0
        %6788 = vmatpush.msra.mxu0 0.0
        %6789 = vmatpush.msra.mxu0 0.0
        %6790 = vmatpush.msra.mxu0 0.0
        %6791 = vmatpush.msra.mxu0 0.0
        %v6792 = vand.u32 %v6419, 4294901760
        %v6793 = vsub.f32 %v6419, %v6792
        %v6794 = vand.u32 %v6793, 4294901760
        %6795 = vmatpush.msra.mxu0 %v6794
        %v6796 = vand.u32 %v6418, 4294901760
        %v6797 = vsub.f32 %v6418, %v6796
        %v6798 = vand.u32 %v6797, 4294901760
        %6799 = vmatpush.msra.mxu0 %v6798
        %v6800 = vand.u32 %v6417, 4294901760
        %v6801 = vsub.f32 %v6417, %v6800
        %v6802 = vand.u32 %v6801, 4294901760
        %6803 = vmatpush.msra.mxu0 %v6802
        %v6804 = vand.u32 %v6416, 4294901760
        %v6805 = vsub.f32 %v6416, %v6804
        %v6806 = vand.u32 %v6805, 4294901760
        %6807 = vmatpush.msra.mxu0 %v6806
        %v6808 = vand.u32 %v6415, 4294901760
        %v6809 = vsub.f32 %v6415, %v6808
        %v6810 = vand.u32 %v6809, 4294901760
        %6811 = vmatpush.msra.mxu0 %v6810
        %v6812 = vand.u32 %v6414, 4294901760
        %v6813 = vsub.f32 %v6414, %v6812
        %v6814 = vand.u32 %v6813, 4294901760
        %6815 = vmatpush.msra.mxu0 %v6814
        %v6816 = vand.u32 %v6413, 4294901760
        %v6817 = vsub.f32 %v6413, %v6816
        %v6818 = vand.u32 %v6817, 4294901760
        %6819 = vmatpush.msra.mxu0 %v6818
        %v6820 = vand.u32 %v6412, 4294901760
        %v6821 = vsub.f32 %v6412, %v6820
        %v6822 = vand.u32 %v6821, 4294901760
        %6823 = vmatpush.msra.mxu0 %v6822
        %v6824 = vand.u32 %v6411, 4294901760
        %v6825 = vsub.f32 %v6411, %v6824
        %v6826 = vand.u32 %v6825, 4294901760
        %6827 = vmatpush.msra.mxu0 %v6826
        %v6828 = vand.u32 %v6410, 4294901760
        %v6829 = vsub.f32 %v6410, %v6828
        %v6830 = vand.u32 %v6829, 4294901760
        %6831 = vmatpush.msra.mxu0 %v6830
        %v6832 = vand.u32 %v6421, 4294901760
        %6833 = vmatmul.f32.gmra.mxu0 %v6832
        %v6834 = vpop.f32.mrf.mxu0
        %v6835 = vadd.f32 %v6742, %v6834
        %v6836 = vand.u32 %v6424, 4294901760
        %6837 = vmatmul.f32.gmra.mxu0 %v6836
        %v6838 = vpop.f32.mrf.mxu0
        %v6839 = vadd.f32 %v6748, %v6838
        %v6840 = vand.u32 %v6427, 4294901760
        %6841 = vmatmul.f32.gmra.mxu0 %v6840
        %v6842 = vpop.f32.mrf.mxu0
        %v6843 = vadd.f32 %v6754, %v6842
        %v6844 = vand.u32 %v6430, 4294901760
        %6845 = vmatmul.f32.gmra.mxu0 %v6844
        %v6846 = vpop.f32.mrf.mxu0
        %v6847 = vadd.f32 %v6760, %v6846
        %v6848 = vand.u32 %v6433, 4294901760
        %6849 = vmatmul.f32.gmra.mxu0 %v6848
        %v6850 = vpop.f32.mrf.mxu0
        %v6851 = vadd.f32 %v6766, %v6850
        %v6852 = vand.u32 %v6436, 4294901760
        %6853 = vmatmul.f32.gmra.mxu0 %v6852
        %v6854 = vpop.f32.mrf.mxu0
        %v6855 = vadd.f32 %v6772, %v6854
        %v6856 = vand.u32 %v6439, 4294901760
        %6857 = vmatmul.f32.gmra.mxu0 %v6856
        %v6858 = vpop.f32.mrf.mxu0
        %v6859 = vadd.f32 %v6778, %v6858
        %v6860 = vand.u32 %v6442, 4294901760
        %6861 = vmatmul.f32.gmra.mxu0 %v6860
        %v6862 = vpop.f32.mrf.mxu0
        %v6863 = vadd.f32 %v6784, %v6862
        %6864 = vdwg.mxu0
        %6865 = vmatpush.msra.mxu0 0.0
        %6866 = vmatpush.msra.mxu0 0.0
        %6867 = vmatpush.msra.mxu0 0.0
        %6868 = vmatpush.msra.mxu0 0.0
        %6869 = vmatpush.msra.mxu0 0.0
        %6870 = vmatpush.msra.mxu0 0.0
        %v6871 = vand.u32 %v6419, 4294901760
        %6872 = vmatpush.msra.mxu0 %v6871
        %v6873 = vand.u32 %v6418, 4294901760
        %6874 = vmatpush.msra.mxu0 %v6873
        %v6875 = vand.u32 %v6417, 4294901760
        %6876 = vmatpush.msra.mxu0 %v6875
        %v6877 = vand.u32 %v6416, 4294901760
        %6878 = vmatpush.msra.mxu0 %v6877
        %v6879 = vand.u32 %v6415, 4294901760
        %6880 = vmatpush.msra.mxu0 %v6879
        %v6881 = vand.u32 %v6414, 4294901760
        %6882 = vmatpush.msra.mxu0 %v6881
        %v6883 = vand.u32 %v6413, 4294901760
        %6884 = vmatpush.msra.mxu0 %v6883
        %v6885 = vand.u32 %v6412, 4294901760
        %6886 = vmatpush.msra.mxu0 %v6885
        %v6887 = vand.u32 %v6411, 4294901760
        %6888 = vmatpush.msra.mxu0 %v6887
        %v6889 = vand.u32 %v6410, 4294901760
        %6890 = vmatpush.msra.mxu0 %v6889
        %v6891 = vand.u32 %v6421, 4294901760
        %6892 = vmatmul.f32.gmra.mxu0 %v6891
        %v6893 = vpop.f32.mrf.mxu0
        %v6894 = vadd.f32 %v6835, %v6893
        %v6895 = vand.u32 %v6424, 4294901760
        %6896 = vmatmul.f32.gmra.mxu0 %v6895
        %v6897 = vpop.f32.mrf.mxu0
        %v6898 = vadd.f32 %v6839, %v6897
        %v6899 = vand.u32 %v6427, 4294901760
        %6900 = vmatmul.f32.gmra.mxu0 %v6899
        %v6901 = vpop.f32.mrf.mxu0
        %v6902 = vadd.f32 %v6843, %v6901
        %v6903 = vand.u32 %v6430, 4294901760
        %6904 = vmatmul.f32.gmra.mxu0 %v6903
        %v6905 = vpop.f32.mrf.mxu0
        %v6906 = vadd.f32 %v6847, %v6905
        %v6907 = vand.u32 %v6433, 4294901760
        %6908 = vmatmul.f32.gmra.mxu0 %v6907
        %v6909 = vpop.f32.mrf.mxu0
        %v6910 = vadd.f32 %v6851, %v6909
        %v6911 = vand.u32 %v6436, 4294901760
        %6912 = vmatmul.f32.gmra.mxu0 %v6911
        %v6913 = vpop.f32.mrf.mxu0
        %v6914 = vadd.f32 %v6855, %v6913
        %v6915 = vand.u32 %v6439, 4294901760
        %6916 = vmatmul.f32.gmra.mxu0 %v6915
        %v6917 = vpop.f32.mrf.mxu0
        %v6918 = vadd.f32 %v6859, %v6917
        %v6919 = vand.u32 %v6442, 4294901760
        %6920 = vmatmul.f32.gmra.mxu0 %v6919
        %v6921 = vpop.f32.mrf.mxu0
        %v6922 = vadd.f32 %v6863, %v6921
        %6923 = vdwg.mxu0
        %v6924 = vadd.f32 %v6393, %v6894
        %v6925 = vadd.f32 %v6394, %v6898
        %v6926 = vadd.f32 %v6395, %v6902
        %v6927 = vadd.f32 %v6396, %v6906
        %v6928 = vadd.f32 %v6397, %v6910
        %v6929 = vadd.f32 %v6398, %v6914
        %v6930 = vadd.f32 %v6399, %v6918
        %v6931 = vadd.f32 %v6400, %v6922
        %v6932 = vld [vmem:[%s4284 + $0x2] sm:$0xff]
        %v6933 = vld [vmem:[%s4284 + $0x12] sm:$0xff]
        %v6934 = vld [vmem:[%s4284 + $0x22] sm:$0xff]
        %v6935 = vld [vmem:[%s4284 + $0x32] sm:$0xff]
        %v6936 = vld [vmem:[%s4284 + $0x42] sm:$0xff]
        %v6937 = vld [vmem:[%s4284 + $0x52] sm:$0xff]
        %v6938 = vld [vmem:[%s4284 + $0x62] sm:$0xff]
        %v6939 = vld [vmem:[%s4284 + $0x72] sm:$0xff]
        %s6940 = scalar_lea.vmem %s2, 400
        %v6941 = vld [vmem:[%s6940] sm:$0xff]
        %v6942 = vld [vmem:[%s6940 + $0x8] sm:$0xff]
        %v6943 = vld [vmem:[%s6940 + $0x10] sm:$0xff]
        %v6944 = vld [vmem:[%s6940 + $0x18] sm:$0xff]
        %v6945 = vld [vmem:[%s6940 + $0x20] sm:$0xff]
        %v6946 = vld [vmem:[%s6940 + $0x28] sm:$0xff]
        %v6947 = vld [vmem:[%s6940 + $0x30] sm:$0xff]
        %v6948 = vld [vmem:[%s6940 + $0x38] sm:$0xff]
        %v6949 = vld [vmem:[%s6940 + $0x40] sm:$0xff]
        %v6950 = vld [vmem:[%s6940 + $0x48] sm:$0xff]
        %v6952 = vsel %vm4230, %v6932, 0
        %v6955 = vsel %vm4230, %v6933, 0
        %v6958 = vsel %vm4230, %v6934, 0
        %v6961 = vsel %vm4230, %v6935, 0
        %v6964 = vsel %vm4230, %v6936, 0
        %v6967 = vsel %vm4230, %v6937, 0
        %v6970 = vsel %vm4230, %v6938, 0
        %v6973 = vsel %vm4230, %v6939, 0
        %6975 = vmatpush.msra.mxu0 0.0
        %6976 = vmatpush.msra.mxu0 0.0
        %6977 = vmatpush.msra.mxu0 0.0
        %6978 = vmatpush.msra.mxu0 0.0
        %6979 = vmatpush.msra.mxu0 0.0
        %6980 = vmatpush.msra.mxu0 0.0
        %v6981 = vand.u32 %v6950, 4294901760
        %6982 = vmatpush.msra.mxu0 %v6981
        %v6983 = vand.u32 %v6949, 4294901760
        %6984 = vmatpush.msra.mxu0 %v6983
        %v6985 = vand.u32 %v6948, 4294901760
        %6986 = vmatpush.msra.mxu0 %v6985
        %v6987 = vand.u32 %v6947, 4294901760
        %6988 = vmatpush.msra.mxu0 %v6987
        %v6989 = vand.u32 %v6946, 4294901760
        %6990 = vmatpush.msra.mxu0 %v6989
        %v6991 = vand.u32 %v6945, 4294901760
        %6992 = vmatpush.msra.mxu0 %v6991
        %v6993 = vand.u32 %v6944, 4294901760
        %6994 = vmatpush.msra.mxu0 %v6993
        %v6995 = vand.u32 %v6943, 4294901760
        %6996 = vmatpush.msra.mxu0 %v6995
        %v6997 = vand.u32 %v6942, 4294901760
        %6998 = vmatpush.msra.mxu0 %v6997
        %v6999 = vand.u32 %v6941, 4294901760
        %7000 = vmatpush.msra.mxu0 %v6999
        %v7001 = vand.u32 %v6952, 4294901760
        %v7002 = vsub.f32 %v6952, %v7001
        %v7003 = vand.u32 %v7002, 4294901760
        %v7004 = vsub.f32 %v7002, %v7003
        %v7005 = vand.u32 %v7004, 4294901760
        %7006 = vmatmul.f32.gmra.mxu0 %v7005
        %v7007 = vpop.f32.mrf.mxu0
        %v7008 = vadd.f32 0.0, %v7007
        %v7009 = vand.u32 %v6955, 4294901760
        %v7010 = vsub.f32 %v6955, %v7009
        %v7011 = vand.u32 %v7010, 4294901760
        %v7012 = vsub.f32 %v7010, %v7011
        %v7013 = vand.u32 %v7012, 4294901760
        %7014 = vmatmul.f32.gmra.mxu0 %v7013
        %v7015 = vpop.f32.mrf.mxu0
        %v7016 = vadd.f32 0.0, %v7015
        %v7017 = vand.u32 %v6958, 4294901760
        %v7018 = vsub.f32 %v6958, %v7017
        %v7019 = vand.u32 %v7018, 4294901760
        %v7020 = vsub.f32 %v7018, %v7019
        %v7021 = vand.u32 %v7020, 4294901760
        %7022 = vmatmul.f32.gmra.mxu0 %v7021
        %v7023 = vpop.f32.mrf.mxu0
        %v7024 = vadd.f32 0.0, %v7023
        %v7025 = vand.u32 %v6961, 4294901760
        %v7026 = vsub.f32 %v6961, %v7025
        %v7027 = vand.u32 %v7026, 4294901760
        %v7028 = vsub.f32 %v7026, %v7027
        %v7029 = vand.u32 %v7028, 4294901760
        %7030 = vmatmul.f32.gmra.mxu0 %v7029
        %v7031 = vpop.f32.mrf.mxu0
        %v7032 = vadd.f32 0.0, %v7031
        %v7033 = vand.u32 %v6964, 4294901760
        %v7034 = vsub.f32 %v6964, %v7033
        %v7035 = vand.u32 %v7034, 4294901760
        %v7036 = vsub.f32 %v7034, %v7035
        %v7037 = vand.u32 %v7036, 4294901760
        %7038 = vmatmul.f32.gmra.mxu0 %v7037
        %v7039 = vpop.f32.mrf.mxu0
        %v7040 = vadd.f32 0.0, %v7039
        %v7041 = vand.u32 %v6967, 4294901760
        %v7042 = vsub.f32 %v6967, %v7041
        %v7043 = vand.u32 %v7042, 4294901760
        %v7044 = vsub.f32 %v7042, %v7043
        %v7045 = vand.u32 %v7044, 4294901760
        %7046 = vmatmul.f32.gmra.mxu0 %v7045
        %v7047 = vpop.f32.mrf.mxu0
        %v7048 = vadd.f32 0.0, %v7047
        %v7049 = vand.u32 %v6970, 4294901760
        %v7050 = vsub.f32 %v6970, %v7049
        %v7051 = vand.u32 %v7050, 4294901760
        %v7052 = vsub.f32 %v7050, %v7051
        %v7053 = vand.u32 %v7052, 4294901760
        %7054 = vmatmul.f32.gmra.mxu0 %v7053
        %v7055 = vpop.f32.mrf.mxu0
        %v7056 = vadd.f32 0.0, %v7055
        %v7057 = vand.u32 %v6973, 4294901760
        %v7058 = vsub.f32 %v6973, %v7057
        %v7059 = vand.u32 %v7058, 4294901760
        %v7060 = vsub.f32 %v7058, %v7059
        %v7061 = vand.u32 %v7060, 4294901760
        %7062 = vmatmul.f32.gmra.mxu0 %v7061
        %v7063 = vpop.f32.mrf.mxu0
        %v7064 = vadd.f32 0.0, %v7063
        %7065 = vdwg.mxu0
        %7066 = vmatpush.msra.mxu0 0.0
        %7067 = vmatpush.msra.mxu0 0.0
        %7068 = vmatpush.msra.mxu0 0.0
        %7069 = vmatpush.msra.mxu0 0.0
        %7070 = vmatpush.msra.mxu0 0.0
        %7071 = vmatpush.msra.mxu0 0.0
        %v7072 = vand.u32 %v6950, 4294901760
        %v7073 = vsub.f32 %v6950, %v7072
        %v7074 = vand.u32 %v7073, 4294901760
        %v7075 = vsub.f32 %v7073, %v7074
        %v7076 = vand.u32 %v7075, 4294901760
        %7077 = vmatpush.msra.mxu0 %v7076
        %v7078 = vand.u32 %v6949, 4294901760
        %v7079 = vsub.f32 %v6949, %v7078
        %v7080 = vand.u32 %v7079, 4294901760
        %v7081 = vsub.f32 %v7079, %v7080
        %v7082 = vand.u32 %v7081, 4294901760
        %7083 = vmatpush.msra.mxu0 %v7082
        %v7084 = vand.u32 %v6948, 4294901760
        %v7085 = vsub.f32 %v6948, %v7084
        %v7086 = vand.u32 %v7085, 4294901760
        %v7087 = vsub.f32 %v7085, %v7086
        %v7088 = vand.u32 %v7087, 4294901760
        %7089 = vmatpush.msra.mxu0 %v7088
        %v7090 = vand.u32 %v6947, 4294901760
        %v7091 = vsub.f32 %v6947, %v7090
        %v7092 = vand.u32 %v7091, 4294901760
        %v7093 = vsub.f32 %v7091, %v7092
        %v7094 = vand.u32 %v7093, 4294901760
        %7095 = vmatpush.msra.mxu0 %v7094
        %v7096 = vand.u32 %v6946, 4294901760
        %v7097 = vsub.f32 %v6946, %v7096
        %v7098 = vand.u32 %v7097, 4294901760
        %v7099 = vsub.f32 %v7097, %v7098
        %v7100 = vand.u32 %v7099, 4294901760
        %7101 = vmatpush.msra.mxu0 %v7100
        %v7102 = vand.u32 %v6945, 4294901760
        %v7103 = vsub.f32 %v6945, %v7102
        %v7104 = vand.u32 %v7103, 4294901760
        %v7105 = vsub.f32 %v7103, %v7104
        %v7106 = vand.u32 %v7105, 4294901760
        %7107 = vmatpush.msra.mxu0 %v7106
        %v7108 = vand.u32 %v6944, 4294901760
        %v7109 = vsub.f32 %v6944, %v7108
        %v7110 = vand.u32 %v7109, 4294901760
        %v7111 = vsub.f32 %v7109, %v7110
        %v7112 = vand.u32 %v7111, 4294901760
        %7113 = vmatpush.msra.mxu0 %v7112
        %v7114 = vand.u32 %v6943, 4294901760
        %v7115 = vsub.f32 %v6943, %v7114
        %v7116 = vand.u32 %v7115, 4294901760
        %v7117 = vsub.f32 %v7115, %v7116
        %v7118 = vand.u32 %v7117, 4294901760
        %7119 = vmatpush.msra.mxu0 %v7118
        %v7120 = vand.u32 %v6942, 4294901760
        %v7121 = vsub.f32 %v6942, %v7120
        %v7122 = vand.u32 %v7121, 4294901760
        %v7123 = vsub.f32 %v7121, %v7122
        %v7124 = vand.u32 %v7123, 4294901760
        %7125 = vmatpush.msra.mxu0 %v7124
        %v7126 = vand.u32 %v6941, 4294901760
        %v7127 = vsub.f32 %v6941, %v7126
        %v7128 = vand.u32 %v7127, 4294901760
        %v7129 = vsub.f32 %v7127, %v7128
        %v7130 = vand.u32 %v7129, 4294901760
        %7131 = vmatpush.msra.mxu0 %v7130
        %v7132 = vand.u32 %v6952, 4294901760
        %7133 = vmatmul.f32.gmra.mxu0 %v7132
        %v7134 = vpop.f32.mrf.mxu0
        %v7135 = vadd.f32 %v7008, %v7134
        %v7136 = vand.u32 %v6955, 4294901760
        %7137 = vmatmul.f32.gmra.mxu0 %v7136
        %v7138 = vpop.f32.mrf.mxu0
        %v7139 = vadd.f32 %v7016, %v7138
        %v7140 = vand.u32 %v6958, 4294901760
        %7141 = vmatmul.f32.gmra.mxu0 %v7140
        %v7142 = vpop.f32.mrf.mxu0
        %v7143 = vadd.f32 %v7024, %v7142
        %v7144 = vand.u32 %v6961, 4294901760
        %7145 = vmatmul.f32.gmra.mxu0 %v7144
        %v7146 = vpop.f32.mrf.mxu0
        %v7147 = vadd.f32 %v7032, %v7146
        %v7148 = vand.u32 %v6964, 4294901760
        %7149 = vmatmul.f32.gmra.mxu0 %v7148
        %v7150 = vpop.f32.mrf.mxu0
        %v7151 = vadd.f32 %v7040, %v7150
        %v7152 = vand.u32 %v6967, 4294901760
        %7153 = vmatmul.f32.gmra.mxu0 %v7152
        %v7154 = vpop.f32.mrf.mxu0
        %v7155 = vadd.f32 %v7048, %v7154
        %v7156 = vand.u32 %v6970, 4294901760
        %7157 = vmatmul.f32.gmra.mxu0 %v7156
        %v7158 = vpop.f32.mrf.mxu0
        %v7159 = vadd.f32 %v7056, %v7158
        %v7160 = vand.u32 %v6973, 4294901760
        %7161 = vmatmul.f32.gmra.mxu0 %v7160
        %v7162 = vpop.f32.mrf.mxu0
        %v7163 = vadd.f32 %v7064, %v7162
        %7164 = vdwg.mxu0
        %7165 = vmatpush.msra.mxu0 0.0
        %7166 = vmatpush.msra.mxu0 0.0
        %7167 = vmatpush.msra.mxu0 0.0
        %7168 = vmatpush.msra.mxu0 0.0
        %7169 = vmatpush.msra.mxu0 0.0
        %7170 = vmatpush.msra.mxu0 0.0
        %v7171 = vand.u32 %v6950, 4294901760
        %v7172 = vsub.f32 %v6950, %v7171
        %7173 = vmatpush.msra.mxu0 %v7172
        %v7174 = vand.u32 %v6949, 4294901760
        %v7175 = vsub.f32 %v6949, %v7174
        %7176 = vmatpush.msra.mxu0 %v7175
        %v7177 = vand.u32 %v6948, 4294901760
        %v7178 = vsub.f32 %v6948, %v7177
        %7179 = vmatpush.msra.mxu0 %v7178
        %v7180 = vand.u32 %v6947, 4294901760
        %v7181 = vsub.f32 %v6947, %v7180
        %7182 = vmatpush.msra.mxu0 %v7181
        %v7183 = vand.u32 %v6946, 4294901760
        %v7184 = vsub.f32 %v6946, %v7183
        %7185 = vmatpush.msra.mxu0 %v7184
        %v7186 = vand.u32 %v6945, 4294901760
        %v7187 = vsub.f32 %v6945, %v7186
        %7188 = vmatpush.msra.mxu0 %v7187
        %v7189 = vand.u32 %v6944, 4294901760
        %v7190 = vsub.f32 %v6944, %v7189
        %7191 = vmatpush.msra.mxu0 %v7190
        %v7192 = vand.u32 %v6943, 4294901760
        %v7193 = vsub.f32 %v6943, %v7192
        %7194 = vmatpush.msra.mxu0 %v7193
        %v7195 = vand.u32 %v6942, 4294901760
        %v7196 = vsub.f32 %v6942, %v7195
        %7197 = vmatpush.msra.mxu0 %v7196
        %v7198 = vand.u32 %v6941, 4294901760
        %v7199 = vsub.f32 %v6941, %v7198
        %7200 = vmatpush.msra.mxu0 %v7199
        %v7201 = vand.u32 %v6952, 4294901760
        %v7202 = vsub.f32 %v6952, %v7201
        %7203 = vmatmul.f32.gmra.mxu0 %v7202
        %v7204 = vpop.f32.mrf.mxu0
        %v7205 = vadd.f32 %v7135, %v7204
        %v7206 = vand.u32 %v6955, 4294901760
        %v7207 = vsub.f32 %v6955, %v7206
        %7208 = vmatmul.f32.gmra.mxu0 %v7207
        %v7209 = vpop.f32.mrf.mxu0
        %v7210 = vadd.f32 %v7139, %v7209
        %v7211 = vand.u32 %v6958, 4294901760
        %v7212 = vsub.f32 %v6958, %v7211
        %7213 = vmatmul.f32.gmra.mxu0 %v7212
        %v7214 = vpop.f32.mrf.mxu0
        %v7215 = vadd.f32 %v7143, %v7214
        %v7216 = vand.u32 %v6961, 4294901760
        %v7217 = vsub.f32 %v6961, %v7216
        %7218 = vmatmul.f32.gmra.mxu0 %v7217
        %v7219 = vpop.f32.mrf.mxu0
        %v7220 = vadd.f32 %v7147, %v7219
        %v7221 = vand.u32 %v6964, 4294901760
        %v7222 = vsub.f32 %v6964, %v7221
        %7223 = vmatmul.f32.gmra.mxu0 %v7222
        %v7224 = vpop.f32.mrf.mxu0
        %v7225 = vadd.f32 %v7151, %v7224
        %v7226 = vand.u32 %v6967, 4294901760
        %v7227 = vsub.f32 %v6967, %v7226
        %7228 = vmatmul.f32.gmra.mxu0 %v7227
        %v7229 = vpop.f32.mrf.mxu0
        %v7230 = vadd.f32 %v7155, %v7229
        %v7231 = vand.u32 %v6970, 4294901760
        %v7232 = vsub.f32 %v6970, %v7231
        %7233 = vmatmul.f32.gmra.mxu0 %v7232
        %v7234 = vpop.f32.mrf.mxu0
        %v7235 = vadd.f32 %v7159, %v7234
        %v7236 = vand.u32 %v6973, 4294901760
        %v7237 = vsub.f32 %v6973, %v7236
        %7238 = vmatmul.f32.gmra.mxu0 %v7237
        %v7239 = vpop.f32.mrf.mxu0
        %v7240 = vadd.f32 %v7163, %v7239
        %7241 = vdwg.mxu0
        %7242 = vmatpush.msra.mxu0 0.0
        %7243 = vmatpush.msra.mxu0 0.0
        %7244 = vmatpush.msra.mxu0 0.0
        %7245 = vmatpush.msra.mxu0 0.0
        %7246 = vmatpush.msra.mxu0 0.0
        %7247 = vmatpush.msra.mxu0 0.0
        %v7248 = vand.u32 %v6950, 4294901760
        %7249 = vmatpush.msra.mxu0 %v7248
        %v7250 = vand.u32 %v6949, 4294901760
        %7251 = vmatpush.msra.mxu0 %v7250
        %v7252 = vand.u32 %v6948, 4294901760
        %7253 = vmatpush.msra.mxu0 %v7252
        %v7254 = vand.u32 %v6947, 4294901760
        %7255 = vmatpush.msra.mxu0 %v7254
        %v7256 = vand.u32 %v6946, 4294901760
        %7257 = vmatpush.msra.mxu0 %v7256
        %v7258 = vand.u32 %v6945, 4294901760
        %7259 = vmatpush.msra.mxu0 %v7258
        %v7260 = vand.u32 %v6944, 4294901760
        %7261 = vmatpush.msra.mxu0 %v7260
        %v7262 = vand.u32 %v6943, 4294901760
        %7263 = vmatpush.msra.mxu0 %v7262
        %v7264 = vand.u32 %v6942, 4294901760
        %7265 = vmatpush.msra.mxu0 %v7264
        %v7266 = vand.u32 %v6941, 4294901760
        %7267 = vmatpush.msra.mxu0 %v7266
        %v7268 = vand.u32 %v6952, 4294901760
        %v7269 = vsub.f32 %v6952, %v7268
        %v7270 = vand.u32 %v7269, 4294901760
        %7271 = vmatmul.f32.gmra.mxu0 %v7270
        %v7272 = vpop.f32.mrf.mxu0
        %v7273 = vadd.f32 %v7205, %v7272
        %v7274 = vand.u32 %v6955, 4294901760
        %v7275 = vsub.f32 %v6955, %v7274
        %v7276 = vand.u32 %v7275, 4294901760
        %7277 = vmatmul.f32.gmra.mxu0 %v7276
        %v7278 = vpop.f32.mrf.mxu0
        %v7279 = vadd.f32 %v7210, %v7278
        %v7280 = vand.u32 %v6958, 4294901760
        %v7281 = vsub.f32 %v6958, %v7280
        %v7282 = vand.u32 %v7281, 4294901760
        %7283 = vmatmul.f32.gmra.mxu0 %v7282
        %v7284 = vpop.f32.mrf.mxu0
        %v7285 = vadd.f32 %v7215, %v7284
        %v7286 = vand.u32 %v6961, 4294901760
        %v7287 = vsub.f32 %v6961, %v7286
        %v7288 = vand.u32 %v7287, 4294901760
        %7289 = vmatmul.f32.gmra.mxu0 %v7288
        %v7290 = vpop.f32.mrf.mxu0
        %v7291 = vadd.f32 %v7220, %v7290
        %v7292 = vand.u32 %v6964, 4294901760
        %v7293 = vsub.f32 %v6964, %v7292
        %v7294 = vand.u32 %v7293, 4294901760
        %7295 = vmatmul.f32.gmra.mxu0 %v7294
        %v7296 = vpop.f32.mrf.mxu0
        %v7297 = vadd.f32 %v7225, %v7296
        %v7298 = vand.u32 %v6967, 4294901760
        %v7299 = vsub.f32 %v6967, %v7298
        %v7300 = vand.u32 %v7299, 4294901760
        %7301 = vmatmul.f32.gmra.mxu0 %v7300
        %v7302 = vpop.f32.mrf.mxu0
        %v7303 = vadd.f32 %v7230, %v7302
        %v7304 = vand.u32 %v6970, 4294901760
        %v7305 = vsub.f32 %v6970, %v7304
        %v7306 = vand.u32 %v7305, 4294901760
        %7307 = vmatmul.f32.gmra.mxu0 %v7306
        %v7308 = vpop.f32.mrf.mxu0
        %v7309 = vadd.f32 %v7235, %v7308
        %v7310 = vand.u32 %v6973, 4294901760
        %v7311 = vsub.f32 %v6973, %v7310
        %v7312 = vand.u32 %v7311, 4294901760
        %7313 = vmatmul.f32.gmra.mxu0 %v7312
        %v7314 = vpop.f32.mrf.mxu0
        %v7315 = vadd.f32 %v7240, %v7314
        %7316 = vdwg.mxu0
        %7317 = vmatpush.msra.mxu0 0.0
        %7318 = vmatpush.msra.mxu0 0.0
        %7319 = vmatpush.msra.mxu0 0.0
        %7320 = vmatpush.msra.mxu0 0.0
        %7321 = vmatpush.msra.mxu0 0.0
        %7322 = vmatpush.msra.mxu0 0.0
        %v7323 = vand.u32 %v6950, 4294901760
        %v7324 = vsub.f32 %v6950, %v7323
        %v7325 = vand.u32 %v7324, 4294901760
        %7326 = vmatpush.msra.mxu0 %v7325
        %v7327 = vand.u32 %v6949, 4294901760
        %v7328 = vsub.f32 %v6949, %v7327
        %v7329 = vand.u32 %v7328, 4294901760
        %7330 = vmatpush.msra.mxu0 %v7329
        %v7331 = vand.u32 %v6948, 4294901760
        %v7332 = vsub.f32 %v6948, %v7331
        %v7333 = vand.u32 %v7332, 4294901760
        %7334 = vmatpush.msra.mxu0 %v7333
        %v7335 = vand.u32 %v6947, 4294901760
        %v7336 = vsub.f32 %v6947, %v7335
        %v7337 = vand.u32 %v7336, 4294901760
        %7338 = vmatpush.msra.mxu0 %v7337
        %v7339 = vand.u32 %v6946, 4294901760
        %v7340 = vsub.f32 %v6946, %v7339
        %v7341 = vand.u32 %v7340, 4294901760
        %7342 = vmatpush.msra.mxu0 %v7341
        %v7343 = vand.u32 %v6945, 4294901760
        %v7344 = vsub.f32 %v6945, %v7343
        %v7345 = vand.u32 %v7344, 4294901760
        %7346 = vmatpush.msra.mxu0 %v7345
        %v7347 = vand.u32 %v6944, 4294901760
        %v7348 = vsub.f32 %v6944, %v7347
        %v7349 = vand.u32 %v7348, 4294901760
        %7350 = vmatpush.msra.mxu0 %v7349
        %v7351 = vand.u32 %v6943, 4294901760
        %v7352 = vsub.f32 %v6943, %v7351
        %v7353 = vand.u32 %v7352, 4294901760
        %7354 = vmatpush.msra.mxu0 %v7353
        %v7355 = vand.u32 %v6942, 4294901760
        %v7356 = vsub.f32 %v6942, %v7355
        %v7357 = vand.u32 %v7356, 4294901760
        %7358 = vmatpush.msra.mxu0 %v7357
        %v7359 = vand.u32 %v6941, 4294901760
        %v7360 = vsub.f32 %v6941, %v7359
        %v7361 = vand.u32 %v7360, 4294901760
        %7362 = vmatpush.msra.mxu0 %v7361
        %v7363 = vand.u32 %v6952, 4294901760
        %7364 = vmatmul.f32.gmra.mxu0 %v7363
        %v7365 = vpop.f32.mrf.mxu0
        %v7366 = vadd.f32 %v7273, %v7365
        %v7367 = vand.u32 %v6955, 4294901760
        %7368 = vmatmul.f32.gmra.mxu0 %v7367
        %v7369 = vpop.f32.mrf.mxu0
        %v7370 = vadd.f32 %v7279, %v7369
        %v7371 = vand.u32 %v6958, 4294901760
        %7372 = vmatmul.f32.gmra.mxu0 %v7371
        %v7373 = vpop.f32.mrf.mxu0
        %v7374 = vadd.f32 %v7285, %v7373
        %v7375 = vand.u32 %v6961, 4294901760
        %7376 = vmatmul.f32.gmra.mxu0 %v7375
        %v7377 = vpop.f32.mrf.mxu0
        %v7378 = vadd.f32 %v7291, %v7377
        %v7379 = vand.u32 %v6964, 4294901760
        %7380 = vmatmul.f32.gmra.mxu0 %v7379
        %v7381 = vpop.f32.mrf.mxu0
        %v7382 = vadd.f32 %v7297, %v7381
        %v7383 = vand.u32 %v6967, 4294901760
        %7384 = vmatmul.f32.gmra.mxu0 %v7383
        %v7385 = vpop.f32.mrf.mxu0
        %v7386 = vadd.f32 %v7303, %v7385
        %v7387 = vand.u32 %v6970, 4294901760
        %7388 = vmatmul.f32.gmra.mxu0 %v7387
        %v7389 = vpop.f32.mrf.mxu0
        %v7390 = vadd.f32 %v7309, %v7389
        %v7391 = vand.u32 %v6973, 4294901760
        %7392 = vmatmul.f32.gmra.mxu0 %v7391
        %v7393 = vpop.f32.mrf.mxu0
        %v7394 = vadd.f32 %v7315, %v7393
        %7395 = vdwg.mxu0
        %7396 = vmatpush.msra.mxu0 0.0
        %7397 = vmatpush.msra.mxu0 0.0
        %7398 = vmatpush.msra.mxu0 0.0
        %7399 = vmatpush.msra.mxu0 0.0
        %7400 = vmatpush.msra.mxu0 0.0
        %7401 = vmatpush.msra.mxu0 0.0
        %v7402 = vand.u32 %v6950, 4294901760
        %7403 = vmatpush.msra.mxu0 %v7402
        %v7404 = vand.u32 %v6949, 4294901760
        %7405 = vmatpush.msra.mxu0 %v7404
        %v7406 = vand.u32 %v6948, 4294901760
        %7407 = vmatpush.msra.mxu0 %v7406
        %v7408 = vand.u32 %v6947, 4294901760
        %7409 = vmatpush.msra.mxu0 %v7408
        %v7410 = vand.u32 %v6946, 4294901760
        %7411 = vmatpush.msra.mxu0 %v7410
        %v7412 = vand.u32 %v6945, 4294901760
        %7413 = vmatpush.msra.mxu0 %v7412
        %v7414 = vand.u32 %v6944, 4294901760
        %7415 = vmatpush.msra.mxu0 %v7414
        %v7416 = vand.u32 %v6943, 4294901760
        %7417 = vmatpush.msra.mxu0 %v7416
        %v7418 = vand.u32 %v6942, 4294901760
        %7419 = vmatpush.msra.mxu0 %v7418
        %v7420 = vand.u32 %v6941, 4294901760
        %7421 = vmatpush.msra.mxu0 %v7420
        %v7422 = vand.u32 %v6952, 4294901760
        %7423 = vmatmul.f32.gmra.mxu0 %v7422
        %v7424 = vpop.f32.mrf.mxu0
        %v7425 = vadd.f32 %v7366, %v7424
        %v7426 = vand.u32 %v6955, 4294901760
        %7427 = vmatmul.f32.gmra.mxu0 %v7426
        %v7428 = vpop.f32.mrf.mxu0
        %v7429 = vadd.f32 %v7370, %v7428
        %v7430 = vand.u32 %v6958, 4294901760
        %7431 = vmatmul.f32.gmra.mxu0 %v7430
        %v7432 = vpop.f32.mrf.mxu0
        %v7433 = vadd.f32 %v7374, %v7432
        %v7434 = vand.u32 %v6961, 4294901760
        %7435 = vmatmul.f32.gmra.mxu0 %v7434
        %v7436 = vpop.f32.mrf.mxu0
        %v7437 = vadd.f32 %v7378, %v7436
        %v7438 = vand.u32 %v6964, 4294901760
        %7439 = vmatmul.f32.gmra.mxu0 %v7438
        %v7440 = vpop.f32.mrf.mxu0
        %v7441 = vadd.f32 %v7382, %v7440
        %v7442 = vand.u32 %v6967, 4294901760
        %7443 = vmatmul.f32.gmra.mxu0 %v7442
        %v7444 = vpop.f32.mrf.mxu0
        %v7445 = vadd.f32 %v7386, %v7444
        %v7446 = vand.u32 %v6970, 4294901760
        %7447 = vmatmul.f32.gmra.mxu0 %v7446
        %v7448 = vpop.f32.mrf.mxu0
        %v7449 = vadd.f32 %v7390, %v7448
        %v7450 = vand.u32 %v6973, 4294901760
        %7451 = vmatmul.f32.gmra.mxu0 %v7450
        %v7452 = vpop.f32.mrf.mxu0
        %v7453 = vadd.f32 %v7394, %v7452
        %7454 = vdwg.mxu0
        %v7455 = vadd.f32 %v6924, %v7425
        %v7456 = vadd.f32 %v6925, %v7429
        %v7457 = vadd.f32 %v6926, %v7433
        %v7458 = vadd.f32 %v6927, %v7437
        %v7459 = vadd.f32 %v6928, %v7441
        %v7460 = vadd.f32 %v6929, %v7445
        %v7461 = vadd.f32 %v6930, %v7449
        %v7462 = vadd.f32 %v6931, %v7453
        %s7463 = scalar_lea.vmem [#allocation2], 32
        %v7464 = vld [vmem:[%s7463] sm:$0xff]
        %v7465 = vld [vmem:[%s7463 + $0x10] sm:$0xff]
        %v7466 = vld [vmem:[%s7463 + $0x20] sm:$0xff]
        %v7467 = vld [vmem:[%s7463 + $0x30] sm:$0xff]
        %v7468 = vld [vmem:[%s7463 + $0x40] sm:$0xff]
        %v7469 = vld [vmem:[%s7463 + $0x50] sm:$0xff]
        %v7470 = vld [vmem:[%s7463 + $0x60] sm:$0xff]
        %v7471 = vld [vmem:[%s7463 + $0x70] sm:$0xff]
        %s7472 = scalar_lea.vmem %s2, 480
        %v7473 = vld [vmem:[%s7472] sm:$0xff]
        %v7474 = vld [vmem:[%s7472 + $0x8] sm:$0xff]
        %v7475 = vld [vmem:[%s7472 + $0x10] sm:$0xff]
        %v7476 = vld [vmem:[%s7472 + $0x18] sm:$0xff]
        %v7477 = vld [vmem:[%s7472 + $0x20] sm:$0xff]
        %v7478 = vld [vmem:[%s7472 + $0x28] sm:$0xff]
        %v7479 = vld [vmem:[%s7472 + $0x30] sm:$0xff]
        %v7480 = vld [vmem:[%s7472 + $0x38] sm:$0xff]
        %v7481 = vld [vmem:[%s7472 + $0x40] sm:$0xff]
        %v7482 = vld [vmem:[%s7472 + $0x48] sm:$0xff]
        %v7484 = vsel %vm4230, %v7464, 0
        %v7487 = vsel %vm4230, %v7465, 0
        %v7490 = vsel %vm4230, %v7466, 0
        %v7493 = vsel %vm4230, %v7467, 0
        %v7496 = vsel %vm4230, %v7468, 0
        %v7499 = vsel %vm4230, %v7469, 0
        %v7502 = vsel %vm4230, %v7470, 0
        %v7505 = vsel %vm4230, %v7471, 0
        %7507 = vmatpush.msra.mxu0 0.0
        %7508 = vmatpush.msra.mxu0 0.0
        %7509 = vmatpush.msra.mxu0 0.0
        %7510 = vmatpush.msra.mxu0 0.0
        %7511 = vmatpush.msra.mxu0 0.0
        %7512 = vmatpush.msra.mxu0 0.0
        %v7513 = vand.u32 %v7482, 4294901760
        %7514 = vmatpush.msra.mxu0 %v7513
        %v7515 = vand.u32 %v7481, 4294901760
        %7516 = vmatpush.msra.mxu0 %v7515
        %v7517 = vand.u32 %v7480, 4294901760
        %7518 = vmatpush.msra.mxu0 %v7517
        %v7519 = vand.u32 %v7479, 4294901760
        %7520 = vmatpush.msra.mxu0 %v7519
        %v7521 = vand.u32 %v7478, 4294901760
        %7522 = vmatpush.msra.mxu0 %v7521
        %v7523 = vand.u32 %v7477, 4294901760
        %7524 = vmatpush.msra.mxu0 %v7523
        %v7525 = vand.u32 %v7476, 4294901760
        %7526 = vmatpush.msra.mxu0 %v7525
        %v7527 = vand.u32 %v7475, 4294901760
        %7528 = vmatpush.msra.mxu0 %v7527
        %v7529 = vand.u32 %v7474, 4294901760
        %7530 = vmatpush.msra.mxu0 %v7529
        %v7531 = vand.u32 %v7473, 4294901760
        %7532 = vmatpush.msra.mxu0 %v7531
        %v7533 = vand.u32 %v7484, 4294901760
        %v7534 = vsub.f32 %v7484, %v7533
        %v7535 = vand.u32 %v7534, 4294901760
        %v7536 = vsub.f32 %v7534, %v7535
        %v7537 = vand.u32 %v7536, 4294901760
        %7538 = vmatmul.f32.gmra.mxu0 %v7537
        %v7539 = vpop.f32.mrf.mxu0
        %v7540 = vadd.f32 0.0, %v7539
        %v7541 = vand.u32 %v7487, 4294901760
        %v7542 = vsub.f32 %v7487, %v7541
        %v7543 = vand.u32 %v7542, 4294901760
        %v7544 = vsub.f32 %v7542, %v7543
        %v7545 = vand.u32 %v7544, 4294901760
        %7546 = vmatmul.f32.gmra.mxu0 %v7545
        %v7547 = vpop.f32.mrf.mxu0
        %v7548 = vadd.f32 0.0, %v7547
        %v7549 = vand.u32 %v7490, 4294901760
        %v7550 = vsub.f32 %v7490, %v7549
        %v7551 = vand.u32 %v7550, 4294901760
        %v7552 = vsub.f32 %v7550, %v7551
        %v7553 = vand.u32 %v7552, 4294901760
        %7554 = vmatmul.f32.gmra.mxu0 %v7553
        %v7555 = vpop.f32.mrf.mxu0
        %v7556 = vadd.f32 0.0, %v7555
        %v7557 = vand.u32 %v7493, 4294901760
        %v7558 = vsub.f32 %v7493, %v7557
        %v7559 = vand.u32 %v7558, 4294901760
        %v7560 = vsub.f32 %v7558, %v7559
        %v7561 = vand.u32 %v7560, 4294901760
        %7562 = vmatmul.f32.gmra.mxu0 %v7561
        %v7563 = vpop.f32.mrf.mxu0
        %v7564 = vadd.f32 0.0, %v7563
        %v7565 = vand.u32 %v7496, 4294901760
        %v7566 = vsub.f32 %v7496, %v7565
        %v7567 = vand.u32 %v7566, 4294901760
        %v7568 = vsub.f32 %v7566, %v7567
        %v7569 = vand.u32 %v7568, 4294901760
        %7570 = vmatmul.f32.gmra.mxu0 %v7569
        %v7571 = vpop.f32.mrf.mxu0
        %v7572 = vadd.f32 0.0, %v7571
        %v7573 = vand.u32 %v7499, 4294901760
        %v7574 = vsub.f32 %v7499, %v7573
        %v7575 = vand.u32 %v7574, 4294901760
        %v7576 = vsub.f32 %v7574, %v7575
        %v7577 = vand.u32 %v7576, 4294901760
        %7578 = vmatmul.f32.gmra.mxu0 %v7577
        %v7579 = vpop.f32.mrf.mxu0
        %v7580 = vadd.f32 0.0, %v7579
        %v7581 = vand.u32 %v7502, 4294901760
        %v7582 = vsub.f32 %v7502, %v7581
        %v7583 = vand.u32 %v7582, 4294901760
        %v7584 = vsub.f32 %v7582, %v7583
        %v7585 = vand.u32 %v7584, 4294901760
        %7586 = vmatmul.f32.gmra.mxu0 %v7585
        %v7587 = vpop.f32.mrf.mxu0
        %v7588 = vadd.f32 0.0, %v7587
        %v7589 = vand.u32 %v7505, 4294901760
        %v7590 = vsub.f32 %v7505, %v7589
        %v7591 = vand.u32 %v7590, 4294901760
        %v7592 = vsub.f32 %v7590, %v7591
        %v7593 = vand.u32 %v7592, 4294901760
        %7594 = vmatmul.f32.gmra.mxu0 %v7593
        %v7595 = vpop.f32.mrf.mxu0
        %v7596 = vadd.f32 0.0, %v7595
        %7597 = vdwg.mxu0
        %7598 = vmatpush.msra.mxu0 0.0
        %7599 = vmatpush.msra.mxu0 0.0
        %7600 = vmatpush.msra.mxu0 0.0
        %7601 = vmatpush.msra.mxu0 0.0
        %7602 = vmatpush.msra.mxu0 0.0
        %7603 = vmatpush.msra.mxu0 0.0
        %v7604 = vand.u32 %v7482, 4294901760
        %v7605 = vsub.f32 %v7482, %v7604
        %v7606 = vand.u32 %v7605, 4294901760
        %v7607 = vsub.f32 %v7605, %v7606
        %v7608 = vand.u32 %v7607, 4294901760
        %7609 = vmatpush.msra.mxu0 %v7608
        %v7610 = vand.u32 %v7481, 4294901760
        %v7611 = vsub.f32 %v7481, %v7610
        %v7612 = vand.u32 %v7611, 4294901760
        %v7613 = vsub.f32 %v7611, %v7612
        %v7614 = vand.u32 %v7613, 4294901760
        %7615 = vmatpush.msra.mxu0 %v7614
        %v7616 = vand.u32 %v7480, 4294901760
        %v7617 = vsub.f32 %v7480, %v7616
        %v7618 = vand.u32 %v7617, 4294901760
        %v7619 = vsub.f32 %v7617, %v7618
        %v7620 = vand.u32 %v7619, 4294901760
        %7621 = vmatpush.msra.mxu0 %v7620
        %v7622 = vand.u32 %v7479, 4294901760
        %v7623 = vsub.f32 %v7479, %v7622
        %v7624 = vand.u32 %v7623, 4294901760
        %v7625 = vsub.f32 %v7623, %v7624
        %v7626 = vand.u32 %v7625, 4294901760
        %7627 = vmatpush.msra.mxu0 %v7626
        %v7628 = vand.u32 %v7478, 4294901760
        %v7629 = vsub.f32 %v7478, %v7628
        %v7630 = vand.u32 %v7629, 4294901760
        %v7631 = vsub.f32 %v7629, %v7630
        %v7632 = vand.u32 %v7631, 4294901760
        %7633 = vmatpush.msra.mxu0 %v7632
        %v7634 = vand.u32 %v7477, 4294901760
        %v7635 = vsub.f32 %v7477, %v7634
        %v7636 = vand.u32 %v7635, 4294901760
        %v7637 = vsub.f32 %v7635, %v7636
        %v7638 = vand.u32 %v7637, 4294901760
        %7639 = vmatpush.msra.mxu0 %v7638
        %v7640 = vand.u32 %v7476, 4294901760
        %v7641 = vsub.f32 %v7476, %v7640
        %v7642 = vand.u32 %v7641, 4294901760
        %v7643 = vsub.f32 %v7641, %v7642
        %v7644 = vand.u32 %v7643, 4294901760
        %7645 = vmatpush.msra.mxu0 %v7644
        %v7646 = vand.u32 %v7475, 4294901760
        %v7647 = vsub.f32 %v7475, %v7646
        %v7648 = vand.u32 %v7647, 4294901760
        %v7649 = vsub.f32 %v7647, %v7648
        %v7650 = vand.u32 %v7649, 4294901760
        %7651 = vmatpush.msra.mxu0 %v7650
        %v7652 = vand.u32 %v7474, 4294901760
        %v7653 = vsub.f32 %v7474, %v7652
        %v7654 = vand.u32 %v7653, 4294901760
        %v7655 = vsub.f32 %v7653, %v7654
        %v7656 = vand.u32 %v7655, 4294901760
        %7657 = vmatpush.msra.mxu0 %v7656
        %v7658 = vand.u32 %v7473, 4294901760
        %v7659 = vsub.f32 %v7473, %v7658
        %v7660 = vand.u32 %v7659, 4294901760
        %v7661 = vsub.f32 %v7659, %v7660
        %v7662 = vand.u32 %v7661, 4294901760
        %7663 = vmatpush.msra.mxu0 %v7662
        %v7664 = vand.u32 %v7484, 4294901760
        %7665 = vmatmul.f32.gmra.mxu0 %v7664
        %v7666 = vpop.f32.mrf.mxu0
        %v7667 = vadd.f32 %v7540, %v7666
        %v7668 = vand.u32 %v7487, 4294901760
        %7669 = vmatmul.f32.gmra.mxu0 %v7668
        %v7670 = vpop.f32.mrf.mxu0
        %v7671 = vadd.f32 %v7548, %v7670
        %v7672 = vand.u32 %v7490, 4294901760
        %7673 = vmatmul.f32.gmra.mxu0 %v7672
        %v7674 = vpop.f32.mrf.mxu0
        %v7675 = vadd.f32 %v7556, %v7674
        %v7676 = vand.u32 %v7493, 4294901760
        %7677 = vmatmul.f32.gmra.mxu0 %v7676
        %v7678 = vpop.f32.mrf.mxu0
        %v7679 = vadd.f32 %v7564, %v7678
        %v7680 = vand.u32 %v7496, 4294901760
        %7681 = vmatmul.f32.gmra.mxu0 %v7680
        %v7682 = vpop.f32.mrf.mxu0
        %v7683 = vadd.f32 %v7572, %v7682
        %v7684 = vand.u32 %v7499, 4294901760
        %7685 = vmatmul.f32.gmra.mxu0 %v7684
        %v7686 = vpop.f32.mrf.mxu0
        %v7687 = vadd.f32 %v7580, %v7686
        %v7688 = vand.u32 %v7502, 4294901760
        %7689 = vmatmul.f32.gmra.mxu0 %v7688
        %v7690 = vpop.f32.mrf.mxu0
        %v7691 = vadd.f32 %v7588, %v7690
        %v7692 = vand.u32 %v7505, 4294901760
        %7693 = vmatmul.f32.gmra.mxu0 %v7692
        %v7694 = vpop.f32.mrf.mxu0
        %v7695 = vadd.f32 %v7596, %v7694
        %7696 = vdwg.mxu0
        %7697 = vmatpush.msra.mxu0 0.0
        %7698 = vmatpush.msra.mxu0 0.0
        %7699 = vmatpush.msra.mxu0 0.0
        %7700 = vmatpush.msra.mxu0 0.0
        %7701 = vmatpush.msra.mxu0 0.0
        %7702 = vmatpush.msra.mxu0 0.0
        %v7703 = vand.u32 %v7482, 4294901760
        %v7704 = vsub.f32 %v7482, %v7703
        %7705 = vmatpush.msra.mxu0 %v7704
        %v7706 = vand.u32 %v7481, 4294901760
        %v7707 = vsub.f32 %v7481, %v7706
        %7708 = vmatpush.msra.mxu0 %v7707
        %v7709 = vand.u32 %v7480, 4294901760
        %v7710 = vsub.f32 %v7480, %v7709
        %7711 = vmatpush.msra.mxu0 %v7710
        %v7712 = vand.u32 %v7479, 4294901760
        %v7713 = vsub.f32 %v7479, %v7712
        %7714 = vmatpush.msra.mxu0 %v7713
        %v7715 = vand.u32 %v7478, 4294901760
        %v7716 = vsub.f32 %v7478, %v7715
        %7717 = vmatpush.msra.mxu0 %v7716
        %v7718 = vand.u32 %v7477, 4294901760
        %v7719 = vsub.f32 %v7477, %v7718
        %7720 = vmatpush.msra.mxu0 %v7719
        %v7721 = vand.u32 %v7476, 4294901760
        %v7722 = vsub.f32 %v7476, %v7721
        %7723 = vmatpush.msra.mxu0 %v7722
        %v7724 = vand.u32 %v7475, 4294901760
        %v7725 = vsub.f32 %v7475, %v7724
        %7726 = vmatpush.msra.mxu0 %v7725
        %v7727 = vand.u32 %v7474, 4294901760
        %v7728 = vsub.f32 %v7474, %v7727
        %7729 = vmatpush.msra.mxu0 %v7728
        %v7730 = vand.u32 %v7473, 4294901760
        %v7731 = vsub.f32 %v7473, %v7730
        %7732 = vmatpush.msra.mxu0 %v7731
        %v7733 = vand.u32 %v7484, 4294901760
        %v7734 = vsub.f32 %v7484, %v7733
        %7735 = vmatmul.f32.gmra.mxu0 %v7734
        %v7736 = vpop.f32.mrf.mxu0
        %v7737 = vadd.f32 %v7667, %v7736
        %v7738 = vand.u32 %v7487, 4294901760
        %v7739 = vsub.f32 %v7487, %v7738
        %7740 = vmatmul.f32.gmra.mxu0 %v7739
        %v7741 = vpop.f32.mrf.mxu0
        %v7742 = vadd.f32 %v7671, %v7741
        %v7743 = vand.u32 %v7490, 4294901760
        %v7744 = vsub.f32 %v7490, %v7743
        %7745 = vmatmul.f32.gmra.mxu0 %v7744
        %v7746 = vpop.f32.mrf.mxu0
        %v7747 = vadd.f32 %v7675, %v7746
        %v7748 = vand.u32 %v7493, 4294901760
        %v7749 = vsub.f32 %v7493, %v7748
        %7750 = vmatmul.f32.gmra.mxu0 %v7749
        %v7751 = vpop.f32.mrf.mxu0
        %v7752 = vadd.f32 %v7679, %v7751
        %v7753 = vand.u32 %v7496, 4294901760
        %v7754 = vsub.f32 %v7496, %v7753
        %7755 = vmatmul.f32.gmra.mxu0 %v7754
        %v7756 = vpop.f32.mrf.mxu0
        %v7757 = vadd.f32 %v7683, %v7756
        %v7758 = vand.u32 %v7499, 4294901760
        %v7759 = vsub.f32 %v7499, %v7758
        %7760 = vmatmul.f32.gmra.mxu0 %v7759
        %v7761 = vpop.f32.mrf.mxu0
        %v7762 = vadd.f32 %v7687, %v7761
        %v7763 = vand.u32 %v7502, 4294901760
        %v7764 = vsub.f32 %v7502, %v7763
        %7765 = vmatmul.f32.gmra.mxu0 %v7764
        %v7766 = vpop.f32.mrf.mxu0
        %v7767 = vadd.f32 %v7691, %v7766
        %v7768 = vand.u32 %v7505, 4294901760
        %v7769 = vsub.f32 %v7505, %v7768
        %7770 = vmatmul.f32.gmra.mxu0 %v7769
        %v7771 = vpop.f32.mrf.mxu0
        %v7772 = vadd.f32 %v7695, %v7771
        %7773 = vdwg.mxu0
        %7774 = vmatpush.msra.mxu0 0.0
        %7775 = vmatpush.msra.mxu0 0.0
        %7776 = vmatpush.msra.mxu0 0.0
        %7777 = vmatpush.msra.mxu0 0.0
        %7778 = vmatpush.msra.mxu0 0.0
        %7779 = vmatpush.msra.mxu0 0.0
        %v7780 = vand.u32 %v7482, 4294901760
        %7781 = vmatpush.msra.mxu0 %v7780
        %v7782 = vand.u32 %v7481, 4294901760
        %7783 = vmatpush.msra.mxu0 %v7782
        %v7784 = vand.u32 %v7480, 4294901760
        %7785 = vmatpush.msra.mxu0 %v7784
        %v7786 = vand.u32 %v7479, 4294901760
        %7787 = vmatpush.msra.mxu0 %v7786
        %v7788 = vand.u32 %v7478, 4294901760
        %7789 = vmatpush.msra.mxu0 %v7788
        %v7790 = vand.u32 %v7477, 4294901760
        %7791 = vmatpush.msra.mxu0 %v7790
        %v7792 = vand.u32 %v7476, 4294901760
        %7793 = vmatpush.msra.mxu0 %v7792
        %v7794 = vand.u32 %v7475, 4294901760
        %7795 = vmatpush.msra.mxu0 %v7794
        %v7796 = vand.u32 %v7474, 4294901760
        %7797 = vmatpush.msra.mxu0 %v7796
        %v7798 = vand.u32 %v7473, 4294901760
        %7799 = vmatpush.msra.mxu0 %v7798
        %v7800 = vand.u32 %v7484, 4294901760
        %v7801 = vsub.f32 %v7484, %v7800
        %v7802 = vand.u32 %v7801, 4294901760
        %7803 = vmatmul.f32.gmra.mxu0 %v7802
        %v7804 = vpop.f32.mrf.mxu0
        %v7805 = vadd.f32 %v7737, %v7804
        %v7806 = vand.u32 %v7487, 4294901760
        %v7807 = vsub.f32 %v7487, %v7806
        %v7808 = vand.u32 %v7807, 4294901760
        %7809 = vmatmul.f32.gmra.mxu0 %v7808
        %v7810 = vpop.f32.mrf.mxu0
        %v7811 = vadd.f32 %v7742, %v7810
        %v7812 = vand.u32 %v7490, 4294901760
        %v7813 = vsub.f32 %v7490, %v7812
        %v7814 = vand.u32 %v7813, 4294901760
        %7815 = vmatmul.f32.gmra.mxu0 %v7814
        %v7816 = vpop.f32.mrf.mxu0
        %v7817 = vadd.f32 %v7747, %v7816
        %v7818 = vand.u32 %v7493, 4294901760
        %v7819 = vsub.f32 %v7493, %v7818
        %v7820 = vand.u32 %v7819, 4294901760
        %7821 = vmatmul.f32.gmra.mxu0 %v7820
        %v7822 = vpop.f32.mrf.mxu0
        %v7823 = vadd.f32 %v7752, %v7822
        %v7824 = vand.u32 %v7496, 4294901760
        %v7825 = vsub.f32 %v7496, %v7824
        %v7826 = vand.u32 %v7825, 4294901760
        %7827 = vmatmul.f32.gmra.mxu0 %v7826
        %v7828 = vpop.f32.mrf.mxu0
        %v7829 = vadd.f32 %v7757, %v7828
        %v7830 = vand.u32 %v7499, 4294901760
        %v7831 = vsub.f32 %v7499, %v7830
        %v7832 = vand.u32 %v7831, 4294901760
        %7833 = vmatmul.f32.gmra.mxu0 %v7832
        %v7834 = vpop.f32.mrf.mxu0
        %v7835 = vadd.f32 %v7762, %v7834
        %v7836 = vand.u32 %v7502, 4294901760
        %v7837 = vsub.f32 %v7502, %v7836
        %v7838 = vand.u32 %v7837, 4294901760
        %7839 = vmatmul.f32.gmra.mxu0 %v7838
        %v7840 = vpop.f32.mrf.mxu0
        %v7841 = vadd.f32 %v7767, %v7840
        %v7842 = vand.u32 %v7505, 4294901760
        %v7843 = vsub.f32 %v7505, %v7842
        %v7844 = vand.u32 %v7843, 4294901760
        %7845 = vmatmul.f32.gmra.mxu0 %v7844
        %v7846 = vpop.f32.mrf.mxu0
        %v7847 = vadd.f32 %v7772, %v7846
        %7848 = vdwg.mxu0
        %7849 = vmatpush.msra.mxu0 0.0
        %7850 = vmatpush.msra.mxu0 0.0
        %7851 = vmatpush.msra.mxu0 0.0
        %7852 = vmatpush.msra.mxu0 0.0
        %7853 = vmatpush.msra.mxu0 0.0
        %7854 = vmatpush.msra.mxu0 0.0
        %v7855 = vand.u32 %v7482, 4294901760
        %v7856 = vsub.f32 %v7482, %v7855
        %v7857 = vand.u32 %v7856, 4294901760
        %7858 = vmatpush.msra.mxu0 %v7857
        %v7859 = vand.u32 %v7481, 4294901760
        %v7860 = vsub.f32 %v7481, %v7859
        %v7861 = vand.u32 %v7860, 4294901760
        %7862 = vmatpush.msra.mxu0 %v7861
        %v7863 = vand.u32 %v7480, 4294901760
        %v7864 = vsub.f32 %v7480, %v7863
        %v7865 = vand.u32 %v7864, 4294901760
        %7866 = vmatpush.msra.mxu0 %v7865
        %v7867 = vand.u32 %v7479, 4294901760
        %v7868 = vsub.f32 %v7479, %v7867
        %v7869 = vand.u32 %v7868, 4294901760
        %7870 = vmatpush.msra.mxu0 %v7869
        %v7871 = vand.u32 %v7478, 4294901760
        %v7872 = vsub.f32 %v7478, %v7871
        %v7873 = vand.u32 %v7872, 4294901760
        %7874 = vmatpush.msra.mxu0 %v7873
        %v7875 = vand.u32 %v7477, 4294901760
        %v7876 = vsub.f32 %v7477, %v7875
        %v7877 = vand.u32 %v7876, 4294901760
        %7878 = vmatpush.msra.mxu0 %v7877
        %v7879 = vand.u32 %v7476, 4294901760
        %v7880 = vsub.f32 %v7476, %v7879
        %v7881 = vand.u32 %v7880, 4294901760
        %7882 = vmatpush.msra.mxu0 %v7881
        %v7883 = vand.u32 %v7475, 4294901760
        %v7884 = vsub.f32 %v7475, %v7883
        %v7885 = vand.u32 %v7884, 4294901760
        %7886 = vmatpush.msra.mxu0 %v7885
        %v7887 = vand.u32 %v7474, 4294901760
        %v7888 = vsub.f32 %v7474, %v7887
        %v7889 = vand.u32 %v7888, 4294901760
        %7890 = vmatpush.msra.mxu0 %v7889
        %v7891 = vand.u32 %v7473, 4294901760
        %v7892 = vsub.f32 %v7473, %v7891
        %v7893 = vand.u32 %v7892, 4294901760
        %7894 = vmatpush.msra.mxu0 %v7893
        %v7895 = vand.u32 %v7484, 4294901760
        %7896 = vmatmul.f32.gmra.mxu0 %v7895
        %v7897 = vpop.f32.mrf.mxu0
        %v7898 = vadd.f32 %v7805, %v7897
        %v7899 = vand.u32 %v7487, 4294901760
        %7900 = vmatmul.f32.gmra.mxu0 %v7899
        %v7901 = vpop.f32.mrf.mxu0
        %v7902 = vadd.f32 %v7811, %v7901
        %v7903 = vand.u32 %v7490, 4294901760
        %7904 = vmatmul.f32.gmra.mxu0 %v7903
        %v7905 = vpop.f32.mrf.mxu0
        %v7906 = vadd.f32 %v7817, %v7905
        %v7907 = vand.u32 %v7493, 4294901760
        %7908 = vmatmul.f32.gmra.mxu0 %v7907
        %v7909 = vpop.f32.mrf.mxu0
        %v7910 = vadd.f32 %v7823, %v7909
        %v7911 = vand.u32 %v7496, 4294901760
        %7912 = vmatmul.f32.gmra.mxu0 %v7911
        %v7913 = vpop.f32.mrf.mxu0
        %v7914 = vadd.f32 %v7829, %v7913
        %v7915 = vand.u32 %v7499, 4294901760
        %7916 = vmatmul.f32.gmra.mxu0 %v7915
        %v7917 = vpop.f32.mrf.mxu0
        %v7918 = vadd.f32 %v7835, %v7917
        %v7919 = vand.u32 %v7502, 4294901760
        %7920 = vmatmul.f32.gmra.mxu0 %v7919
        %v7921 = vpop.f32.mrf.mxu0
        %v7922 = vadd.f32 %v7841, %v7921
        %v7923 = vand.u32 %v7505, 4294901760
        %7924 = vmatmul.f32.gmra.mxu0 %v7923
        %v7925 = vpop.f32.mrf.mxu0
        %v7926 = vadd.f32 %v7847, %v7925
        %7927 = vdwg.mxu0
        %7928 = vmatpush.msra.mxu0 0.0
        %7929 = vmatpush.msra.mxu0 0.0
        %7930 = vmatpush.msra.mxu0 0.0
        %7931 = vmatpush.msra.mxu0 0.0
        %7932 = vmatpush.msra.mxu0 0.0
        %7933 = vmatpush.msra.mxu0 0.0
        %v7934 = vand.u32 %v7482, 4294901760
        %7935 = vmatpush.msra.mxu0 %v7934
        %v7936 = vand.u32 %v7481, 4294901760
        %7937 = vmatpush.msra.mxu0 %v7936
        %v7938 = vand.u32 %v7480, 4294901760
        %7939 = vmatpush.msra.mxu0 %v7938
        %v7940 = vand.u32 %v7479, 4294901760
        %7941 = vmatpush.msra.mxu0 %v7940
        %v7942 = vand.u32 %v7478, 4294901760
        %7943 = vmatpush.msra.mxu0 %v7942
        %v7944 = vand.u32 %v7477, 4294901760
        %7945 = vmatpush.msra.mxu0 %v7944
        %v7946 = vand.u32 %v7476, 4294901760
        %7947 = vmatpush.msra.mxu0 %v7946
        %v7948 = vand.u32 %v7475, 4294901760
        %7949 = vmatpush.msra.mxu0 %v7948
        %v7950 = vand.u32 %v7474, 4294901760
        %7951 = vmatpush.msra.mxu0 %v7950
        %v7952 = vand.u32 %v7473, 4294901760
        %7953 = vmatpush.msra.mxu0 %v7952
        %v7954 = vand.u32 %v7484, 4294901760
        %7955 = vmatmul.f32.gmra.mxu0 %v7954
        %v7956 = vpop.f32.mrf.mxu0
        %v7957 = vadd.f32 %v7898, %v7956
        %v7958 = vand.u32 %v7487, 4294901760
        %7959 = vmatmul.f32.gmra.mxu0 %v7958
        %v7960 = vpop.f32.mrf.mxu0
        %v7961 = vadd.f32 %v7902, %v7960
        %v7962 = vand.u32 %v7490, 4294901760
        %7963 = vmatmul.f32.gmra.mxu0 %v7962
        %v7964 = vpop.f32.mrf.mxu0
        %v7965 = vadd.f32 %v7906, %v7964
        %v7966 = vand.u32 %v7493, 4294901760
        %7967 = vmatmul.f32.gmra.mxu0 %v7966
        %v7968 = vpop.f32.mrf.mxu0
        %v7969 = vadd.f32 %v7910, %v7968
        %v7970 = vand.u32 %v7496, 4294901760
        %7971 = vmatmul.f32.gmra.mxu0 %v7970
        %v7972 = vpop.f32.mrf.mxu0
        %v7973 = vadd.f32 %v7914, %v7972
        %v7974 = vand.u32 %v7499, 4294901760
        %7975 = vmatmul.f32.gmra.mxu0 %v7974
        %v7976 = vpop.f32.mrf.mxu0
        %v7977 = vadd.f32 %v7918, %v7976
        %v7978 = vand.u32 %v7502, 4294901760
        %7979 = vmatmul.f32.gmra.mxu0 %v7978
        %v7980 = vpop.f32.mrf.mxu0
        %v7981 = vadd.f32 %v7922, %v7980
        %v7982 = vand.u32 %v7505, 4294901760
        %7983 = vmatmul.f32.gmra.mxu0 %v7982
        %v7984 = vpop.f32.mrf.mxu0
        %v7985 = vadd.f32 %v7926, %v7984
        %7986 = vdwg.mxu0
        %v7987 = vadd.f32 %v7455, %v7957
        %v7988 = vadd.f32 %v7456, %v7961
        %v7989 = vadd.f32 %v7457, %v7965
        %v7990 = vadd.f32 %v7458, %v7969
        %v7991 = vadd.f32 %v7459, %v7973
        %v7992 = vadd.f32 %v7460, %v7977
        %v7993 = vadd.f32 %v7461, %v7981
        %v7994 = vadd.f32 %v7462, %v7985
        %v7995 = vld [vmem:[%s7463 + $0x1] sm:$0xff]
        %v7996 = vld [vmem:[%s7463 + $0x11] sm:$0xff]
        %v7997 = vld [vmem:[%s7463 + $0x21] sm:$0xff]
        %v7998 = vld [vmem:[%s7463 + $0x31] sm:$0xff]
        %v7999 = vld [vmem:[%s7463 + $0x41] sm:$0xff]
        %v8000 = vld [vmem:[%s7463 + $0x51] sm:$0xff]
        %v8001 = vld [vmem:[%s7463 + $0x61] sm:$0xff]
        %v8002 = vld [vmem:[%s7463 + $0x71] sm:$0xff]
        %s8003 = scalar_lea.vmem %s2, 560
        %v8004 = vld [vmem:[%s8003] sm:$0xff]
        %v8005 = vld [vmem:[%s8003 + $0x8] sm:$0xff]
        %v8006 = vld [vmem:[%s8003 + $0x10] sm:$0xff]
        %v8007 = vld [vmem:[%s8003 + $0x18] sm:$0xff]
        %v8008 = vld [vmem:[%s8003 + $0x20] sm:$0xff]
        %v8009 = vld [vmem:[%s8003 + $0x28] sm:$0xff]
        %v8010 = vld [vmem:[%s8003 + $0x30] sm:$0xff]
        %v8011 = vld [vmem:[%s8003 + $0x38] sm:$0xff]
        %v8012 = vld [vmem:[%s8003 + $0x40] sm:$0xff]
        %v8013 = vld [vmem:[%s8003 + $0x48] sm:$0xff]
        %v8015 = vsel %vm4230, %v7995, 0
        %v8018 = vsel %vm4230, %v7996, 0
        %v8021 = vsel %vm4230, %v7997, 0
        %v8024 = vsel %vm4230, %v7998, 0
        %v8027 = vsel %vm4230, %v7999, 0
        %v8030 = vsel %vm4230, %v8000, 0
        %v8033 = vsel %vm4230, %v8001, 0
        %v8036 = vsel %vm4230, %v8002, 0
        %8038 = vmatpush.msra.mxu0 0.0
        %8039 = vmatpush.msra.mxu0 0.0
        %8040 = vmatpush.msra.mxu0 0.0
        %8041 = vmatpush.msra.mxu0 0.0
        %8042 = vmatpush.msra.mxu0 0.0
        %8043 = vmatpush.msra.mxu0 0.0
        %v8044 = vand.u32 %v8013, 4294901760
        %8045 = vmatpush.msra.mxu0 %v8044
        %v8046 = vand.u32 %v8012, 4294901760
        %8047 = vmatpush.msra.mxu0 %v8046
        %v8048 = vand.u32 %v8011, 4294901760
        %8049 = vmatpush.msra.mxu0 %v8048
        %v8050 = vand.u32 %v8010, 4294901760
        %8051 = vmatpush.msra.mxu0 %v8050
        %v8052 = vand.u32 %v8009, 4294901760
        %8053 = vmatpush.msra.mxu0 %v8052
        %v8054 = vand.u32 %v8008, 4294901760
        %8055 = vmatpush.msra.mxu0 %v8054
        %v8056 = vand.u32 %v8007, 4294901760
        %8057 = vmatpush.msra.mxu0 %v8056
        %v8058 = vand.u32 %v8006, 4294901760
        %8059 = vmatpush.msra.mxu0 %v8058
        %v8060 = vand.u32 %v8005, 4294901760
        %8061 = vmatpush.msra.mxu0 %v8060
        %v8062 = vand.u32 %v8004, 4294901760
        %8063 = vmatpush.msra.mxu0 %v8062
        %v8064 = vand.u32 %v8015, 4294901760
        %v8065 = vsub.f32 %v8015, %v8064
        %v8066 = vand.u32 %v8065, 4294901760
        %v8067 = vsub.f32 %v8065, %v8066
        %v8068 = vand.u32 %v8067, 4294901760
        %8069 = vmatmul.f32.gmra.mxu0 %v8068
        %v8070 = vpop.f32.mrf.mxu0
        %v8071 = vadd.f32 0.0, %v8070
        %v8072 = vand.u32 %v8018, 4294901760
        %v8073 = vsub.f32 %v8018, %v8072
        %v8074 = vand.u32 %v8073, 4294901760
        %v8075 = vsub.f32 %v8073, %v8074
        %v8076 = vand.u32 %v8075, 4294901760
        %8077 = vmatmul.f32.gmra.mxu0 %v8076
        %v8078 = vpop.f32.mrf.mxu0
        %v8079 = vadd.f32 0.0, %v8078
        %v8080 = vand.u32 %v8021, 4294901760
        %v8081 = vsub.f32 %v8021, %v8080
        %v8082 = vand.u32 %v8081, 4294901760
        %v8083 = vsub.f32 %v8081, %v8082
        %v8084 = vand.u32 %v8083, 4294901760
        %8085 = vmatmul.f32.gmra.mxu0 %v8084
        %v8086 = vpop.f32.mrf.mxu0
        %v8087 = vadd.f32 0.0, %v8086
        %v8088 = vand.u32 %v8024, 4294901760
        %v8089 = vsub.f32 %v8024, %v8088
        %v8090 = vand.u32 %v8089, 4294901760
        %v8091 = vsub.f32 %v8089, %v8090
        %v8092 = vand.u32 %v8091, 4294901760
        %8093 = vmatmul.f32.gmra.mxu0 %v8092
        %v8094 = vpop.f32.mrf.mxu0
        %v8095 = vadd.f32 0.0, %v8094
        %v8096 = vand.u32 %v8027, 4294901760
        %v8097 = vsub.f32 %v8027, %v8096
        %v8098 = vand.u32 %v8097, 4294901760
        %v8099 = vsub.f32 %v8097, %v8098
        %v8100 = vand.u32 %v8099, 4294901760
        %8101 = vmatmul.f32.gmra.mxu0 %v8100
        %v8102 = vpop.f32.mrf.mxu0
        %v8103 = vadd.f32 0.0, %v8102
        %v8104 = vand.u32 %v8030, 4294901760
        %v8105 = vsub.f32 %v8030, %v8104
        %v8106 = vand.u32 %v8105, 4294901760
        %v8107 = vsub.f32 %v8105, %v8106
        %v8108 = vand.u32 %v8107, 4294901760
        %8109 = vmatmul.f32.gmra.mxu0 %v8108
        %v8110 = vpop.f32.mrf.mxu0
        %v8111 = vadd.f32 0.0, %v8110
        %v8112 = vand.u32 %v8033, 4294901760
        %v8113 = vsub.f32 %v8033, %v8112
        %v8114 = vand.u32 %v8113, 4294901760
        %v8115 = vsub.f32 %v8113, %v8114
        %v8116 = vand.u32 %v8115, 4294901760
        %8117 = vmatmul.f32.gmra.mxu0 %v8116
        %v8118 = vpop.f32.mrf.mxu0
        %v8119 = vadd.f32 0.0, %v8118
        %v8120 = vand.u32 %v8036, 4294901760
        %v8121 = vsub.f32 %v8036, %v8120
        %v8122 = vand.u32 %v8121, 4294901760
        %v8123 = vsub.f32 %v8121, %v8122
        %v8124 = vand.u32 %v8123, 4294901760
        %8125 = vmatmul.f32.gmra.mxu0 %v8124
        %v8126 = vpop.f32.mrf.mxu0
        %v8127 = vadd.f32 0.0, %v8126
        %8128 = vdwg.mxu0
        %8129 = vmatpush.msra.mxu0 0.0
        %8130 = vmatpush.msra.mxu0 0.0
        %8131 = vmatpush.msra.mxu0 0.0
        %8132 = vmatpush.msra.mxu0 0.0
        %8133 = vmatpush.msra.mxu0 0.0
        %8134 = vmatpush.msra.mxu0 0.0
        %v8135 = vand.u32 %v8013, 4294901760
        %v8136 = vsub.f32 %v8013, %v8135
        %v8137 = vand.u32 %v8136, 4294901760
        %v8138 = vsub.f32 %v8136, %v8137
        %v8139 = vand.u32 %v8138, 4294901760
        %8140 = vmatpush.msra.mxu0 %v8139
        %v8141 = vand.u32 %v8012, 4294901760
        %v8142 = vsub.f32 %v8012, %v8141
        %v8143 = vand.u32 %v8142, 4294901760
        %v8144 = vsub.f32 %v8142, %v8143
        %v8145 = vand.u32 %v8144, 4294901760
        %8146 = vmatpush.msra.mxu0 %v8145
        %v8147 = vand.u32 %v8011, 4294901760
        %v8148 = vsub.f32 %v8011, %v8147
        %v8149 = vand.u32 %v8148, 4294901760
        %v8150 = vsub.f32 %v8148, %v8149
        %v8151 = vand.u32 %v8150, 4294901760
        %8152 = vmatpush.msra.mxu0 %v8151
        %v8153 = vand.u32 %v8010, 4294901760
        %v8154 = vsub.f32 %v8010, %v8153
        %v8155 = vand.u32 %v8154, 4294901760
        %v8156 = vsub.f32 %v8154, %v8155
        %v8157 = vand.u32 %v8156, 4294901760
        %8158 = vmatpush.msra.mxu0 %v8157
        %v8159 = vand.u32 %v8009, 4294901760
        %v8160 = vsub.f32 %v8009, %v8159
        %v8161 = vand.u32 %v8160, 4294901760
        %v8162 = vsub.f32 %v8160, %v8161
        %v8163 = vand.u32 %v8162, 4294901760
        %8164 = vmatpush.msra.mxu0 %v8163
        %v8165 = vand.u32 %v8008, 4294901760
        %v8166 = vsub.f32 %v8008, %v8165
        %v8167 = vand.u32 %v8166, 4294901760
        %v8168 = vsub.f32 %v8166, %v8167
        %v8169 = vand.u32 %v8168, 4294901760
        %8170 = vmatpush.msra.mxu0 %v8169
        %v8171 = vand.u32 %v8007, 4294901760
        %v8172 = vsub.f32 %v8007, %v8171
        %v8173 = vand.u32 %v8172, 4294901760
        %v8174 = vsub.f32 %v8172, %v8173
        %v8175 = vand.u32 %v8174, 4294901760
        %8176 = vmatpush.msra.mxu0 %v8175
        %v8177 = vand.u32 %v8006, 4294901760
        %v8178 = vsub.f32 %v8006, %v8177
        %v8179 = vand.u32 %v8178, 4294901760
        %v8180 = vsub.f32 %v8178, %v8179
        %v8181 = vand.u32 %v8180, 4294901760
        %8182 = vmatpush.msra.mxu0 %v8181
        %v8183 = vand.u32 %v8005, 4294901760
        %v8184 = vsub.f32 %v8005, %v8183
        %v8185 = vand.u32 %v8184, 4294901760
        %v8186 = vsub.f32 %v8184, %v8185
        %v8187 = vand.u32 %v8186, 4294901760
        %8188 = vmatpush.msra.mxu0 %v8187
        %v8189 = vand.u32 %v8004, 4294901760
        %v8190 = vsub.f32 %v8004, %v8189
        %v8191 = vand.u32 %v8190, 4294901760
        %v8192 = vsub.f32 %v8190, %v8191
        %v8193 = vand.u32 %v8192, 4294901760
        %8194 = vmatpush.msra.mxu0 %v8193
        %v8195 = vand.u32 %v8015, 4294901760
        %8196 = vmatmul.f32.gmra.mxu0 %v8195
        %v8197 = vpop.f32.mrf.mxu0
        %v8198 = vadd.f32 %v8071, %v8197
        %v8199 = vand.u32 %v8018, 4294901760
        %8200 = vmatmul.f32.gmra.mxu0 %v8199
        %v8201 = vpop.f32.mrf.mxu0
        %v8202 = vadd.f32 %v8079, %v8201
        %v8203 = vand.u32 %v8021, 4294901760
        %8204 = vmatmul.f32.gmra.mxu0 %v8203
        %v8205 = vpop.f32.mrf.mxu0
        %v8206 = vadd.f32 %v8087, %v8205
        %v8207 = vand.u32 %v8024, 4294901760
        %8208 = vmatmul.f32.gmra.mxu0 %v8207
        %v8209 = vpop.f32.mrf.mxu0
        %v8210 = vadd.f32 %v8095, %v8209
        %v8211 = vand.u32 %v8027, 4294901760
        %8212 = vmatmul.f32.gmra.mxu0 %v8211
        %v8213 = vpop.f32.mrf.mxu0
        %v8214 = vadd.f32 %v8103, %v8213
        %v8215 = vand.u32 %v8030, 4294901760
        %8216 = vmatmul.f32.gmra.mxu0 %v8215
        %v8217 = vpop.f32.mrf.mxu0
        %v8218 = vadd.f32 %v8111, %v8217
        %v8219 = vand.u32 %v8033, 4294901760
        %8220 = vmatmul.f32.gmra.mxu0 %v8219
        %v8221 = vpop.f32.mrf.mxu0
        %v8222 = vadd.f32 %v8119, %v8221
        %v8223 = vand.u32 %v8036, 4294901760
        %8224 = vmatmul.f32.gmra.mxu0 %v8223
        %v8225 = vpop.f32.mrf.mxu0
        %v8226 = vadd.f32 %v8127, %v8225
        %8227 = vdwg.mxu0
        %8228 = vmatpush.msra.mxu0 0.0
        %8229 = vmatpush.msra.mxu0 0.0
        %8230 = vmatpush.msra.mxu0 0.0
        %8231 = vmatpush.msra.mxu0 0.0
        %8232 = vmatpush.msra.mxu0 0.0
        %8233 = vmatpush.msra.mxu0 0.0
        %v8234 = vand.u32 %v8013, 4294901760
        %v8235 = vsub.f32 %v8013, %v8234
        %8236 = vmatpush.msra.mxu0 %v8235
        %v8237 = vand.u32 %v8012, 4294901760
        %v8238 = vsub.f32 %v8012, %v8237
        %8239 = vmatpush.msra.mxu0 %v8238
        %v8240 = vand.u32 %v8011, 4294901760
        %v8241 = vsub.f32 %v8011, %v8240
        %8242 = vmatpush.msra.mxu0 %v8241
        %v8243 = vand.u32 %v8010, 4294901760
        %v8244 = vsub.f32 %v8010, %v8243
        %8245 = vmatpush.msra.mxu0 %v8244
        %v8246 = vand.u32 %v8009, 4294901760
        %v8247 = vsub.f32 %v8009, %v8246
        %8248 = vmatpush.msra.mxu0 %v8247
        %v8249 = vand.u32 %v8008, 4294901760
        %v8250 = vsub.f32 %v8008, %v8249
        %8251 = vmatpush.msra.mxu0 %v8250
        %v8252 = vand.u32 %v8007, 4294901760
        %v8253 = vsub.f32 %v8007, %v8252
        %8254 = vmatpush.msra.mxu0 %v8253
        %v8255 = vand.u32 %v8006, 4294901760
        %v8256 = vsub.f32 %v8006, %v8255
        %8257 = vmatpush.msra.mxu0 %v8256
        %v8258 = vand.u32 %v8005, 4294901760
        %v8259 = vsub.f32 %v8005, %v8258
        %8260 = vmatpush.msra.mxu0 %v8259
        %v8261 = vand.u32 %v8004, 4294901760
        %v8262 = vsub.f32 %v8004, %v8261
        %8263 = vmatpush.msra.mxu0 %v8262
        %v8264 = vand.u32 %v8015, 4294901760
        %v8265 = vsub.f32 %v8015, %v8264
        %8266 = vmatmul.f32.gmra.mxu0 %v8265
        %v8267 = vpop.f32.mrf.mxu0
        %v8268 = vadd.f32 %v8198, %v8267
        %v8269 = vand.u32 %v8018, 4294901760
        %v8270 = vsub.f32 %v8018, %v8269
        %8271 = vmatmul.f32.gmra.mxu0 %v8270
        %v8272 = vpop.f32.mrf.mxu0
        %v8273 = vadd.f32 %v8202, %v8272
        %v8274 = vand.u32 %v8021, 4294901760
        %v8275 = vsub.f32 %v8021, %v8274
        %8276 = vmatmul.f32.gmra.mxu0 %v8275
        %v8277 = vpop.f32.mrf.mxu0
        %v8278 = vadd.f32 %v8206, %v8277
        %v8279 = vand.u32 %v8024, 4294901760
        %v8280 = vsub.f32 %v8024, %v8279
        %8281 = vmatmul.f32.gmra.mxu0 %v8280
        %v8282 = vpop.f32.mrf.mxu0
        %v8283 = vadd.f32 %v8210, %v8282
        %v8284 = vand.u32 %v8027, 4294901760
        %v8285 = vsub.f32 %v8027, %v8284
        %8286 = vmatmul.f32.gmra.mxu0 %v8285
        %v8287 = vpop.f32.mrf.mxu0
        %v8288 = vadd.f32 %v8214, %v8287
        %v8289 = vand.u32 %v8030, 4294901760
        %v8290 = vsub.f32 %v8030, %v8289
        %8291 = vmatmul.f32.gmra.mxu0 %v8290
        %v8292 = vpop.f32.mrf.mxu0
        %v8293 = vadd.f32 %v8218, %v8292
        %v8294 = vand.u32 %v8033, 4294901760
        %v8295 = vsub.f32 %v8033, %v8294
        %8296 = vmatmul.f32.gmra.mxu0 %v8295
        %v8297 = vpop.f32.mrf.mxu0
        %v8298 = vadd.f32 %v8222, %v8297
        %v8299 = vand.u32 %v8036, 4294901760
        %v8300 = vsub.f32 %v8036, %v8299
        %8301 = vmatmul.f32.gmra.mxu0 %v8300
        %v8302 = vpop.f32.mrf.mxu0
        %v8303 = vadd.f32 %v8226, %v8302
        %8304 = vdwg.mxu0
        %8305 = vmatpush.msra.mxu0 0.0
        %8306 = vmatpush.msra.mxu0 0.0
        %8307 = vmatpush.msra.mxu0 0.0
        %8308 = vmatpush.msra.mxu0 0.0
        %8309 = vmatpush.msra.mxu0 0.0
        %8310 = vmatpush.msra.mxu0 0.0
        %v8311 = vand.u32 %v8013, 4294901760
        %8312 = vmatpush.msra.mxu0 %v8311
        %v8313 = vand.u32 %v8012, 4294901760
        %8314 = vmatpush.msra.mxu0 %v8313
        %v8315 = vand.u32 %v8011, 4294901760
        %8316 = vmatpush.msra.mxu0 %v8315
        %v8317 = vand.u32 %v8010, 4294901760
        %8318 = vmatpush.msra.mxu0 %v8317
        %v8319 = vand.u32 %v8009, 4294901760
        %8320 = vmatpush.msra.mxu0 %v8319
        %v8321 = vand.u32 %v8008, 4294901760
        %8322 = vmatpush.msra.mxu0 %v8321
        %v8323 = vand.u32 %v8007, 4294901760
        %8324 = vmatpush.msra.mxu0 %v8323
        %v8325 = vand.u32 %v8006, 4294901760
        %8326 = vmatpush.msra.mxu0 %v8325
        %v8327 = vand.u32 %v8005, 4294901760
        %8328 = vmatpush.msra.mxu0 %v8327
        %v8329 = vand.u32 %v8004, 4294901760
        %8330 = vmatpush.msra.mxu0 %v8329
        %v8331 = vand.u32 %v8015, 4294901760
        %v8332 = vsub.f32 %v8015, %v8331
        %v8333 = vand.u32 %v8332, 4294901760
        %8334 = vmatmul.f32.gmra.mxu0 %v8333
        %v8335 = vpop.f32.mrf.mxu0
        %v8336 = vadd.f32 %v8268, %v8335
        %v8337 = vand.u32 %v8018, 4294901760
        %v8338 = vsub.f32 %v8018, %v8337
        %v8339 = vand.u32 %v8338, 4294901760
        %8340 = vmatmul.f32.gmra.mxu0 %v8339
        %v8341 = vpop.f32.mrf.mxu0
        %v8342 = vadd.f32 %v8273, %v8341
        %v8343 = vand.u32 %v8021, 4294901760
        %v8344 = vsub.f32 %v8021, %v8343
        %v8345 = vand.u32 %v8344, 4294901760
        %8346 = vmatmul.f32.gmra.mxu0 %v8345
        %v8347 = vpop.f32.mrf.mxu0
        %v8348 = vadd.f32 %v8278, %v8347
        %v8349 = vand.u32 %v8024, 4294901760
        %v8350 = vsub.f32 %v8024, %v8349
        %v8351 = vand.u32 %v8350, 4294901760
        %8352 = vmatmul.f32.gmra.mxu0 %v8351
        %v8353 = vpop.f32.mrf.mxu0
        %v8354 = vadd.f32 %v8283, %v8353
        %v8355 = vand.u32 %v8027, 4294901760
        %v8356 = vsub.f32 %v8027, %v8355
        %v8357 = vand.u32 %v8356, 4294901760
        %8358 = vmatmul.f32.gmra.mxu0 %v8357
        %v8359 = vpop.f32.mrf.mxu0
        %v8360 = vadd.f32 %v8288, %v8359
        %v8361 = vand.u32 %v8030, 4294901760
        %v8362 = vsub.f32 %v8030, %v8361
        %v8363 = vand.u32 %v8362, 4294901760
        %8364 = vmatmul.f32.gmra.mxu0 %v8363
        %v8365 = vpop.f32.mrf.mxu0
        %v8366 = vadd.f32 %v8293, %v8365
        %v8367 = vand.u32 %v8033, 4294901760
        %v8368 = vsub.f32 %v8033, %v8367
        %v8369 = vand.u32 %v8368, 4294901760
        %8370 = vmatmul.f32.gmra.mxu0 %v8369
        %v8371 = vpop.f32.mrf.mxu0
        %v8372 = vadd.f32 %v8298, %v8371
        %v8373 = vand.u32 %v8036, 4294901760
        %v8374 = vsub.f32 %v8036, %v8373
        %v8375 = vand.u32 %v8374, 4294901760
        %8376 = vmatmul.f32.gmra.mxu0 %v8375
        %v8377 = vpop.f32.mrf.mxu0
        %v8378 = vadd.f32 %v8303, %v8377
        %8379 = vdwg.mxu0
        %8380 = vmatpush.msra.mxu0 0.0
        %8381 = vmatpush.msra.mxu0 0.0
        %8382 = vmatpush.msra.mxu0 0.0
        %8383 = vmatpush.msra.mxu0 0.0
        %8384 = vmatpush.msra.mxu0 0.0
        %8385 = vmatpush.msra.mxu0 0.0
        %v8386 = vand.u32 %v8013, 4294901760
        %v8387 = vsub.f32 %v8013, %v8386
        %v8388 = vand.u32 %v8387, 4294901760
        %8389 = vmatpush.msra.mxu0 %v8388
        %v8390 = vand.u32 %v8012, 4294901760
        %v8391 = vsub.f32 %v8012, %v8390
        %v8392 = vand.u32 %v8391, 4294901760
        %8393 = vmatpush.msra.mxu0 %v8392
        %v8394 = vand.u32 %v8011, 4294901760
        %v8395 = vsub.f32 %v8011, %v8394
        %v8396 = vand.u32 %v8395, 4294901760
        %8397 = vmatpush.msra.mxu0 %v8396
        %v8398 = vand.u32 %v8010, 4294901760
        %v8399 = vsub.f32 %v8010, %v8398
        %v8400 = vand.u32 %v8399, 4294901760
        %8401 = vmatpush.msra.mxu0 %v8400
        %v8402 = vand.u32 %v8009, 4294901760
        %v8403 = vsub.f32 %v8009, %v8402
        %v8404 = vand.u32 %v8403, 4294901760
        %8405 = vmatpush.msra.mxu0 %v8404
        %v8406 = vand.u32 %v8008, 4294901760
        %v8407 = vsub.f32 %v8008, %v8406
        %v8408 = vand.u32 %v8407, 4294901760
        %8409 = vmatpush.msra.mxu0 %v8408
        %v8410 = vand.u32 %v8007, 4294901760
        %v8411 = vsub.f32 %v8007, %v8410
        %v8412 = vand.u32 %v8411, 4294901760
        %8413 = vmatpush.msra.mxu0 %v8412
        %v8414 = vand.u32 %v8006, 4294901760
        %v8415 = vsub.f32 %v8006, %v8414
        %v8416 = vand.u32 %v8415, 4294901760
        %8417 = vmatpush.msra.mxu0 %v8416
        %v8418 = vand.u32 %v8005, 4294901760
        %v8419 = vsub.f32 %v8005, %v8418
        %v8420 = vand.u32 %v8419, 4294901760
        %8421 = vmatpush.msra.mxu0 %v8420
        %v8422 = vand.u32 %v8004, 4294901760
        %v8423 = vsub.f32 %v8004, %v8422
        %v8424 = vand.u32 %v8423, 4294901760
        %8425 = vmatpush.msra.mxu0 %v8424
        %v8426 = vand.u32 %v8015, 4294901760
        %8427 = vmatmul.f32.gmra.mxu0 %v8426
        %v8428 = vpop.f32.mrf.mxu0
        %v8429 = vadd.f32 %v8336, %v8428
        %v8430 = vand.u32 %v8018, 4294901760
        %8431 = vmatmul.f32.gmra.mxu0 %v8430
        %v8432 = vpop.f32.mrf.mxu0
        %v8433 = vadd.f32 %v8342, %v8432
        %v8434 = vand.u32 %v8021, 4294901760
        %8435 = vmatmul.f32.gmra.mxu0 %v8434
        %v8436 = vpop.f32.mrf.mxu0
        %v8437 = vadd.f32 %v8348, %v8436
        %v8438 = vand.u32 %v8024, 4294901760
        %8439 = vmatmul.f32.gmra.mxu0 %v8438
        %v8440 = vpop.f32.mrf.mxu0
        %v8441 = vadd.f32 %v8354, %v8440
        %v8442 = vand.u32 %v8027, 4294901760
        %8443 = vmatmul.f32.gmra.mxu0 %v8442
        %v8444 = vpop.f32.mrf.mxu0
        %v8445 = vadd.f32 %v8360, %v8444
        %v8446 = vand.u32 %v8030, 4294901760
        %8447 = vmatmul.f32.gmra.mxu0 %v8446
        %v8448 = vpop.f32.mrf.mxu0
        %v8449 = vadd.f32 %v8366, %v8448
        %v8450 = vand.u32 %v8033, 4294901760
        %8451 = vmatmul.f32.gmra.mxu0 %v8450
        %v8452 = vpop.f32.mrf.mxu0
        %v8453 = vadd.f32 %v8372, %v8452
        %v8454 = vand.u32 %v8036, 4294901760
        %8455 = vmatmul.f32.gmra.mxu0 %v8454
        %v8456 = vpop.f32.mrf.mxu0
        %v8457 = vadd.f32 %v8378, %v8456
        %8458 = vdwg.mxu0
        %8459 = vmatpush.msra.mxu0 0.0
        %8460 = vmatpush.msra.mxu0 0.0
        %8461 = vmatpush.msra.mxu0 0.0
        %8462 = vmatpush.msra.mxu0 0.0
        %8463 = vmatpush.msra.mxu0 0.0
        %8464 = vmatpush.msra.mxu0 0.0
        %v8465 = vand.u32 %v8013, 4294901760
        %8466 = vmatpush.msra.mxu0 %v8465
        %v8467 = vand.u32 %v8012, 4294901760
        %8468 = vmatpush.msra.mxu0 %v8467
        %v8469 = vand.u32 %v8011, 4294901760
        %8470 = vmatpush.msra.mxu0 %v8469
        %v8471 = vand.u32 %v8010, 4294901760
        %8472 = vmatpush.msra.mxu0 %v8471
        %v8473 = vand.u32 %v8009, 4294901760
        %8474 = vmatpush.msra.mxu0 %v8473
        %v8475 = vand.u32 %v8008, 4294901760
        %8476 = vmatpush.msra.mxu0 %v8475
        %v8477 = vand.u32 %v8007, 4294901760
        %8478 = vmatpush.msra.mxu0 %v8477
        %v8479 = vand.u32 %v8006, 4294901760
        %8480 = vmatpush.msra.mxu0 %v8479
        %v8481 = vand.u32 %v8005, 4294901760
        %8482 = vmatpush.msra.mxu0 %v8481
        %v8483 = vand.u32 %v8004, 4294901760
        %8484 = vmatpush.msra.mxu0 %v8483
        %v8485 = vand.u32 %v8015, 4294901760
        %8486 = vmatmul.f32.gmra.mxu0 %v8485
        %v8487 = vpop.f32.mrf.mxu0
        %v8488 = vadd.f32 %v8429, %v8487
        %v8489 = vand.u32 %v8018, 4294901760
        %8490 = vmatmul.f32.gmra.mxu0 %v8489
        %v8491 = vpop.f32.mrf.mxu0
        %v8492 = vadd.f32 %v8433, %v8491
        %v8493 = vand.u32 %v8021, 4294901760
        %8494 = vmatmul.f32.gmra.mxu0 %v8493
        %v8495 = vpop.f32.mrf.mxu0
        %v8496 = vadd.f32 %v8437, %v8495
        %v8497 = vand.u32 %v8024, 4294901760
        %8498 = vmatmul.f32.gmra.mxu0 %v8497
        %v8499 = vpop.f32.mrf.mxu0
        %v8500 = vadd.f32 %v8441, %v8499
        %v8501 = vand.u32 %v8027, 4294901760
        %8502 = vmatmul.f32.gmra.mxu0 %v8501
        %v8503 = vpop.f32.mrf.mxu0
        %v8504 = vadd.f32 %v8445, %v8503
        %v8505 = vand.u32 %v8030, 4294901760
        %8506 = vmatmul.f32.gmra.mxu0 %v8505
        %v8507 = vpop.f32.mrf.mxu0
        %v8508 = vadd.f32 %v8449, %v8507
        %v8509 = vand.u32 %v8033, 4294901760
        %8510 = vmatmul.f32.gmra.mxu0 %v8509
        %v8511 = vpop.f32.mrf.mxu0
        %v8512 = vadd.f32 %v8453, %v8511
        %v8513 = vand.u32 %v8036, 4294901760
        %8514 = vmatmul.f32.gmra.mxu0 %v8513
        %v8515 = vpop.f32.mrf.mxu0
        %v8516 = vadd.f32 %v8457, %v8515
        %8517 = vdwg.mxu0
        %v8518 = vadd.f32 %v7987, %v8488
        %v8519 = vadd.f32 %v7988, %v8492
        %v8520 = vadd.f32 %v7989, %v8496
        %v8521 = vadd.f32 %v7990, %v8500
        %v8522 = vadd.f32 %v7991, %v8504
        %v8523 = vadd.f32 %v7992, %v8508
        %v8524 = vadd.f32 %v7993, %v8512
        %v8525 = vadd.f32 %v7994, %v8516
        %v8526 = vld [vmem:[%s7463 + $0x2] sm:$0xff]
        %v8527 = vld [vmem:[%s7463 + $0x12] sm:$0xff]
        %v8528 = vld [vmem:[%s7463 + $0x22] sm:$0xff]
        %v8529 = vld [vmem:[%s7463 + $0x32] sm:$0xff]
        %v8530 = vld [vmem:[%s7463 + $0x42] sm:$0xff]
        %v8531 = vld [vmem:[%s7463 + $0x52] sm:$0xff]
        %v8532 = vld [vmem:[%s7463 + $0x62] sm:$0xff]
        %v8533 = vld [vmem:[%s7463 + $0x72] sm:$0xff]
        %s8534 = scalar_lea.vmem %s2, 640
        %v8535 = vld [vmem:[%s8534] sm:$0xff]
        %v8536 = vld [vmem:[%s8534 + $0x8] sm:$0xff]
        %v8537 = vld [vmem:[%s8534 + $0x10] sm:$0xff]
        %v8538 = vld [vmem:[%s8534 + $0x18] sm:$0xff]
        %v8539 = vld [vmem:[%s8534 + $0x20] sm:$0xff]
        %v8540 = vld [vmem:[%s8534 + $0x28] sm:$0xff]
        %v8541 = vld [vmem:[%s8534 + $0x30] sm:$0xff]
        %v8542 = vld [vmem:[%s8534 + $0x38] sm:$0xff]
        %v8543 = vld [vmem:[%s8534 + $0x40] sm:$0xff]
        %v8544 = vld [vmem:[%s8534 + $0x48] sm:$0xff]
        %v8546 = vsel %vm4230, %v8526, 0
        %v8549 = vsel %vm4230, %v8527, 0
        %v8552 = vsel %vm4230, %v8528, 0
        %v8555 = vsel %vm4230, %v8529, 0
        %v8558 = vsel %vm4230, %v8530, 0
        %v8561 = vsel %vm4230, %v8531, 0
        %v8564 = vsel %vm4230, %v8532, 0
        %v8567 = vsel %vm4230, %v8533, 0
        %8569 = vmatpush.msra.mxu0 0.0
        %8570 = vmatpush.msra.mxu0 0.0
        %8571 = vmatpush.msra.mxu0 0.0
        %8572 = vmatpush.msra.mxu0 0.0
        %8573 = vmatpush.msra.mxu0 0.0
        %8574 = vmatpush.msra.mxu0 0.0
        %v8575 = vand.u32 %v8544, 4294901760
        %8576 = vmatpush.msra.mxu0 %v8575
        %v8577 = vand.u32 %v8543, 4294901760
        %8578 = vmatpush.msra.mxu0 %v8577
        %v8579 = vand.u32 %v8542, 4294901760
        %8580 = vmatpush.msra.mxu0 %v8579
        %v8581 = vand.u32 %v8541, 4294901760
        %8582 = vmatpush.msra.mxu0 %v8581
        %v8583 = vand.u32 %v8540, 4294901760
        %8584 = vmatpush.msra.mxu0 %v8583
        %v8585 = vand.u32 %v8539, 4294901760
        %8586 = vmatpush.msra.mxu0 %v8585
        %v8587 = vand.u32 %v8538, 4294901760
        %8588 = vmatpush.msra.mxu0 %v8587
        %v8589 = vand.u32 %v8537, 4294901760
        %8590 = vmatpush.msra.mxu0 %v8589
        %v8591 = vand.u32 %v8536, 4294901760
        %8592 = vmatpush.msra.mxu0 %v8591
        %v8593 = vand.u32 %v8535, 4294901760
        %8594 = vmatpush.msra.mxu0 %v8593
        %v8595 = vand.u32 %v8546, 4294901760
        %v8596 = vsub.f32 %v8546, %v8595
        %v8597 = vand.u32 %v8596, 4294901760
        %v8598 = vsub.f32 %v8596, %v8597
        %v8599 = vand.u32 %v8598, 4294901760
        %8600 = vmatmul.f32.gmra.mxu0 %v8599
        %v8601 = vpop.f32.mrf.mxu0
        %v8602 = vadd.f32 0.0, %v8601
        %v8603 = vand.u32 %v8549, 4294901760
        %v8604 = vsub.f32 %v8549, %v8603
        %v8605 = vand.u32 %v8604, 4294901760
        %v8606 = vsub.f32 %v8604, %v8605
        %v8607 = vand.u32 %v8606, 4294901760
        %8608 = vmatmul.f32.gmra.mxu0 %v8607
        %v8609 = vpop.f32.mrf.mxu0
        %v8610 = vadd.f32 0.0, %v8609
        %v8611 = vand.u32 %v8552, 4294901760
        %v8612 = vsub.f32 %v8552, %v8611
        %v8613 = vand.u32 %v8612, 4294901760
        %v8614 = vsub.f32 %v8612, %v8613
        %v8615 = vand.u32 %v8614, 4294901760
        %8616 = vmatmul.f32.gmra.mxu0 %v8615
        %v8617 = vpop.f32.mrf.mxu0
        %v8618 = vadd.f32 0.0, %v8617
        %v8619 = vand.u32 %v8555, 4294901760
        %v8620 = vsub.f32 %v8555, %v8619
        %v8621 = vand.u32 %v8620, 4294901760
        %v8622 = vsub.f32 %v8620, %v8621
        %v8623 = vand.u32 %v8622, 4294901760
        %8624 = vmatmul.f32.gmra.mxu0 %v8623
        %v8625 = vpop.f32.mrf.mxu0
        %v8626 = vadd.f32 0.0, %v8625
        %v8627 = vand.u32 %v8558, 4294901760
        %v8628 = vsub.f32 %v8558, %v8627
        %v8629 = vand.u32 %v8628, 4294901760
        %v8630 = vsub.f32 %v8628, %v8629
        %v8631 = vand.u32 %v8630, 4294901760
        %8632 = vmatmul.f32.gmra.mxu0 %v8631
        %v8633 = vpop.f32.mrf.mxu0
        %v8634 = vadd.f32 0.0, %v8633
        %v8635 = vand.u32 %v8561, 4294901760
        %v8636 = vsub.f32 %v8561, %v8635
        %v8637 = vand.u32 %v8636, 4294901760
        %v8638 = vsub.f32 %v8636, %v8637
        %v8639 = vand.u32 %v8638, 4294901760
        %8640 = vmatmul.f32.gmra.mxu0 %v8639
        %v8641 = vpop.f32.mrf.mxu0
        %v8642 = vadd.f32 0.0, %v8641
        %v8643 = vand.u32 %v8564, 4294901760
        %v8644 = vsub.f32 %v8564, %v8643
        %v8645 = vand.u32 %v8644, 4294901760
        %v8646 = vsub.f32 %v8644, %v8645
        %v8647 = vand.u32 %v8646, 4294901760
        %8648 = vmatmul.f32.gmra.mxu0 %v8647
        %v8649 = vpop.f32.mrf.mxu0
        %v8650 = vadd.f32 0.0, %v8649
        %v8651 = vand.u32 %v8567, 4294901760
        %v8652 = vsub.f32 %v8567, %v8651
        %v8653 = vand.u32 %v8652, 4294901760
        %v8654 = vsub.f32 %v8652, %v8653
        %v8655 = vand.u32 %v8654, 4294901760
        %8656 = vmatmul.f32.gmra.mxu0 %v8655
        %v8657 = vpop.f32.mrf.mxu0
        %v8658 = vadd.f32 0.0, %v8657
        %8659 = vdwg.mxu0
        %8660 = vmatpush.msra.mxu0 0.0
        %8661 = vmatpush.msra.mxu0 0.0
        %8662 = vmatpush.msra.mxu0 0.0
        %8663 = vmatpush.msra.mxu0 0.0
        %8664 = vmatpush.msra.mxu0 0.0
        %8665 = vmatpush.msra.mxu0 0.0
        %v8666 = vand.u32 %v8544, 4294901760
        %v8667 = vsub.f32 %v8544, %v8666
        %v8668 = vand.u32 %v8667, 4294901760
        %v8669 = vsub.f32 %v8667, %v8668
        %v8670 = vand.u32 %v8669, 4294901760
        %8671 = vmatpush.msra.mxu0 %v8670
        %v8672 = vand.u32 %v8543, 4294901760
        %v8673 = vsub.f32 %v8543, %v8672
        %v8674 = vand.u32 %v8673, 4294901760
        %v8675 = vsub.f32 %v8673, %v8674
        %v8676 = vand.u32 %v8675, 4294901760
        %8677 = vmatpush.msra.mxu0 %v8676
        %v8678 = vand.u32 %v8542, 4294901760
        %v8679 = vsub.f32 %v8542, %v8678
        %v8680 = vand.u32 %v8679, 4294901760
        %v8681 = vsub.f32 %v8679, %v8680
        %v8682 = vand.u32 %v8681, 4294901760
        %8683 = vmatpush.msra.mxu0 %v8682
        %v8684 = vand.u32 %v8541, 4294901760
        %v8685 = vsub.f32 %v8541, %v8684
        %v8686 = vand.u32 %v8685, 4294901760
        %v8687 = vsub.f32 %v8685, %v8686
        %v8688 = vand.u32 %v8687, 4294901760
        %8689 = vmatpush.msra.mxu0 %v8688
        %v8690 = vand.u32 %v8540, 4294901760
        %v8691 = vsub.f32 %v8540, %v8690
        %v8692 = vand.u32 %v8691, 4294901760
        %v8693 = vsub.f32 %v8691, %v8692
        %v8694 = vand.u32 %v8693, 4294901760
        %8695 = vmatpush.msra.mxu0 %v8694
        %v8696 = vand.u32 %v8539, 4294901760
        %v8697 = vsub.f32 %v8539, %v8696
        %v8698 = vand.u32 %v8697, 4294901760
        %v8699 = vsub.f32 %v8697, %v8698
        %v8700 = vand.u32 %v8699, 4294901760
        %8701 = vmatpush.msra.mxu0 %v8700
        %v8702 = vand.u32 %v8538, 4294901760
        %v8703 = vsub.f32 %v8538, %v8702
        %v8704 = vand.u32 %v8703, 4294901760
        %v8705 = vsub.f32 %v8703, %v8704
        %v8706 = vand.u32 %v8705, 4294901760
        %8707 = vmatpush.msra.mxu0 %v8706
        %v8708 = vand.u32 %v8537, 4294901760
        %v8709 = vsub.f32 %v8537, %v8708
        %v8710 = vand.u32 %v8709, 4294901760
        %v8711 = vsub.f32 %v8709, %v8710
        %v8712 = vand.u32 %v8711, 4294901760
        %8713 = vmatpush.msra.mxu0 %v8712
        %v8714 = vand.u32 %v8536, 4294901760
        %v8715 = vsub.f32 %v8536, %v8714
        %v8716 = vand.u32 %v8715, 4294901760
        %v8717 = vsub.f32 %v8715, %v8716
        %v8718 = vand.u32 %v8717, 4294901760
        %8719 = vmatpush.msra.mxu0 %v8718
        %v8720 = vand.u32 %v8535, 4294901760
        %v8721 = vsub.f32 %v8535, %v8720
        %v8722 = vand.u32 %v8721, 4294901760
        %v8723 = vsub.f32 %v8721, %v8722
        %v8724 = vand.u32 %v8723, 4294901760
        %8725 = vmatpush.msra.mxu0 %v8724
        %v8726 = vand.u32 %v8546, 4294901760
        %8727 = vmatmul.f32.gmra.mxu0 %v8726
        %v8728 = vpop.f32.mrf.mxu0
        %v8729 = vadd.f32 %v8602, %v8728
        %v8730 = vand.u32 %v8549, 4294901760
        %8731 = vmatmul.f32.gmra.mxu0 %v8730
        %v8732 = vpop.f32.mrf.mxu0
        %v8733 = vadd.f32 %v8610, %v8732
        %v8734 = vand.u32 %v8552, 4294901760
        %8735 = vmatmul.f32.gmra.mxu0 %v8734
        %v8736 = vpop.f32.mrf.mxu0
        %v8737 = vadd.f32 %v8618, %v8736
        %v8738 = vand.u32 %v8555, 4294901760
        %8739 = vmatmul.f32.gmra.mxu0 %v8738
        %v8740 = vpop.f32.mrf.mxu0
        %v8741 = vadd.f32 %v8626, %v8740
        %v8742 = vand.u32 %v8558, 4294901760
        %8743 = vmatmul.f32.gmra.mxu0 %v8742
        %v8744 = vpop.f32.mrf.mxu0
        %v8745 = vadd.f32 %v8634, %v8744
        %v8746 = vand.u32 %v8561, 4294901760
        %8747 = vmatmul.f32.gmra.mxu0 %v8746
        %v8748 = vpop.f32.mrf.mxu0
        %v8749 = vadd.f32 %v8642, %v8748
        %v8750 = vand.u32 %v8564, 4294901760
        %8751 = vmatmul.f32.gmra.mxu0 %v8750
        %v8752 = vpop.f32.mrf.mxu0
        %v8753 = vadd.f32 %v8650, %v8752
        %v8754 = vand.u32 %v8567, 4294901760
        %8755 = vmatmul.f32.gmra.mxu0 %v8754
        %v8756 = vpop.f32.mrf.mxu0
        %v8757 = vadd.f32 %v8658, %v8756
        %8758 = vdwg.mxu0
        %8759 = vmatpush.msra.mxu0 0.0
        %8760 = vmatpush.msra.mxu0 0.0
        %8761 = vmatpush.msra.mxu0 0.0
        %8762 = vmatpush.msra.mxu0 0.0
        %8763 = vmatpush.msra.mxu0 0.0
        %8764 = vmatpush.msra.mxu0 0.0
        %v8765 = vand.u32 %v8544, 4294901760
        %v8766 = vsub.f32 %v8544, %v8765
        %8767 = vmatpush.msra.mxu0 %v8766
        %v8768 = vand.u32 %v8543, 4294901760
        %v8769 = vsub.f32 %v8543, %v8768
        %8770 = vmatpush.msra.mxu0 %v8769
        %v8771 = vand.u32 %v8542, 4294901760
        %v8772 = vsub.f32 %v8542, %v8771
        %8773 = vmatpush.msra.mxu0 %v8772
        %v8774 = vand.u32 %v8541, 4294901760
        %v8775 = vsub.f32 %v8541, %v8774
        %8776 = vmatpush.msra.mxu0 %v8775
        %v8777 = vand.u32 %v8540, 4294901760
        %v8778 = vsub.f32 %v8540, %v8777
        %8779 = vmatpush.msra.mxu0 %v8778
        %v8780 = vand.u32 %v8539, 4294901760
        %v8781 = vsub.f32 %v8539, %v8780
        %8782 = vmatpush.msra.mxu0 %v8781
        %v8783 = vand.u32 %v8538, 4294901760
        %v8784 = vsub.f32 %v8538, %v8783
        %8785 = vmatpush.msra.mxu0 %v8784
        %v8786 = vand.u32 %v8537, 4294901760
        %v8787 = vsub.f32 %v8537, %v8786
        %8788 = vmatpush.msra.mxu0 %v8787
        %v8789 = vand.u32 %v8536, 4294901760
        %v8790 = vsub.f32 %v8536, %v8789
        %8791 = vmatpush.msra.mxu0 %v8790
        %v8792 = vand.u32 %v8535, 4294901760
        %v8793 = vsub.f32 %v8535, %v8792
        %8794 = vmatpush.msra.mxu0 %v8793
        %v8795 = vand.u32 %v8546, 4294901760
        %v8796 = vsub.f32 %v8546, %v8795
        %8797 = vmatmul.f32.gmra.mxu0 %v8796
        %v8798 = vpop.f32.mrf.mxu0
        %v8799 = vadd.f32 %v8729, %v8798
        %v8800 = vand.u32 %v8549, 4294901760
        %v8801 = vsub.f32 %v8549, %v8800
        %8802 = vmatmul.f32.gmra.mxu0 %v8801
        %v8803 = vpop.f32.mrf.mxu0
        %v8804 = vadd.f32 %v8733, %v8803
        %v8805 = vand.u32 %v8552, 4294901760
        %v8806 = vsub.f32 %v8552, %v8805
        %8807 = vmatmul.f32.gmra.mxu0 %v8806
        %v8808 = vpop.f32.mrf.mxu0
        %v8809 = vadd.f32 %v8737, %v8808
        %v8810 = vand.u32 %v8555, 4294901760
        %v8811 = vsub.f32 %v8555, %v8810
        %8812 = vmatmul.f32.gmra.mxu0 %v8811
        %v8813 = vpop.f32.mrf.mxu0
        %v8814 = vadd.f32 %v8741, %v8813
        %v8815 = vand.u32 %v8558, 4294901760
        %v8816 = vsub.f32 %v8558, %v8815
        %8817 = vmatmul.f32.gmra.mxu0 %v8816
        %v8818 = vpop.f32.mrf.mxu0
        %v8819 = vadd.f32 %v8745, %v8818
        %v8820 = vand.u32 %v8561, 4294901760
        %v8821 = vsub.f32 %v8561, %v8820
        %8822 = vmatmul.f32.gmra.mxu0 %v8821
        %v8823 = vpop.f32.mrf.mxu0
        %v8824 = vadd.f32 %v8749, %v8823
        %v8825 = vand.u32 %v8564, 4294901760
        %v8826 = vsub.f32 %v8564, %v8825
        %8827 = vmatmul.f32.gmra.mxu0 %v8826
        %v8828 = vpop.f32.mrf.mxu0
        %v8829 = vadd.f32 %v8753, %v8828
        %v8830 = vand.u32 %v8567, 4294901760
        %v8831 = vsub.f32 %v8567, %v8830
        %8832 = vmatmul.f32.gmra.mxu0 %v8831
        %v8833 = vpop.f32.mrf.mxu0
        %v8834 = vadd.f32 %v8757, %v8833
        %8835 = vdwg.mxu0
        %8836 = vmatpush.msra.mxu0 0.0
        %8837 = vmatpush.msra.mxu0 0.0
        %8838 = vmatpush.msra.mxu0 0.0
        %8839 = vmatpush.msra.mxu0 0.0
        %8840 = vmatpush.msra.mxu0 0.0
        %8841 = vmatpush.msra.mxu0 0.0
        %v8842 = vand.u32 %v8544, 4294901760
        %8843 = vmatpush.msra.mxu0 %v8842
        %v8844 = vand.u32 %v8543, 4294901760
        %8845 = vmatpush.msra.mxu0 %v8844
        %v8846 = vand.u32 %v8542, 4294901760
        %8847 = vmatpush.msra.mxu0 %v8846
        %v8848 = vand.u32 %v8541, 4294901760
        %8849 = vmatpush.msra.mxu0 %v8848
        %v8850 = vand.u32 %v8540, 4294901760
        %8851 = vmatpush.msra.mxu0 %v8850
        %v8852 = vand.u32 %v8539, 4294901760
        %8853 = vmatpush.msra.mxu0 %v8852
        %v8854 = vand.u32 %v8538, 4294901760
        %8855 = vmatpush.msra.mxu0 %v8854
        %v8856 = vand.u32 %v8537, 4294901760
        %8857 = vmatpush.msra.mxu0 %v8856
        %v8858 = vand.u32 %v8536, 4294901760
        %8859 = vmatpush.msra.mxu0 %v8858
        %v8860 = vand.u32 %v8535, 4294901760
        %8861 = vmatpush.msra.mxu0 %v8860
        %v8862 = vand.u32 %v8546, 4294901760
        %v8863 = vsub.f32 %v8546, %v8862
        %v8864 = vand.u32 %v8863, 4294901760
        %8865 = vmatmul.f32.gmra.mxu0 %v8864
        %v8866 = vpop.f32.mrf.mxu0
        %v8867 = vadd.f32 %v8799, %v8866
        %v8868 = vand.u32 %v8549, 4294901760
        %v8869 = vsub.f32 %v8549, %v8868
        %v8870 = vand.u32 %v8869, 4294901760
        %8871 = vmatmul.f32.gmra.mxu0 %v8870
        %v8872 = vpop.f32.mrf.mxu0
        %v8873 = vadd.f32 %v8804, %v8872
        %v8874 = vand.u32 %v8552, 4294901760
        %v8875 = vsub.f32 %v8552, %v8874
        %v8876 = vand.u32 %v8875, 4294901760
        %8877 = vmatmul.f32.gmra.mxu0 %v8876
        %v8878 = vpop.f32.mrf.mxu0
        %v8879 = vadd.f32 %v8809, %v8878
        %v8880 = vand.u32 %v8555, 4294901760
        %v8881 = vsub.f32 %v8555, %v8880
        %v8882 = vand.u32 %v8881, 4294901760
        %8883 = vmatmul.f32.gmra.mxu0 %v8882
        %v8884 = vpop.f32.mrf.mxu0
        %v8885 = vadd.f32 %v8814, %v8884
        %v8886 = vand.u32 %v8558, 4294901760
        %v8887 = vsub.f32 %v8558, %v8886
        %v8888 = vand.u32 %v8887, 4294901760
        %8889 = vmatmul.f32.gmra.mxu0 %v8888
        %v8890 = vpop.f32.mrf.mxu0
        %v8891 = vadd.f32 %v8819, %v8890
        %v8892 = vand.u32 %v8561, 4294901760
        %v8893 = vsub.f32 %v8561, %v8892
        %v8894 = vand.u32 %v8893, 4294901760
        %8895 = vmatmul.f32.gmra.mxu0 %v8894
        %v8896 = vpop.f32.mrf.mxu0
        %v8897 = vadd.f32 %v8824, %v8896
        %v8898 = vand.u32 %v8564, 4294901760
        %v8899 = vsub.f32 %v8564, %v8898
        %v8900 = vand.u32 %v8899, 4294901760
        %8901 = vmatmul.f32.gmra.mxu0 %v8900
        %v8902 = vpop.f32.mrf.mxu0
        %v8903 = vadd.f32 %v8829, %v8902
        %v8904 = vand.u32 %v8567, 4294901760
        %v8905 = vsub.f32 %v8567, %v8904
        %v8906 = vand.u32 %v8905, 4294901760
        %8907 = vmatmul.f32.gmra.mxu0 %v8906
        %v8908 = vpop.f32.mrf.mxu0
        %v8909 = vadd.f32 %v8834, %v8908
        %8910 = vdwg.mxu0
        %8911 = vmatpush.msra.mxu0 0.0
        %8912 = vmatpush.msra.mxu0 0.0
        %8913 = vmatpush.msra.mxu0 0.0
        %8914 = vmatpush.msra.mxu0 0.0
        %8915 = vmatpush.msra.mxu0 0.0
        %8916 = vmatpush.msra.mxu0 0.0
        %v8917 = vand.u32 %v8544, 4294901760
        %v8918 = vsub.f32 %v8544, %v8917
        %v8919 = vand.u32 %v8918, 4294901760
        %8920 = vmatpush.msra.mxu0 %v8919
        %v8921 = vand.u32 %v8543, 4294901760
        %v8922 = vsub.f32 %v8543, %v8921
        %v8923 = vand.u32 %v8922, 4294901760
        %8924 = vmatpush.msra.mxu0 %v8923
        %v8925 = vand.u32 %v8542, 4294901760
        %v8926 = vsub.f32 %v8542, %v8925
        %v8927 = vand.u32 %v8926, 4294901760
        %8928 = vmatpush.msra.mxu0 %v8927
        %v8929 = vand.u32 %v8541, 4294901760
        %v8930 = vsub.f32 %v8541, %v8929
        %v8931 = vand.u32 %v8930, 4294901760
        %8932 = vmatpush.msra.mxu0 %v8931
        %v8933 = vand.u32 %v8540, 4294901760
        %v8934 = vsub.f32 %v8540, %v8933
        %v8935 = vand.u32 %v8934, 4294901760
        %8936 = vmatpush.msra.mxu0 %v8935
        %v8937 = vand.u32 %v8539, 4294901760
        %v8938 = vsub.f32 %v8539, %v8937
        %v8939 = vand.u32 %v8938, 4294901760
        %8940 = vmatpush.msra.mxu0 %v8939
        %v8941 = vand.u32 %v8538, 4294901760
        %v8942 = vsub.f32 %v8538, %v8941
        %v8943 = vand.u32 %v8942, 4294901760
        %8944 = vmatpush.msra.mxu0 %v8943
        %v8945 = vand.u32 %v8537, 4294901760
        %v8946 = vsub.f32 %v8537, %v8945
        %v8947 = vand.u32 %v8946, 4294901760
        %8948 = vmatpush.msra.mxu0 %v8947
        %v8949 = vand.u32 %v8536, 4294901760
        %v8950 = vsub.f32 %v8536, %v8949
        %v8951 = vand.u32 %v8950, 4294901760
        %8952 = vmatpush.msra.mxu0 %v8951
        %v8953 = vand.u32 %v8535, 4294901760
        %v8954 = vsub.f32 %v8535, %v8953
        %v8955 = vand.u32 %v8954, 4294901760
        %8956 = vmatpush.msra.mxu0 %v8955
        %v8957 = vand.u32 %v8546, 4294901760
        %8958 = vmatmul.f32.gmra.mxu0 %v8957
        %v8959 = vpop.f32.mrf.mxu0
        %v8960 = vadd.f32 %v8867, %v8959
        %v8961 = vand.u32 %v8549, 4294901760
        %8962 = vmatmul.f32.gmra.mxu0 %v8961
        %v8963 = vpop.f32.mrf.mxu0
        %v8964 = vadd.f32 %v8873, %v8963
        %v8965 = vand.u32 %v8552, 4294901760
        %8966 = vmatmul.f32.gmra.mxu0 %v8965
        %v8967 = vpop.f32.mrf.mxu0
        %v8968 = vadd.f32 %v8879, %v8967
        %v8969 = vand.u32 %v8555, 4294901760
        %8970 = vmatmul.f32.gmra.mxu0 %v8969
        %v8971 = vpop.f32.mrf.mxu0
        %v8972 = vadd.f32 %v8885, %v8971
        %v8973 = vand.u32 %v8558, 4294901760
        %8974 = vmatmul.f32.gmra.mxu0 %v8973
        %v8975 = vpop.f32.mrf.mxu0
        %v8976 = vadd.f32 %v8891, %v8975
        %v8977 = vand.u32 %v8561, 4294901760
        %8978 = vmatmul.f32.gmra.mxu0 %v8977
        %v8979 = vpop.f32.mrf.mxu0
        %v8980 = vadd.f32 %v8897, %v8979
        %v8981 = vand.u32 %v8564, 4294901760
        %8982 = vmatmul.f32.gmra.mxu0 %v8981
        %v8983 = vpop.f32.mrf.mxu0
        %v8984 = vadd.f32 %v8903, %v8983
        %v8985 = vand.u32 %v8567, 4294901760
        %8986 = vmatmul.f32.gmra.mxu0 %v8985
        %v8987 = vpop.f32.mrf.mxu0
        %v8988 = vadd.f32 %v8909, %v8987
        %8989 = vdwg.mxu0
        %8990 = vmatpush.msra.mxu0 0.0
        %8991 = vmatpush.msra.mxu0 0.0
        %8992 = vmatpush.msra.mxu0 0.0
        %8993 = vmatpush.msra.mxu0 0.0
        %8994 = vmatpush.msra.mxu0 0.0
        %8995 = vmatpush.msra.mxu0 0.0
        %v8996 = vand.u32 %v8544, 4294901760
        %8997 = vmatpush.msra.mxu0 %v8996
        %v8998 = vand.u32 %v8543, 4294901760
        %8999 = vmatpush.msra.mxu0 %v8998
        %v9000 = vand.u32 %v8542, 4294901760
        %9001 = vmatpush.msra.mxu0 %v9000
        %v9002 = vand.u32 %v8541, 4294901760
        %9003 = vmatpush.msra.mxu0 %v9002
        %v9004 = vand.u32 %v8540, 4294901760
        %9005 = vmatpush.msra.mxu0 %v9004
        %v9006 = vand.u32 %v8539, 4294901760
        %9007 = vmatpush.msra.mxu0 %v9006
        %v9008 = vand.u32 %v8538, 4294901760
        %9009 = vmatpush.msra.mxu0 %v9008
        %v9010 = vand.u32 %v8537, 4294901760
        %9011 = vmatpush.msra.mxu0 %v9010
        %v9012 = vand.u32 %v8536, 4294901760
        %9013 = vmatpush.msra.mxu0 %v9012
        %v9014 = vand.u32 %v8535, 4294901760
        %9015 = vmatpush.msra.mxu0 %v9014
        %v9016 = vand.u32 %v8546, 4294901760
        %9017 = vmatmul.f32.gmra.mxu0 %v9016
        %v9018 = vpop.f32.mrf.mxu0
        %v9019 = vadd.f32 %v8960, %v9018
        %v9020 = vand.u32 %v8549, 4294901760
        %9021 = vmatmul.f32.gmra.mxu0 %v9020
        %v9022 = vpop.f32.mrf.mxu0
        %v9023 = vadd.f32 %v8964, %v9022
        %v9024 = vand.u32 %v8552, 4294901760
        %9025 = vmatmul.f32.gmra.mxu0 %v9024
        %v9026 = vpop.f32.mrf.mxu0
        %v9027 = vadd.f32 %v8968, %v9026
        %v9028 = vand.u32 %v8555, 4294901760
        %9029 = vmatmul.f32.gmra.mxu0 %v9028
        %v9030 = vpop.f32.mrf.mxu0
        %v9031 = vadd.f32 %v8972, %v9030
        %v9032 = vand.u32 %v8558, 4294901760
        %9033 = vmatmul.f32.gmra.mxu0 %v9032
        %v9034 = vpop.f32.mrf.mxu0
        %v9035 = vadd.f32 %v8976, %v9034
        %v9036 = vand.u32 %v8561, 4294901760
        %9037 = vmatmul.f32.gmra.mxu0 %v9036
        %v9038 = vpop.f32.mrf.mxu0
        %v9039 = vadd.f32 %v8980, %v9038
        %v9040 = vand.u32 %v8564, 4294901760
        %9041 = vmatmul.f32.gmra.mxu0 %v9040
        %v9042 = vpop.f32.mrf.mxu0
        %v9043 = vadd.f32 %v8984, %v9042
        %v9044 = vand.u32 %v8567, 4294901760
        %9045 = vmatmul.f32.gmra.mxu0 %v9044
        %v9046 = vpop.f32.mrf.mxu0
        %v9047 = vadd.f32 %v8988, %v9046
        %9048 = vdwg.mxu0
        %v9049 = vadd.f32 %v8518, %v9019
        %v9050 = vadd.f32 %v8519, %v9023
        %v9051 = vadd.f32 %v8520, %v9027
        %v9052 = vadd.f32 %v8521, %v9031
        %v9053 = vadd.f32 %v8522, %v9035
        %v9054 = vadd.f32 %v8523, %v9039
        %v9055 = vadd.f32 %v8524, %v9043
        %v9056 = vadd.f32 %v8525, %v9047
        %v9057 = vperm.slane %v216, 2
        %v9058 = vmul.f32 %v9049, %v9057
        %v9059 = vmul.f32 %v9050, %v9057
        %v9060 = vmul.f32 %v9051, %v9057
        %v9061 = vmul.f32 %v9052, %v9057
        %v9062 = vmul.f32 %v9053, %v9057
        %v9063 = vmul.f32 %v9054, %v9057
        %v9064 = vmul.f32 %v9055, %v9057
        %v9065 = vmul.f32 %v9056, %v9057
        %v9066 = vperm.slane %v216, 3
        %v9067 = vadd.f32 %v9058, %v9066
        %v9068 = vadd.f32 %v9059, %v9066
        %v9069 = vadd.f32 %v9060, %v9066
        %v9070 = vadd.f32 %v9061, %v9066
        %v9071 = vadd.f32 %v9062, %v9066
        %v9072 = vadd.f32 %v9063, %v9066
        %v9073 = vadd.f32 %v9064, %v9066
        %v9074 = vadd.f32 %v9065, %v9066
        %v9075 = vmax.f32 %v9067, 0.0
        %v9076 = vmax.f32 %v9068, 0.0
        %v9077 = vmax.f32 %v9069, 0.0
        %v9078 = vmax.f32 %v9070, 0.0
        %v9079 = vmax.f32 %v9071, 0.0
        %v9080 = vmax.f32 %v9072, 0.0
        %v9081 = vmax.f32 %v9073, 0.0
        %v9082 = vmax.f32 %v9074, 0.0
        %vm9083 = vcmask 523264
        %9084 = vst.msk [vmem:[%s190] sm:$0xff] %vm9083, %v9075
        %9085 = vst.msk [vmem:[%s190 + $0x8] sm:$0xff] %vm9083, %v9076
        %9086 = vst.msk [vmem:[%s190 + $0x10] sm:$0xff] %vm9083, %v9077
        %9087 = vst.msk [vmem:[%s190 + $0x18] sm:$0xff] %vm9083, %v9078
        %9088 = vst.msk [vmem:[%s190 + $0x20] sm:$0xff] %vm9083, %v9079
        %9089 = vst.msk [vmem:[%s190 + $0x28] sm:$0xff] %vm9083, %v9080
        %9090 = vst.msk [vmem:[%s190 + $0x30] sm:$0xff] %vm9083, %v9081
        %9091 = vst.msk [vmem:[%s190 + $0x38] sm:$0xff] %vm9083, %v9082
        %s9092 = sand.u32 %s115, 1
        %s9093 = scalar_lea.sflag [#allocation4], %s9092
        %s9094 = sand.u32 %s115, 1
        %s9095 = smul.addr %s9094, 64
        %s9096 = scalar_lea.vmem [#allocation3], %s9095
        // Predicated region
        $region37: #{tpu_custom_call.1} parent=35 // pred_check
          %p9097 = pneg %p125
        $region38: #{tpu_custom_call.1} parent=35 // pred_check_branch
          %9099 = sbr.rel (%p9097) target = $region40
        $region39: #{tpu_custom_call.1} parent=35 // pred_region
          %9101 = vsyncadd %s9093, 0
          %s9102 = smul.addr %s18, 8
          %s9103 = smul.addr %s9102, 8
          %s9104 = scalar_lea.hbm %s4, %s9103
          %s9105 = sshll.u32 %s9096, 4
          %s9106 = int_to_ptr.vmem [resolvable:$true] %s9105
          %s9107 = sshll.u32 %s9104, 4
          %s9108 = int_to_ptr.hbm [resolvable:$true] %s9107
          %9113 = dma.vmem_to_hbm [thread:$0]  %s9106, 1024, %s9108, %s9093, 128, 128, 8
        $region40: #{tpu_custom_call.1} parent=35 // pred_fallthru
          _
      $region36: #{tpu_custom_call.1} parent=5 // pred_fallthru
        _
      %p9114 = scmp.le.s32.totalorder 2, %s13
      // Predicated region
      $region41: #{tpu_custom_call.1} parent=5 // pred_check
        %p9115 = pneg %p9114
      $region42: #{tpu_custom_call.1} parent=5 // pred_check_branch
        %9117 = sbr.rel (%p9115) target = $region44
      $region43: #{tpu_custom_call.1} parent=5 // pred_region
        %s9118 = ssub.s32 %s13, 2
        // Predicated region
        $region45: #{tpu_custom_call.1} parent=43 // pred_check
          %p9119 = pneg %p131
        $region46: #{tpu_custom_call.1} parent=43 // pred_check_branch
          %9121 = sbr.rel (%p9119) target = $region48
        $region47: #{tpu_custom_call.1} parent=43 // pred_region
          %s9122 = sand.u32 %s116, 1
          %s9123 = scalar_lea.sflag [#allocation4], %s9122
          %s9124 = sand.u32 %s116, 1
          %s9125 = smul.addr %s9124, 64
          %s9126 = scalar_lea.vmem [#allocation3], %s9125
          %9128 = dma.done %s9123, 1024
        $region48: #{tpu_custom_call.1} parent=43 // pred_fallthru
          _
      $region44: #{tpu_custom_call.1} parent=5 // pred_fallthru
        _
    $region6: #{tpu_custom_call.1} parent=1 // loop_footer
      %s17 = sadd.s32 1, %s13
    $region7: #{tpu_custom_call.1} parent=1 // loop_footer_branch
      %12 = sbr.rel target = $region3
    $region8: #{tpu_custom_call.1} parent=1 // loop_exit
      _
    %9129 = vsyncpa [#allocation4], 1
    %s9130 = scalar_lea.sflag [#allocation4], 1
    %9131 = vsyncpa %s9130, 1

</llo_original>
